<compile_context>
chip_gen: v7x
topology: tpu7x:2x2x1
jax: 0.10.0
libtpu: 0.0.40
codegen_flags: <defaults>
</compile_context>

<pallas_src>
import functools

import jax
import jax.numpy as jnp
from jax import lax
from jax.experimental import pallas as pl
from jax.experimental.pallas import tpu as pltpu

NEG_SLOPE = 0.01  # nn.LeakyReLU default
HIDDEN = 256


def _round_up(x, m):
    return (x + m - 1) // m * m


# ---------------------------------------------------------------------------
# Fused Conv1d(k=5, stride=2) + LeakyReLU + MaxPool1d(3, 3) kernel.
#
# Wrapper packs, per (batch, pooled-time) row:
#   y9[b*Tp + t, :] = [x[b, 6t], x[b, 6t+1], ..., x[b, 6t+8]]   (9*Cin lanes)
# Conv output at position 3t+j uses samples 6t+2j .. 6t+2j+4, so each of the
# three pooled taps is a matmul of a 128-aligned lane slice of y9 against the
# same stacked filter W5 = [W0;W1;W2;W3;W4]^T  (5*Cin, Cout) -- zero padding,
# zero wasted MACs.  max / bias / LeakyReLU commute (monotone, shared bias).
# ---------------------------------------------------------------------------
def _conv_pool_kernel(y_ref, w_ref, b_ref, o_ref, *, cin):
    y = y_ref[...]                                   # (TM, 9*Cin) bf16
    w = w_ref[...]                                   # (5*Cin, Cout) bf16
    a0 = jnp.dot(y[:, 0 * cin:5 * cin], w, preferred_element_type=jnp.float32)
    a1 = jnp.dot(y[:, 2 * cin:7 * cin], w, preferred_element_type=jnp.float32)
    a2 = jnp.dot(y[:, 4 * cin:9 * cin], w, preferred_element_type=jnp.float32)
    acc = jnp.maximum(jnp.maximum(a0, a1), a2) + b_ref[...]
    acc = jnp.where(acc > 0, acc, NEG_SLOPE * acc)   # LeakyReLU
    o_ref[...] = acc.astype(o_ref.dtype)


def conv_pool_block(x, w5, bias):
    """x: (B, T, Cin) channels-last -> (B, T_pool, Cout) bf16."""
    B, T, Cin = x.shape
    Cout = w5.shape[1]
    T_conv = (T - 5) // 2 + 1
    T_pool = T_conv // 3
    assert T_pool >= 1, "sequence too short for conv+pool"

    # Pack 9-sample receptive fields (stride 6) into lane-dense rows.
    need = 6 * (T_pool + 1)
    if need > T:
        x = jnp.pad(x, ((0, 0), (0, need - T), (0, 0)))
    else:
        x = x[:, :need, :]
    xp6 = x.reshape(B, T_pool + 1, 6 * Cin)
    y9 = jnp.concatenate([xp6[:, :T_pool, :], xp6[:, 1:, :3 * Cin]], axis=-1)
    y9 = y9.reshape(B * T_pool, 9 * Cin).astype(jnp.bfloat16)

    M = B * T_pool
    TM = min(1024, _round_up(M, 256))   # big M block: fills MXU, amortizes grid step
    Mp = _round_up(M, TM)
    if Mp > M:
        y9 = jnp.pad(y9, ((0, Mp - M), (0, 0)))

    out = pl.pallas_call(
        functools.partial(_conv_pool_kernel, cin=Cin),
        out_shape=jax.ShapeDtypeStruct((Mp, Cout), jnp.bfloat16),
        grid=(Mp // TM,),
        in_specs=[
            pl.BlockSpec((TM, 9 * Cin), lambda i: (i, 0)),
            pl.BlockSpec(w5.shape, lambda i: (0, 0)),
            pl.BlockSpec(bias.shape, lambda i: (0, 0)),
        ],
        out_specs=pl.BlockSpec((TM, Cout), lambda i: (i, 0)),
        compiler_params=pltpu.CompilerParams(
            dimension_semantics=("parallel",),
            vmem_limit_bytes=32 * 1024 * 1024),
    )(y9, w5, bias)
    return out[:M].reshape(B, T_pool, Cout)


# ---------------------------------------------------------------------------
# Fused bidirectional LSTM + FC head kernel (grid over batch tiles).
#   x_ref     : (T, BT, 256) bf16, time-major batch tile
#   wih_ref   : (256, 8H) bf16 = [W_ih_f^T | W_ih_b^T]
#   bih_ref   : (1, 8H)   f32  = [b_ih_f + b_hh_f | b_ih_b + b_hh_b]
#   whhf/whhb : (H, 4H)   bf16 per-direction recurrent weights
#   fc1/fc2   : pre-transposed (fc2 zero-padded to 128 output lanes)
#   xp_ref    : VMEM scratch (T*BT, 8H) bf16 holding both input projections
# PyTorch gate order: i, f, g, o.  Output = fc(cat[h_fwd_final, h_bwd_final]).
# ---------------------------------------------------------------------------
def _lstm_head_kernel(x_ref, wih_ref, bih_ref, whhf_ref, whhb_ref,
                      fc1w_ref, fc1b_ref, fc2w_ref, fc2b_ref, o_ref,
                      xp_ref, *, bt, seq, hidden):
    T, BT, H = seq, bt, hidden

    # Input projections for BOTH directions in one big matmul (M = T*BT).
    x2d = x_ref[...].reshape(T * BT, x_ref.shape[-1])     # BT % 16 == 0 -> free reshape
    xp_ref[...] = (jnp.dot(x2d, wih_ref[...],
                           preferred_element_type=jnp.float32)
                   + bih_ref[...]).astype(xp_ref.dtype)

    def gates(g, c):
        i = jax.nn.sigmoid(g[:, 0:H])
        f = jax.nn.sigmoid(g[:, H:2 * H])
        gg = jnp.tanh(g[:, 2 * H:3 * H])
        o = jax.nn.sigmoid(g[:, 3 * H:4 * H])
        c_new = f * c + i * gg
        return o * jnp.tanh(c_new), c_new

    def step(t, carry):
        h_f, c_f, h_b, c_b = carry
        # Split per-direction recurrent matmuls: no wasted MXU FLOPs.
        rec_f = jnp.dot(h_f.astype(jnp.bfloat16), whhf_ref[...],
                        preferred_element_type=jnp.float32)
        rec_b = jnp.dot(h_b.astype(jnp.bfloat16), whhb_ref[...],
                        preferred_element_type=jnp.float32)
        off_f = pl.multiple_of(t * BT, BT)
        off_b = pl.multiple_of((T - 1 - t) * BT, BT)
        gf = xp_ref[pl.ds(off_f, BT), 0:4 * H] + rec_f
        gb = xp_ref[pl.ds(off_b, BT), 4 * H:8 * H] + rec_b
        h_f, c_f = gates(gf, c_f)
        h_b, c_b = gates(gb, c_b)
        return h_f, c_f, h_b, c_b

    zeros = jnp.zeros((BT, H), jnp.float32)
    h_f, c_f, h_b, c_b = lax.fori_loop(0, T, step, (zeros, zeros, zeros, zeros))

    # h_n = cat([h_fwd_final, h_bwd_final], axis=-1) -> (BT, 2H)
    h_cat = jnp.concatenate([h_f, h_b], axis=1)
    z = jnp.dot(h_cat.astype(jnp.bfloat16), fc1w_ref[...],
                preferred_element_type=jnp.float32) + fc1b_ref[...]
    z = jnp.where(z > 0, z, NEG_SLOPE * z)
    o_ref[...] = jnp.dot(z.astype(jnp.bfloat16), fc2w_ref[...],
                         preferred_element_type=jnp.float32) + fc2b_ref[...]


def lstm_head(x, wih, bih, whh_f, whh_b, fc1w, fc1b, fc2w, fc2b):
    """x: (B, T, 256) -> (B, n_pad) f32 padded logits."""
    B, T, D = x.shape
    H = HIDDEN
    n_pad = fc2w.shape[1]

    # Batch tile: multiple of 16 (clean bf16 reshape), bounded so the
    # (T*BT, 8H) projection / scratch stays comfortably inside VMEM.
    bt = max(16, min(64, (1024 // T) // 16 * 16))
    bt = min(bt, _round_up(B, 16))
    Bp = _round_up(B, bt)
    if Bp > B:
        x = jnp.pad(x, ((0, Bp - B), (0, 0), (0, 0)))
    x_tm = x.transpose(1, 0, 2).astype(jnp.bfloat16)       # (T, Bp, D) time-major

    kernel = functools.partial(_lstm_head_kernel, bt=bt, seq=T, hidden=H)
    out = pl.pallas_call(
        kernel,
        out_shape=jax.ShapeDtypeStruct((Bp, n_pad), jnp.float32),
        grid=(Bp // bt,),
        in_specs=[
            pl.BlockSpec((T, bt, D), lambda i: (0, i, 0)),
            pl.BlockSpec(wih.shape, lambda i: (0, 0)),
            pl.BlockSpec(bih.shape, lambda i: (0, 0)),
            pl.BlockSpec(whh_f.shape, lambda i: (0, 0)),
            pl.BlockSpec(whh_b.shape, lambda i: (0, 0)),
            pl.BlockSpec(fc1w.shape, lambda i: (0, 0)),
            pl.BlockSpec(fc1b.shape, lambda i: (0, 0)),
            pl.BlockSpec(fc2w.shape, lambda i: (0, 0)),
            pl.BlockSpec(fc2b.shape, lambda i: (0, 0)),
        ],
        out_specs=pl.BlockSpec((bt, n_pad), lambda i: (i, 0)),
        scratch_shapes=[pltpu.VMEM((T * bt, 8 * H), jnp.bfloat16)],
        compiler_params=pltpu.CompilerParams(
            dimension_semantics=("parallel",),
            vmem_limit_bytes=48 * 1024 * 1024),
    )(x_tm, wih, bih, whh_f, whh_b, fc1w, fc1b, fc2w, fc2b)
    return out[:B]


# ---------------------------------------------------------------------------
# Parameter init (PyTorch layout) and one-time packing / pre-transposition.
# ---------------------------------------------------------------------------
def init_params(key, num_vocab, num_classes):
    def rnd(k, shape, fan_in):
        return jax.random.normal(k, shape, jnp.float32) / jnp.sqrt(fan_in)

    ks = jax.random.split(key, 20)
    H = HIDDEN
    return {
        "emb": jax.random.normal(ks[0], (num_vocab, 128), jnp.float32) * 0.1,
        "conv1_w": rnd(ks[1], (128, 128, 5), 128 * 5),
        "conv1_b": rnd(ks[2], (128,), 128 * 5),
        "conv2_w": rnd(ks[3], (256, 128, 5), 128 * 5),
        "conv2_b": rnd(ks[4], (256,), 128 * 5),
        "w_ih_f": rnd(ks[5], (4 * H, 256), 256),
        "w_hh_f": rnd(ks[6], (4 * H, H), H),
        "b_ih_f": rnd(ks[7], (4 * H,), H),
        "b_hh_f": rnd(ks[8], (4 * H,), H),
        "w_ih_b": rnd(ks[9], (4 * H, 256), 256),
        "w_hh_b": rnd(ks[10], (4 * H, H), H),
        "b_ih_b": rnd(ks[11], (4 * H,), H),
        "b_hh_b": rnd(ks[12], (4 * H,), H),
        "fc1_w": rnd(ks[13], (256, 512), 512),
        "fc1_b": rnd(ks[14], (256,), 512),
        "fc2_w": rnd(ks[15], (num_classes, 256), 256),
        "fc2_b": rnd(ks[16], (num_classes,), 256),
    }


def _pack_conv(w, b):
    """w: (Cout, Cin, 5) PyTorch Conv1d weight -> stacked filter W5 (5*Cin, Cout)."""
    W5 = jnp.concatenate([w[:, :, k].T for k in range(5)], axis=0)
    return W5.astype(jnp.bfloat16), b[None, :].astype(jnp.float32)


def pack_params(p, num_classes):
    w5_1, b1 = _pack_conv(p["conv1_w"], p["conv1_b"])
    w5_2, b2 = _pack_conv(p["conv2_w"], p["conv2_b"])
    wih = jnp.concatenate([p["w_ih_f"].T, p["w_ih_b"].T], axis=1).astype(jnp.bfloat16)
    bih = jnp.concatenate([p["b_ih_f"] + p["b_hh_f"],
                           p["b_ih_b"] + p["b_hh_b"]])[None, :].astype(jnp.float32)
    whh_f = p["w_hh_f"].T.astype(jnp.bfloat16)                  # (H, 4H)
    whh_b = p["w_hh_b"].T.astype(jnp.bfloat16)
    fc1w = p["fc1_w"].T.astype(jnp.bfloat16)                    # (512, 256)
    fc1b = p["fc1_b"][None, :].astype(jnp.float32)
    n_pad = _round_up(num_classes, 128)                         # lane-dense output
    fc2w = jnp.zeros((p["fc2_w"].shape[1], n_pad), jnp.float32)
    fc2w = fc2w.at[:, :num_classes].set(p["fc2_w"].T).astype(jnp.bfloat16)
    fc2b = jnp.zeros((1, n_pad), jnp.float32).at[0, :num_classes].set(p["fc2_b"])
    return {
        "emb": p["emb"],
        "conv1_w5": w5_1, "conv1_b": b1,
        "conv2_w5": w5_2, "conv2_b": b2,
        "wih": wih, "bih": bih, "whh_f": whh_f, "whh_b": whh_b,
        "fc1_w": fc1w, "fc1_b": fc1b, "fc2_w": fc2w, "fc2_b": fc2b,
    }


# ---------------------------------------------------------------------------
# Full forward pass.
# ---------------------------------------------------------------------------
@functools.partial(jax.jit, static_argnames=("num_classes",))
def forward(pp, x_ids, *, num_classes):
    # Embedding lookup (gather = XLA glue), channels-last (B, L, 128).
    out = jnp.take(pp["emb"], x_ids, axis=0).astype(jnp.bfloat16)

    # Fused conv + LeakyReLU + pool blocks (Dropout = identity at inference).
    out = conv_pool_block(out, pp["conv1_w5"], pp["conv1_b"])
    out = conv_pool_block(out, pp["conv2_w5"], pp["conv2_b"])
    # out: (B, T, 256) bf16 — matches PyTorch's permute(0, 2, 1) before the LSTM.

    logits = lstm_head(out, pp["wih"], pp["bih"], pp["whh_f"], pp["whh_b"],
                       pp["fc1_w"], pp["fc1_b"], pp["fc2_w"], pp["fc2_b"])
    return logits[:, :num_classes]


if __name__ == "__main__":
    key = jax.random.PRNGKey(0)
    num_vocab = 100
    num_classes = 9
    B, L = 2, 256   # L=256 -> conv1/pool1 -> 42 -> conv2/pool2 -> T=6 for the LSTM

    k_x, k_p = jax.random.split(key)
    x = jax.random.randint(k_x, (B, L), 0, num_vocab, dtype=jnp.int32)
    params = init_params(k_p, num_vocab, num_classes)
    packed = pack_params(params, num_classes)

    out = forward(packed, x, num_classes=num_classes)
    out = jax.block_until_ready(out)
    assert out.shape == (B, num_classes), out.shape
    assert out.dtype == jnp.float32
    print("KERNEL_OK")
</pallas_src>

<mosaic_0001>
module attributes {stable_mosaic.version = 11 : i64} {
  func.func @_conv_pool_kernel(%arg0: i32, %arg1: memref<256x1152xbf16, #tpu.memory_space<vmem>>, %arg2: memref<640x128xbf16, #tpu.memory_space<vmem>>, %arg3: memref<1x128xf32, #tpu.memory_space<vmem>>, %arg4: memref<256x128xbf16, #tpu.memory_space<vmem>>) attributes {dimension_semantics = [#tpu.dimension_semantics<parallel>], iteration_bounds = array<i64: 1>, scalar_prefetch = 0 : i64, scratch_operands = 0 : i64, tpu.core_type = #tpu.core_type<tc>, window_params = [{transform_indices = @transform_0, window_bounds = array<i64: 256, 1152>}, {pipeline_mode = #tpu.pipeline_mode<synchronous>, transform_indices = @transform_1, window_bounds = array<i64: 640, 128>}, {pipeline_mode = #tpu.pipeline_mode<synchronous>, transform_indices = @transform_2, window_bounds = array<i64: 1, 128>}, {transform_indices = @transform_3, window_bounds = array<i64: 256, 128>}]} {
    %c0 = arith.constant 0 : index
    %c0_0 = arith.constant 0 : index
    %0 = vector.load %arg1[%c0, %c0_0] : memref<256x1152xbf16, #tpu.memory_space<vmem>>, vector<256x1152xbf16>
    %c0_1 = arith.constant 0 : index
    %c0_2 = arith.constant 0 : index
    %1 = vector.load %arg2[%c0_1, %c0_2] : memref<640x128xbf16, #tpu.memory_space<vmem>>, vector<640x128xbf16>
    %2 = vector.extract_strided_slice %0 {offsets = [0, 0], sizes = [256, 640], strides = [1, 1]} : vector<256x1152xbf16> to vector<256x640xbf16>
    %cst = arith.constant dense<0.000000e+00> : vector<256x128xf32>
    %3 = tpu.matmul %2, %1, %cst {dimension_numbers = #tpu.dot_dimension_numbers<[1], [0], [0], [1], [0, 0, 1, 1], [], []>} : vector<256x640xbf16>, vector<640x128xbf16>, vector<256x128xf32> -> vector<256x128xf32>
    %4 = vector.extract_strided_slice %0 {offsets = [0, 256], sizes = [256, 640], strides = [1, 1]} : vector<256x1152xbf16> to vector<256x640xbf16>
    %cst_3 = arith.constant dense<0.000000e+00> : vector<256x128xf32>
    %5 = tpu.matmul %4, %1, %cst_3 {dimension_numbers = #tpu.dot_dimension_numbers<[1], [0], [0], [1], [0, 0, 1, 1], [], []>} : vector<256x640xbf16>, vector<640x128xbf16>, vector<256x128xf32> -> vector<256x128xf32>
    %6 = vector.extract_strided_slice %0 {offsets = [0, 512], sizes = [256, 640], strides = [1, 1]} : vector<256x1152xbf16> to vector<256x640xbf16>
    %cst_4 = arith.constant dense<0.000000e+00> : vector<256x128xf32>
    %7 = tpu.matmul %6, %1, %cst_4 {dimension_numbers = #tpu.dot_dimension_numbers<[1], [0], [0], [1], [0, 0, 1, 1], [], []>} : vector<256x640xbf16>, vector<640x128xbf16>, vector<256x128xf32> -> vector<256x128xf32>
    %8 = arith.maximumf %3, %5 : vector<256x128xf32>
    %9 = arith.maximumf %8, %7 : vector<256x128xf32>
    %c0_5 = arith.constant 0 : index
    %c0_6 = arith.constant 0 : index
    %10 = vector.load %arg3[%c0_5, %c0_6] : memref<1x128xf32, #tpu.memory_space<vmem>>, vector<1x128xf32>
    %11 = vector.broadcast %10 : vector<1x128xf32> to vector<256x128xf32>
    %12 = arith.addf %9, %11 : vector<256x128xf32>
    %cst_7 = arith.constant 0.000000e+00 : f32
    %13 = vector.broadcast %cst_7 : f32 to vector<256x128xf32>
    %14 = arith.cmpf ogt, %12, %13 : vector<256x128xf32>
    %cst_8 = arith.constant 0.00999999977 : f32
    %15 = vector.broadcast %cst_8 : f32 to vector<256x128xf32>
    %16 = arith.mulf %15, %12 : vector<256x128xf32>
    %17 = arith.select %14, %12, %16 : vector<256x128xi1>, vector<256x128xf32>
    %18 = arith.truncf %17 : vector<256x128xf32> to vector<256x128xbf16>
    %c0_9 = arith.constant 0 : index
    %c0_10 = arith.constant 0 : index
    %19 = vector.load %arg4[%c0_9, %c0_10] : memref<256x128xbf16, #tpu.memory_space<vmem>>, vector<256x128xbf16>
    tpu.vector_store %arg4[%c0_9, %c0_10], %18 {strides = array<i32>} : memref<256x128xbf16, #tpu.memory_space<vmem>>, vector<256x128xbf16>,
    return
  }
  func.func @transform_0(%arg0: i32) -> (i32, i32) {
    %c0_i32 = arith.constant 0 : i32
    %c0_i32_0 = arith.constant 0 : i32
    return %arg0, %c0_i32 : i32, i32
  }
  func.func @transform_1(%arg0: i32) -> (i32, i32) {
    %c0_i32 = arith.constant 0 : i32
    %c0_i32_0 = arith.constant 0 : i32
    %c0_i32_1 = arith.constant 0 : i32
    return %c0_i32, %c0_i32_0 : i32, i32
  }
  func.func @transform_2(%arg0: i32) -> (i32, i32) {
    %c0_i32 = arith.constant 0 : i32
    %c0_i32_0 = arith.constant 0 : i32
    %c0_i32_1 = arith.constant 0 : i32
    return %c0_i32, %c0_i32_0 : i32, i32
  }
  func.func @transform_3(%arg0: i32) -> (i32, i32) {
    %c0_i32 = arith.constant 0 : i32
    %c0_i32_0 = arith.constant 0 : i32
    return %arg0, %c0_i32 : i32, i32
  }
}

module attributes {stable_mosaic.version = 11 : i64} {
  func.func @_conv_pool_kernel(%arg0: i32, %arg1: memref<256x1152xbf16, #tpu.memory_space<vmem>>, %arg2: memref<640x256xbf16, #tpu.memory_space<vmem>>, %arg3: memref<1x256xf32, #tpu.memory_space<vmem>>, %arg4: memref<256x256xbf16, #tpu.memory_space<vmem>>) attributes {dimension_semantics = [#tpu.dimension_semantics<parallel>], iteration_bounds = array<i64: 1>, scalar_prefetch = 0 : i64, scratch_operands = 0 : i64, tpu.core_type = #tpu.core_type<tc>, window_params = [{transform_indices = @transform_0, window_bounds = array<i64: 256, 1152>}, {pipeline_mode = #tpu.pipeline_mode<synchronous>, transform_indices = @transform_1, window_bounds = array<i64: 640, 256>}, {pipeline_mode = #tpu.pipeline_mode<synchronous>, transform_indices = @transform_2, window_bounds = array<i64: 1, 256>}, {transform_indices = @transform_3, window_bounds = array<i64: 256, 256>}]} {
    %c0 = arith.constant 0 : index
    %c0_0 = arith.constant 0 : index
    %0 = vector.load %arg1[%c0, %c0_0] : memref<256x1152xbf16, #tpu.memory_space<vmem>>, vector<256x1152xbf16>
    %c0_1 = arith.constant 0 : index
    %c0_2 = arith.constant 0 : index
    %1 = vector.load %arg2[%c0_1, %c0_2] : memref<640x256xbf16, #tpu.memory_space<vmem>>, vector<640x256xbf16>
    %2 = vector.extract_strided_slice %0 {offsets = [0, 0], sizes = [256, 640], strides = [1, 1]} : vector<256x1152xbf16> to vector<256x640xbf16>
    %cst = arith.constant dense<0.000000e+00> : vector<256x256xf32>
    %3 = tpu.matmul %2, %1, %cst {dimension_numbers = #tpu.dot_dimension_numbers<[1], [0], [0], [1], [0, 0, 1, 1], [], []>} : vector<256x640xbf16>, vector<640x256xbf16>, vector<256x256xf32> -> vector<256x256xf32>
    %4 = vector.extract_strided_slice %0 {offsets = [0, 256], sizes = [256, 640], strides = [1, 1]} : vector<256x1152xbf16> to vector<256x640xbf16>
    %cst_3 = arith.constant dense<0.000000e+00> : vector<256x256xf32>
    %5 = tpu.matmul %4, %1, %cst_3 {dimension_numbers = #tpu.dot_dimension_numbers<[1], [0], [0], [1], [0, 0, 1, 1], [], []>} : vector<256x640xbf16>, vector<640x256xbf16>, vector<256x256xf32> -> vector<256x256xf32>
    %6 = vector.extract_strided_slice %0 {offsets = [0, 512], sizes = [256, 640], strides = [1, 1]} : vector<256x1152xbf16> to vector<256x640xbf16>
    %cst_4 = arith.constant dense<0.000000e+00> : vector<256x256xf32>
    %7 = tpu.matmul %6, %1, %cst_4 {dimension_numbers = #tpu.dot_dimension_numbers<[1], [0], [0], [1], [0, 0, 1, 1], [], []>} : vector<256x640xbf16>, vector<640x256xbf16>, vector<256x256xf32> -> vector<256x256xf32>
    %8 = arith.maximumf %3, %5 : vector<256x256xf32>
    %9 = arith.maximumf %8, %7 : vector<256x256xf32>
    %c0_5 = arith.constant 0 : index
    %c0_6 = arith.constant 0 : index
    %10 = vector.load %arg3[%c0_5, %c0_6] : memref<1x256xf32, #tpu.memory_space<vmem>>, vector<1x256xf32>
    %11 = vector.broadcast %10 : vector<1x256xf32> to vector<256x256xf32>
    %12 = arith.addf %9, %11 : vector<256x256xf32>
    %cst_7 = arith.constant 0.000000e+00 : f32
    %13 = vector.broadcast %cst_7 : f32 to vector<256x256xf32>
    %14 = arith.cmpf ogt, %12, %13 : vector<256x256xf32>
    %cst_8 = arith.constant 0.00999999977 : f32
    %15 = vector.broadcast %cst_8 : f32 to vector<256x256xf32>
    %16 = arith.mulf %15, %12 : vector<256x256xf32>
    %17 = arith.select %14, %12, %16 : vector<256x256xi1>, vector<256x256xf32>
    %18 = arith.truncf %17 : vector<256x256xf32> to vector<256x256xbf16>
    %c0_9 = arith.constant 0 : index
    %c0_10 = arith.constant 0 : index
    %19 = vector.load %arg4[%c0_9, %c0_10] : memref<256x256xbf16, #tpu.memory_space<vmem>>, vector<256x256xbf16>
    tpu.vector_store %arg4[%c0_9, %c0_10], %18 {strides = array<i32>} : memref<256x256xbf16, #tpu.memory_space<vmem>>, vector<256x256xbf16>,
    return
  }
  func.func @transform_0(%arg0: i32) -> (i32, i32) {
    %c0_i32 = arith.constant 0 : i32
    %c0_i32_0 = arith.constant 0 : i32
    return %arg0, %c0_i32 : i32, i32
  }
  func.func @transform_1(%arg0: i32) -> (i32, i32) {
    %c0_i32 = arith.constant 0 : i32
    %c0_i32_0 = arith.constant 0 : i32
    %c0_i32_1 = arith.constant 0 : i32
    return %c0_i32, %c0_i32_0 : i32, i32
  }
  func.func @transform_2(%arg0: i32) -> (i32, i32) {
    %c0_i32 = arith.constant 0 : i32
    %c0_i32_0 = arith.constant 0 : i32
    %c0_i32_1 = arith.constant 0 : i32
    return %c0_i32, %c0_i32_0 : i32, i32
  }
  func.func @transform_3(%arg0: i32) -> (i32, i32) {
    %c0_i32 = arith.constant 0 : i32
    %c0_i32_0 = arith.constant 0 : i32
    return %arg0, %c0_i32 : i32, i32
  }
}

module attributes {stable_mosaic.version = 11 : i64} {
  func.func @_lstm_head_kernel(%arg0: i32, %arg1: memref<6x16x256xbf16, #tpu.memory_space<vmem>>, %arg2: memref<256x2048xbf16, #tpu.memory_space<vmem>>, %arg3: memref<1x2048xf32, #tpu.memory_space<vmem>>, %arg4: memref<256x1024xbf16, #tpu.memory_space<vmem>>, %arg5: memref<256x1024xbf16, #tpu.memory_space<vmem>>, %arg6: memref<512x256xbf16, #tpu.memory_space<vmem>>, %arg7: memref<1x256xf32, #tpu.memory_space<vmem>>, %arg8: memref<256x128xbf16, #tpu.memory_space<vmem>>, %arg9: memref<1x128xf32, #tpu.memory_space<vmem>>, %arg10: memref<16x128xf32, #tpu.memory_space<vmem>>, %arg11: memref<96x2048xbf16, #tpu.memory_space<vmem>>) attributes {dimension_semantics = [#tpu.dimension_semantics<parallel>], iteration_bounds = array<i64: 1>, scalar_prefetch = 0 : i64, scratch_operands = 1 : i64, tpu.core_type = #tpu.core_type<tc>, window_params = [{transform_indices = @transform_0, window_bounds = array<i64: 6, 16, 256>}, {pipeline_mode = #tpu.pipeline_mode<synchronous>, transform_indices = @transform_1, window_bounds = array<i64: 256, 2048>}, {pipeline_mode = #tpu.pipeline_mode<synchronous>, transform_indices = @transform_2, window_bounds = array<i64: 1, 2048>}, {pipeline_mode = #tpu.pipeline_mode<synchronous>, transform_indices = @transform_3, window_bounds = array<i64: 256, 1024>}, {pipeline_mode = #tpu.pipeline_mode<synchronous>, transform_indices = @transform_4, window_bounds = array<i64: 256, 1024>}, {pipeline_mode = #tpu.pipeline_mode<synchronous>, transform_indices = @transform_5, window_bounds = array<i64: 512, 256>}, {pipeline_mode = #tpu.pipeline_mode<synchronous>, transform_indices = @transform_6, window_bounds = array<i64: 1, 256>}, {pipeline_mode = #tpu.pipeline_mode<synchronous>, transform_indices = @transform_7, window_bounds = array<i64: 256, 128>}, {pipeline_mode = #tpu.pipeline_mode<synchronous>, transform_indices = @transform_8, window_bounds = array<i64: 1, 128>}, {transform_indices = @transform_9, window_bounds = array<i64: 16, 128>}]} {
    %c0 = arith.constant 0 : index
    %c0_0 = arith.constant 0 : index
    %c0_1 = arith.constant 0 : index
    %0 = vector.load %arg1[%c0, %c0_0, %c0_1] : memref<6x16x256xbf16, #tpu.memory_space<vmem>>, vector<6x16x256xbf16>
    %1 = vector.shape_cast %0 : vector<6x16x256xbf16> to vector<96x256xbf16>
    %c0_2 = arith.constant 0 : index
    %c0_3 = arith.constant 0 : index
    %2 = vector.load %arg2[%c0_2, %c0_3] : memref<256x2048xbf16, #tpu.memory_space<vmem>>, vector<256x2048xbf16>
    %cst = arith.constant dense<0.000000e+00> : vector<96x2048xf32>
    %3 = tpu.matmul %1, %2, %cst {dimension_numbers = #tpu.dot_dimension_numbers<[1], [0], [0], [1], [0, 0, 1, 1], [], []>} : vector<96x256xbf16>, vector<256x2048xbf16>, vector<96x2048xf32> -> vector<96x2048xf32>
    %c0_4 = arith.constant 0 : index
    %c0_5 = arith.constant 0 : index
    %4 = vector.load %arg3[%c0_4, %c0_5] : memref<1x2048xf32, #tpu.memory_space<vmem>>, vector<1x2048xf32>
    %5 = vector.broadcast %4 : vector<1x2048xf32> to vector<96x2048xf32>
    %6 = arith.addf %3, %5 : vector<96x2048xf32>
    %7 = arith.truncf %6 : vector<96x2048xf32> to vector<96x2048xbf16>
    %c0_6 = arith.constant 0 : index
    %c0_7 = arith.constant 0 : index
    %8 = vector.load %arg11[%c0_6, %c0_7] : memref<96x2048xbf16, #tpu.memory_space<vmem>>, vector<96x2048xbf16>
    tpu.vector_store %arg11[%c0_6, %c0_7], %7 {strides = array<i32>} : memref<96x2048xbf16, #tpu.memory_space<vmem>>, vector<96x2048xbf16>,
    %cst_8 = arith.constant 0.000000e+00 : f32
    %9 = vector.broadcast %cst_8 : f32 to vector<16x256xf32>
    %c0_i32 = arith.constant 0 : i32
    %c6_i32 = arith.constant 6 : i32
    %10 = arith.addi %c0_i32, %c6_i32 : i32
    %c1_i32 = arith.constant 1 : i32
    %11:4 = scf.for %arg12 = %c0_i32 to %10 step %c1_i32 iter_args(%arg13 = %9, %arg14 = %9, %arg15 = %9, %arg16 = %9) -> (vector<16x256xf32>, vector<16x256xf32>, vector<16x256xf32>, vector<16x256xf32>)  : i32 {
      %31 = arith.truncf %arg13 : vector<16x256xf32> to vector<16x256xbf16>
      %c0_24 = arith.constant 0 : index
      %c0_25 = arith.constant 0 : index
      %32 = vector.load %arg4[%c0_24, %c0_25] : memref<256x1024xbf16, #tpu.memory_space<vmem>>, vector<256x1024xbf16>
      %cst_26 = arith.constant dense<0.000000e+00> : vector<16x1024xf32>
      %33 = tpu.matmul %31, %32, %cst_26 {dimension_numbers = #tpu.dot_dimension_numbers<[1], [0], [0], [1], [0, 0, 1, 1], [], []>} : vector<16x256xbf16>, vector<256x1024xbf16>, vector<16x1024xf32> -> vector<16x1024xf32>
      %34 = arith.truncf %arg15 : vector<16x256xf32> to vector<16x256xbf16>
      %c0_27 = arith.constant 0 : index
      %c0_28 = arith.constant 0 : index
      %35 = vector.load %arg5[%c0_27, %c0_28] : memref<256x1024xbf16, #tpu.memory_space<vmem>>, vector<256x1024xbf16>
      %cst_29 = arith.constant dense<0.000000e+00> : vector<16x1024xf32>
      %36 = tpu.matmul %34, %35, %cst_29 {dimension_numbers = #tpu.dot_dimension_numbers<[1], [0], [0], [1], [0, 0, 1, 1], [], []>} : vector<16x256xbf16>, vector<256x1024xbf16>, vector<16x1024xf32> -> vector<16x1024xf32>
      %c16_i32 = arith.constant 16 : i32
      %37 = arith.muli %arg12, %c16_i32 : i32
      %38 = tpu.assume_multiple %37, 16 : i32
      %c5_i32 = arith.constant 5 : i32
      %39 = arith.subi %c5_i32, %arg12 : i32
      %c16_i32_30 = arith.constant 16 : i32
      %40 = arith.muli %39, %c16_i32_30 : i32
      %41 = tpu.assume_multiple %40, 16 : i32
      %42 = arith.index_cast %38 : i32 to index
      %c0_31 = arith.constant 0 : index
      %43 = vector.load %arg11[%42, %c0_31] : memref<96x2048xbf16, #tpu.memory_space<vmem>>, vector<16x1024xbf16>
      %44 = arith.extf %43 : vector<16x1024xbf16> to vector<16x1024xf32>
      %45 = arith.addf %44, %33 : vector<16x1024xf32>
      %46 = arith.index_cast %41 : i32 to index
      %c1024 = arith.constant 1024 : index
      %47 = vector.load %arg11[%46, %c1024] : memref<96x2048xbf16, #tpu.memory_space<vmem>>, vector<16x1024xbf16>
      %48 = arith.extf %47 : vector<16x1024xbf16> to vector<16x1024xf32>
      %49 = arith.addf %48, %36 : vector<16x1024xf32>
      %50 = vector.extract_strided_slice %45 {offsets = [0, 0], sizes = [16, 256], strides = [1, 1]} : vector<16x1024xf32> to vector<16x256xf32>
      %51 = arith.negf %50 : vector<16x256xf32>
      %52 = math.exp %51 : vector<16x256xf32>
      %cst_32 = arith.constant 1.000000e+00 : f32
      %53 = vector.broadcast %cst_32 : f32 to vector<16x256xf32>
      %54 = arith.addf %53, %52 : vector<16x256xf32>
      %55 = arith.divf %53, %54 : vector<16x256xf32>
      %56 = vector.extract_strided_slice %45 {offsets = [0, 256], sizes = [16, 256], strides = [1, 1]} : vector<16x1024xf32> to vector<16x256xf32>
      %57 = arith.negf %56 : vector<16x256xf32>
      %58 = math.exp %57 : vector<16x256xf32>
      %cst_33 = arith.constant 1.000000e+00 : f32
      %59 = vector.broadcast %cst_33 : f32 to vector<16x256xf32>
      %60 = arith.addf %59, %58 : vector<16x256xf32>
      %61 = arith.divf %59, %60 : vector<16x256xf32>
      %62 = vector.extract_strided_slice %45 {offsets = [0, 512], sizes = [16, 256], strides = [1, 1]} : vector<16x1024xf32> to vector<16x256xf32>
      %63 = math.tanh %62 : vector<16x256xf32>
      %64 = vector.extract_strided_slice %45 {offsets = [0, 768], sizes = [16, 256], strides = [1, 1]} : vector<16x1024xf32> to vector<16x256xf32>
      %65 = arith.negf %64 : vector<16x256xf32>
      %66 = math.exp %65 : vector<16x256xf32>
      %cst_34 = arith.constant 1.000000e+00 : f32
      %67 = vector.broadcast %cst_34 : f32 to vector<16x256xf32>
      %68 = arith.addf %67, %66 : vector<16x256xf32>
      %69 = arith.divf %67, %68 : vector<16x256xf32>
      %70 = arith.mulf %61, %arg14 : vector<16x256xf32>
      %71 = arith.mulf %55, %63 : vector<16x256xf32>
      %72 = arith.addf %70, %71 : vector<16x256xf32>
      %73 = math.tanh %72 : vector<16x256xf32>
      %74 = arith.mulf %69, %73 : vector<16x256xf32>
      %75 = vector.extract_strided_slice %49 {offsets = [0, 0], sizes = [16, 256], strides = [1, 1]} : vector<16x1024xf32> to vector<16x256xf32>
      %76 = arith.negf %75 : vector<16x256xf32>
      %77 = math.exp %76 : vector<16x256xf32>
      %cst_35 = arith.constant 1.000000e+00 : f32
      %78 = vector.broadcast %cst_35 : f32 to vector<16x256xf32>
      %79 = arith.addf %78, %77 : vector<16x256xf32>
      %80 = arith.divf %78, %79 : vector<16x256xf32>
      %81 = vector.extract_strided_slice %49 {offsets = [0, 256], sizes = [16, 256], strides = [1, 1]} : vector<16x1024xf32> to vector<16x256xf32>
      %82 = arith.negf %81 : vector<16x256xf32>
      %83 = math.exp %82 : vector<16x256xf32>
      %cst_36 = arith.constant 1.000000e+00 : f32
      %84 = vector.broadcast %cst_36 : f32 to vector<16x256xf32>
      %85 = arith.addf %84, %83 : vector<16x256xf32>
      %86 = arith.divf %84, %85 : vector<16x256xf32>
      %87 = vector.extract_strided_slice %49 {offsets = [0, 512], sizes = [16, 256], strides = [1, 1]} : vector<16x1024xf32> to vector<16x256xf32>
      %88 = math.tanh %87 : vector<16x256xf32>
      %89 = vector.extract_strided_slice %49 {offsets = [0, 768], sizes = [16, 256], strides = [1, 1]} : vector<16x1024xf32> to vector<16x256xf32>
      %90 = arith.negf %89 : vector<16x256xf32>
      %91 = math.exp %90 : vector<16x256xf32>
      %cst_37 = arith.constant 1.000000e+00 : f32
      %92 = vector.broadcast %cst_37 : f32 to vector<16x256xf32>
      %93 = arith.addf %92, %91 : vector<16x256xf32>
      %94 = arith.divf %92, %93 : vector<16x256xf32>
      %95 = arith.mulf %86, %arg16 : vector<16x256xf32>
      %96 = arith.mulf %80, %88 : vector<16x256xf32>
      %97 = arith.addf %95, %96 : vector<16x256xf32>
      %98 = math.tanh %97 : vector<16x256xf32>
      %99 = arith.mulf %94, %98 : vector<16x256xf32>
      scf.yield %74, %72, %99, %97 : vector<16x256xf32>, vector<16x256xf32>, vector<16x256xf32>, vector<16x256xf32>
    }
    %c6_i32_9 = arith.constant 6 : i32
    %12 = tpu.concatenate %11#0, %11#2 in 1 : vector<16x256xf32>, vector<16x256xf32> -> vector<16x512xf32>
    %13 = arith.truncf %12 : vector<16x512xf32> to vector<16x512xbf16>
    %c0_10 = arith.constant 0 : index
    %c0_11 = arith.constant 0 : index
    %14 = vector.load %arg6[%c0_10, %c0_11] : memref<512x256xbf16, #tpu.memory_space<vmem>>, vector<512x256xbf16>
    %cst_12 = arith.constant dense<0.000000e+00> : vector<16x256xf32>
    %15 = tpu.matmul %13, %14, %cst_12 {dimension_numbers = #tpu.dot_dimension_numbers<[1], [0], [0], [1], [0, 0, 1, 1], [], []>} : vector<16x512xbf16>, vector<512x256xbf16>, vector<16x256xf32> -> vector<16x256xf32>
    %c0_13 = arith.constant 0 : index
    %c0_14 = arith.constant 0 : index
    %16 = vector.load %arg7[%c0_13, %c0_14] : memref<1x256xf32, #tpu.memory_space<vmem>>, vector<1x256xf32>
    %17 = vector.broadcast %16 : vector<1x256xf32> to vector<16x256xf32>
    %18 = arith.addf %15, %17 : vector<16x256xf32>
    %cst_15 = arith.constant 0.000000e+00 : f32
    %19 = vector.broadcast %cst_15 : f32 to vector<16x256xf32>
    %20 = arith.cmpf ogt, %18, %19 : vector<16x256xf32>
    %cst_16 = arith.constant 0.00999999977 : f32
    %21 = vector.broadcast %cst_16 : f32 to vector<16x256xf32>
    %22 = arith.mulf %21, %18 : vector<16x256xf32>
    %23 = arith.select %20, %18, %22 : vector<16x256xi1>, vector<16x256xf32>
    %24 = arith.truncf %23 : vector<16x256xf32> to vector<16x256xbf16>
    %c0_17 = arith.constant 0 : index
    %c0_18 = arith.constant 0 : index
    %25 = vector.load %arg8[%c0_17, %c0_18] : memref<256x128xbf16, #tpu.memory_space<vmem>>, vector<256x128xbf16>
    %cst_19 = arith.constant dense<0.000000e+00> : vector<16x128xf32>
    %26 = tpu.matmul %24, %25, %cst_19 {dimension_numbers = #tpu.dot_dimension_numbers<[1], [0], [0], [1], [0, 0, 1, 1], [], []>} : vector<16x256xbf16>, vector<256x128xbf16>, vector<16x128xf32> -> vector<16x128xf32>
    %c0_20 = arith.constant 0 : index
    %c0_21 = arith.constant 0 : index
    %27 = vector.load %arg9[%c0_20, %c0_21] : memref<1x128xf32, #tpu.memory_space<vmem>>, vector<1x128xf32>
    %28 = vector.broadcast %27 : vector<1x128xf32> to vector<16x128xf32>
    %29 = arith.addf %26, %28 : vector<16x128xf32>
    %c0_22 = arith.constant 0 : index
    %c0_23 = arith.constant 0 : index
    %30 = vector.load %arg10[%c0_22, %c0_23] : memref<16x128xf32, #tpu.memory_space<vmem>>, vector<16x128xf32>
    tpu.vector_store %arg10[%c0_22, %c0_23], %29 {strides = array<i32>} : memref<16x128xf32, #tpu.memory_space<vmem>>, vector<16x128xf32>,
    return
  }
  func.func @transform_0(%arg0: i32) -> (i32, i32, i32) {
    %c0_i32 = arith.constant 0 : i32
    %c0_i32_0 = arith.constant 0 : i32
    %c0_i32_1 = arith.constant 0 : i32
    return %c0_i32, %arg0, %c0_i32_0 : i32, i32, i32
  }
  func.func @transform_1(%arg0: i32) -> (i32, i32) {
    %c0_i32 = arith.constant 0 : i32
    %c0_i32_0 = arith.constant 0 : i32
    %c0_i32_1 = arith.constant 0 : i32
    return %c0_i32, %c0_i32_0 : i32, i32
  }
  func.func @transform_2(%arg0: i32) -> (i32, i32) {
    %c0_i32 = arith.constant 0 : i32
    %c0_i32_0 = arith.constant 0 : i32
    %c0_i32_1 = arith.constant 0 : i32
    return %c0_i32, %c0_i32_0 : i32, i32
  }
  func.func @transform_3(%arg0: i32) -> (i32, i32) {
    %c0_i32 = arith.constant 0 : i32
    %c0_i32_0 = arith.constant 0 : i32
    %c0_i32_1 = arith.constant 0 : i32
    return %c0_i32, %c0_i32_0 : i32, i32
  }
  func.func @transform_4(%arg0: i32) -> (i32, i32) {
    %c0_i32 = arith.constant 0 : i32
    %c0_i32_0 = arith.constant 0 : i32
    %c0_i32_1 = arith.constant 0 : i32
    return %c0_i32, %c0_i32_0 : i32, i32
  }
  func.func @transform_5(%arg0: i32) -> (i32, i32) {
    %c0_i32 = arith.constant 0 : i32
    %c0_i32_0 = arith.constant 0 : i32
    %c0_i32_1 = arith.constant 0 : i32
    return %c0_i32, %c0_i32_0 : i32, i32
  }
  func.func @transform_6(%arg0: i32) -> (i32, i32) {
    %c0_i32 = arith.constant 0 : i32
    %c0_i32_0 = arith.constant 0 : i32
    %c0_i32_1 = arith.constant 0 : i32
    return %c0_i32, %c0_i32_0 : i32, i32
  }
  func.func @transform_7(%arg0: i32) -> (i32, i32) {
    %c0_i32 = arith.constant 0 : i32
    %c0_i32_0 = arith.constant 0 : i32
    %c0_i32_1 = arith.constant 0 : i32
    return %c0_i32, %c0_i32_0 : i32, i32
  }
  func.func @transform_8(%arg0: i32) -> (i32, i32) {
    %c0_i32 = arith.constant 0 : i32
    %c0_i32_0 = arith.constant 0 : i32
    %c0_i32_1 = arith.constant 0 : i32
    return %c0_i32, %c0_i32_0 : i32, i32
  }
  func.func @transform_9(%arg0: i32) -> (i32, i32) {
    %c0_i32 = arith.constant 0 : i32
    %c0_i32_0 = arith.constant 0 : i32
    return %arg0, %c0_i32 : i32, i32
  }
}

</mosaic_0001>

<llo_original>
// kernel: forward.3
$region0: #{forward.3}
  #allocation0 [shape = 'u32[]', space=smem, size = 0x4, offset = 0x4, fixed_abs, tag = 'smem constant byte address 0x4 - core index']
  #allocation1 [shape = 'u32[144,128]{1,0:T(1,128)}', space=vmem, size = 0x12000, scoped, tag = 'internal scratch']
  %s0 = inlined_call_operand.vmem [shape: bf16[256,1152], index: 0, kind: input, shape index: {}]
  %s1 = inlined_call_operand.vmem [shape: bf16[640,128], index: 1, kind: input, shape index: {}]
  %s2 = inlined_call_operand.vmem [shape: f32[1,128], index: 2, kind: input, shape index: {}]
  %s3 = inlined_call_operand.vmem [shape: bf16[256,128], index: 3, kind: output, shape index: {}]
  %s4 = sld [smem:[#allocation0]]
  $region22: #{forward.3} parent=0
    _
  %s6 = ssub.s32 1, %s4
  %s7 = scalar_select 0, %s6, %s4
  // Predicated region
  $region2: #{forward.3} parent=0 // pred_check
    _
  $region3: #{forward.3} parent=0 // pred_check_branch
    %9 = sbr.rel (0) target = $region5
  $region4: #{forward.3} parent=0 // pred_region
    _
  $region5: #{forward.3} parent=0 // pred_fallthru
    _
  // Predicated region
  $region6: #{forward.3} parent=0 // pred_check
    _
  $region7: #{forward.3} parent=0 // pred_check_branch
    %11 = sbr.rel (0) target = $region9
  $region8: #{forward.3} parent=0 // pred_region
    _
  $region9: #{forward.3} parent=0 // pred_fallthru
    _
  // Predicated region
  $region10: #{forward.3} parent=0 // pred_check
    _
  $region11: #{forward.3} parent=0 // pred_check_branch
    %13 = sbr.rel (0) target = $region13
  $region12: #{forward.3} parent=0 // pred_region
    _
  $region13: #{forward.3} parent=0 // pred_fallthru
    _
  %v15 = vld [vmem:[%s0] sm:$0xff]
  %v16 = vld [vmem:[%s0 + $0x8] sm:$0xff]
  %v17 = vld [vmem:[%s0 + $0x10] sm:$0xff]
  %v18 = vld [vmem:[%s0 + $0x18] sm:$0xff]
  %v19 = vld [vmem:[%s0 + $0x20] sm:$0xf]
  %v20 = vld [vmem:[%s0 + $0x24] sm:$0xff]
  %v21 = vld [vmem:[%s0 + $0x2c] sm:$0xff]
  %v22 = vld [vmem:[%s0 + $0x34] sm:$0xff]
  %v23 = vld [vmem:[%s0 + $0x3c] sm:$0xff]
  %v24 = vld [vmem:[%s0 + $0x44] sm:$0xf]
  %v25 = vld [vmem:[%s0 + $0x48] sm:$0xff]
  %v26 = vld [vmem:[%s0 + $0x50] sm:$0xff]
  %v27 = vld [vmem:[%s0 + $0x58] sm:$0xff]
  %v28 = vld [vmem:[%s0 + $0x60] sm:$0xff]
  %v29 = vld [vmem:[%s0 + $0x68] sm:$0xf]
  %v30 = vld [vmem:[%s0 + $0x6c] sm:$0xff]
  %v31 = vld [vmem:[%s0 + $0x74] sm:$0xff]
  %v32 = vld [vmem:[%s0 + $0x7c] sm:$0xff]
  %v33 = vld [vmem:[%s0 + $0x84] sm:$0xff]
  %v34 = vld [vmem:[%s0 + $0x8c] sm:$0xf]
  %v35 = vld [vmem:[%s0 + $0x90] sm:$0xff]
  %v36 = vld [vmem:[%s0 + $0x98] sm:$0xff]
  %v37 = vld [vmem:[%s0 + $0xa0] sm:$0xff]
  %v38 = vld [vmem:[%s0 + $0xa8] sm:$0xff]
  %v39 = vld [vmem:[%s0 + $0xb0] sm:$0xf]
  %v40 = vld [vmem:[%s0 + $0xb4] sm:$0xff]
  %v41 = vld [vmem:[%s0 + $0xbc] sm:$0xff]
  %v42 = vld [vmem:[%s0 + $0xc4] sm:$0xff]
  %v43 = vld [vmem:[%s0 + $0xcc] sm:$0xff]
  %v44 = vld [vmem:[%s0 + $0xd4] sm:$0xf]
  %v45 = vld [vmem:[%s0 + $0xd8] sm:$0xff]
  %v46 = vld [vmem:[%s0 + $0xe0] sm:$0xff]
  %v47 = vld [vmem:[%s0 + $0xe8] sm:$0xff]
  %v48 = vld [vmem:[%s0 + $0xf0] sm:$0xff]
  %v49 = vld [vmem:[%s0 + $0xf8] sm:$0xf]
  %v50 = vld [vmem:[%s0 + $0xfc] sm:$0xff]
  %v51 = vld [vmem:[%s0 + $0x104] sm:$0xff]
  %v52 = vld [vmem:[%s0 + $0x10c] sm:$0xff]
  %v53 = vld [vmem:[%s0 + $0x114] sm:$0xff]
  %v54 = vld [vmem:[%s0 + $0x11c] sm:$0xf]
  %v55 = vld [vmem:[%s0 + $0x120] sm:$0xff]
  %v56 = vld [vmem:[%s0 + $0x128] sm:$0xff]
  %v57 = vld [vmem:[%s0 + $0x130] sm:$0xff]
  %v58 = vld [vmem:[%s0 + $0x138] sm:$0xff]
  %v59 = vld [vmem:[%s0 + $0x140] sm:$0xf]
  %v60 = vld [vmem:[%s0 + $0x144] sm:$0xff]
  %v61 = vld [vmem:[%s0 + $0x14c] sm:$0xff]
  %v62 = vld [vmem:[%s0 + $0x154] sm:$0xff]
  %v63 = vld [vmem:[%s0 + $0x15c] sm:$0xff]
  %v64 = vld [vmem:[%s0 + $0x164] sm:$0xf]
  %v65 = vld [vmem:[%s0 + $0x168] sm:$0xff]
  %v66 = vld [vmem:[%s0 + $0x170] sm:$0xff]
  %v67 = vld [vmem:[%s0 + $0x178] sm:$0xff]
  %v68 = vld [vmem:[%s0 + $0x180] sm:$0xff]
  %v69 = vld [vmem:[%s0 + $0x188] sm:$0xf]
  %v70 = vld [vmem:[%s0 + $0x18c] sm:$0xff]
  %v71 = vld [vmem:[%s0 + $0x194] sm:$0xff]
  %v72 = vld [vmem:[%s0 + $0x19c] sm:$0xff]
  %v73 = vld [vmem:[%s0 + $0x1a4] sm:$0xff]
  %v74 = vld [vmem:[%s0 + $0x1ac] sm:$0xf]
  %v75 = vld [vmem:[%s0 + $0x1b0] sm:$0xff]
  %v76 = vld [vmem:[%s0 + $0x1b8] sm:$0xff]
  %v77 = vld [vmem:[%s0 + $0x1c0] sm:$0xff]
  %v78 = vld [vmem:[%s0 + $0x1c8] sm:$0xff]
  %v79 = vld [vmem:[%s0 + $0x1d0] sm:$0xf]
  %v80 = vld [vmem:[%s0 + $0x1d4] sm:$0xff]
  %v81 = vld [vmem:[%s0 + $0x1dc] sm:$0xff]
  %v82 = vld [vmem:[%s0 + $0x1e4] sm:$0xff]
  %v83 = vld [vmem:[%s0 + $0x1ec] sm:$0xff]
  %v84 = vld [vmem:[%s0 + $0x1f4] sm:$0xf]
  %v85 = vld [vmem:[%s0 + $0x1f8] sm:$0xff]
  %v86 = vld [vmem:[%s0 + $0x200] sm:$0xff]
  %v87 = vld [vmem:[%s0 + $0x208] sm:$0xff]
  %v88 = vld [vmem:[%s0 + $0x210] sm:$0xff]
  %v89 = vld [vmem:[%s0 + $0x218] sm:$0xf]
  %v90 = vld [vmem:[%s0 + $0x21c] sm:$0xff]
  %v91 = vld [vmem:[%s0 + $0x224] sm:$0xff]
  %v92 = vld [vmem:[%s0 + $0x22c] sm:$0xff]
  %v93 = vld [vmem:[%s0 + $0x234] sm:$0xff]
  %v94 = vld [vmem:[%s0 + $0x23c] sm:$0xf]
  %v95 = vld [vmem:[%s0 + $0x240] sm:$0xff]
  %v96 = vld [vmem:[%s0 + $0x248] sm:$0xff]
  %v97 = vld [vmem:[%s0 + $0x250] sm:$0xff]
  %v98 = vld [vmem:[%s0 + $0x258] sm:$0xff]
  %v99 = vld [vmem:[%s0 + $0x260] sm:$0xf]
  %v100 = vld [vmem:[%s0 + $0x264] sm:$0xff]
  %v101 = vld [vmem:[%s0 + $0x26c] sm:$0xff]
  %v102 = vld [vmem:[%s0 + $0x274] sm:$0xff]
  %v103 = vld [vmem:[%s0 + $0x27c] sm:$0xff]
  %v104 = vld [vmem:[%s0 + $0x284] sm:$0xf]
  %v105 = vld [vmem:[%s0 + $0x288] sm:$0xff]
  %v106 = vld [vmem:[%s0 + $0x290] sm:$0xff]
  %v107 = vld [vmem:[%s0 + $0x298] sm:$0xff]
  %v108 = vld [vmem:[%s0 + $0x2a0] sm:$0xff]
  %v109 = vld [vmem:[%s0 + $0x2a8] sm:$0xf]
  %v110 = vld [vmem:[%s0 + $0x2ac] sm:$0xff]
  %v111 = vld [vmem:[%s0 + $0x2b4] sm:$0xff]
  %v112 = vld [vmem:[%s0 + $0x2bc] sm:$0xff]
  %v113 = vld [vmem:[%s0 + $0x2c4] sm:$0xff]
  %v114 = vld [vmem:[%s0 + $0x2cc] sm:$0xf]
  %v115 = vld [vmem:[%s0 + $0x2d0] sm:$0xff]
  %v116 = vld [vmem:[%s0 + $0x2d8] sm:$0xff]
  %v117 = vld [vmem:[%s0 + $0x2e0] sm:$0xff]
  %v118 = vld [vmem:[%s0 + $0x2e8] sm:$0xff]
  %v119 = vld [vmem:[%s0 + $0x2f0] sm:$0xf]
  %v120 = vld [vmem:[%s0 + $0x2f4] sm:$0xff]
  %v121 = vld [vmem:[%s0 + $0x2fc] sm:$0xff]
  %v122 = vld [vmem:[%s0 + $0x304] sm:$0xff]
  %v123 = vld [vmem:[%s0 + $0x30c] sm:$0xff]
  %v124 = vld [vmem:[%s0 + $0x314] sm:$0xf]
  %v125 = vld [vmem:[%s0 + $0x318] sm:$0xff]
  %v126 = vld [vmem:[%s0 + $0x320] sm:$0xff]
  %v127 = vld [vmem:[%s0 + $0x328] sm:$0xff]
  %v128 = vld [vmem:[%s0 + $0x330] sm:$0xff]
  %v129 = vld [vmem:[%s0 + $0x338] sm:$0xf]
  %v130 = vld [vmem:[%s0 + $0x33c] sm:$0xff]
  %v131 = vld [vmem:[%s0 + $0x344] sm:$0xff]
  %v132 = vld [vmem:[%s0 + $0x34c] sm:$0xff]
  %v133 = vld [vmem:[%s0 + $0x354] sm:$0xff]
  %v134 = vld [vmem:[%s0 + $0x35c] sm:$0xf]
  %v135 = vld [vmem:[%s0 + $0x360] sm:$0xff]
  %v136 = vld [vmem:[%s0 + $0x368] sm:$0xff]
  %v137 = vld [vmem:[%s0 + $0x370] sm:$0xff]
  %v138 = vld [vmem:[%s0 + $0x378] sm:$0xff]
  %v139 = vld [vmem:[%s0 + $0x380] sm:$0xf]
  %v140 = vld [vmem:[%s0 + $0x384] sm:$0xff]
  %v141 = vld [vmem:[%s0 + $0x38c] sm:$0xff]
  %v142 = vld [vmem:[%s0 + $0x394] sm:$0xff]
  %v143 = vld [vmem:[%s0 + $0x39c] sm:$0xff]
  %v144 = vld [vmem:[%s0 + $0x3a4] sm:$0xf]
  %v145 = vld [vmem:[%s0 + $0x3a8] sm:$0xff]
  %v146 = vld [vmem:[%s0 + $0x3b0] sm:$0xff]
  %v147 = vld [vmem:[%s0 + $0x3b8] sm:$0xff]
  %v148 = vld [vmem:[%s0 + $0x3c0] sm:$0xff]
  %v149 = vld [vmem:[%s0 + $0x3c8] sm:$0xf]
  %v150 = vld [vmem:[%s0 + $0x3cc] sm:$0xff]
  %v151 = vld [vmem:[%s0 + $0x3d4] sm:$0xff]
  %v152 = vld [vmem:[%s0 + $0x3dc] sm:$0xff]
  %v153 = vld [vmem:[%s0 + $0x3e4] sm:$0xff]
  %v154 = vld [vmem:[%s0 + $0x3ec] sm:$0xf]
  %v155 = vld [vmem:[%s0 + $0x3f0] sm:$0xff]
  %v156 = vld [vmem:[%s0 + $0x3f8] sm:$0xff]
  %v157 = vld [vmem:[%s0 + $0x400] sm:$0xff]
  %v158 = vld [vmem:[%s0 + $0x408] sm:$0xff]
  %v159 = vld [vmem:[%s0 + $0x410] sm:$0xf]
  %v160 = vld [vmem:[%s0 + $0x414] sm:$0xff]
  %v161 = vld [vmem:[%s0 + $0x41c] sm:$0xff]
  %v162 = vld [vmem:[%s0 + $0x424] sm:$0xff]
  %v163 = vld [vmem:[%s0 + $0x42c] sm:$0xff]
  %v164 = vld [vmem:[%s0 + $0x434] sm:$0xf]
  %v165 = vld [vmem:[%s0 + $0x438] sm:$0xff]
  %v166 = vld [vmem:[%s0 + $0x440] sm:$0xff]
  %v167 = vld [vmem:[%s0 + $0x448] sm:$0xff]
  %v168 = vld [vmem:[%s0 + $0x450] sm:$0xff]
  %v169 = vld [vmem:[%s0 + $0x458] sm:$0xf]
  %v170 = vld [vmem:[%s0 + $0x45c] sm:$0xff]
  %v171 = vld [vmem:[%s0 + $0x464] sm:$0xff]
  %v172 = vld [vmem:[%s0 + $0x46c] sm:$0xff]
  %v173 = vld [vmem:[%s0 + $0x474] sm:$0xff]
  %v174 = vld [vmem:[%s0 + $0x47c] sm:$0xf]
  %v175 = vld [vmem:[%s1] sm:$0xf]
  %v176 = vld [vmem:[%s1 + $0x4] sm:$0xf]
  %v177 = vld [vmem:[%s1 + $0x8] sm:$0xf]
  %v178 = vld [vmem:[%s1 + $0xc] sm:$0xf]
  %v179 = vld [vmem:[%s1 + $0x10] sm:$0xf]
  %v180 = vld [vmem:[%s1 + $0x14] sm:$0xf]
  %v181 = vld [vmem:[%s1 + $0x18] sm:$0xf]
  %v182 = vld [vmem:[%s1 + $0x1c] sm:$0xf]
  %v183 = vld [vmem:[%s1 + $0x20] sm:$0xf]
  %v184 = vld [vmem:[%s1 + $0x24] sm:$0xf]
  %v185 = vld [vmem:[%s1 + $0x28] sm:$0xf]
  %v186 = vld [vmem:[%s1 + $0x2c] sm:$0xf]
  %v187 = vld [vmem:[%s1 + $0x30] sm:$0xf]
  %v188 = vld [vmem:[%s1 + $0x34] sm:$0xf]
  %v189 = vld [vmem:[%s1 + $0x38] sm:$0xf]
  %v190 = vld [vmem:[%s1 + $0x3c] sm:$0xf]
  %v191 = vld [vmem:[%s1 + $0x40] sm:$0xf]
  %v192 = vld [vmem:[%s1 + $0x44] sm:$0xf]
  %v193 = vld [vmem:[%s1 + $0x48] sm:$0xf]
  %v194 = vld [vmem:[%s1 + $0x4c] sm:$0xf]
  %v195 = vld [vmem:[%s1 + $0x50] sm:$0xf]
  %v196 = vld [vmem:[%s1 + $0x54] sm:$0xf]
  %v197 = vld [vmem:[%s1 + $0x58] sm:$0xf]
  %v198 = vld [vmem:[%s1 + $0x5c] sm:$0xf]
  %v199 = vld [vmem:[%s1 + $0x60] sm:$0xf]
  %v200 = vld [vmem:[%s1 + $0x64] sm:$0xf]
  %v201 = vld [vmem:[%s1 + $0x68] sm:$0xf]
  %v202 = vld [vmem:[%s1 + $0x6c] sm:$0xf]
  %v203 = vld [vmem:[%s1 + $0x70] sm:$0xf]
  %v204 = vld [vmem:[%s1 + $0x74] sm:$0xf]
  %v205 = vld [vmem:[%s1 + $0x78] sm:$0xf]
  %v206 = vld [vmem:[%s1 + $0x7c] sm:$0xf]
  %v207 = vld [vmem:[%s1 + $0x80] sm:$0xf]
  %v208 = vld [vmem:[%s1 + $0x84] sm:$0xf]
  %v209 = vld [vmem:[%s1 + $0x88] sm:$0xf]
  %v210 = vld [vmem:[%s1 + $0x8c] sm:$0xf]
  %v211 = vld [vmem:[%s1 + $0x90] sm:$0xf]
  %v212 = vld [vmem:[%s1 + $0x94] sm:$0xf]
  %v213 = vld [vmem:[%s1 + $0x98] sm:$0xf]
  %v214 = vld [vmem:[%s1 + $0x9c] sm:$0xf]
  %v215 = vld [vmem:[%s1 + $0xa0] sm:$0xf]
  %v216 = vld [vmem:[%s1 + $0xa4] sm:$0xf]
  %v217 = vld [vmem:[%s1 + $0xa8] sm:$0xf]
  %v218 = vld [vmem:[%s1 + $0xac] sm:$0xf]
  %v219 = vld [vmem:[%s1 + $0xb0] sm:$0xf]
  %v220 = vld [vmem:[%s1 + $0xb4] sm:$0xf]
  %v221 = vld [vmem:[%s1 + $0xb8] sm:$0xf]
  %v222 = vld [vmem:[%s1 + $0xbc] sm:$0xf]
  %v223 = vld [vmem:[%s1 + $0xc0] sm:$0xf]
  %v224 = vld [vmem:[%s1 + $0xc4] sm:$0xf]
  %v225 = vld [vmem:[%s1 + $0xc8] sm:$0xf]
  %v226 = vld [vmem:[%s1 + $0xcc] sm:$0xf]
  %v227 = vld [vmem:[%s1 + $0xd0] sm:$0xf]
  %v228 = vld [vmem:[%s1 + $0xd4] sm:$0xf]
  %v229 = vld [vmem:[%s1 + $0xd8] sm:$0xf]
  %v230 = vld [vmem:[%s1 + $0xdc] sm:$0xf]
  %v231 = vld [vmem:[%s1 + $0xe0] sm:$0xf]
  %v232 = vld [vmem:[%s1 + $0xe4] sm:$0xf]
  %v233 = vld [vmem:[%s1 + $0xe8] sm:$0xf]
  %v234 = vld [vmem:[%s1 + $0xec] sm:$0xf]
  %v235 = vld [vmem:[%s1 + $0xf0] sm:$0xf]
  %v236 = vld [vmem:[%s1 + $0xf4] sm:$0xf]
  %v237 = vld [vmem:[%s1 + $0xf8] sm:$0xf]
  %v238 = vld [vmem:[%s1 + $0xfc] sm:$0xf]
  %v239 = vld [vmem:[%s1 + $0x100] sm:$0xf]
  %v240 = vld [vmem:[%s1 + $0x104] sm:$0xf]
  %v241 = vld [vmem:[%s1 + $0x108] sm:$0xf]
  %v242 = vld [vmem:[%s1 + $0x10c] sm:$0xf]
  %v243 = vld [vmem:[%s1 + $0x110] sm:$0xf]
  %v244 = vld [vmem:[%s1 + $0x114] sm:$0xf]
  %v245 = vld [vmem:[%s1 + $0x118] sm:$0xf]
  %v246 = vld [vmem:[%s1 + $0x11c] sm:$0xf]
  %v247 = vld [vmem:[%s1 + $0x120] sm:$0xf]
  %v248 = vld [vmem:[%s1 + $0x124] sm:$0xf]
  %v249 = vld [vmem:[%s1 + $0x128] sm:$0xf]
  %v250 = vld [vmem:[%s1 + $0x12c] sm:$0xf]
  %v251 = vld [vmem:[%s1 + $0x130] sm:$0xf]
  %v252 = vld [vmem:[%s1 + $0x134] sm:$0xf]
  %v253 = vld [vmem:[%s1 + $0x138] sm:$0xf]
  %v254 = vld [vmem:[%s1 + $0x13c] sm:$0xf]
  %v351 = vunpack.c.l.b16 %v15
  %v352 = vunpack.c.h.b16 %v15
  %v353 = vunpack.c.l.b16 %v16
  %v354 = vunpack.c.h.b16 %v16
  %v355 = vunpack.c.l.b16 %v17
  %v356 = vunpack.c.l.b16 %v20
  %v357 = vunpack.c.h.b16 %v20
  %v358 = vunpack.c.l.b16 %v21
  %v359 = vunpack.c.h.b16 %v21
  %v360 = vunpack.c.l.b16 %v22
  %v361 = vunpack.c.l.b16 %v25
  %v362 = vunpack.c.h.b16 %v25
  %v363 = vunpack.c.l.b16 %v26
  %v364 = vunpack.c.h.b16 %v26
  %v365 = vunpack.c.l.b16 %v27
  %v366 = vunpack.c.l.b16 %v30
  %v367 = vunpack.c.h.b16 %v30
  %v368 = vunpack.c.l.b16 %v31
  %v369 = vunpack.c.h.b16 %v31
  %v370 = vunpack.c.l.b16 %v32
  %v371 = vunpack.c.l.b16 %v35
  %v372 = vunpack.c.h.b16 %v35
  %v373 = vunpack.c.l.b16 %v36
  %v374 = vunpack.c.h.b16 %v36
  %v375 = vunpack.c.l.b16 %v37
  %v376 = vunpack.c.l.b16 %v40
  %v377 = vunpack.c.h.b16 %v40
  %v378 = vunpack.c.l.b16 %v41
  %v379 = vunpack.c.h.b16 %v41
  %v380 = vunpack.c.l.b16 %v42
  %v381 = vunpack.c.l.b16 %v45
  %v382 = vunpack.c.h.b16 %v45
  %v383 = vunpack.c.l.b16 %v46
  %v384 = vunpack.c.h.b16 %v46
  %v385 = vunpack.c.l.b16 %v47
  %v386 = vunpack.c.l.b16 %v50
  %v387 = vunpack.c.h.b16 %v50
  %v388 = vunpack.c.l.b16 %v51
  %v389 = vunpack.c.h.b16 %v51
  %v390 = vunpack.c.l.b16 %v52
  %v391 = vunpack.c.l.b16 %v55
  %v392 = vunpack.c.h.b16 %v55
  %v393 = vunpack.c.l.b16 %v56
  %v394 = vunpack.c.h.b16 %v56
  %v395 = vunpack.c.l.b16 %v57
  %v396 = vunpack.c.l.b16 %v60
  %v397 = vunpack.c.h.b16 %v60
  %v398 = vunpack.c.l.b16 %v61
  %v399 = vunpack.c.h.b16 %v61
  %v400 = vunpack.c.l.b16 %v62
  %v401 = vunpack.c.l.b16 %v65
  %v402 = vunpack.c.h.b16 %v65
  %v403 = vunpack.c.l.b16 %v66
  %v404 = vunpack.c.h.b16 %v66
  %v405 = vunpack.c.l.b16 %v67
  %v406 = vunpack.c.l.b16 %v70
  %v407 = vunpack.c.h.b16 %v70
  %v408 = vunpack.c.l.b16 %v71
  %v409 = vunpack.c.h.b16 %v71
  %v410 = vunpack.c.l.b16 %v72
  %v411 = vunpack.c.l.b16 %v75
  %v412 = vunpack.c.h.b16 %v75
  %v413 = vunpack.c.l.b16 %v76
  %v414 = vunpack.c.h.b16 %v76
  %v415 = vunpack.c.l.b16 %v77
  %v416 = vunpack.c.l.b16 %v80
  %v417 = vunpack.c.h.b16 %v80
  %v418 = vunpack.c.l.b16 %v81
  %v419 = vunpack.c.h.b16 %v81
  %v420 = vunpack.c.l.b16 %v82
  %v421 = vunpack.c.l.b16 %v85
  %v422 = vunpack.c.h.b16 %v85
  %v423 = vunpack.c.l.b16 %v86
  %v424 = vunpack.c.h.b16 %v86
  %v425 = vunpack.c.l.b16 %v87
  %v426 = vunpack.c.l.b16 %v90
  %v427 = vunpack.c.h.b16 %v90
  %v428 = vunpack.c.l.b16 %v91
  %v429 = vunpack.c.h.b16 %v91
  %v430 = vunpack.c.l.b16 %v92
  %v431 = vunpack.c.l.b16 %v95
  %v432 = vunpack.c.h.b16 %v95
  %v433 = vunpack.c.l.b16 %v96
  %v434 = vunpack.c.h.b16 %v96
  %v435 = vunpack.c.l.b16 %v97
  %v436 = vunpack.c.l.b16 %v100
  %v437 = vunpack.c.h.b16 %v100
  %v438 = vunpack.c.l.b16 %v101
  %v439 = vunpack.c.h.b16 %v101
  %v440 = vunpack.c.l.b16 %v102
  %v441 = vunpack.c.l.b16 %v105
  %v442 = vunpack.c.h.b16 %v105
  %v443 = vunpack.c.l.b16 %v106
  %v444 = vunpack.c.h.b16 %v106
  %v445 = vunpack.c.l.b16 %v107
  %v446 = vunpack.c.l.b16 %v110
  %v447 = vunpack.c.h.b16 %v110
  %v448 = vunpack.c.l.b16 %v111
  %v449 = vunpack.c.h.b16 %v111
  %v450 = vunpack.c.l.b16 %v112
  %v451 = vunpack.c.l.b16 %v115
  %v452 = vunpack.c.h.b16 %v115
  %v453 = vunpack.c.l.b16 %v116
  %v454 = vunpack.c.h.b16 %v116
  %v455 = vunpack.c.l.b16 %v117
  %v456 = vunpack.c.l.b16 %v120
  %v457 = vunpack.c.h.b16 %v120
  %v458 = vunpack.c.l.b16 %v121
  %v459 = vunpack.c.h.b16 %v121
  %v460 = vunpack.c.l.b16 %v122
  %v461 = vunpack.c.l.b16 %v125
  %v462 = vunpack.c.h.b16 %v125
  %v463 = vunpack.c.l.b16 %v126
  %v464 = vunpack.c.h.b16 %v126
  %v465 = vunpack.c.l.b16 %v127
  %v466 = vunpack.c.l.b16 %v130
  %v467 = vunpack.c.h.b16 %v130
  %v468 = vunpack.c.l.b16 %v131
  %v469 = vunpack.c.h.b16 %v131
  %v470 = vunpack.c.l.b16 %v132
  %v471 = vunpack.c.l.b16 %v135
  %v472 = vunpack.c.h.b16 %v135
  %v473 = vunpack.c.l.b16 %v136
  %v474 = vunpack.c.h.b16 %v136
  %v475 = vunpack.c.l.b16 %v137
  %v476 = vunpack.c.l.b16 %v140
  %v477 = vunpack.c.h.b16 %v140
  %v478 = vunpack.c.l.b16 %v141
  %v479 = vunpack.c.h.b16 %v141
  %v480 = vunpack.c.l.b16 %v142
  %v481 = vunpack.c.l.b16 %v145
  %v482 = vunpack.c.h.b16 %v145
  %v483 = vunpack.c.l.b16 %v146
  %v484 = vunpack.c.h.b16 %v146
  %v485 = vunpack.c.l.b16 %v147
  %v486 = vunpack.c.l.b16 %v150
  %v487 = vunpack.c.h.b16 %v150
  %v488 = vunpack.c.l.b16 %v151
  %v489 = vunpack.c.h.b16 %v151
  %v490 = vunpack.c.l.b16 %v152
  %v491 = vunpack.c.l.b16 %v155
  %v492 = vunpack.c.h.b16 %v155
  %v493 = vunpack.c.l.b16 %v156
  %v494 = vunpack.c.h.b16 %v156
  %v495 = vunpack.c.l.b16 %v157
  %v496 = vunpack.c.l.b16 %v160
  %v497 = vunpack.c.h.b16 %v160
  %v498 = vunpack.c.l.b16 %v161
  %v499 = vunpack.c.h.b16 %v161
  %v500 = vunpack.c.l.b16 %v162
  %v501 = vunpack.c.l.b16 %v165
  %v502 = vunpack.c.h.b16 %v165
  %v503 = vunpack.c.l.b16 %v166
  %v504 = vunpack.c.h.b16 %v166
  %v505 = vunpack.c.l.b16 %v167
  %v506 = vunpack.c.l.b16 %v170
  %v507 = vunpack.c.h.b16 %v170
  %v508 = vunpack.c.l.b16 %v171
  %v509 = vunpack.c.h.b16 %v171
  %v510 = vunpack.c.l.b16 %v172
  %v511 = vpack.c.b16 %v356, %v351
  %v512 = vpack.c.b16 %v357, %v352
  %v513 = vpack.c.b16 %v358, %v353
  %v514 = vpack.c.b16 %v359, %v354
  %v515 = vpack.c.b16 %v360, %v355
  %v516 = vpack.c.b16 %v366, %v361
  %v517 = vpack.c.b16 %v367, %v362
  %v518 = vpack.c.b16 %v368, %v363
  %v519 = vpack.c.b16 %v369, %v364
  %v520 = vpack.c.b16 %v370, %v365
  %v521 = vpack.c.b16 %v376, %v371
  %v522 = vpack.c.b16 %v377, %v372
  %v523 = vpack.c.b16 %v378, %v373
  %v524 = vpack.c.b16 %v379, %v374
  %v525 = vpack.c.b16 %v380, %v375
  %v526 = vpack.c.b16 %v386, %v381
  %v527 = vpack.c.b16 %v387, %v382
  %v528 = vpack.c.b16 %v388, %v383
  %v529 = vpack.c.b16 %v389, %v384
  %v530 = vpack.c.b16 %v390, %v385
  %v531 = vpack.c.b16 %v396, %v391
  %v532 = vpack.c.b16 %v397, %v392
  %v533 = vpack.c.b16 %v398, %v393
  %v534 = vpack.c.b16 %v399, %v394
  %v535 = vpack.c.b16 %v400, %v395
  %v536 = vpack.c.b16 %v406, %v401
  %v537 = vpack.c.b16 %v407, %v402
  %v538 = vpack.c.b16 %v408, %v403
  %v539 = vpack.c.b16 %v409, %v404
  %v540 = vpack.c.b16 %v410, %v405
  %v541 = vpack.c.b16 %v416, %v411
  %v542 = vpack.c.b16 %v417, %v412
  %v543 = vpack.c.b16 %v418, %v413
  %v544 = vpack.c.b16 %v419, %v414
  %v545 = vpack.c.b16 %v420, %v415
  %v546 = vpack.c.b16 %v426, %v421
  %v547 = vpack.c.b16 %v427, %v422
  %v548 = vpack.c.b16 %v428, %v423
  %v549 = vpack.c.b16 %v429, %v424
  %v550 = vpack.c.b16 %v430, %v425
  %v551 = vpack.c.b16 %v436, %v431
  %v552 = vpack.c.b16 %v437, %v432
  %v553 = vpack.c.b16 %v438, %v433
  %v554 = vpack.c.b16 %v439, %v434
  %v555 = vpack.c.b16 %v440, %v435
  %v556 = vpack.c.b16 %v446, %v441
  %v557 = vpack.c.b16 %v447, %v442
  %v558 = vpack.c.b16 %v448, %v443
  %v559 = vpack.c.b16 %v449, %v444
  %v560 = vpack.c.b16 %v450, %v445
  %v561 = vpack.c.b16 %v456, %v451
  %v562 = vpack.c.b16 %v457, %v452
  %v563 = vpack.c.b16 %v458, %v453
  %v564 = vpack.c.b16 %v459, %v454
  %v565 = vpack.c.b16 %v460, %v455
  %v566 = vpack.c.b16 %v466, %v461
  %v567 = vpack.c.b16 %v467, %v462
  %v568 = vpack.c.b16 %v468, %v463
  %v569 = vpack.c.b16 %v469, %v464
  %v570 = vpack.c.b16 %v470, %v465
  %v571 = vpack.c.b16 %v476, %v471
  %v572 = vpack.c.b16 %v477, %v472
  %v573 = vpack.c.b16 %v478, %v473
  %v574 = vpack.c.b16 %v479, %v474
  %v575 = vpack.c.b16 %v480, %v475
  %v576 = vpack.c.b16 %v486, %v481
  %v577 = vpack.c.b16 %v487, %v482
  %v578 = vpack.c.b16 %v488, %v483
  %v579 = vpack.c.b16 %v489, %v484
  %v580 = vpack.c.b16 %v490, %v485
  %v581 = vpack.c.b16 %v496, %v491
  %v582 = vpack.c.b16 %v497, %v492
  %v583 = vpack.c.b16 %v498, %v493
  %v584 = vpack.c.b16 %v499, %v494
  %v585 = vpack.c.b16 %v500, %v495
  %v586 = vpack.c.b16 %v506, %v501
  %v587 = vpack.c.b16 %v507, %v502
  %v588 = vpack.c.b16 %v508, %v503
  %v589 = vpack.c.b16 %v509, %v504
  %v590 = vpack.c.b16 %v510, %v505
  %v751 = vunpack.c.l.b16 %v175
  %v752 = vunpack.c.l.b16 %v176
  %v753 = vunpack.c.l.b16 %v177
  %v754 = vunpack.c.l.b16 %v178
  %v755 = vunpack.c.l.b16 %v179
  %v756 = vunpack.c.l.b16 %v180
  %v757 = vunpack.c.l.b16 %v181
  %v758 = vunpack.c.l.b16 %v182
  %v759 = vunpack.c.l.b16 %v183
  %v760 = vunpack.c.l.b16 %v184
  %v761 = vunpack.c.l.b16 %v185
  %v762 = vunpack.c.l.b16 %v186
  %v763 = vunpack.c.l.b16 %v187
  %v764 = vunpack.c.l.b16 %v188
  %v765 = vunpack.c.l.b16 %v189
  %v766 = vunpack.c.l.b16 %v190
  %v767 = vunpack.c.l.b16 %v191
  %v768 = vunpack.c.l.b16 %v192
  %v769 = vunpack.c.l.b16 %v193
  %v770 = vunpack.c.l.b16 %v194
  %v771 = vunpack.c.l.b16 %v195
  %v772 = vunpack.c.l.b16 %v196
  %v773 = vunpack.c.l.b16 %v197
  %v774 = vunpack.c.l.b16 %v198
  %v775 = vunpack.c.l.b16 %v199
  %v776 = vunpack.c.l.b16 %v200
  %v777 = vunpack.c.l.b16 %v201
  %v778 = vunpack.c.l.b16 %v202
  %v779 = vunpack.c.l.b16 %v203
  %v780 = vunpack.c.l.b16 %v204
  %v781 = vunpack.c.l.b16 %v205
  %v782 = vunpack.c.l.b16 %v206
  %v783 = vunpack.c.l.b16 %v207
  %v784 = vunpack.c.l.b16 %v208
  %v785 = vunpack.c.l.b16 %v209
  %v786 = vunpack.c.l.b16 %v210
  %v787 = vunpack.c.l.b16 %v211
  %v788 = vunpack.c.l.b16 %v212
  %v789 = vunpack.c.l.b16 %v213
  %v790 = vunpack.c.l.b16 %v214
  %v791 = vunpack.c.l.b16 %v215
  %v792 = vunpack.c.l.b16 %v216
  %v793 = vunpack.c.l.b16 %v217
  %v794 = vunpack.c.l.b16 %v218
  %v795 = vunpack.c.l.b16 %v219
  %v796 = vunpack.c.l.b16 %v220
  %v797 = vunpack.c.l.b16 %v221
  %v798 = vunpack.c.l.b16 %v222
  %v799 = vunpack.c.l.b16 %v223
  %v800 = vunpack.c.l.b16 %v224
  %v801 = vunpack.c.l.b16 %v225
  %v802 = vunpack.c.l.b16 %v226
  %v803 = vunpack.c.l.b16 %v227
  %v804 = vunpack.c.l.b16 %v228
  %v805 = vunpack.c.l.b16 %v229
  %v806 = vunpack.c.l.b16 %v230
  %v807 = vunpack.c.l.b16 %v231
  %v808 = vunpack.c.l.b16 %v232
  %v809 = vunpack.c.l.b16 %v233
  %v810 = vunpack.c.l.b16 %v234
  %v811 = vunpack.c.l.b16 %v235
  %v812 = vunpack.c.l.b16 %v236
  %v813 = vunpack.c.l.b16 %v237
  %v814 = vunpack.c.l.b16 %v238
  %v815 = vunpack.c.l.b16 %v239
  %v816 = vunpack.c.l.b16 %v240
  %v817 = vunpack.c.l.b16 %v241
  %v818 = vunpack.c.l.b16 %v242
  %v819 = vunpack.c.l.b16 %v243
  %v820 = vunpack.c.l.b16 %v244
  %v821 = vunpack.c.l.b16 %v245
  %v822 = vunpack.c.l.b16 %v246
  %v823 = vunpack.c.l.b16 %v247
  %v824 = vunpack.c.l.b16 %v248
  %v825 = vunpack.c.l.b16 %v249
  %v826 = vunpack.c.l.b16 %v250
  %v827 = vunpack.c.l.b16 %v251
  %v828 = vunpack.c.l.b16 %v252
  %v829 = vunpack.c.l.b16 %v253
  %v830 = vunpack.c.l.b16 %v254
  %v831 = vpack.c.b16 %v752, %v751
  %v832 = vpack.c.b16 %v754, %v753
  %v833 = vpack.c.b16 %v756, %v755
  %v834 = vpack.c.b16 %v758, %v757
  %v835 = vpack.c.b16 %v760, %v759
  %v836 = vpack.c.b16 %v762, %v761
  %v837 = vpack.c.b16 %v764, %v763
  %v838 = vpack.c.b16 %v766, %v765
  %v839 = vpack.c.b16 %v768, %v767
  %v840 = vpack.c.b16 %v770, %v769
  %v841 = vpack.c.b16 %v772, %v771
  %v842 = vpack.c.b16 %v774, %v773
  %v843 = vpack.c.b16 %v776, %v775
  %v844 = vpack.c.b16 %v778, %v777
  %v845 = vpack.c.b16 %v780, %v779
  %v846 = vpack.c.b16 %v782, %v781
  %v847 = vpack.c.b16 %v784, %v783
  %v848 = vpack.c.b16 %v786, %v785
  %v849 = vpack.c.b16 %v788, %v787
  %v850 = vpack.c.b16 %v790, %v789
  %v851 = vpack.c.b16 %v792, %v791
  %v852 = vpack.c.b16 %v794, %v793
  %v853 = vpack.c.b16 %v796, %v795
  %v854 = vpack.c.b16 %v798, %v797
  %v855 = vpack.c.b16 %v800, %v799
  %v856 = vpack.c.b16 %v802, %v801
  %v857 = vpack.c.b16 %v804, %v803
  %v858 = vpack.c.b16 %v806, %v805
  %v859 = vpack.c.b16 %v808, %v807
  %v860 = vpack.c.b16 %v810, %v809
  %v861 = vpack.c.b16 %v812, %v811
  %v862 = vpack.c.b16 %v814, %v813
  %v863 = vpack.c.b16 %v816, %v815
  %v864 = vpack.c.b16 %v818, %v817
  %v865 = vpack.c.b16 %v820, %v819
  %v866 = vpack.c.b16 %v822, %v821
  %v867 = vpack.c.b16 %v824, %v823
  %v868 = vpack.c.b16 %v826, %v825
  %v869 = vpack.c.b16 %v828, %v827
  %v870 = vpack.c.b16 %v830, %v829
  %911 = vmatprep.subr.bf16.mxu0 0
  %912 = vmatpush1.bf16.msra.mxu0 %v831
  %913 = vmatprep.subr.bf16.mxu0 0
  %914 = vmatpush1.bf16.msra.mxu0 %v832
  %915 = vmatprep.subr.bf16.mxu0 0
  %916 = vmatpush1.bf16.msra.mxu0 %v833
  %917 = vmatprep.subr.bf16.mxu0 0
  %918 = vmatpush1.bf16.msra.mxu0 %v834
  %919 = vmatprep.subr.bf16.mxu0 0
  %920 = vmatpush1.bf16.msra.mxu0 %v835
  %921 = vmatprep.subr.bf16.mxu0 0
  %922 = vmatpush1.bf16.msra.mxu0 %v836
  %923 = vmatprep.subr.bf16.mxu0 0
  %924 = vmatpush1.bf16.msra.mxu0 %v837
  %925 = vmatprep.subr.bf16.mxu0 0
  %926 = vmatpush1.bf16.msra.mxu0 %v838
  %927 = vmatprep.subr.bf16.mxu0 0
  %928 = vmatpush1.bf16.msra.mxu0 %v839
  %929 = vmatprep.subr.bf16.mxu0 0
  %930 = vmatpush1.bf16.msra.mxu0 %v840
  %931 = vmatprep.subr.bf16.mxu0 0
  %932 = vmatpush1.bf16.msra.mxu0 %v841
  %933 = vmatprep.subr.bf16.mxu0 0
  %934 = vmatpush1.bf16.msra.mxu0 %v842
  %935 = vmatprep.subr.bf16.mxu0 0
  %936 = vmatpush1.bf16.msra.mxu0 %v843
  %937 = vmatprep.subr.bf16.mxu0 0
  %938 = vmatpush1.bf16.msra.mxu0 %v844
  %939 = vmatprep.subr.bf16.mxu0 0
  %940 = vmatpush1.bf16.msra.mxu0 %v845
  %941 = vmatprep.subr.bf16.mxu0 0
  %942 = vmatpush1.bf16.msra.mxu0 %v846
  %943 = vmatprep.mubr.bf16.mxu0 %v512
  %944 = vmatmul.mubr.bf16.gmra.mrb[0].mxu0 %v511
  %v945 = vpop.f32.mrb[0].mxu0
  %v946 = vadd.f32 0.0, %v945
  %v947 = vpop.f32.mrb[0].mxu0
  %v948 = vpop.f32.mrb[0].mxu0
  %v949 = vadd.f32 0.0, %v948
  %v950 = vpop.f32.mrb[0].mxu0
  %951 = vmatprep.mubr.bf16.mxu0 %v517
  %952 = vmatmul.mubr.bf16.gmra.mrb[0].mxu0 %v516
  %v953 = vpop.f32.mrb[0].mxu0
  %v954 = vadd.f32 0.0, %v953
  %v955 = vpop.f32.mrb[0].mxu0
  %v956 = vpop.f32.mrb[0].mxu0
  %v957 = vadd.f32 0.0, %v956
  %v958 = vpop.f32.mrb[0].mxu0
  %959 = vmatprep.mubr.bf16.mxu0 %v522
  %960 = vmatmul.mubr.bf16.gmra.mrb[0].mxu0 %v521
  %v961 = vpop.f32.mrb[0].mxu0
  %v962 = vadd.f32 0.0, %v961
  %v963 = vpop.f32.mrb[0].mxu0
  %v964 = vpop.f32.mrb[0].mxu0
  %v965 = vadd.f32 0.0, %v964
  %v966 = vpop.f32.mrb[0].mxu0
  %967 = vmatprep.mubr.bf16.mxu0 %v527
  %968 = vmatmul.mubr.bf16.gmra.mrb[0].mxu0 %v526
  %v969 = vpop.f32.mrb[0].mxu0
  %v970 = vadd.f32 0.0, %v969
  %v971 = vpop.f32.mrb[0].mxu0
  %v972 = vpop.f32.mrb[0].mxu0
  %v973 = vadd.f32 0.0, %v972
  %v974 = vpop.f32.mrb[0].mxu0
  %975 = vmatprep.mubr.bf16.mxu0 %v532
  %976 = vmatmul.mubr.bf16.gmra.mrb[0].mxu0 %v531
  %v977 = vpop.f32.mrb[0].mxu0
  %v978 = vadd.f32 0.0, %v977
  %v979 = vpop.f32.mrb[0].mxu0
  %v980 = vpop.f32.mrb[0].mxu0
  %v981 = vadd.f32 0.0, %v980
  %v982 = vpop.f32.mrb[0].mxu0
  %983 = vmatprep.mubr.bf16.mxu0 %v537
  %984 = vmatmul.mubr.bf16.gmra.mrb[0].mxu0 %v536
  %v985 = vpop.f32.mrb[0].mxu0
  %v986 = vadd.f32 0.0, %v985
  %v987 = vpop.f32.mrb[0].mxu0
  %v988 = vpop.f32.mrb[0].mxu0
  %v989 = vadd.f32 0.0, %v988
  %v990 = vpop.f32.mrb[0].mxu0
  %991 = vmatprep.mubr.bf16.mxu0 %v542
  %992 = vmatmul.mubr.bf16.gmra.mrb[0].mxu0 %v541
  %v993 = vpop.f32.mrb[0].mxu0
  %v994 = vadd.f32 0.0, %v993
  %v995 = vpop.f32.mrb[0].mxu0
  %v996 = vpop.f32.mrb[0].mxu0
  %v997 = vadd.f32 0.0, %v996
  %v998 = vpop.f32.mrb[0].mxu0
  %999 = vmatprep.mubr.bf16.mxu0 %v547
  %1000 = vmatmul.mubr.bf16.gmra.mrb[0].mxu0 %v546
  %v1001 = vpop.f32.mrb[0].mxu0
  %v1002 = vadd.f32 0.0, %v1001
  %v1003 = vpop.f32.mrb[0].mxu0
  %v1004 = vpop.f32.mrb[0].mxu0
  %v1005 = vadd.f32 0.0, %v1004
  %v1006 = vpop.f32.mrb[0].mxu0
  %1007 = vmatprep.mubr.bf16.mxu0 %v552
  %1008 = vmatmul.mubr.bf16.gmra.mrb[0].mxu0 %v551
  %v1009 = vpop.f32.mrb[0].mxu0
  %v1010 = vadd.f32 0.0, %v1009
  %v1011 = vpop.f32.mrb[0].mxu0
  %v1012 = vpop.f32.mrb[0].mxu0
  %v1013 = vadd.f32 0.0, %v1012
  %v1014 = vpop.f32.mrb[0].mxu0
  %1015 = vmatprep.mubr.bf16.mxu0 %v557
  %1016 = vmatmul.mubr.bf16.gmra.mrb[0].mxu0 %v556
  %v1017 = vpop.f32.mrb[0].mxu0
  %v1018 = vadd.f32 0.0, %v1017
  %v1019 = vpop.f32.mrb[0].mxu0
  %v1020 = vpop.f32.mrb[0].mxu0
  %v1021 = vadd.f32 0.0, %v1020
  %v1022 = vpop.f32.mrb[0].mxu0
  %1023 = vmatprep.mubr.bf16.mxu0 %v562
  %1024 = vmatmul.mubr.bf16.gmra.mrb[0].mxu0 %v561
  %v1025 = vpop.f32.mrb[0].mxu0
  %v1026 = vadd.f32 0.0, %v1025
  %v1027 = vpop.f32.mrb[0].mxu0
  %v1028 = vpop.f32.mrb[0].mxu0
  %v1029 = vadd.f32 0.0, %v1028
  %v1030 = vpop.f32.mrb[0].mxu0
  %1031 = vmatprep.mubr.bf16.mxu0 %v567
  %1032 = vmatmul.mubr.bf16.gmra.mrb[0].mxu0 %v566
  %v1033 = vpop.f32.mrb[0].mxu0
  %v1034 = vadd.f32 0.0, %v1033
  %v1035 = vpop.f32.mrb[0].mxu0
  %v1036 = vpop.f32.mrb[0].mxu0
  %v1037 = vadd.f32 0.0, %v1036
  %v1038 = vpop.f32.mrb[0].mxu0
  %1039 = vmatprep.mubr.bf16.mxu0 %v572
  %1040 = vmatmul.mubr.bf16.gmra.mrb[0].mxu0 %v571
  %v1041 = vpop.f32.mrb[0].mxu0
  %v1042 = vadd.f32 0.0, %v1041
  %v1043 = vpop.f32.mrb[0].mxu0
  %v1044 = vpop.f32.mrb[0].mxu0
  %v1045 = vadd.f32 0.0, %v1044
  %v1046 = vpop.f32.mrb[0].mxu0
  %1047 = vmatprep.mubr.bf16.mxu0 %v577
  %1048 = vmatmul.mubr.bf16.gmra.mrb[0].mxu0 %v576
  %v1049 = vpop.f32.mrb[0].mxu0
  %v1050 = vadd.f32 0.0, %v1049
  %v1051 = vpop.f32.mrb[0].mxu0
  %v1052 = vpop.f32.mrb[0].mxu0
  %v1053 = vadd.f32 0.0, %v1052
  %v1054 = vpop.f32.mrb[0].mxu0
  %1055 = vmatprep.mubr.bf16.mxu0 %v582
  %1056 = vmatmul.mubr.bf16.gmra.mrb[0].mxu0 %v581
  %v1057 = vpop.f32.mrb[0].mxu0
  %v1058 = vadd.f32 0.0, %v1057
  %v1059 = vpop.f32.mrb[0].mxu0
  %v1060 = vpop.f32.mrb[0].mxu0
  %v1061 = vadd.f32 0.0, %v1060
  %v1062 = vpop.f32.mrb[0].mxu0
  %1063 = vmatprep.mubr.bf16.mxu0 %v587
  %1064 = vmatmul.mubr.bf16.gmra.mrb[0].mxu0 %v586
  %v1065 = vpop.f32.mrb[0].mxu0
  %v1066 = vadd.f32 0.0, %v1065
  %v1067 = vpop.f32.mrb[0].mxu0
  %v1068 = vpop.f32.mrb[0].mxu0
  %v1069 = vadd.f32 0.0, %v1068
  %v1070 = vpop.f32.mrb[0].mxu0
  %1071 = vdwg.mxu0
  %1072 = vmatprep.subr.bf16.mxu0 0
  %1073 = vmatpush1.bf16.msra.mxu0 %v847
  %1074 = vmatprep.subr.bf16.mxu0 0
  %1075 = vmatpush1.bf16.msra.mxu0 %v848
  %1076 = vmatprep.subr.bf16.mxu0 0
  %1077 = vmatpush1.bf16.msra.mxu0 %v849
  %1078 = vmatprep.subr.bf16.mxu0 0
  %1079 = vmatpush1.bf16.msra.mxu0 %v850
  %1080 = vmatprep.subr.bf16.mxu0 0
  %1081 = vmatpush1.bf16.msra.mxu0 %v851
  %1082 = vmatprep.subr.bf16.mxu0 0
  %1083 = vmatpush1.bf16.msra.mxu0 %v852
  %1084 = vmatprep.subr.bf16.mxu0 0
  %1085 = vmatpush1.bf16.msra.mxu0 %v853
  %1086 = vmatprep.subr.bf16.mxu0 0
  %1087 = vmatpush1.bf16.msra.mxu0 %v854
  %1088 = vmatprep.subr.bf16.mxu0 0
  %1089 = vmatpush1.bf16.msra.mxu0 %v855
  %1090 = vmatprep.subr.bf16.mxu0 0
  %1091 = vmatpush1.bf16.msra.mxu0 %v856
  %1092 = vmatprep.subr.bf16.mxu0 0
  %1093 = vmatpush1.bf16.msra.mxu0 %v857
  %1094 = vmatprep.subr.bf16.mxu0 0
  %1095 = vmatpush1.bf16.msra.mxu0 %v858
  %1096 = vmatprep.subr.bf16.mxu0 0
  %1097 = vmatpush1.bf16.msra.mxu0 %v859
  %1098 = vmatprep.subr.bf16.mxu0 0
  %1099 = vmatpush1.bf16.msra.mxu0 %v860
  %1100 = vmatprep.subr.bf16.mxu0 0
  %1101 = vmatpush1.bf16.msra.mxu0 %v861
  %1102 = vmatprep.subr.bf16.mxu0 0
  %1103 = vmatpush1.bf16.msra.mxu0 %v862
  %1104 = vmatprep.mubr.bf16.mxu0 %v514
  %1105 = vmatmul.mubr.bf16.gmra.mrb[0].mxu0 %v513
  %v1106 = vpop.f32.mrb[0].mxu0
  %v1107 = vadd.f32 %v946, %v1106
  %v1108 = vpop.f32.mrb[0].mxu0
  %v1109 = vpop.f32.mrb[0].mxu0
  %v1110 = vadd.f32 %v949, %v1109
  %v1111 = vpop.f32.mrb[0].mxu0
  %1112 = vmatprep.mubr.bf16.mxu0 %v519
  %1113 = vmatmul.mubr.bf16.gmra.mrb[0].mxu0 %v518
  %v1114 = vpop.f32.mrb[0].mxu0
  %v1115 = vadd.f32 %v954, %v1114
  %v1116 = vpop.f32.mrb[0].mxu0
  %v1117 = vpop.f32.mrb[0].mxu0
  %v1118 = vadd.f32 %v957, %v1117
  %v1119 = vpop.f32.mrb[0].mxu0
  %1120 = vmatprep.mubr.bf16.mxu0 %v524
  %1121 = vmatmul.mubr.bf16.gmra.mrb[0].mxu0 %v523
  %v1122 = vpop.f32.mrb[0].mxu0
  %v1123 = vadd.f32 %v962, %v1122
  %v1124 = vpop.f32.mrb[0].mxu0
  %v1125 = vpop.f32.mrb[0].mxu0
  %v1126 = vadd.f32 %v965, %v1125
  %v1127 = vpop.f32.mrb[0].mxu0
  %1128 = vmatprep.mubr.bf16.mxu0 %v529
  %1129 = vmatmul.mubr.bf16.gmra.mrb[0].mxu0 %v528
  %v1130 = vpop.f32.mrb[0].mxu0
  %v1131 = vadd.f32 %v970, %v1130
  %v1132 = vpop.f32.mrb[0].mxu0
  %v1133 = vpop.f32.mrb[0].mxu0
  %v1134 = vadd.f32 %v973, %v1133
  %v1135 = vpop.f32.mrb[0].mxu0
  %1136 = vmatprep.mubr.bf16.mxu0 %v534
  %1137 = vmatmul.mubr.bf16.gmra.mrb[0].mxu0 %v533
  %v1138 = vpop.f32.mrb[0].mxu0
  %v1139 = vadd.f32 %v978, %v1138
  %v1140 = vpop.f32.mrb[0].mxu0
  %v1141 = vpop.f32.mrb[0].mxu0
  %v1142 = vadd.f32 %v981, %v1141
  %v1143 = vpop.f32.mrb[0].mxu0
  %1144 = vmatprep.mubr.bf16.mxu0 %v539
  %1145 = vmatmul.mubr.bf16.gmra.mrb[0].mxu0 %v538
  %v1146 = vpop.f32.mrb[0].mxu0
  %v1147 = vadd.f32 %v986, %v1146
  %v1148 = vpop.f32.mrb[0].mxu0
  %v1149 = vpop.f32.mrb[0].mxu0
  %v1150 = vadd.f32 %v989, %v1149
  %v1151 = vpop.f32.mrb[0].mxu0
  %1152 = vmatprep.mubr.bf16.mxu0 %v544
  %1153 = vmatmul.mubr.bf16.gmra.mrb[0].mxu0 %v543
  %v1154 = vpop.f32.mrb[0].mxu0
  %v1155 = vadd.f32 %v994, %v1154
  %v1156 = vpop.f32.mrb[0].mxu0
  %v1157 = vpop.f32.mrb[0].mxu0
  %v1158 = vadd.f32 %v997, %v1157
  %v1159 = vpop.f32.mrb[0].mxu0
  %1160 = vmatprep.mubr.bf16.mxu0 %v549
  %1161 = vmatmul.mubr.bf16.gmra.mrb[0].mxu0 %v548
  %v1162 = vpop.f32.mrb[0].mxu0
  %v1163 = vadd.f32 %v1002, %v1162
  %v1164 = vpop.f32.mrb[0].mxu0
  %v1165 = vpop.f32.mrb[0].mxu0
  %v1166 = vadd.f32 %v1005, %v1165
  %v1167 = vpop.f32.mrb[0].mxu0
  %1168 = vmatprep.mubr.bf16.mxu0 %v554
  %1169 = vmatmul.mubr.bf16.gmra.mrb[0].mxu0 %v553
  %v1170 = vpop.f32.mrb[0].mxu0
  %v1171 = vadd.f32 %v1010, %v1170
  %v1172 = vpop.f32.mrb[0].mxu0
  %v1173 = vpop.f32.mrb[0].mxu0
  %v1174 = vadd.f32 %v1013, %v1173
  %v1175 = vpop.f32.mrb[0].mxu0
  %1176 = vmatprep.mubr.bf16.mxu0 %v559
  %1177 = vmatmul.mubr.bf16.gmra.mrb[0].mxu0 %v558
  %v1178 = vpop.f32.mrb[0].mxu0
  %v1179 = vadd.f32 %v1018, %v1178
  %v1180 = vpop.f32.mrb[0].mxu0
  %v1181 = vpop.f32.mrb[0].mxu0
  %v1182 = vadd.f32 %v1021, %v1181
  %v1183 = vpop.f32.mrb[0].mxu0
  %1184 = vmatprep.mubr.bf16.mxu0 %v564
  %1185 = vmatmul.mubr.bf16.gmra.mrb[0].mxu0 %v563
  %v1186 = vpop.f32.mrb[0].mxu0
  %v1187 = vadd.f32 %v1026, %v1186
  %v1188 = vpop.f32.mrb[0].mxu0
  %v1189 = vpop.f32.mrb[0].mxu0
  %v1190 = vadd.f32 %v1029, %v1189
  %v1191 = vpop.f32.mrb[0].mxu0
  %1192 = vmatprep.mubr.bf16.mxu0 %v569
  %1193 = vmatmul.mubr.bf16.gmra.mrb[0].mxu0 %v568
  %v1194 = vpop.f32.mrb[0].mxu0
  %v1195 = vadd.f32 %v1034, %v1194
  %v1196 = vpop.f32.mrb[0].mxu0
  %v1197 = vpop.f32.mrb[0].mxu0
  %v1198 = vadd.f32 %v1037, %v1197
  %v1199 = vpop.f32.mrb[0].mxu0
  %1200 = vmatprep.mubr.bf16.mxu0 %v574
  %1201 = vmatmul.mubr.bf16.gmra.mrb[0].mxu0 %v573
  %v1202 = vpop.f32.mrb[0].mxu0
  %v1203 = vadd.f32 %v1042, %v1202
  %v1204 = vpop.f32.mrb[0].mxu0
  %v1205 = vpop.f32.mrb[0].mxu0
  %v1206 = vadd.f32 %v1045, %v1205
  %v1207 = vpop.f32.mrb[0].mxu0
  %1208 = vmatprep.mubr.bf16.mxu0 %v579
  %1209 = vmatmul.mubr.bf16.gmra.mrb[0].mxu0 %v578
  %v1210 = vpop.f32.mrb[0].mxu0
  %v1211 = vadd.f32 %v1050, %v1210
  %v1212 = vpop.f32.mrb[0].mxu0
  %v1213 = vpop.f32.mrb[0].mxu0
  %v1214 = vadd.f32 %v1053, %v1213
  %v1215 = vpop.f32.mrb[0].mxu0
  %1216 = vmatprep.mubr.bf16.mxu0 %v584
  %1217 = vmatmul.mubr.bf16.gmra.mrb[0].mxu0 %v583
  %v1218 = vpop.f32.mrb[0].mxu0
  %v1219 = vadd.f32 %v1058, %v1218
  %v1220 = vpop.f32.mrb[0].mxu0
  %v1221 = vpop.f32.mrb[0].mxu0
  %v1222 = vadd.f32 %v1061, %v1221
  %v1223 = vpop.f32.mrb[0].mxu0
  %1224 = vmatprep.mubr.bf16.mxu0 %v589
  %1225 = vmatmul.mubr.bf16.gmra.mrb[0].mxu0 %v588
  %v1226 = vpop.f32.mrb[0].mxu0
  %v1227 = vadd.f32 %v1066, %v1226
  %v1228 = vpop.f32.mrb[0].mxu0
  %v1229 = vpop.f32.mrb[0].mxu0
  %v1230 = vadd.f32 %v1069, %v1229
  %v1231 = vpop.f32.mrb[0].mxu0
  %1232 = vdwg.mxu0
  %1233 = vmatprep.subr.bf16.mxu0 0
  %1234 = vmatpush1.bf16.msra.mxu0 %v863
  %1235 = vmatprep.subr.bf16.mxu0 0
  %1236 = vmatpush1.bf16.msra.mxu0 %v864
  %1237 = vmatprep.subr.bf16.mxu0 0
  %1238 = vmatpush1.bf16.msra.mxu0 %v865
  %1239 = vmatprep.subr.bf16.mxu0 0
  %1240 = vmatpush1.bf16.msra.mxu0 %v866
  %1241 = vmatprep.subr.bf16.mxu0 0
  %1242 = vmatpush1.bf16.msra.mxu0 %v867
  %1243 = vmatprep.subr.bf16.mxu0 0
  %1244 = vmatpush1.bf16.msra.mxu0 %v868
  %1245 = vmatprep.subr.bf16.mxu0 0
  %1246 = vmatpush1.bf16.msra.mxu0 %v869
  %1247 = vmatprep.subr.bf16.mxu0 0
  %1248 = vmatpush1.bf16.msra.mxu0 %v870
  %1249 = vmatprep.subr.bf16.mxu0 0
  %1250 = vmatpush1.bf16.msra.mxu0 0
  %1251 = vmatprep.subr.bf16.mxu0 0
  %1252 = vmatpush1.bf16.msra.mxu0 0
  %1253 = vmatprep.subr.bf16.mxu0 0
  %1254 = vmatpush1.bf16.msra.mxu0 0
  %1255 = vmatprep.subr.bf16.mxu0 0
  %1256 = vmatpush1.bf16.msra.mxu0 0
  %1257 = vmatprep.subr.bf16.mxu0 0
  %1258 = vmatpush1.bf16.msra.mxu0 0
  %1259 = vmatprep.subr.bf16.mxu0 0
  %1260 = vmatpush1.bf16.msra.mxu0 0
  %1261 = vmatprep.subr.bf16.mxu0 0
  %1262 = vmatpush1.bf16.msra.mxu0 0
  %1263 = vmatprep.subr.bf16.mxu0 0
  %1264 = vmatpush1.bf16.msra.mxu0 0
  %1265 = vmatprep.mubr.bf16.mxu0 0
  %1266 = vmatmul.mubr.bf16.gmra.mrb[0].mxu0 %v515
  %v1267 = vpop.f32.mrb[0].mxu0
  %v1268 = vadd.f32 %v1107, %v1267
  %v1269 = vpop.f32.mrb[0].mxu0
  %v1270 = vpop.f32.mrb[0].mxu0
  %v1271 = vadd.f32 %v1110, %v1270
  %v1272 = vpop.f32.mrb[0].mxu0
  %1273 = vmatprep.mubr.bf16.mxu0 0
  %1274 = vmatmul.mubr.bf16.gmra.mrb[0].mxu0 %v520
  %v1275 = vpop.f32.mrb[0].mxu0
  %v1276 = vadd.f32 %v1115, %v1275
  %v1277 = vpop.f32.mrb[0].mxu0
  %v1278 = vpop.f32.mrb[0].mxu0
  %v1279 = vadd.f32 %v1118, %v1278
  %v1280 = vpop.f32.mrb[0].mxu0
  %1281 = vmatprep.mubr.bf16.mxu0 0
  %1282 = vmatmul.mubr.bf16.gmra.mrb[0].mxu0 %v525
  %v1283 = vpop.f32.mrb[0].mxu0
  %v1284 = vadd.f32 %v1123, %v1283
  %v1285 = vpop.f32.mrb[0].mxu0
  %v1286 = vpop.f32.mrb[0].mxu0
  %v1287 = vadd.f32 %v1126, %v1286
  %v1288 = vpop.f32.mrb[0].mxu0
  %1289 = vmatprep.mubr.bf16.mxu0 0
  %1290 = vmatmul.mubr.bf16.gmra.mrb[0].mxu0 %v530
  %v1291 = vpop.f32.mrb[0].mxu0
  %v1292 = vadd.f32 %v1131, %v1291
  %v1293 = vpop.f32.mrb[0].mxu0
  %v1294 = vpop.f32.mrb[0].mxu0
  %v1295 = vadd.f32 %v1134, %v1294
  %v1296 = vpop.f32.mrb[0].mxu0
  %1297 = vmatprep.mubr.bf16.mxu0 0
  %1298 = vmatmul.mubr.bf16.gmra.mrb[0].mxu0 %v535
  %v1299 = vpop.f32.mrb[0].mxu0
  %v1300 = vadd.f32 %v1139, %v1299
  %v1301 = vpop.f32.mrb[0].mxu0
  %v1302 = vpop.f32.mrb[0].mxu0
  %v1303 = vadd.f32 %v1142, %v1302
  %v1304 = vpop.f32.mrb[0].mxu0
  %1305 = vmatprep.mubr.bf16.mxu0 0
  %1306 = vmatmul.mubr.bf16.gmra.mrb[0].mxu0 %v540
  %v1307 = vpop.f32.mrb[0].mxu0
  %v1308 = vadd.f32 %v1147, %v1307
  %v1309 = vpop.f32.mrb[0].mxu0
  %v1310 = vpop.f32.mrb[0].mxu0
  %v1311 = vadd.f32 %v1150, %v1310
  %v1312 = vpop.f32.mrb[0].mxu0
  %1313 = vmatprep.mubr.bf16.mxu0 0
  %1314 = vmatmul.mubr.bf16.gmra.mrb[0].mxu0 %v545
  %v1315 = vpop.f32.mrb[0].mxu0
  %v1316 = vadd.f32 %v1155, %v1315
  %v1317 = vpop.f32.mrb[0].mxu0
  %v1318 = vpop.f32.mrb[0].mxu0
  %v1319 = vadd.f32 %v1158, %v1318
  %v1320 = vpop.f32.mrb[0].mxu0
  %1321 = vmatprep.mubr.bf16.mxu0 0
  %1322 = vmatmul.mubr.bf16.gmra.mrb[0].mxu0 %v550
  %v1323 = vpop.f32.mrb[0].mxu0
  %v1324 = vadd.f32 %v1163, %v1323
  %v1325 = vpop.f32.mrb[0].mxu0
  %v1326 = vpop.f32.mrb[0].mxu0
  %v1327 = vadd.f32 %v1166, %v1326
  %v1328 = vpop.f32.mrb[0].mxu0
  %1329 = vmatprep.mubr.bf16.mxu0 0
  %1330 = vmatmul.mubr.bf16.gmra.mrb[0].mxu0 %v555
  %v1331 = vpop.f32.mrb[0].mxu0
  %v1332 = vadd.f32 %v1171, %v1331
  %v1333 = vpop.f32.mrb[0].mxu0
  %v1334 = vpop.f32.mrb[0].mxu0
  %v1335 = vadd.f32 %v1174, %v1334
  %v1336 = vpop.f32.mrb[0].mxu0
  %1337 = vmatprep.mubr.bf16.mxu0 0
  %1338 = vmatmul.mubr.bf16.gmra.mrb[0].mxu0 %v560
  %v1339 = vpop.f32.mrb[0].mxu0
  %v1340 = vadd.f32 %v1179, %v1339
  %v1341 = vpop.f32.mrb[0].mxu0
  %v1342 = vpop.f32.mrb[0].mxu0
  %v1343 = vadd.f32 %v1182, %v1342
  %v1344 = vpop.f32.mrb[0].mxu0
  %1345 = vmatprep.mubr.bf16.mxu0 0
  %1346 = vmatmul.mubr.bf16.gmra.mrb[0].mxu0 %v565
  %v1347 = vpop.f32.mrb[0].mxu0
  %v1348 = vadd.f32 %v1187, %v1347
  %v1349 = vpop.f32.mrb[0].mxu0
  %v1350 = vpop.f32.mrb[0].mxu0
  %v1351 = vadd.f32 %v1190, %v1350
  %v1352 = vpop.f32.mrb[0].mxu0
  %1353 = vmatprep.mubr.bf16.mxu0 0
  %1354 = vmatmul.mubr.bf16.gmra.mrb[0].mxu0 %v570
  %v1355 = vpop.f32.mrb[0].mxu0
  %v1356 = vadd.f32 %v1195, %v1355
  %v1357 = vpop.f32.mrb[0].mxu0
  %v1358 = vpop.f32.mrb[0].mxu0
  %v1359 = vadd.f32 %v1198, %v1358
  %v1360 = vpop.f32.mrb[0].mxu0
  %1361 = vmatprep.mubr.bf16.mxu0 0
  %1362 = vmatmul.mubr.bf16.gmra.mrb[0].mxu0 %v575
  %v1363 = vpop.f32.mrb[0].mxu0
  %v1364 = vadd.f32 %v1203, %v1363
  %v1365 = vpop.f32.mrb[0].mxu0
  %v1366 = vpop.f32.mrb[0].mxu0
  %v1367 = vadd.f32 %v1206, %v1366
  %v1368 = vpop.f32.mrb[0].mxu0
  %1369 = vmatprep.mubr.bf16.mxu0 0
  %1370 = vmatmul.mubr.bf16.gmra.mrb[0].mxu0 %v580
  %v1371 = vpop.f32.mrb[0].mxu0
  %v1372 = vadd.f32 %v1211, %v1371
  %v1373 = vpop.f32.mrb[0].mxu0
  %v1374 = vpop.f32.mrb[0].mxu0
  %v1375 = vadd.f32 %v1214, %v1374
  %v1376 = vpop.f32.mrb[0].mxu0
  %1377 = vmatprep.mubr.bf16.mxu0 0
  %1378 = vmatmul.mubr.bf16.gmra.mrb[0].mxu0 %v585
  %v1379 = vpop.f32.mrb[0].mxu0
  %v1380 = vadd.f32 %v1219, %v1379
  %v1381 = vpop.f32.mrb[0].mxu0
  %v1382 = vpop.f32.mrb[0].mxu0
  %v1383 = vadd.f32 %v1222, %v1382
  %v1384 = vpop.f32.mrb[0].mxu0
  %1385 = vmatprep.mubr.bf16.mxu0 0
  %1386 = vmatmul.mubr.bf16.gmra.mrb[0].mxu0 %v590
  %v1387 = vpop.f32.mrb[0].mxu0
  %v1388 = vadd.f32 %v1227, %v1387
  %v1389 = vpop.f32.mrb[0].mxu0
  %v1390 = vpop.f32.mrb[0].mxu0
  %v1391 = vadd.f32 %v1230, %v1390
  %v1392 = vpop.f32.mrb[0].mxu0
  %1393 = vdwg.mxu0
  %v1426 = vunpack.c.h.b16 %v17
  %v1427 = vunpack.c.l.b16 %v18
  %v1428 = vunpack.c.h.b16 %v22
  %v1429 = vunpack.c.l.b16 %v23
  %v1430 = vunpack.c.h.b16 %v27
  %v1431 = vunpack.c.l.b16 %v28
  %v1432 = vunpack.c.h.b16 %v32
  %v1433 = vunpack.c.l.b16 %v33
  %v1434 = vunpack.c.h.b16 %v37
  %v1435 = vunpack.c.l.b16 %v38
  %v1436 = vunpack.c.h.b16 %v42
  %v1437 = vunpack.c.l.b16 %v43
  %v1438 = vunpack.c.h.b16 %v47
  %v1439 = vunpack.c.l.b16 %v48
  %v1440 = vunpack.c.h.b16 %v52
  %v1441 = vunpack.c.l.b16 %v53
  %v1442 = vunpack.c.h.b16 %v57
  %v1443 = vunpack.c.l.b16 %v58
  %v1444 = vunpack.c.h.b16 %v62
  %v1445 = vunpack.c.l.b16 %v63
  %v1446 = vunpack.c.h.b16 %v67
  %v1447 = vunpack.c.l.b16 %v68
  %v1448 = vunpack.c.h.b16 %v72
  %v1449 = vunpack.c.l.b16 %v73
  %v1450 = vunpack.c.h.b16 %v77
  %v1451 = vunpack.c.l.b16 %v78
  %v1452 = vunpack.c.h.b16 %v82
  %v1453 = vunpack.c.l.b16 %v83
  %v1454 = vunpack.c.h.b16 %v87
  %v1455 = vunpack.c.l.b16 %v88
  %v1456 = vunpack.c.h.b16 %v92
  %v1457 = vunpack.c.l.b16 %v93
  %v1458 = vunpack.c.h.b16 %v97
  %v1459 = vunpack.c.l.b16 %v98
  %v1460 = vunpack.c.h.b16 %v102
  %v1461 = vunpack.c.l.b16 %v103
  %v1462 = vunpack.c.h.b16 %v107
  %v1463 = vunpack.c.l.b16 %v108
  %v1464 = vunpack.c.h.b16 %v112
  %v1465 = vunpack.c.l.b16 %v113
  %v1466 = vunpack.c.h.b16 %v117
  %v1467 = vunpack.c.l.b16 %v118
  %v1468 = vunpack.c.h.b16 %v122
  %v1469 = vunpack.c.l.b16 %v123
  %v1470 = vunpack.c.h.b16 %v127
  %v1471 = vunpack.c.l.b16 %v128
  %v1472 = vunpack.c.h.b16 %v132
  %v1473 = vunpack.c.l.b16 %v133
  %v1474 = vunpack.c.h.b16 %v137
  %v1475 = vunpack.c.l.b16 %v138
  %v1476 = vunpack.c.h.b16 %v142
  %v1477 = vunpack.c.l.b16 %v143
  %v1478 = vunpack.c.h.b16 %v147
  %v1479 = vunpack.c.l.b16 %v148
  %v1480 = vunpack.c.h.b16 %v152
  %v1481 = vunpack.c.l.b16 %v153
  %v1482 = vunpack.c.h.b16 %v157
  %v1483 = vunpack.c.l.b16 %v158
  %v1484 = vunpack.c.h.b16 %v162
  %v1485 = vunpack.c.l.b16 %v163
  %v1486 = vunpack.c.h.b16 %v167
  %v1487 = vunpack.c.l.b16 %v168
  %v1488 = vunpack.c.h.b16 %v172
  %v1489 = vunpack.c.l.b16 %v173
  %v1490 = vpack.c.b16 %v1428, %v1426
  %v1491 = vpack.c.b16 %v1429, %v1427
  %v1492 = vpack.c.b16 %v1432, %v1430
  %v1493 = vpack.c.b16 %v1433, %v1431
  %v1494 = vpack.c.b16 %v1436, %v1434
  %v1495 = vpack.c.b16 %v1437, %v1435
  %v1496 = vpack.c.b16 %v1440, %v1438
  %v1497 = vpack.c.b16 %v1441, %v1439
  %v1498 = vpack.c.b16 %v1444, %v1442
  %v1499 = vpack.c.b16 %v1445, %v1443
  %v1500 = vpack.c.b16 %v1448, %v1446
  %v1501 = vpack.c.b16 %v1449, %v1447
  %v1502 = vpack.c.b16 %v1452, %v1450
  %v1503 = vpack.c.b16 %v1453, %v1451
  %v1504 = vpack.c.b16 %v1456, %v1454
  %v1505 = vpack.c.b16 %v1457, %v1455
  %v1506 = vpack.c.b16 %v1460, %v1458
  %v1507 = vpack.c.b16 %v1461, %v1459
  %v1508 = vpack.c.b16 %v1464, %v1462
  %v1509 = vpack.c.b16 %v1465, %v1463
  %v1510 = vpack.c.b16 %v1468, %v1466
  %v1511 = vpack.c.b16 %v1469, %v1467
  %v1512 = vpack.c.b16 %v1472, %v1470
  %v1513 = vpack.c.b16 %v1473, %v1471
  %v1514 = vpack.c.b16 %v1476, %v1474
  %v1515 = vpack.c.b16 %v1477, %v1475
  %v1516 = vpack.c.b16 %v1480, %v1478
  %v1517 = vpack.c.b16 %v1481, %v1479
  %v1518 = vpack.c.b16 %v1484, %v1482
  %v1519 = vpack.c.b16 %v1485, %v1483
  %v1520 = vpack.c.b16 %v1488, %v1486
  %v1521 = vpack.c.b16 %v1489, %v1487
  %1554 = vmatprep.subr.bf16.mxu0 0
  %1555 = vmatpush1.bf16.msra.mxu0 %v831
  %1556 = vmatprep.subr.bf16.mxu0 0
  %1557 = vmatpush1.bf16.msra.mxu0 %v832
  %1558 = vmatprep.subr.bf16.mxu0 0
  %1559 = vmatpush1.bf16.msra.mxu0 %v833
  %1560 = vmatprep.subr.bf16.mxu0 0
  %1561 = vmatpush1.bf16.msra.mxu0 %v834
  %1562 = vmatprep.subr.bf16.mxu0 0
  %1563 = vmatpush1.bf16.msra.mxu0 %v835
  %1564 = vmatprep.subr.bf16.mxu0 0
  %1565 = vmatpush1.bf16.msra.mxu0 %v836
  %1566 = vmatprep.subr.bf16.mxu0 0
  %1567 = vmatpush1.bf16.msra.mxu0 %v837
  %1568 = vmatprep.subr.bf16.mxu0 0
  %1569 = vmatpush1.bf16.msra.mxu0 %v838
  %1570 = vmatprep.subr.bf16.mxu0 0
  %1571 = vmatpush1.bf16.msra.mxu0 %v839
  %1572 = vmatprep.subr.bf16.mxu0 0
  %1573 = vmatpush1.bf16.msra.mxu0 %v840
  %1574 = vmatprep.subr.bf16.mxu0 0
  %1575 = vmatpush1.bf16.msra.mxu0 %v841
  %1576 = vmatprep.subr.bf16.mxu0 0
  %1577 = vmatpush1.bf16.msra.mxu0 %v842
  %1578 = vmatprep.subr.bf16.mxu0 0
  %1579 = vmatpush1.bf16.msra.mxu0 %v843
  %1580 = vmatprep.subr.bf16.mxu0 0
  %1581 = vmatpush1.bf16.msra.mxu0 %v844
  %1582 = vmatprep.subr.bf16.mxu0 0
  %1583 = vmatpush1.bf16.msra.mxu0 %v845
  %1584 = vmatprep.subr.bf16.mxu0 0
  %1585 = vmatpush1.bf16.msra.mxu0 %v846
  %1586 = vmatprep.mubr.bf16.mxu0 %v514
  %1587 = vmatmul.mubr.bf16.gmra.mrb[0].mxu0 %v513
  %v1588 = vpop.f32.mrb[0].mxu0
  %v1589 = vadd.f32 0.0, %v1588
  %v1590 = vpop.f32.mrb[0].mxu0
  %v1591 = vpop.f32.mrb[0].mxu0
  %v1592 = vadd.f32 0.0, %v1591
  %v1593 = vpop.f32.mrb[0].mxu0
  %1594 = vmatprep.mubr.bf16.mxu0 %v519
  %1595 = vmatmul.mubr.bf16.gmra.mrb[0].mxu0 %v518
  %v1596 = vpop.f32.mrb[0].mxu0
  %v1597 = vadd.f32 0.0, %v1596
  %v1598 = vpop.f32.mrb[0].mxu0
  %v1599 = vpop.f32.mrb[0].mxu0
  %v1600 = vadd.f32 0.0, %v1599
  %v1601 = vpop.f32.mrb[0].mxu0
  %1602 = vmatprep.mubr.bf16.mxu0 %v524
  %1603 = vmatmul.mubr.bf16.gmra.mrb[0].mxu0 %v523
  %v1604 = vpop.f32.mrb[0].mxu0
  %v1605 = vadd.f32 0.0, %v1604
  %v1606 = vpop.f32.mrb[0].mxu0
  %v1607 = vpop.f32.mrb[0].mxu0
  %v1608 = vadd.f32 0.0, %v1607
  %v1609 = vpop.f32.mrb[0].mxu0
  %1610 = vmatprep.mubr.bf16.mxu0 %v529
  %1611 = vmatmul.mubr.bf16.gmra.mrb[0].mxu0 %v528
  %v1612 = vpop.f32.mrb[0].mxu0
  %v1613 = vadd.f32 0.0, %v1612
  %v1614 = vpop.f32.mrb[0].mxu0
  %v1615 = vpop.f32.mrb[0].mxu0
  %v1616 = vadd.f32 0.0, %v1615
  %v1617 = vpop.f32.mrb[0].mxu0
  %1618 = vmatprep.mubr.bf16.mxu0 %v534
  %1619 = vmatmul.mubr.bf16.gmra.mrb[0].mxu0 %v533
  %v1620 = vpop.f32.mrb[0].mxu0
  %v1621 = vadd.f32 0.0, %v1620
  %v1622 = vpop.f32.mrb[0].mxu0
  %v1623 = vpop.f32.mrb[0].mxu0
  %v1624 = vadd.f32 0.0, %v1623
  %v1625 = vpop.f32.mrb[0].mxu0
  %1626 = vmatprep.mubr.bf16.mxu0 %v539
  %1627 = vmatmul.mubr.bf16.gmra.mrb[0].mxu0 %v538
  %v1628 = vpop.f32.mrb[0].mxu0
  %v1629 = vadd.f32 0.0, %v1628
  %v1630 = vpop.f32.mrb[0].mxu0
  %v1631 = vpop.f32.mrb[0].mxu0
  %v1632 = vadd.f32 0.0, %v1631
  %v1633 = vpop.f32.mrb[0].mxu0
  %1634 = vmatprep.mubr.bf16.mxu0 %v544
  %1635 = vmatmul.mubr.bf16.gmra.mrb[0].mxu0 %v543
  %v1636 = vpop.f32.mrb[0].mxu0
  %v1637 = vadd.f32 0.0, %v1636
  %v1638 = vpop.f32.mrb[0].mxu0
  %v1639 = vpop.f32.mrb[0].mxu0
  %v1640 = vadd.f32 0.0, %v1639
  %v1641 = vpop.f32.mrb[0].mxu0
  %1642 = vmatprep.mubr.bf16.mxu0 %v549
  %1643 = vmatmul.mubr.bf16.gmra.mrb[0].mxu0 %v548
  %v1644 = vpop.f32.mrb[0].mxu0
  %v1645 = vadd.f32 0.0, %v1644
  %v1646 = vpop.f32.mrb[0].mxu0
  %v1647 = vpop.f32.mrb[0].mxu0
  %v1648 = vadd.f32 0.0, %v1647
  %v1649 = vpop.f32.mrb[0].mxu0
  %1650 = vmatprep.mubr.bf16.mxu0 %v554
  %1651 = vmatmul.mubr.bf16.gmra.mrb[0].mxu0 %v553
  %v1652 = vpop.f32.mrb[0].mxu0
  %v1653 = vadd.f32 0.0, %v1652
  %v1654 = vpop.f32.mrb[0].mxu0
  %v1655 = vpop.f32.mrb[0].mxu0
  %v1656 = vadd.f32 0.0, %v1655
  %v1657 = vpop.f32.mrb[0].mxu0
  %1658 = vmatprep.mubr.bf16.mxu0 %v559
  %1659 = vmatmul.mubr.bf16.gmra.mrb[0].mxu0 %v558
  %v1660 = vpop.f32.mrb[0].mxu0
  %v1661 = vadd.f32 0.0, %v1660
  %v1662 = vpop.f32.mrb[0].mxu0
  %v1663 = vpop.f32.mrb[0].mxu0
  %v1664 = vadd.f32 0.0, %v1663
  %v1665 = vpop.f32.mrb[0].mxu0
  %1666 = vmatprep.mubr.bf16.mxu0 %v564
  %1667 = vmatmul.mubr.bf16.gmra.mrb[0].mxu0 %v563
  %v1668 = vpop.f32.mrb[0].mxu0
  %v1669 = vadd.f32 0.0, %v1668
  %v1670 = vpop.f32.mrb[0].mxu0
  %v1671 = vpop.f32.mrb[0].mxu0
  %v1672 = vadd.f32 0.0, %v1671
  %v1673 = vpop.f32.mrb[0].mxu0
  %1674 = vmatprep.mubr.bf16.mxu0 %v569
  %1675 = vmatmul.mubr.bf16.gmra.mrb[0].mxu0 %v568
  %v1676 = vpop.f32.mrb[0].mxu0
  %v1677 = vadd.f32 0.0, %v1676
  %v1678 = vpop.f32.mrb[0].mxu0
  %v1679 = vpop.f32.mrb[0].mxu0
  %v1680 = vadd.f32 0.0, %v1679
  %v1681 = vpop.f32.mrb[0].mxu0
  %1682 = vmatprep.mubr.bf16.mxu0 %v574
  %1683 = vmatmul.mubr.bf16.gmra.mrb[0].mxu0 %v573
  %v1684 = vpop.f32.mrb[0].mxu0
  %v1685 = vadd.f32 0.0, %v1684
  %v1686 = vpop.f32.mrb[0].mxu0
  %v1687 = vpop.f32.mrb[0].mxu0
  %v1688 = vadd.f32 0.0, %v1687
  %v1689 = vpop.f32.mrb[0].mxu0
  %1690 = vmatprep.mubr.bf16.mxu0 %v579
  %1691 = vmatmul.mubr.bf16.gmra.mrb[0].mxu0 %v578
  %v1692 = vpop.f32.mrb[0].mxu0
  %v1693 = vadd.f32 0.0, %v1692
  %v1694 = vpop.f32.mrb[0].mxu0
  %v1695 = vpop.f32.mrb[0].mxu0
  %v1696 = vadd.f32 0.0, %v1695
  %v1697 = vpop.f32.mrb[0].mxu0
  %1698 = vmatprep.mubr.bf16.mxu0 %v584
  %1699 = vmatmul.mubr.bf16.gmra.mrb[0].mxu0 %v583
  %v1700 = vpop.f32.mrb[0].mxu0
  %v1701 = vadd.f32 0.0, %v1700
  %v1702 = vpop.f32.mrb[0].mxu0
  %v1703 = vpop.f32.mrb[0].mxu0
  %v1704 = vadd.f32 0.0, %v1703
  %v1705 = vpop.f32.mrb[0].mxu0
  %1706 = vmatprep.mubr.bf16.mxu0 %v589
  %1707 = vmatmul.mubr.bf16.gmra.mrb[0].mxu0 %v588
  %v1708 = vpop.f32.mrb[0].mxu0
  %v1709 = vadd.f32 0.0, %v1708
  %v1710 = vpop.f32.mrb[0].mxu0
  %v1711 = vpop.f32.mrb[0].mxu0
  %v1712 = vadd.f32 0.0, %v1711
  %v1713 = vpop.f32.mrb[0].mxu0
  %1714 = vdwg.mxu0
  %1715 = vmatprep.subr.bf16.mxu0 0
  %1716 = vmatpush1.bf16.msra.mxu0 %v847
  %1717 = vmatprep.subr.bf16.mxu0 0
  %1718 = vmatpush1.bf16.msra.mxu0 %v848
  %1719 = vmatprep.subr.bf16.mxu0 0
  %1720 = vmatpush1.bf16.msra.mxu0 %v849
  %1721 = vmatprep.subr.bf16.mxu0 0
  %1722 = vmatpush1.bf16.msra.mxu0 %v850
  %1723 = vmatprep.subr.bf16.mxu0 0
  %1724 = vmatpush1.bf16.msra.mxu0 %v851
  %1725 = vmatprep.subr.bf16.mxu0 0
  %1726 = vmatpush1.bf16.msra.mxu0 %v852
  %1727 = vmatprep.subr.bf16.mxu0 0
  %1728 = vmatpush1.bf16.msra.mxu0 %v853
  %1729 = vmatprep.subr.bf16.mxu0 0
  %1730 = vmatpush1.bf16.msra.mxu0 %v854
  %1731 = vmatprep.subr.bf16.mxu0 0
  %1732 = vmatpush1.bf16.msra.mxu0 %v855
  %1733 = vmatprep.subr.bf16.mxu0 0
  %1734 = vmatpush1.bf16.msra.mxu0 %v856
  %1735 = vmatprep.subr.bf16.mxu0 0
  %1736 = vmatpush1.bf16.msra.mxu0 %v857
  %1737 = vmatprep.subr.bf16.mxu0 0
  %1738 = vmatpush1.bf16.msra.mxu0 %v858
  %1739 = vmatprep.subr.bf16.mxu0 0
  %1740 = vmatpush1.bf16.msra.mxu0 %v859
  %1741 = vmatprep.subr.bf16.mxu0 0
  %1742 = vmatpush1.bf16.msra.mxu0 %v860
  %1743 = vmatprep.subr.bf16.mxu0 0
  %1744 = vmatpush1.bf16.msra.mxu0 %v861
  %1745 = vmatprep.subr.bf16.mxu0 0
  %1746 = vmatpush1.bf16.msra.mxu0 %v862
  %1747 = vmatprep.mubr.bf16.mxu0 %v1490
  %1748 = vmatmul.mubr.bf16.gmra.mrb[0].mxu0 %v515
  %v1749 = vpop.f32.mrb[0].mxu0
  %v1750 = vadd.f32 %v1589, %v1749
  %v1751 = vpop.f32.mrb[0].mxu0
  %v1752 = vpop.f32.mrb[0].mxu0
  %v1753 = vadd.f32 %v1592, %v1752
  %v1754 = vpop.f32.mrb[0].mxu0
  %1755 = vmatprep.mubr.bf16.mxu0 %v1492
  %1756 = vmatmul.mubr.bf16.gmra.mrb[0].mxu0 %v520
  %v1757 = vpop.f32.mrb[0].mxu0
  %v1758 = vadd.f32 %v1597, %v1757
  %v1759 = vpop.f32.mrb[0].mxu0
  %v1760 = vpop.f32.mrb[0].mxu0
  %v1761 = vadd.f32 %v1600, %v1760
  %v1762 = vpop.f32.mrb[0].mxu0
  %1763 = vmatprep.mubr.bf16.mxu0 %v1494
  %1764 = vmatmul.mubr.bf16.gmra.mrb[0].mxu0 %v525
  %v1765 = vpop.f32.mrb[0].mxu0
  %v1766 = vadd.f32 %v1605, %v1765
  %v1767 = vpop.f32.mrb[0].mxu0
  %v1768 = vpop.f32.mrb[0].mxu0
  %v1769 = vadd.f32 %v1608, %v1768
  %v1770 = vpop.f32.mrb[0].mxu0
  %1771 = vmatprep.mubr.bf16.mxu0 %v1496
  %1772 = vmatmul.mubr.bf16.gmra.mrb[0].mxu0 %v530
  %v1773 = vpop.f32.mrb[0].mxu0
  %v1774 = vadd.f32 %v1613, %v1773
  %v1775 = vpop.f32.mrb[0].mxu0
  %v1776 = vpop.f32.mrb[0].mxu0
  %v1777 = vadd.f32 %v1616, %v1776
  %v1778 = vpop.f32.mrb[0].mxu0
  %1779 = vmatprep.mubr.bf16.mxu0 %v1498
  %1780 = vmatmul.mubr.bf16.gmra.mrb[0].mxu0 %v535
  %v1781 = vpop.f32.mrb[0].mxu0
  %v1782 = vadd.f32 %v1621, %v1781
  %v1783 = vpop.f32.mrb[0].mxu0
  %v1784 = vpop.f32.mrb[0].mxu0
  %v1785 = vadd.f32 %v1624, %v1784
  %v1786 = vpop.f32.mrb[0].mxu0
  %1787 = vmatprep.mubr.bf16.mxu0 %v1500
  %1788 = vmatmul.mubr.bf16.gmra.mrb[0].mxu0 %v540
  %v1789 = vpop.f32.mrb[0].mxu0
  %v1790 = vadd.f32 %v1629, %v1789
  %v1791 = vpop.f32.mrb[0].mxu0
  %v1792 = vpop.f32.mrb[0].mxu0
  %v1793 = vadd.f32 %v1632, %v1792
  %v1794 = vpop.f32.mrb[0].mxu0
  %1795 = vmatprep.mubr.bf16.mxu0 %v1502
  %1796 = vmatmul.mubr.bf16.gmra.mrb[0].mxu0 %v545
  %v1797 = vpop.f32.mrb[0].mxu0
  %v1798 = vadd.f32 %v1637, %v1797
  %v1799 = vpop.f32.mrb[0].mxu0
  %v1800 = vpop.f32.mrb[0].mxu0
  %v1801 = vadd.f32 %v1640, %v1800
  %v1802 = vpop.f32.mrb[0].mxu0
  %1803 = vmatprep.mubr.bf16.mxu0 %v1504
  %1804 = vmatmul.mubr.bf16.gmra.mrb[0].mxu0 %v550
  %v1805 = vpop.f32.mrb[0].mxu0
  %v1806 = vadd.f32 %v1645, %v1805
  %v1807 = vpop.f32.mrb[0].mxu0
  %v1808 = vpop.f32.mrb[0].mxu0
  %v1809 = vadd.f32 %v1648, %v1808
  %v1810 = vpop.f32.mrb[0].mxu0
  %1811 = vmatprep.mubr.bf16.mxu0 %v1506
  %1812 = vmatmul.mubr.bf16.gmra.mrb[0].mxu0 %v555
  %v1813 = vpop.f32.mrb[0].mxu0
  %v1814 = vadd.f32 %v1653, %v1813
  %v1815 = vpop.f32.mrb[0].mxu0
  %v1816 = vpop.f32.mrb[0].mxu0
  %v1817 = vadd.f32 %v1656, %v1816
  %v1818 = vpop.f32.mrb[0].mxu0
  %1819 = vmatprep.mubr.bf16.mxu0 %v1508
  %1820 = vmatmul.mubr.bf16.gmra.mrb[0].mxu0 %v560
  %v1821 = vpop.f32.mrb[0].mxu0
  %v1822 = vadd.f32 %v1661, %v1821
  %v1823 = vpop.f32.mrb[0].mxu0
  %v1824 = vpop.f32.mrb[0].mxu0
  %v1825 = vadd.f32 %v1664, %v1824
  %v1826 = vpop.f32.mrb[0].mxu0
  %1827 = vmatprep.mubr.bf16.mxu0 %v1510
  %1828 = vmatmul.mubr.bf16.gmra.mrb[0].mxu0 %v565
  %v1829 = vpop.f32.mrb[0].mxu0
  %v1830 = vadd.f32 %v1669, %v1829
  %v1831 = vpop.f32.mrb[0].mxu0
  %v1832 = vpop.f32.mrb[0].mxu0
  %v1833 = vadd.f32 %v1672, %v1832
  %v1834 = vpop.f32.mrb[0].mxu0
  %1835 = vmatprep.mubr.bf16.mxu0 %v1512
  %1836 = vmatmul.mubr.bf16.gmra.mrb[0].mxu0 %v570
  %v1837 = vpop.f32.mrb[0].mxu0
  %v1838 = vadd.f32 %v1677, %v1837
  %v1839 = vpop.f32.mrb[0].mxu0
  %v1840 = vpop.f32.mrb[0].mxu0
  %v1841 = vadd.f32 %v1680, %v1840
  %v1842 = vpop.f32.mrb[0].mxu0
  %1843 = vmatprep.mubr.bf16.mxu0 %v1514
  %1844 = vmatmul.mubr.bf16.gmra.mrb[0].mxu0 %v575
  %v1845 = vpop.f32.mrb[0].mxu0
  %v1846 = vadd.f32 %v1685, %v1845
  %v1847 = vpop.f32.mrb[0].mxu0
  %v1848 = vpop.f32.mrb[0].mxu0
  %v1849 = vadd.f32 %v1688, %v1848
  %v1850 = vpop.f32.mrb[0].mxu0
  %1851 = vmatprep.mubr.bf16.mxu0 %v1516
  %1852 = vmatmul.mubr.bf16.gmra.mrb[0].mxu0 %v580
  %v1853 = vpop.f32.mrb[0].mxu0
  %v1854 = vadd.f32 %v1693, %v1853
  %v1855 = vpop.f32.mrb[0].mxu0
  %v1856 = vpop.f32.mrb[0].mxu0
  %v1857 = vadd.f32 %v1696, %v1856
  %v1858 = vpop.f32.mrb[0].mxu0
  %1859 = vmatprep.mubr.bf16.mxu0 %v1518
  %1860 = vmatmul.mubr.bf16.gmra.mrb[0].mxu0 %v585
  %v1861 = vpop.f32.mrb[0].mxu0
  %v1862 = vadd.f32 %v1701, %v1861
  %v1863 = vpop.f32.mrb[0].mxu0
  %v1864 = vpop.f32.mrb[0].mxu0
  %v1865 = vadd.f32 %v1704, %v1864
  %v1866 = vpop.f32.mrb[0].mxu0
  %1867 = vmatprep.mubr.bf16.mxu0 %v1520
  %1868 = vmatmul.mubr.bf16.gmra.mrb[0].mxu0 %v590
  %v1869 = vpop.f32.mrb[0].mxu0
  %v1870 = vadd.f32 %v1709, %v1869
  %v1871 = vpop.f32.mrb[0].mxu0
  %v1872 = vpop.f32.mrb[0].mxu0
  %v1873 = vadd.f32 %v1712, %v1872
  %v1874 = vpop.f32.mrb[0].mxu0
  %1875 = vdwg.mxu0
  %1876 = vmatprep.subr.bf16.mxu0 0
  %1877 = vmatpush1.bf16.msra.mxu0 %v863
  %1878 = vmatprep.subr.bf16.mxu0 0
  %1879 = vmatpush1.bf16.msra.mxu0 %v864
  %1880 = vmatprep.subr.bf16.mxu0 0
  %1881 = vmatpush1.bf16.msra.mxu0 %v865
  %1882 = vmatprep.subr.bf16.mxu0 0
  %1883 = vmatpush1.bf16.msra.mxu0 %v866
  %1884 = vmatprep.subr.bf16.mxu0 0
  %1885 = vmatpush1.bf16.msra.mxu0 %v867
  %1886 = vmatprep.subr.bf16.mxu0 0
  %1887 = vmatpush1.bf16.msra.mxu0 %v868
  %1888 = vmatprep.subr.bf16.mxu0 0
  %1889 = vmatpush1.bf16.msra.mxu0 %v869
  %1890 = vmatprep.subr.bf16.mxu0 0
  %1891 = vmatpush1.bf16.msra.mxu0 %v870
  %1892 = vmatprep.subr.bf16.mxu0 0
  %1893 = vmatpush1.bf16.msra.mxu0 0
  %1894 = vmatprep.subr.bf16.mxu0 0
  %1895 = vmatpush1.bf16.msra.mxu0 0
  %1896 = vmatprep.subr.bf16.mxu0 0
  %1897 = vmatpush1.bf16.msra.mxu0 0
  %1898 = vmatprep.subr.bf16.mxu0 0
  %1899 = vmatpush1.bf16.msra.mxu0 0
  %1900 = vmatprep.subr.bf16.mxu0 0
  %1901 = vmatpush1.bf16.msra.mxu0 0
  %1902 = vmatprep.subr.bf16.mxu0 0
  %1903 = vmatpush1.bf16.msra.mxu0 0
  %1904 = vmatprep.subr.bf16.mxu0 0
  %1905 = vmatpush1.bf16.msra.mxu0 0
  %1906 = vmatprep.subr.bf16.mxu0 0
  %1907 = vmatpush1.bf16.msra.mxu0 0
  %1908 = vmatprep.mubr.bf16.mxu0 0
  %1909 = vmatmul.mubr.bf16.gmra.mrb[0].mxu0 %v1491
  %v1910 = vpop.f32.mrb[0].mxu0
  %v1911 = vadd.f32 %v1750, %v1910
  %v1912 = vpop.f32.mrb[0].mxu0
  %v1913 = vpop.f32.mrb[0].mxu0
  %v1914 = vadd.f32 %v1753, %v1913
  %v1915 = vpop.f32.mrb[0].mxu0
  %1916 = vmatprep.mubr.bf16.mxu0 0
  %1917 = vmatmul.mubr.bf16.gmra.mrb[0].mxu0 %v1493
  %v1918 = vpop.f32.mrb[0].mxu0
  %v1919 = vadd.f32 %v1758, %v1918
  %v1920 = vpop.f32.mrb[0].mxu0
  %v1921 = vpop.f32.mrb[0].mxu0
  %v1922 = vadd.f32 %v1761, %v1921
  %v1923 = vpop.f32.mrb[0].mxu0
  %1924 = vmatprep.mubr.bf16.mxu0 0
  %1925 = vmatmul.mubr.bf16.gmra.mrb[0].mxu0 %v1495
  %v1926 = vpop.f32.mrb[0].mxu0
  %v1927 = vadd.f32 %v1766, %v1926
  %v1928 = vpop.f32.mrb[0].mxu0
  %v1929 = vpop.f32.mrb[0].mxu0
  %v1930 = vadd.f32 %v1769, %v1929
  %v1931 = vpop.f32.mrb[0].mxu0
  %1932 = vmatprep.mubr.bf16.mxu0 0
  %1933 = vmatmul.mubr.bf16.gmra.mrb[0].mxu0 %v1497
  %v1934 = vpop.f32.mrb[0].mxu0
  %v1935 = vadd.f32 %v1774, %v1934
  %v1936 = vpop.f32.mrb[0].mxu0
  %v1937 = vpop.f32.mrb[0].mxu0
  %v1938 = vadd.f32 %v1777, %v1937
  %v1939 = vpop.f32.mrb[0].mxu0
  %1940 = vmatprep.mubr.bf16.mxu0 0
  %1941 = vmatmul.mubr.bf16.gmra.mrb[0].mxu0 %v1499
  %v1942 = vpop.f32.mrb[0].mxu0
  %v1943 = vadd.f32 %v1782, %v1942
  %v1944 = vpop.f32.mrb[0].mxu0
  %v1945 = vpop.f32.mrb[0].mxu0
  %v1946 = vadd.f32 %v1785, %v1945
  %v1947 = vpop.f32.mrb[0].mxu0
  %1948 = vmatprep.mubr.bf16.mxu0 0
  %1949 = vmatmul.mubr.bf16.gmra.mrb[0].mxu0 %v1501
  %v1950 = vpop.f32.mrb[0].mxu0
  %v1951 = vadd.f32 %v1790, %v1950
  %v1952 = vpop.f32.mrb[0].mxu0
  %v1953 = vpop.f32.mrb[0].mxu0
  %v1954 = vadd.f32 %v1793, %v1953
  %v1955 = vpop.f32.mrb[0].mxu0
  %1956 = vmatprep.mubr.bf16.mxu0 0
  %1957 = vmatmul.mubr.bf16.gmra.mrb[0].mxu0 %v1503
  %v1958 = vpop.f32.mrb[0].mxu0
  %v1959 = vadd.f32 %v1798, %v1958
  %v1960 = vpop.f32.mrb[0].mxu0
  %v1961 = vpop.f32.mrb[0].mxu0
  %v1962 = vadd.f32 %v1801, %v1961
  %v1963 = vpop.f32.mrb[0].mxu0
  %1964 = vmatprep.mubr.bf16.mxu0 0
  %1965 = vmatmul.mubr.bf16.gmra.mrb[0].mxu0 %v1505
  %v1966 = vpop.f32.mrb[0].mxu0
  %v1967 = vadd.f32 %v1806, %v1966
  %v1968 = vpop.f32.mrb[0].mxu0
  %v1969 = vpop.f32.mrb[0].mxu0
  %v1970 = vadd.f32 %v1809, %v1969
  %v1971 = vpop.f32.mrb[0].mxu0
  %1972 = vmatprep.mubr.bf16.mxu0 0
  %1973 = vmatmul.mubr.bf16.gmra.mrb[0].mxu0 %v1507
  %v1974 = vpop.f32.mrb[0].mxu0
  %v1975 = vadd.f32 %v1814, %v1974
  %v1976 = vpop.f32.mrb[0].mxu0
  %v1977 = vpop.f32.mrb[0].mxu0
  %v1978 = vadd.f32 %v1817, %v1977
  %v1979 = vpop.f32.mrb[0].mxu0
  %1980 = vmatprep.mubr.bf16.mxu0 0
  %1981 = vmatmul.mubr.bf16.gmra.mrb[0].mxu0 %v1509
  %v1982 = vpop.f32.mrb[0].mxu0
  %v1983 = vadd.f32 %v1822, %v1982
  %v1984 = vpop.f32.mrb[0].mxu0
  %v1985 = vpop.f32.mrb[0].mxu0
  %v1986 = vadd.f32 %v1825, %v1985
  %v1987 = vpop.f32.mrb[0].mxu0
  %1988 = vmatprep.mubr.bf16.mxu0 0
  %1989 = vmatmul.mubr.bf16.gmra.mrb[0].mxu0 %v1511
  %v1990 = vpop.f32.mrb[0].mxu0
  %v1991 = vadd.f32 %v1830, %v1990
  %v1992 = vpop.f32.mrb[0].mxu0
  %v1993 = vpop.f32.mrb[0].mxu0
  %v1994 = vadd.f32 %v1833, %v1993
  %v1995 = vpop.f32.mrb[0].mxu0
  %1996 = vmatprep.mubr.bf16.mxu0 0
  %1997 = vmatmul.mubr.bf16.gmra.mrb[0].mxu0 %v1513
  %v1998 = vpop.f32.mrb[0].mxu0
  %v1999 = vadd.f32 %v1838, %v1998
  %v2000 = vpop.f32.mrb[0].mxu0
  %v2001 = vpop.f32.mrb[0].mxu0
  %v2002 = vadd.f32 %v1841, %v2001
  %v2003 = vpop.f32.mrb[0].mxu0
  %2004 = vmatprep.mubr.bf16.mxu0 0
  %2005 = vmatmul.mubr.bf16.gmra.mrb[0].mxu0 %v1515
  %v2006 = vpop.f32.mrb[0].mxu0
  %v2007 = vadd.f32 %v1846, %v2006
  %v2008 = vpop.f32.mrb[0].mxu0
  %v2009 = vpop.f32.mrb[0].mxu0
  %v2010 = vadd.f32 %v1849, %v2009
  %v2011 = vpop.f32.mrb[0].mxu0
  %2012 = vmatprep.mubr.bf16.mxu0 0
  %2013 = vmatmul.mubr.bf16.gmra.mrb[0].mxu0 %v1517
  %v2014 = vpop.f32.mrb[0].mxu0
  %v2015 = vadd.f32 %v1854, %v2014
  %v2016 = vpop.f32.mrb[0].mxu0
  %v2017 = vpop.f32.mrb[0].mxu0
  %v2018 = vadd.f32 %v1857, %v2017
  %v2019 = vpop.f32.mrb[0].mxu0
  %2020 = vmatprep.mubr.bf16.mxu0 0
  %2021 = vmatmul.mubr.bf16.gmra.mrb[0].mxu0 %v1519
  %v2022 = vpop.f32.mrb[0].mxu0
  %v2023 = vadd.f32 %v1862, %v2022
  %v2024 = vpop.f32.mrb[0].mxu0
  %v2025 = vpop.f32.mrb[0].mxu0
  %v2026 = vadd.f32 %v1865, %v2025
  %v2027 = vpop.f32.mrb[0].mxu0
  %2028 = vmatprep.mubr.bf16.mxu0 0
  %2029 = vmatmul.mubr.bf16.gmra.mrb[0].mxu0 %v1521
  %v2030 = vpop.f32.mrb[0].mxu0
  %v2031 = vadd.f32 %v1870, %v2030
  %v2032 = vpop.f32.mrb[0].mxu0
  %v2033 = vpop.f32.mrb[0].mxu0
  %v2034 = vadd.f32 %v1873, %v2033
  %v2035 = vpop.f32.mrb[0].mxu0
  %2036 = vdwg.mxu0
  %v2069 = vunpack.c.h.b16 %v18
  %v2070 = vunpack.c.l.b16 %v19
  %v2071 = vunpack.c.h.b16 %v23
  %v2072 = vunpack.c.l.b16 %v24
  %v2073 = vunpack.c.h.b16 %v28
  %v2074 = vunpack.c.l.b16 %v29
  %v2075 = vunpack.c.h.b16 %v33
  %v2076 = vunpack.c.l.b16 %v34
  %v2077 = vunpack.c.h.b16 %v38
  %v2078 = vunpack.c.l.b16 %v39
  %v2079 = vunpack.c.h.b16 %v43
  %v2080 = vunpack.c.l.b16 %v44
  %v2081 = vunpack.c.h.b16 %v48
  %v2082 = vunpack.c.l.b16 %v49
  %v2083 = vunpack.c.h.b16 %v53
  %v2084 = vunpack.c.l.b16 %v54
  %v2085 = vunpack.c.h.b16 %v58
  %v2086 = vunpack.c.l.b16 %v59
  %v2087 = vunpack.c.h.b16 %v63
  %v2088 = vunpack.c.l.b16 %v64
  %v2089 = vunpack.c.h.b16 %v68
  %v2090 = vunpack.c.l.b16 %v69
  %v2091 = vunpack.c.h.b16 %v73
  %v2092 = vunpack.c.l.b16 %v74
  %v2093 = vunpack.c.h.b16 %v78
  %v2094 = vunpack.c.l.b16 %v79
  %v2095 = vunpack.c.h.b16 %v83
  %v2096 = vunpack.c.l.b16 %v84
  %v2097 = vunpack.c.h.b16 %v88
  %v2098 = vunpack.c.l.b16 %v89
  %v2099 = vunpack.c.h.b16 %v93
  %v2100 = vunpack.c.l.b16 %v94
  %v2101 = vunpack.c.h.b16 %v98
  %v2102 = vunpack.c.l.b16 %v99
  %v2103 = vunpack.c.h.b16 %v103
  %v2104 = vunpack.c.l.b16 %v104
  %v2105 = vunpack.c.h.b16 %v108
  %v2106 = vunpack.c.l.b16 %v109
  %v2107 = vunpack.c.h.b16 %v113
  %v2108 = vunpack.c.l.b16 %v114
  %v2109 = vunpack.c.h.b16 %v118
  %v2110 = vunpack.c.l.b16 %v119
  %v2111 = vunpack.c.h.b16 %v123
  %v2112 = vunpack.c.l.b16 %v124
  %v2113 = vunpack.c.h.b16 %v128
  %v2114 = vunpack.c.l.b16 %v129
  %v2115 = vunpack.c.h.b16 %v133
  %v2116 = vunpack.c.l.b16 %v134
  %v2117 = vunpack.c.h.b16 %v138
  %v2118 = vunpack.c.l.b16 %v139
  %v2119 = vunpack.c.h.b16 %v143
  %v2120 = vunpack.c.l.b16 %v144
  %v2121 = vunpack.c.h.b16 %v148
  %v2122 = vunpack.c.l.b16 %v149
  %v2123 = vunpack.c.h.b16 %v153
  %v2124 = vunpack.c.l.b16 %v154
  %v2125 = vunpack.c.h.b16 %v158
  %v2126 = vunpack.c.l.b16 %v159
  %v2127 = vunpack.c.h.b16 %v163
  %v2128 = vunpack.c.l.b16 %v164
  %v2129 = vunpack.c.h.b16 %v168
  %v2130 = vunpack.c.l.b16 %v169
  %v2131 = vunpack.c.h.b16 %v173
  %v2132 = vunpack.c.l.b16 %v174
  %v2133 = vpack.c.b16 %v2071, %v2069
  %v2134 = vpack.c.b16 %v2072, %v2070
  %v2135 = vpack.c.b16 %v2075, %v2073
  %v2136 = vpack.c.b16 %v2076, %v2074
  %v2137 = vpack.c.b16 %v2079, %v2077
  %v2138 = vpack.c.b16 %v2080, %v2078
  %v2139 = vpack.c.b16 %v2083, %v2081
  %v2140 = vpack.c.b16 %v2084, %v2082
  %v2141 = vpack.c.b16 %v2087, %v2085
  %v2142 = vpack.c.b16 %v2088, %v2086
  %v2143 = vpack.c.b16 %v2091, %v2089
  %v2144 = vpack.c.b16 %v2092, %v2090
  %v2145 = vpack.c.b16 %v2095, %v2093
  %v2146 = vpack.c.b16 %v2096, %v2094
  %v2147 = vpack.c.b16 %v2099, %v2097
  %v2148 = vpack.c.b16 %v2100, %v2098
  %v2149 = vpack.c.b16 %v2103, %v2101
  %v2150 = vpack.c.b16 %v2104, %v2102
  %v2151 = vpack.c.b16 %v2107, %v2105
  %v2152 = vpack.c.b16 %v2108, %v2106
  %v2153 = vpack.c.b16 %v2111, %v2109
  %v2154 = vpack.c.b16 %v2112, %v2110
  %v2155 = vpack.c.b16 %v2115, %v2113
  %v2156 = vpack.c.b16 %v2116, %v2114
  %v2157 = vpack.c.b16 %v2119, %v2117
  %v2158 = vpack.c.b16 %v2120, %v2118
  %v2159 = vpack.c.b16 %v2123, %v2121
  %v2160 = vpack.c.b16 %v2124, %v2122
  %v2161 = vpack.c.b16 %v2127, %v2125
  %v2162 = vpack.c.b16 %v2128, %v2126
  %v2163 = vpack.c.b16 %v2131, %v2129
  %v2164 = vpack.c.b16 %v2132, %v2130
  %2197 = vmatprep.subr.bf16.mxu0 0
  %2198 = vmatpush1.bf16.msra.mxu0 %v831
  %2199 = vmatprep.subr.bf16.mxu0 0
  %2200 = vmatpush1.bf16.msra.mxu0 %v832
  %2201 = vmatprep.subr.bf16.mxu0 0
  %2202 = vmatpush1.bf16.msra.mxu0 %v833
  %2203 = vmatprep.subr.bf16.mxu0 0
  %2204 = vmatpush1.bf16.msra.mxu0 %v834
  %2205 = vmatprep.subr.bf16.mxu0 0
  %2206 = vmatpush1.bf16.msra.mxu0 %v835
  %2207 = vmatprep.subr.bf16.mxu0 0
  %2208 = vmatpush1.bf16.msra.mxu0 %v836
  %2209 = vmatprep.subr.bf16.mxu0 0
  %2210 = vmatpush1.bf16.msra.mxu0 %v837
  %2211 = vmatprep.subr.bf16.mxu0 0
  %2212 = vmatpush1.bf16.msra.mxu0 %v838
  %2213 = vmatprep.subr.bf16.mxu0 0
  %2214 = vmatpush1.bf16.msra.mxu0 %v839
  %2215 = vmatprep.subr.bf16.mxu0 0
  %2216 = vmatpush1.bf16.msra.mxu0 %v840
  %2217 = vmatprep.subr.bf16.mxu0 0
  %2218 = vmatpush1.bf16.msra.mxu0 %v841
  %2219 = vmatprep.subr.bf16.mxu0 0
  %2220 = vmatpush1.bf16.msra.mxu0 %v842
  %2221 = vmatprep.subr.bf16.mxu0 0
  %2222 = vmatpush1.bf16.msra.mxu0 %v843
  %2223 = vmatprep.subr.bf16.mxu0 0
  %2224 = vmatpush1.bf16.msra.mxu0 %v844
  %2225 = vmatprep.subr.bf16.mxu0 0
  %2226 = vmatpush1.bf16.msra.mxu0 %v845
  %2227 = vmatprep.subr.bf16.mxu0 0
  %2228 = vmatpush1.bf16.msra.mxu0 %v846
  %2229 = vmatprep.mubr.bf16.mxu0 %v1490
  %2230 = vmatmul.mubr.bf16.gmra.mrb[0].mxu0 %v515
  %v2231 = vpop.f32.mrb[0].mxu0
  %v2232 = vadd.f32 0.0, %v2231
  %v2233 = vpop.f32.mrb[0].mxu0
  %v2234 = vpop.f32.mrb[0].mxu0
  %v2235 = vadd.f32 0.0, %v2234
  %v2236 = vpop.f32.mrb[0].mxu0
  %2237 = vmatprep.mubr.bf16.mxu0 %v1492
  %2238 = vmatmul.mubr.bf16.gmra.mrb[0].mxu0 %v520
  %v2239 = vpop.f32.mrb[0].mxu0
  %v2240 = vadd.f32 0.0, %v2239
  %v2241 = vpop.f32.mrb[0].mxu0
  %v2242 = vpop.f32.mrb[0].mxu0
  %v2243 = vadd.f32 0.0, %v2242
  %v2244 = vpop.f32.mrb[0].mxu0
  %2245 = vmatprep.mubr.bf16.mxu0 %v1494
  %2246 = vmatmul.mubr.bf16.gmra.mrb[0].mxu0 %v525
  %v2247 = vpop.f32.mrb[0].mxu0
  %v2248 = vadd.f32 0.0, %v2247
  %v2249 = vpop.f32.mrb[0].mxu0
  %v2250 = vpop.f32.mrb[0].mxu0
  %v2251 = vadd.f32 0.0, %v2250
  %v2252 = vpop.f32.mrb[0].mxu0
  %2253 = vmatprep.mubr.bf16.mxu0 %v1496
  %2254 = vmatmul.mubr.bf16.gmra.mrb[0].mxu0 %v530
  %v2255 = vpop.f32.mrb[0].mxu0
  %v2256 = vadd.f32 0.0, %v2255
  %v2257 = vpop.f32.mrb[0].mxu0
  %v2258 = vpop.f32.mrb[0].mxu0
  %v2259 = vadd.f32 0.0, %v2258
  %v2260 = vpop.f32.mrb[0].mxu0
  %2261 = vmatprep.mubr.bf16.mxu0 %v1498
  %2262 = vmatmul.mubr.bf16.gmra.mrb[0].mxu0 %v535
  %v2263 = vpop.f32.mrb[0].mxu0
  %v2264 = vadd.f32 0.0, %v2263
  %v2265 = vpop.f32.mrb[0].mxu0
  %v2266 = vpop.f32.mrb[0].mxu0
  %v2267 = vadd.f32 0.0, %v2266
  %v2268 = vpop.f32.mrb[0].mxu0
  %2269 = vmatprep.mubr.bf16.mxu0 %v1500
  %2270 = vmatmul.mubr.bf16.gmra.mrb[0].mxu0 %v540
  %v2271 = vpop.f32.mrb[0].mxu0
  %v2272 = vadd.f32 0.0, %v2271
  %v2273 = vpop.f32.mrb[0].mxu0
  %v2274 = vpop.f32.mrb[0].mxu0
  %v2275 = vadd.f32 0.0, %v2274
  %v2276 = vpop.f32.mrb[0].mxu0
  %2277 = vmatprep.mubr.bf16.mxu0 %v1502
  %2278 = vmatmul.mubr.bf16.gmra.mrb[0].mxu0 %v545
  %v2279 = vpop.f32.mrb[0].mxu0
  %v2280 = vadd.f32 0.0, %v2279
  %v2281 = vpop.f32.mrb[0].mxu0
  %v2282 = vpop.f32.mrb[0].mxu0
  %v2283 = vadd.f32 0.0, %v2282
  %v2284 = vpop.f32.mrb[0].mxu0
  %2285 = vmatprep.mubr.bf16.mxu0 %v1504
  %2286 = vmatmul.mubr.bf16.gmra.mrb[0].mxu0 %v550
  %v2287 = vpop.f32.mrb[0].mxu0
  %v2288 = vadd.f32 0.0, %v2287
  %v2289 = vpop.f32.mrb[0].mxu0
  %v2290 = vpop.f32.mrb[0].mxu0
  %v2291 = vadd.f32 0.0, %v2290
  %v2292 = vpop.f32.mrb[0].mxu0
  %2293 = vmatprep.mubr.bf16.mxu0 %v1506
  %2294 = vmatmul.mubr.bf16.gmra.mrb[0].mxu0 %v555
  %v2295 = vpop.f32.mrb[0].mxu0
  %v2296 = vadd.f32 0.0, %v2295
  %v2297 = vpop.f32.mrb[0].mxu0
  %v2298 = vpop.f32.mrb[0].mxu0
  %v2299 = vadd.f32 0.0, %v2298
  %v2300 = vpop.f32.mrb[0].mxu0
  %2301 = vmatprep.mubr.bf16.mxu0 %v1508
  %2302 = vmatmul.mubr.bf16.gmra.mrb[0].mxu0 %v560
  %v2303 = vpop.f32.mrb[0].mxu0
  %v2304 = vadd.f32 0.0, %v2303
  %v2305 = vpop.f32.mrb[0].mxu0
  %v2306 = vpop.f32.mrb[0].mxu0
  %v2307 = vadd.f32 0.0, %v2306
  %v2308 = vpop.f32.mrb[0].mxu0
  %2309 = vmatprep.mubr.bf16.mxu0 %v1510
  %2310 = vmatmul.mubr.bf16.gmra.mrb[0].mxu0 %v565
  %v2311 = vpop.f32.mrb[0].mxu0
  %v2312 = vadd.f32 0.0, %v2311
  %v2313 = vpop.f32.mrb[0].mxu0
  %v2314 = vpop.f32.mrb[0].mxu0
  %v2315 = vadd.f32 0.0, %v2314
  %v2316 = vpop.f32.mrb[0].mxu0
  %2317 = vmatprep.mubr.bf16.mxu0 %v1512
  %2318 = vmatmul.mubr.bf16.gmra.mrb[0].mxu0 %v570
  %v2319 = vpop.f32.mrb[0].mxu0
  %v2320 = vadd.f32 0.0, %v2319
  %v2321 = vpop.f32.mrb[0].mxu0
  %v2322 = vpop.f32.mrb[0].mxu0
  %v2323 = vadd.f32 0.0, %v2322
  %v2324 = vpop.f32.mrb[0].mxu0
  %2325 = vmatprep.mubr.bf16.mxu0 %v1514
  %2326 = vmatmul.mubr.bf16.gmra.mrb[0].mxu0 %v575
  %v2327 = vpop.f32.mrb[0].mxu0
  %v2328 = vadd.f32 0.0, %v2327
  %v2329 = vpop.f32.mrb[0].mxu0
  %v2330 = vpop.f32.mrb[0].mxu0
  %v2331 = vadd.f32 0.0, %v2330
  %v2332 = vpop.f32.mrb[0].mxu0
  %2333 = vmatprep.mubr.bf16.mxu0 %v1516
  %2334 = vmatmul.mubr.bf16.gmra.mrb[0].mxu0 %v580
  %v2335 = vpop.f32.mrb[0].mxu0
  %v2336 = vadd.f32 0.0, %v2335
  %v2337 = vpop.f32.mrb[0].mxu0
  %v2338 = vpop.f32.mrb[0].mxu0
  %v2339 = vadd.f32 0.0, %v2338
  %v2340 = vpop.f32.mrb[0].mxu0
  %2341 = vmatprep.mubr.bf16.mxu0 %v1518
  %2342 = vmatmul.mubr.bf16.gmra.mrb[0].mxu0 %v585
  %v2343 = vpop.f32.mrb[0].mxu0
  %v2344 = vadd.f32 0.0, %v2343
  %v2345 = vpop.f32.mrb[0].mxu0
  %v2346 = vpop.f32.mrb[0].mxu0
  %v2347 = vadd.f32 0.0, %v2346
  %v2348 = vpop.f32.mrb[0].mxu0
  %2349 = vmatprep.mubr.bf16.mxu0 %v1520
  %2350 = vmatmul.mubr.bf16.gmra.mrb[0].mxu0 %v590
  %v2351 = vpop.f32.mrb[0].mxu0
  %v2352 = vadd.f32 0.0, %v2351
  %v2353 = vpop.f32.mrb[0].mxu0
  %v2354 = vpop.f32.mrb[0].mxu0
  %v2355 = vadd.f32 0.0, %v2354
  %v2356 = vpop.f32.mrb[0].mxu0
  %2357 = vdwg.mxu0
  %2358 = vmatprep.subr.bf16.mxu0 0
  %2359 = vmatpush1.bf16.msra.mxu0 %v847
  %2360 = vmatprep.subr.bf16.mxu0 0
  %2361 = vmatpush1.bf16.msra.mxu0 %v848
  %2362 = vmatprep.subr.bf16.mxu0 0
  %2363 = vmatpush1.bf16.msra.mxu0 %v849
  %2364 = vmatprep.subr.bf16.mxu0 0
  %2365 = vmatpush1.bf16.msra.mxu0 %v850
  %2366 = vmatprep.subr.bf16.mxu0 0
  %2367 = vmatpush1.bf16.msra.mxu0 %v851
  %2368 = vmatprep.subr.bf16.mxu0 0
  %2369 = vmatpush1.bf16.msra.mxu0 %v852
  %2370 = vmatprep.subr.bf16.mxu0 0
  %2371 = vmatpush1.bf16.msra.mxu0 %v853
  %2372 = vmatprep.subr.bf16.mxu0 0
  %2373 = vmatpush1.bf16.msra.mxu0 %v854
  %2374 = vmatprep.subr.bf16.mxu0 0
  %2375 = vmatpush1.bf16.msra.mxu0 %v855
  %2376 = vmatprep.subr.bf16.mxu0 0
  %2377 = vmatpush1.bf16.msra.mxu0 %v856
  %2378 = vmatprep.subr.bf16.mxu0 0
  %2379 = vmatpush1.bf16.msra.mxu0 %v857
  %2380 = vmatprep.subr.bf16.mxu0 0
  %2381 = vmatpush1.bf16.msra.mxu0 %v858
  %2382 = vmatprep.subr.bf16.mxu0 0
  %2383 = vmatpush1.bf16.msra.mxu0 %v859
  %2384 = vmatprep.subr.bf16.mxu0 0
  %2385 = vmatpush1.bf16.msra.mxu0 %v860
  %2386 = vmatprep.subr.bf16.mxu0 0
  %2387 = vmatpush1.bf16.msra.mxu0 %v861
  %2388 = vmatprep.subr.bf16.mxu0 0
  %2389 = vmatpush1.bf16.msra.mxu0 %v862
  %2390 = vmatprep.mubr.bf16.mxu0 %v2133
  %2391 = vmatmul.mubr.bf16.gmra.mrb[0].mxu0 %v1491
  %v2392 = vpop.f32.mrb[0].mxu0
  %v2393 = vadd.f32 %v2232, %v2392
  %v2394 = vpop.f32.mrb[0].mxu0
  %v2395 = vpop.f32.mrb[0].mxu0
  %v2396 = vadd.f32 %v2235, %v2395
  %v2397 = vpop.f32.mrb[0].mxu0
  %2398 = vmatprep.mubr.bf16.mxu0 %v2135
  %2399 = vmatmul.mubr.bf16.gmra.mrb[0].mxu0 %v1493
  %v2400 = vpop.f32.mrb[0].mxu0
  %v2401 = vadd.f32 %v2240, %v2400
  %v2402 = vpop.f32.mrb[0].mxu0
  %v2403 = vpop.f32.mrb[0].mxu0
  %v2404 = vadd.f32 %v2243, %v2403
  %v2405 = vpop.f32.mrb[0].mxu0
  %2406 = vmatprep.mubr.bf16.mxu0 %v2137
  %2407 = vmatmul.mubr.bf16.gmra.mrb[0].mxu0 %v1495
  %v2408 = vpop.f32.mrb[0].mxu0
  %v2409 = vadd.f32 %v2248, %v2408
  %v2410 = vpop.f32.mrb[0].mxu0
  %v2411 = vpop.f32.mrb[0].mxu0
  %v2412 = vadd.f32 %v2251, %v2411
  %v2413 = vpop.f32.mrb[0].mxu0
  %2414 = vmatprep.mubr.bf16.mxu0 %v2139
  %2415 = vmatmul.mubr.bf16.gmra.mrb[0].mxu0 %v1497
  %v2416 = vpop.f32.mrb[0].mxu0
  %v2417 = vadd.f32 %v2256, %v2416
  %v2418 = vpop.f32.mrb[0].mxu0
  %v2419 = vpop.f32.mrb[0].mxu0
  %v2420 = vadd.f32 %v2259, %v2419
  %v2421 = vpop.f32.mrb[0].mxu0
  %2422 = vmatprep.mubr.bf16.mxu0 %v2141
  %2423 = vmatmul.mubr.bf16.gmra.mrb[0].mxu0 %v1499
  %v2424 = vpop.f32.mrb[0].mxu0
  %v2425 = vadd.f32 %v2264, %v2424
  %v2426 = vpop.f32.mrb[0].mxu0
  %v2427 = vpop.f32.mrb[0].mxu0
  %v2428 = vadd.f32 %v2267, %v2427
  %v2429 = vpop.f32.mrb[0].mxu0
  %2430 = vmatprep.mubr.bf16.mxu0 %v2143
  %2431 = vmatmul.mubr.bf16.gmra.mrb[0].mxu0 %v1501
  %v2432 = vpop.f32.mrb[0].mxu0
  %v2433 = vadd.f32 %v2272, %v2432
  %v2434 = vpop.f32.mrb[0].mxu0
  %v2435 = vpop.f32.mrb[0].mxu0
  %v2436 = vadd.f32 %v2275, %v2435
  %v2437 = vpop.f32.mrb[0].mxu0
  %2438 = vmatprep.mubr.bf16.mxu0 %v2145
  %2439 = vmatmul.mubr.bf16.gmra.mrb[0].mxu0 %v1503
  %v2440 = vpop.f32.mrb[0].mxu0
  %v2441 = vadd.f32 %v2280, %v2440
  %v2442 = vpop.f32.mrb[0].mxu0
  %v2443 = vpop.f32.mrb[0].mxu0
  %v2444 = vadd.f32 %v2283, %v2443
  %v2445 = vpop.f32.mrb[0].mxu0
  %2446 = vmatprep.mubr.bf16.mxu0 %v2147
  %2447 = vmatmul.mubr.bf16.gmra.mrb[0].mxu0 %v1505
  %v2448 = vpop.f32.mrb[0].mxu0
  %v2449 = vadd.f32 %v2288, %v2448
  %v2450 = vpop.f32.mrb[0].mxu0
  %v2451 = vpop.f32.mrb[0].mxu0
  %v2452 = vadd.f32 %v2291, %v2451
  %v2453 = vpop.f32.mrb[0].mxu0
  %2454 = vmatprep.mubr.bf16.mxu0 %v2149
  %2455 = vmatmul.mubr.bf16.gmra.mrb[0].mxu0 %v1507
  %v2456 = vpop.f32.mrb[0].mxu0
  %v2457 = vadd.f32 %v2296, %v2456
  %v2458 = vpop.f32.mrb[0].mxu0
  %v2459 = vpop.f32.mrb[0].mxu0
  %v2460 = vadd.f32 %v2299, %v2459
  %v2461 = vpop.f32.mrb[0].mxu0
  %2462 = vmatprep.mubr.bf16.mxu0 %v2151
  %2463 = vmatmul.mubr.bf16.gmra.mrb[0].mxu0 %v1509
  %v2464 = vpop.f32.mrb[0].mxu0
  %v2465 = vadd.f32 %v2304, %v2464
  %v2466 = vpop.f32.mrb[0].mxu0
  %v2467 = vpop.f32.mrb[0].mxu0
  %v2468 = vadd.f32 %v2307, %v2467
  %v2469 = vpop.f32.mrb[0].mxu0
  %2470 = vmatprep.mubr.bf16.mxu0 %v2153
  %2471 = vmatmul.mubr.bf16.gmra.mrb[0].mxu0 %v1511
  %v2472 = vpop.f32.mrb[0].mxu0
  %v2473 = vadd.f32 %v2312, %v2472
  %v2474 = vpop.f32.mrb[0].mxu0
  %v2475 = vpop.f32.mrb[0].mxu0
  %v2476 = vadd.f32 %v2315, %v2475
  %v2477 = vpop.f32.mrb[0].mxu0
  %2478 = vmatprep.mubr.bf16.mxu0 %v2155
  %2479 = vmatmul.mubr.bf16.gmra.mrb[0].mxu0 %v1513
  %v2480 = vpop.f32.mrb[0].mxu0
  %v2481 = vadd.f32 %v2320, %v2480
  %v2482 = vpop.f32.mrb[0].mxu0
  %v2483 = vpop.f32.mrb[0].mxu0
  %v2484 = vadd.f32 %v2323, %v2483
  %v2485 = vpop.f32.mrb[0].mxu0
  %2486 = vmatprep.mubr.bf16.mxu0 %v2157
  %2487 = vmatmul.mubr.bf16.gmra.mrb[0].mxu0 %v1515
  %v2488 = vpop.f32.mrb[0].mxu0
  %v2489 = vadd.f32 %v2328, %v2488
  %v2490 = vpop.f32.mrb[0].mxu0
  %v2491 = vpop.f32.mrb[0].mxu0
  %v2492 = vadd.f32 %v2331, %v2491
  %v2493 = vpop.f32.mrb[0].mxu0
  %2494 = vmatprep.mubr.bf16.mxu0 %v2159
  %2495 = vmatmul.mubr.bf16.gmra.mrb[0].mxu0 %v1517
  %v2496 = vpop.f32.mrb[0].mxu0
  %v2497 = vadd.f32 %v2336, %v2496
  %v2498 = vpop.f32.mrb[0].mxu0
  %v2499 = vpop.f32.mrb[0].mxu0
  %v2500 = vadd.f32 %v2339, %v2499
  %v2501 = vpop.f32.mrb[0].mxu0
  %2502 = vmatprep.mubr.bf16.mxu0 %v2161
  %2503 = vmatmul.mubr.bf16.gmra.mrb[0].mxu0 %v1519
  %v2504 = vpop.f32.mrb[0].mxu0
  %v2505 = vadd.f32 %v2344, %v2504
  %v2506 = vpop.f32.mrb[0].mxu0
  %v2507 = vpop.f32.mrb[0].mxu0
  %v2508 = vadd.f32 %v2347, %v2507
  %v2509 = vpop.f32.mrb[0].mxu0
  %2510 = vmatprep.mubr.bf16.mxu0 %v2163
  %2511 = vmatmul.mubr.bf16.gmra.mrb[0].mxu0 %v1521
  %v2512 = vpop.f32.mrb[0].mxu0
  %v2513 = vadd.f32 %v2352, %v2512
  %v2514 = vpop.f32.mrb[0].mxu0
  %v2515 = vpop.f32.mrb[0].mxu0
  %v2516 = vadd.f32 %v2355, %v2515
  %v2517 = vpop.f32.mrb[0].mxu0
  %2518 = vdwg.mxu0
  %2519 = vmatprep.subr.bf16.mxu0 0
  %2520 = vmatpush1.bf16.msra.mxu0 %v863
  %2521 = vmatprep.subr.bf16.mxu0 0
  %2522 = vmatpush1.bf16.msra.mxu0 %v864
  %2523 = vmatprep.subr.bf16.mxu0 0
  %2524 = vmatpush1.bf16.msra.mxu0 %v865
  %2525 = vmatprep.subr.bf16.mxu0 0
  %2526 = vmatpush1.bf16.msra.mxu0 %v866
  %2527 = vmatprep.subr.bf16.mxu0 0
  %2528 = vmatpush1.bf16.msra.mxu0 %v867
  %2529 = vmatprep.subr.bf16.mxu0 0
  %2530 = vmatpush1.bf16.msra.mxu0 %v868
  %2531 = vmatprep.subr.bf16.mxu0 0
  %2532 = vmatpush1.bf16.msra.mxu0 %v869
  %2533 = vmatprep.subr.bf16.mxu0 0
  %2534 = vmatpush1.bf16.msra.mxu0 %v870
  %2535 = vmatprep.subr.bf16.mxu0 0
  %2536 = vmatpush1.bf16.msra.mxu0 0
  %2537 = vmatprep.subr.bf16.mxu0 0
  %2538 = vmatpush1.bf16.msra.mxu0 0
  %2539 = vmatprep.subr.bf16.mxu0 0
  %2540 = vmatpush1.bf16.msra.mxu0 0
  %2541 = vmatprep.subr.bf16.mxu0 0
  %2542 = vmatpush1.bf16.msra.mxu0 0
  %2543 = vmatprep.subr.bf16.mxu0 0
  %2544 = vmatpush1.bf16.msra.mxu0 0
  %2545 = vmatprep.subr.bf16.mxu0 0
  %2546 = vmatpush1.bf16.msra.mxu0 0
  %2547 = vmatprep.subr.bf16.mxu0 0
  %2548 = vmatpush1.bf16.msra.mxu0 0
  %2549 = vmatprep.subr.bf16.mxu0 0
  %2550 = vmatpush1.bf16.msra.mxu0 0
  %2551 = vmatprep.mubr.bf16.mxu0 0
  %2552 = vmatmul.mubr.bf16.gmra.mrb[0].mxu0 %v2134
  %v2553 = vpop.f32.mrb[0].mxu0
  %v2554 = vadd.f32 %v2393, %v2553
  %v2555 = vpop.f32.mrb[0].mxu0
  %v2556 = vpop.f32.mrb[0].mxu0
  %v2557 = vadd.f32 %v2396, %v2556
  %v2558 = vpop.f32.mrb[0].mxu0
  %2559 = vmatprep.mubr.bf16.mxu0 0
  %2560 = vmatmul.mubr.bf16.gmra.mrb[0].mxu0 %v2136
  %v2561 = vpop.f32.mrb[0].mxu0
  %v2562 = vadd.f32 %v2401, %v2561
  %v2563 = vpop.f32.mrb[0].mxu0
  %v2564 = vpop.f32.mrb[0].mxu0
  %v2565 = vadd.f32 %v2404, %v2564
  %v2566 = vpop.f32.mrb[0].mxu0
  %2567 = vmatprep.mubr.bf16.mxu0 0
  %2568 = vmatmul.mubr.bf16.gmra.mrb[0].mxu0 %v2138
  %v2569 = vpop.f32.mrb[0].mxu0
  %v2570 = vadd.f32 %v2409, %v2569
  %v2571 = vpop.f32.mrb[0].mxu0
  %v2572 = vpop.f32.mrb[0].mxu0
  %v2573 = vadd.f32 %v2412, %v2572
  %v2574 = vpop.f32.mrb[0].mxu0
  %2575 = vmatprep.mubr.bf16.mxu0 0
  %2576 = vmatmul.mubr.bf16.gmra.mrb[0].mxu0 %v2140
  %v2577 = vpop.f32.mrb[0].mxu0
  %v2578 = vadd.f32 %v2417, %v2577
  %v2579 = vpop.f32.mrb[0].mxu0
  %v2580 = vpop.f32.mrb[0].mxu0
  %v2581 = vadd.f32 %v2420, %v2580
  %v2582 = vpop.f32.mrb[0].mxu0
  %2583 = vmatprep.mubr.bf16.mxu0 0
  %2584 = vmatmul.mubr.bf16.gmra.mrb[0].mxu0 %v2142
  %v2585 = vpop.f32.mrb[0].mxu0
  %v2586 = vadd.f32 %v2425, %v2585
  %v2587 = vpop.f32.mrb[0].mxu0
  %v2588 = vpop.f32.mrb[0].mxu0
  %v2589 = vadd.f32 %v2428, %v2588
  %v2590 = vpop.f32.mrb[0].mxu0
  %2591 = vmatprep.mubr.bf16.mxu0 0
  %2592 = vmatmul.mubr.bf16.gmra.mrb[0].mxu0 %v2144
  %v2593 = vpop.f32.mrb[0].mxu0
  %v2594 = vadd.f32 %v2433, %v2593
  %v2595 = vpop.f32.mrb[0].mxu0
  %v2596 = vpop.f32.mrb[0].mxu0
  %v2597 = vadd.f32 %v2436, %v2596
  %v2598 = vpop.f32.mrb[0].mxu0
  %2599 = vmatprep.mubr.bf16.mxu0 0
  %2600 = vmatmul.mubr.bf16.gmra.mrb[0].mxu0 %v2146
  %v2601 = vpop.f32.mrb[0].mxu0
  %v2602 = vadd.f32 %v2441, %v2601
  %v2603 = vpop.f32.mrb[0].mxu0
  %v2604 = vpop.f32.mrb[0].mxu0
  %v2605 = vadd.f32 %v2444, %v2604
  %v2606 = vpop.f32.mrb[0].mxu0
  %2607 = vmatprep.mubr.bf16.mxu0 0
  %2608 = vmatmul.mubr.bf16.gmra.mrb[0].mxu0 %v2148
  %v2609 = vpop.f32.mrb[0].mxu0
  %v2610 = vadd.f32 %v2449, %v2609
  %v2611 = vpop.f32.mrb[0].mxu0
  %v2612 = vpop.f32.mrb[0].mxu0
  %v2613 = vadd.f32 %v2452, %v2612
  %v2614 = vpop.f32.mrb[0].mxu0
  %2615 = vmatprep.mubr.bf16.mxu0 0
  %2616 = vmatmul.mubr.bf16.gmra.mrb[0].mxu0 %v2150
  %v2617 = vpop.f32.mrb[0].mxu0
  %v2618 = vadd.f32 %v2457, %v2617
  %v2619 = vpop.f32.mrb[0].mxu0
  %v2620 = vpop.f32.mrb[0].mxu0
  %v2621 = vadd.f32 %v2460, %v2620
  %v2622 = vpop.f32.mrb[0].mxu0
  %2623 = vmatprep.mubr.bf16.mxu0 0
  %2624 = vmatmul.mubr.bf16.gmra.mrb[0].mxu0 %v2152
  %v2625 = vpop.f32.mrb[0].mxu0
  %v2626 = vadd.f32 %v2465, %v2625
  %v2627 = vpop.f32.mrb[0].mxu0
  %v2628 = vpop.f32.mrb[0].mxu0
  %v2629 = vadd.f32 %v2468, %v2628
  %v2630 = vpop.f32.mrb[0].mxu0
  %2631 = vmatprep.mubr.bf16.mxu0 0
  %2632 = vmatmul.mubr.bf16.gmra.mrb[0].mxu0 %v2154
  %v2633 = vpop.f32.mrb[0].mxu0
  %v2634 = vadd.f32 %v2473, %v2633
  %v2635 = vpop.f32.mrb[0].mxu0
  %v2636 = vpop.f32.mrb[0].mxu0
  %v2637 = vadd.f32 %v2476, %v2636
  %v2638 = vpop.f32.mrb[0].mxu0
  %2639 = vmatprep.mubr.bf16.mxu0 0
  %2640 = vmatmul.mubr.bf16.gmra.mrb[0].mxu0 %v2156
  %v2641 = vpop.f32.mrb[0].mxu0
  %v2642 = vadd.f32 %v2481, %v2641
  %v2643 = vpop.f32.mrb[0].mxu0
  %v2644 = vpop.f32.mrb[0].mxu0
  %v2645 = vadd.f32 %v2484, %v2644
  %v2646 = vpop.f32.mrb[0].mxu0
  %2647 = vmatprep.mubr.bf16.mxu0 0
  %2648 = vmatmul.mubr.bf16.gmra.mrb[0].mxu0 %v2158
  %v2649 = vpop.f32.mrb[0].mxu0
  %v2650 = vadd.f32 %v2489, %v2649
  %v2651 = vpop.f32.mrb[0].mxu0
  %v2652 = vpop.f32.mrb[0].mxu0
  %v2653 = vadd.f32 %v2492, %v2652
  %v2654 = vpop.f32.mrb[0].mxu0
  %2655 = vmatprep.mubr.bf16.mxu0 0
  %2656 = vmatmul.mubr.bf16.gmra.mrb[0].mxu0 %v2160
  %v2657 = vpop.f32.mrb[0].mxu0
  %v2658 = vadd.f32 %v2497, %v2657
  %v2659 = vpop.f32.mrb[0].mxu0
  %v2660 = vpop.f32.mrb[0].mxu0
  %v2661 = vadd.f32 %v2500, %v2660
  %v2662 = vpop.f32.mrb[0].mxu0
  %2663 = vmatprep.mubr.bf16.mxu0 0
  %2664 = vmatmul.mubr.bf16.gmra.mrb[0].mxu0 %v2162
  %v2665 = vpop.f32.mrb[0].mxu0
  %v2666 = vadd.f32 %v2505, %v2665
  %v2667 = vpop.f32.mrb[0].mxu0
  %v2668 = vpop.f32.mrb[0].mxu0
  %v2669 = vadd.f32 %v2508, %v2668
  %v2670 = vpop.f32.mrb[0].mxu0
  %2671 = vmatprep.mubr.bf16.mxu0 0
  %2672 = vmatmul.mubr.bf16.gmra.mrb[0].mxu0 %v2164
  %v2673 = vpop.f32.mrb[0].mxu0
  %v2674 = vadd.f32 %v2513, %v2673
  %v2675 = vpop.f32.mrb[0].mxu0
  %v2676 = vpop.f32.mrb[0].mxu0
  %v2677 = vadd.f32 %v2516, %v2676
  %v2678 = vpop.f32.mrb[0].mxu0
  %2679 = vdwg.mxu0
  %v2680 = vmax.f32 %v1268, %v1911
  %v2681 = vmax.f32 %v1271, %v1914
  %v2682 = vmax.f32 %v1276, %v1919
  %v2683 = vmax.f32 %v1279, %v1922
  %v2684 = vmax.f32 %v1284, %v1927
  %v2685 = vmax.f32 %v1287, %v1930
  %v2686 = vmax.f32 %v1292, %v1935
  %v2687 = vmax.f32 %v1295, %v1938
  %v2688 = vmax.f32 %v1300, %v1943
  %v2689 = vmax.f32 %v1303, %v1946
  %v2690 = vmax.f32 %v1308, %v1951
  %v2691 = vmax.f32 %v1311, %v1954
  %v2692 = vmax.f32 %v1316, %v1959
  %v2693 = vmax.f32 %v1319, %v1962
  %v2694 = vmax.f32 %v1324, %v1967
  %v2695 = vmax.f32 %v1327, %v1970
  %v2696 = vmax.f32 %v1332, %v1975
  %v2697 = vmax.f32 %v1335, %v1978
  %v2698 = vmax.f32 %v1340, %v1983
  %v2699 = vmax.f32 %v1343, %v1986
  %v2700 = vmax.f32 %v1348, %v1991
  %v2701 = vmax.f32 %v1351, %v1994
  %v2702 = vmax.f32 %v1356, %v1999
  %v2703 = vmax.f32 %v1359, %v2002
  %v2704 = vmax.f32 %v1364, %v2007
  %v2705 = vmax.f32 %v1367, %v2010
  %v2706 = vmax.f32 %v1372, %v2015
  %v2707 = vmax.f32 %v1375, %v2018
  %v2708 = vmax.f32 %v1380, %v2023
  %v2709 = vmax.f32 %v1383, %v2026
  %v2710 = vmax.f32 %v1388, %v2031
  %v2711 = vmax.f32 %v1391, %v2034
  %v2712 = vmax.f32 %v2680, %v2554
  %v2713 = vmax.f32 %v2681, %v2557
  %v2714 = vmax.f32 %v2682, %v2562
  %v2715 = vmax.f32 %v2683, %v2565
  %v2716 = vmax.f32 %v2684, %v2570
  %v2717 = vmax.f32 %v2685, %v2573
  %v2718 = vmax.f32 %v2686, %v2578
  %v2719 = vmax.f32 %v2687, %v2581
  %v2720 = vmax.f32 %v2688, %v2586
  %v2721 = vmax.f32 %v2689, %v2589
  %v2722 = vmax.f32 %v2690, %v2594
  %v2723 = vmax.f32 %v2691, %v2597
  %v2724 = vmax.f32 %v2692, %v2602
  %v2725 = vmax.f32 %v2693, %v2605
  %v2726 = vmax.f32 %v2694, %v2610
  %v2727 = vmax.f32 %v2695, %v2613
  %v2728 = vmax.f32 %v2696, %v2618
  %v2729 = vmax.f32 %v2697, %v2621
  %v2730 = vmax.f32 %v2698, %v2626
  %v2731 = vmax.f32 %v2699, %v2629
  %v2732 = vmax.f32 %v2700, %v2634
  %v2733 = vmax.f32 %v2701, %v2637
  %v2734 = vmax.f32 %v2702, %v2642
  %v2735 = vmax.f32 %v2703, %v2645
  %v2736 = vmax.f32 %v2704, %v2650
  %v2737 = vmax.f32 %v2705, %v2653
  %v2738 = vmax.f32 %v2706, %v2658
  %v2739 = vmax.f32 %v2707, %v2661
  %v2740 = vmax.f32 %v2708, %v2666
  %v2741 = vmax.f32 %v2709, %v2669
  %v2742 = vmax.f32 %v2710, %v2674
  %v2743 = vmax.f32 %v2711, %v2677
  %v2744 = vld [vmem:[%s2] sm:$0x1]
  %v2746 = vlaneseq
  %v2747 = vshrl.u32 %v2746, 7
  %v2748 = vsub.s32 0, %v2747
  %v2749 = vrot.slane %v2744, %v2748
  %v2751 = vadd.f32 %v2712, %v2749
  %v2752 = vadd.f32 %v2713, %v2749
  %v2753 = vadd.f32 %v2714, %v2749
  %v2754 = vadd.f32 %v2715, %v2749
  %v2755 = vadd.f32 %v2716, %v2749
  %v2756 = vadd.f32 %v2717, %v2749
  %v2757 = vadd.f32 %v2718, %v2749
  %v2758 = vadd.f32 %v2719, %v2749
  %v2759 = vadd.f32 %v2720, %v2749
  %v2760 = vadd.f32 %v2721, %v2749
  %v2761 = vadd.f32 %v2722, %v2749
  %v2762 = vadd.f32 %v2723, %v2749
  %v2763 = vadd.f32 %v2724, %v2749
  %v2764 = vadd.f32 %v2725, %v2749
  %v2765 = vadd.f32 %v2726, %v2749
  %v2766 = vadd.f32 %v2727, %v2749
  %v2767 = vadd.f32 %v2728, %v2749
  %v2768 = vadd.f32 %v2729, %v2749
  %v2769 = vadd.f32 %v2730, %v2749
  %v2770 = vadd.f32 %v2731, %v2749
  %v2771 = vadd.f32 %v2732, %v2749
  %v2772 = vadd.f32 %v2733, %v2749
  %v2773 = vadd.f32 %v2734, %v2749
  %v2774 = vadd.f32 %v2735, %v2749
  %v2775 = vadd.f32 %v2736, %v2749
  %v2776 = vadd.f32 %v2737, %v2749
  %v2777 = vadd.f32 %v2738, %v2749
  %v2778 = vadd.f32 %v2739, %v2749
  %v2779 = vadd.f32 %v2740, %v2749
  %v2780 = vadd.f32 %v2741, %v2749
  %v2781 = vadd.f32 %v2742, %v2749
  %v2782 = vadd.f32 %v2743, %v2749
  %vm2783 = vcmp.gt.f32.partialorder %v2751, 0.0
  %vm2784 = vcmp.gt.f32.partialorder %v2752, 0.0
  %vm2785 = vcmp.gt.f32.partialorder %v2753, 0.0
  %vm2786 = vcmp.gt.f32.partialorder %v2754, 0.0
  %vm2787 = vcmp.gt.f32.partialorder %v2755, 0.0
  %vm2788 = vcmp.gt.f32.partialorder %v2756, 0.0
  %vm2789 = vcmp.gt.f32.partialorder %v2757, 0.0
  %vm2790 = vcmp.gt.f32.partialorder %v2758, 0.0
  %vm2791 = vcmp.gt.f32.partialorder %v2759, 0.0
  %vm2792 = vcmp.gt.f32.partialorder %v2760, 0.0
  %vm2793 = vcmp.gt.f32.partialorder %v2761, 0.0
  %vm2794 = vcmp.gt.f32.partialorder %v2762, 0.0
  %vm2795 = vcmp.gt.f32.partialorder %v2763, 0.0
  %vm2796 = vcmp.gt.f32.partialorder %v2764, 0.0
  %vm2797 = vcmp.gt.f32.partialorder %v2765, 0.0
  %vm2798 = vcmp.gt.f32.partialorder %v2766, 0.0
  %vm2799 = vcmp.gt.f32.partialorder %v2767, 0.0
  %vm2800 = vcmp.gt.f32.partialorder %v2768, 0.0
  %vm2801 = vcmp.gt.f32.partialorder %v2769, 0.0
  %vm2802 = vcmp.gt.f32.partialorder %v2770, 0.0
  %vm2803 = vcmp.gt.f32.partialorder %v2771, 0.0
  %vm2804 = vcmp.gt.f32.partialorder %v2772, 0.0
  %vm2805 = vcmp.gt.f32.partialorder %v2773, 0.0
  %vm2806 = vcmp.gt.f32.partialorder %v2774, 0.0
  %vm2807 = vcmp.gt.f32.partialorder %v2775, 0.0
  %vm2808 = vcmp.gt.f32.partialorder %v2776, 0.0
  %vm2809 = vcmp.gt.f32.partialorder %v2777, 0.0
  %vm2810 = vcmp.gt.f32.partialorder %v2778, 0.0
  %vm2811 = vcmp.gt.f32.partialorder %v2779, 0.0
  %vm2812 = vcmp.gt.f32.partialorder %v2780, 0.0
  %vm2813 = vcmp.gt.f32.partialorder %v2781, 0.0
  %vm2814 = vcmp.gt.f32.partialorder %v2782, 0.0
  %v2815 = vmul.f32 %v2751, 0.01
  %v2816 = vmul.f32 %v2752, 0.01
  %v2817 = vmul.f32 %v2753, 0.01
  %v2818 = vmul.f32 %v2754, 0.01
  %v2819 = vmul.f32 %v2755, 0.01
  %v2820 = vmul.f32 %v2756, 0.01
  %v2821 = vmul.f32 %v2757, 0.01
  %v2822 = vmul.f32 %v2758, 0.01
  %v2823 = vmul.f32 %v2759, 0.01
  %v2824 = vmul.f32 %v2760, 0.01
  %v2825 = vmul.f32 %v2761, 0.01
  %v2826 = vmul.f32 %v2762, 0.01
  %v2827 = vmul.f32 %v2763, 0.01
  %v2828 = vmul.f32 %v2764, 0.01
  %v2829 = vmul.f32 %v2765, 0.01
  %v2830 = vmul.f32 %v2766, 0.01
  %v2831 = vmul.f32 %v2767, 0.01
  %v2832 = vmul.f32 %v2768, 0.01
  %v2833 = vmul.f32 %v2769, 0.01
  %v2834 = vmul.f32 %v2770, 0.01
  %v2835 = vmul.f32 %v2771, 0.01
  %v2836 = vmul.f32 %v2772, 0.01
  %v2837 = vmul.f32 %v2773, 0.01
  %v2838 = vmul.f32 %v2774, 0.01
  %v2839 = vmul.f32 %v2775, 0.01
  %v2840 = vmul.f32 %v2776, 0.01
  %v2841 = vmul.f32 %v2777, 0.01
  %v2842 = vmul.f32 %v2778, 0.01
  %v2843 = vmul.f32 %v2779, 0.01
  %v2844 = vmul.f32 %v2780, 0.01
  %v2845 = vmul.f32 %v2781, 0.01
  %v2846 = vmul.f32 %v2782, 0.01
  %v2847 = vsel %vm2783, %v2751, %v2815
  %v2848 = vsel %vm2784, %v2752, %v2816
  %v2849 = vsel %vm2785, %v2753, %v2817
  %v2850 = vsel %vm2786, %v2754, %v2818
  %v2851 = vsel %vm2787, %v2755, %v2819
  %v2852 = vsel %vm2788, %v2756, %v2820
  %v2853 = vsel %vm2789, %v2757, %v2821
  %v2854 = vsel %vm2790, %v2758, %v2822
  %v2855 = vsel %vm2791, %v2759, %v2823
  %v2856 = vsel %vm2792, %v2760, %v2824
  %v2857 = vsel %vm2793, %v2761, %v2825
  %v2858 = vsel %vm2794, %v2762, %v2826
  %v2859 = vsel %vm2795, %v2763, %v2827
  %v2860 = vsel %vm2796, %v2764, %v2828
  %v2861 = vsel %vm2797, %v2765, %v2829
  %v2862 = vsel %vm2798, %v2766, %v2830
  %v2863 = vsel %vm2799, %v2767, %v2831
  %v2864 = vsel %vm2800, %v2768, %v2832
  %v2865 = vsel %vm2801, %v2769, %v2833
  %v2866 = vsel %vm2802, %v2770, %v2834
  %v2867 = vsel %vm2803, %v2771, %v2835
  %v2868 = vsel %vm2804, %v2772, %v2836
  %v2869 = vsel %vm2805, %v2773, %v2837
  %v2870 = vsel %vm2806, %v2774, %v2838
  %v2871 = vsel %vm2807, %v2775, %v2839
  %v2872 = vsel %vm2808, %v2776, %v2840
  %v2873 = vsel %vm2809, %v2777, %v2841
  %v2874 = vsel %vm2810, %v2778, %v2842
  %v2875 = vsel %vm2811, %v2779, %v2843
  %v2876 = vsel %vm2812, %v2780, %v2844
  %v2877 = vsel %vm2813, %v2781, %v2845
  %v2878 = vsel %vm2814, %v2782, %v2846
  %v2879 = vpack.c.bf16 %v2848, %v2847
  %v2880 = vpack.c.bf16 %v2850, %v2849
  %v2881 = vpack.c.bf16 %v2852, %v2851
  %v2882 = vpack.c.bf16 %v2854, %v2853
  %v2883 = vpack.c.bf16 %v2856, %v2855
  %v2884 = vpack.c.bf16 %v2858, %v2857
  %v2885 = vpack.c.bf16 %v2860, %v2859
  %v2886 = vpack.c.bf16 %v2862, %v2861
  %v2887 = vpack.c.bf16 %v2864, %v2863
  %v2888 = vpack.c.bf16 %v2866, %v2865
  %v2889 = vpack.c.bf16 %v2868, %v2867
  %v2890 = vpack.c.bf16 %v2870, %v2869
  %v2891 = vpack.c.bf16 %v2872, %v2871
  %v2892 = vpack.c.bf16 %v2874, %v2873
  %v2893 = vpack.c.bf16 %v2876, %v2875
  %v2894 = vpack.c.bf16 %v2878, %v2877
  %v2911 = vunpack.c.l.b16 %v2879
  %v2912 = vunpack.c.h.b16 %v2879
  %v2913 = vunpack.c.l.b16 %v2880
  %v2914 = vunpack.c.h.b16 %v2880
  %v2915 = vunpack.c.l.b16 %v2881
  %v2916 = vunpack.c.h.b16 %v2881
  %v2917 = vunpack.c.l.b16 %v2882
  %v2918 = vunpack.c.h.b16 %v2882
  %v2919 = vunpack.c.l.b16 %v2883
  %v2920 = vunpack.c.h.b16 %v2883
  %v2921 = vunpack.c.l.b16 %v2884
  %v2922 = vunpack.c.h.b16 %v2884
  %v2923 = vunpack.c.l.b16 %v2885
  %v2924 = vunpack.c.h.b16 %v2885
  %v2925 = vunpack.c.l.b16 %v2886
  %v2926 = vunpack.c.h.b16 %v2886
  %v2927 = vunpack.c.l.b16 %v2887
  %v2928 = vunpack.c.h.b16 %v2887
  %v2929 = vunpack.c.l.b16 %v2888
  %v2930 = vunpack.c.h.b16 %v2888
  %v2931 = vunpack.c.l.b16 %v2889
  %v2932 = vunpack.c.h.b16 %v2889
  %v2933 = vunpack.c.l.b16 %v2890
  %v2934 = vunpack.c.h.b16 %v2890
  %v2935 = vunpack.c.l.b16 %v2891
  %v2936 = vunpack.c.h.b16 %v2891
  %v2937 = vunpack.c.l.b16 %v2892
  %v2938 = vunpack.c.h.b16 %v2892
  %v2939 = vunpack.c.l.b16 %v2893
  %v2940 = vunpack.c.h.b16 %v2893
  %v2941 = vunpack.c.l.b16 %v2894
  %v2942 = vunpack.c.h.b16 %v2894
  %v2943 = vpack.c.b16 %v2911, %v2911
  %v2944 = vpack.c.b16 %v2912, %v2912
  %v2945 = vpack.c.b16 %v2913, %v2913
  %v2946 = vpack.c.b16 %v2914, %v2914
  %v2947 = vpack.c.b16 %v2915, %v2915
  %v2948 = vpack.c.b16 %v2916, %v2916
  %v2949 = vpack.c.b16 %v2917, %v2917
  %v2950 = vpack.c.b16 %v2918, %v2918
  %v2951 = vpack.c.b16 %v2919, %v2919
  %v2952 = vpack.c.b16 %v2920, %v2920
  %v2953 = vpack.c.b16 %v2921, %v2921
  %v2954 = vpack.c.b16 %v2922, %v2922
  %v2955 = vpack.c.b16 %v2923, %v2923
  %v2956 = vpack.c.b16 %v2924, %v2924
  %v2957 = vpack.c.b16 %v2925, %v2925
  %v2958 = vpack.c.b16 %v2926, %v2926
  %v2959 = vpack.c.b16 %v2927, %v2927
  %v2960 = vpack.c.b16 %v2928, %v2928
  %v2961 = vpack.c.b16 %v2929, %v2929
  %v2962 = vpack.c.b16 %v2930, %v2930
  %v2963 = vpack.c.b16 %v2931, %v2931
  %v2964 = vpack.c.b16 %v2932, %v2932
  %v2965 = vpack.c.b16 %v2933, %v2933
  %v2966 = vpack.c.b16 %v2934, %v2934
  %v2967 = vpack.c.b16 %v2935, %v2935
  %v2968 = vpack.c.b16 %v2936, %v2936
  %v2969 = vpack.c.b16 %v2937, %v2937
  %v2970 = vpack.c.b16 %v2938, %v2938
  %v2971 = vpack.c.b16 %v2939, %v2939
  %v2972 = vpack.c.b16 %v2940, %v2940
  %v2973 = vpack.c.b16 %v2941, %v2941
  %v2974 = vpack.c.b16 %v2942, %v2942
  %3007 = vst [vmem:[%s3] sm:$0xf] %v2943
  %3008 = vst [vmem:[%s3 + $0x4] sm:$0xf] %v2944
  %3009 = vst [vmem:[%s3 + $0x8] sm:$0xf] %v2945
  %3010 = vst [vmem:[%s3 + $0xc] sm:$0xf] %v2946
  %3011 = vst [vmem:[%s3 + $0x10] sm:$0xf] %v2947
  %3012 = vst [vmem:[%s3 + $0x14] sm:$0xf] %v2948
  %3013 = vst [vmem:[%s3 + $0x18] sm:$0xf] %v2949
  %3014 = vst [vmem:[%s3 + $0x1c] sm:$0xf] %v2950
  %3015 = vst [vmem:[%s3 + $0x20] sm:$0xf] %v2951
  %3016 = vst [vmem:[%s3 + $0x24] sm:$0xf] %v2952
  %3017 = vst [vmem:[%s3 + $0x28] sm:$0xf] %v2953
  %3018 = vst [vmem:[%s3 + $0x2c] sm:$0xf] %v2954
  %3019 = vst [vmem:[%s3 + $0x30] sm:$0xf] %v2955
  %3020 = vst [vmem:[%s3 + $0x34] sm:$0xf] %v2956
  %3021 = vst [vmem:[%s3 + $0x38] sm:$0xf] %v2957
  %3022 = vst [vmem:[%s3 + $0x3c] sm:$0xf] %v2958
  %3023 = vst [vmem:[%s3 + $0x40] sm:$0xf] %v2959
  %3024 = vst [vmem:[%s3 + $0x44] sm:$0xf] %v2960
  %3025 = vst [vmem:[%s3 + $0x48] sm:$0xf] %v2961
  %3026 = vst [vmem:[%s3 + $0x4c] sm:$0xf] %v2962
  %3027 = vst [vmem:[%s3 + $0x50] sm:$0xf] %v2963
  %3028 = vst [vmem:[%s3 + $0x54] sm:$0xf] %v2964
  %3029 = vst [vmem:[%s3 + $0x58] sm:$0xf] %v2965
  %3030 = vst [vmem:[%s3 + $0x5c] sm:$0xf] %v2966
  %3031 = vst [vmem:[%s3 + $0x60] sm:$0xf] %v2967
  %3032 = vst [vmem:[%s3 + $0x64] sm:$0xf] %v2968
  %3033 = vst [vmem:[%s3 + $0x68] sm:$0xf] %v2969
  %3034 = vst [vmem:[%s3 + $0x6c] sm:$0xf] %v2970
  %3035 = vst [vmem:[%s3 + $0x70] sm:$0xf] %v2971
  %3036 = vst [vmem:[%s3 + $0x74] sm:$0xf] %v2972
  %3037 = vst [vmem:[%s3 + $0x78] sm:$0xf] %v2973
  %3038 = vst [vmem:[%s3 + $0x7c] sm:$0xf] %v2974
  // Predicated region
  $region14: #{forward.3} parent=0 // pred_check
    _
  $region15: #{forward.3} parent=0 // pred_check_branch
    %3040 = sbr.rel (0) target = $region17
  $region16: #{forward.3} parent=0 // pred_region
    _
  $region17: #{forward.3} parent=0 // pred_fallthru
    _
  // Predicated region
  $region18: #{forward.3} parent=0 // pred_check
    _
  $region19: #{forward.3} parent=0 // pred_check_branch
    %3042 = sbr.rel (0) target = $region21
  $region20: #{forward.3} parent=0 // pred_region
    _
  $region21: #{forward.3} parent=0 // pred_fallthru
    _

// kernel: forward.4
$region0: #{forward.4}
  #allocation0 [shape = 'u32[]', space=smem, size = 0x4, offset = 0x4, fixed_abs, tag = 'smem constant byte address 0x4 - core index']
  #allocation1 [shape = 'u32[144,128]{1,0:T(1,128)}', space=vmem, size = 0x12000, scoped, tag = 'internal scratch']
  %s0 = inlined_call_operand.vmem [shape: bf16[256,1152], index: 0, kind: input, shape index: {}]
  %s1 = inlined_call_operand.vmem [shape: bf16[640,256], index: 1, kind: input, shape index: {}]
  %s2 = inlined_call_operand.vmem [shape: f32[1,256], index: 2, kind: input, shape index: {}]
  %s3 = inlined_call_operand.vmem [shape: bf16[256,256], index: 3, kind: output, shape index: {}]
  %s4 = sld [smem:[#allocation0]]
  $region22: #{forward.4} parent=0
    _
  %s6 = ssub.s32 1, %s4
  %s7 = scalar_select 0, %s6, %s4
  // Predicated region
  $region2: #{forward.4} parent=0 // pred_check
    _
  $region3: #{forward.4} parent=0 // pred_check_branch
    %9 = sbr.rel (0) target = $region5
  $region4: #{forward.4} parent=0 // pred_region
    _
  $region5: #{forward.4} parent=0 // pred_fallthru
    _
  // Predicated region
  $region6: #{forward.4} parent=0 // pred_check
    _
  $region7: #{forward.4} parent=0 // pred_check_branch
    %11 = sbr.rel (0) target = $region9
  $region8: #{forward.4} parent=0 // pred_region
    _
  $region9: #{forward.4} parent=0 // pred_fallthru
    _
  // Predicated region
  $region10: #{forward.4} parent=0 // pred_check
    _
  $region11: #{forward.4} parent=0 // pred_check_branch
    %13 = sbr.rel (0) target = $region13
  $region12: #{forward.4} parent=0 // pred_region
    _
  $region13: #{forward.4} parent=0 // pred_fallthru
    _
  %v15 = vld [vmem:[%s0] sm:$0xff]
  %v16 = vld [vmem:[%s0 + $0x8] sm:$0xff]
  %v17 = vld [vmem:[%s0 + $0x10] sm:$0xff]
  %v18 = vld [vmem:[%s0 + $0x18] sm:$0xff]
  %v19 = vld [vmem:[%s0 + $0x20] sm:$0xf]
  %v20 = vld [vmem:[%s0 + $0x24] sm:$0xff]
  %v21 = vld [vmem:[%s0 + $0x2c] sm:$0xff]
  %v22 = vld [vmem:[%s0 + $0x34] sm:$0xff]
  %v23 = vld [vmem:[%s0 + $0x3c] sm:$0xff]
  %v24 = vld [vmem:[%s0 + $0x44] sm:$0xf]
  %v25 = vld [vmem:[%s0 + $0x48] sm:$0xff]
  %v26 = vld [vmem:[%s0 + $0x50] sm:$0xff]
  %v27 = vld [vmem:[%s0 + $0x58] sm:$0xff]
  %v28 = vld [vmem:[%s0 + $0x60] sm:$0xff]
  %v29 = vld [vmem:[%s0 + $0x68] sm:$0xf]
  %v30 = vld [vmem:[%s0 + $0x6c] sm:$0xff]
  %v31 = vld [vmem:[%s0 + $0x74] sm:$0xff]
  %v32 = vld [vmem:[%s0 + $0x7c] sm:$0xff]
  %v33 = vld [vmem:[%s0 + $0x84] sm:$0xff]
  %v34 = vld [vmem:[%s0 + $0x8c] sm:$0xf]
  %v35 = vld [vmem:[%s0 + $0x90] sm:$0xff]
  %v36 = vld [vmem:[%s0 + $0x98] sm:$0xff]
  %v37 = vld [vmem:[%s0 + $0xa0] sm:$0xff]
  %v38 = vld [vmem:[%s0 + $0xa8] sm:$0xff]
  %v39 = vld [vmem:[%s0 + $0xb0] sm:$0xf]
  %v40 = vld [vmem:[%s0 + $0xb4] sm:$0xff]
  %v41 = vld [vmem:[%s0 + $0xbc] sm:$0xff]
  %v42 = vld [vmem:[%s0 + $0xc4] sm:$0xff]
  %v43 = vld [vmem:[%s0 + $0xcc] sm:$0xff]
  %v44 = vld [vmem:[%s0 + $0xd4] sm:$0xf]
  %v45 = vld [vmem:[%s0 + $0xd8] sm:$0xff]
  %v46 = vld [vmem:[%s0 + $0xe0] sm:$0xff]
  %v47 = vld [vmem:[%s0 + $0xe8] sm:$0xff]
  %v48 = vld [vmem:[%s0 + $0xf0] sm:$0xff]
  %v49 = vld [vmem:[%s0 + $0xf8] sm:$0xf]
  %v50 = vld [vmem:[%s0 + $0xfc] sm:$0xff]
  %v51 = vld [vmem:[%s0 + $0x104] sm:$0xff]
  %v52 = vld [vmem:[%s0 + $0x10c] sm:$0xff]
  %v53 = vld [vmem:[%s0 + $0x114] sm:$0xff]
  %v54 = vld [vmem:[%s0 + $0x11c] sm:$0xf]
  %v55 = vld [vmem:[%s0 + $0x120] sm:$0xff]
  %v56 = vld [vmem:[%s0 + $0x128] sm:$0xff]
  %v57 = vld [vmem:[%s0 + $0x130] sm:$0xff]
  %v58 = vld [vmem:[%s0 + $0x138] sm:$0xff]
  %v59 = vld [vmem:[%s0 + $0x140] sm:$0xf]
  %v60 = vld [vmem:[%s0 + $0x144] sm:$0xff]
  %v61 = vld [vmem:[%s0 + $0x14c] sm:$0xff]
  %v62 = vld [vmem:[%s0 + $0x154] sm:$0xff]
  %v63 = vld [vmem:[%s0 + $0x15c] sm:$0xff]
  %v64 = vld [vmem:[%s0 + $0x164] sm:$0xf]
  %v65 = vld [vmem:[%s0 + $0x168] sm:$0xff]
  %v66 = vld [vmem:[%s0 + $0x170] sm:$0xff]
  %v67 = vld [vmem:[%s0 + $0x178] sm:$0xff]
  %v68 = vld [vmem:[%s0 + $0x180] sm:$0xff]
  %v69 = vld [vmem:[%s0 + $0x188] sm:$0xf]
  %v70 = vld [vmem:[%s0 + $0x18c] sm:$0xff]
  %v71 = vld [vmem:[%s0 + $0x194] sm:$0xff]
  %v72 = vld [vmem:[%s0 + $0x19c] sm:$0xff]
  %v73 = vld [vmem:[%s0 + $0x1a4] sm:$0xff]
  %v74 = vld [vmem:[%s0 + $0x1ac] sm:$0xf]
  %v75 = vld [vmem:[%s0 + $0x1b0] sm:$0xff]
  %v76 = vld [vmem:[%s0 + $0x1b8] sm:$0xff]
  %v77 = vld [vmem:[%s0 + $0x1c0] sm:$0xff]
  %v78 = vld [vmem:[%s0 + $0x1c8] sm:$0xff]
  %v79 = vld [vmem:[%s0 + $0x1d0] sm:$0xf]
  %v80 = vld [vmem:[%s0 + $0x1d4] sm:$0xff]
  %v81 = vld [vmem:[%s0 + $0x1dc] sm:$0xff]
  %v82 = vld [vmem:[%s0 + $0x1e4] sm:$0xff]
  %v83 = vld [vmem:[%s0 + $0x1ec] sm:$0xff]
  %v84 = vld [vmem:[%s0 + $0x1f4] sm:$0xf]
  %v85 = vld [vmem:[%s0 + $0x1f8] sm:$0xff]
  %v86 = vld [vmem:[%s0 + $0x200] sm:$0xff]
  %v87 = vld [vmem:[%s0 + $0x208] sm:$0xff]
  %v88 = vld [vmem:[%s0 + $0x210] sm:$0xff]
  %v89 = vld [vmem:[%s0 + $0x218] sm:$0xf]
  %v90 = vld [vmem:[%s0 + $0x21c] sm:$0xff]
  %v91 = vld [vmem:[%s0 + $0x224] sm:$0xff]
  %v92 = vld [vmem:[%s0 + $0x22c] sm:$0xff]
  %v93 = vld [vmem:[%s0 + $0x234] sm:$0xff]
  %v94 = vld [vmem:[%s0 + $0x23c] sm:$0xf]
  %v95 = vld [vmem:[%s0 + $0x240] sm:$0xff]
  %v96 = vld [vmem:[%s0 + $0x248] sm:$0xff]
  %v97 = vld [vmem:[%s0 + $0x250] sm:$0xff]
  %v98 = vld [vmem:[%s0 + $0x258] sm:$0xff]
  %v99 = vld [vmem:[%s0 + $0x260] sm:$0xf]
  %v100 = vld [vmem:[%s0 + $0x264] sm:$0xff]
  %v101 = vld [vmem:[%s0 + $0x26c] sm:$0xff]
  %v102 = vld [vmem:[%s0 + $0x274] sm:$0xff]
  %v103 = vld [vmem:[%s0 + $0x27c] sm:$0xff]
  %v104 = vld [vmem:[%s0 + $0x284] sm:$0xf]
  %v105 = vld [vmem:[%s0 + $0x288] sm:$0xff]
  %v106 = vld [vmem:[%s0 + $0x290] sm:$0xff]
  %v107 = vld [vmem:[%s0 + $0x298] sm:$0xff]
  %v108 = vld [vmem:[%s0 + $0x2a0] sm:$0xff]
  %v109 = vld [vmem:[%s0 + $0x2a8] sm:$0xf]
  %v110 = vld [vmem:[%s0 + $0x2ac] sm:$0xff]
  %v111 = vld [vmem:[%s0 + $0x2b4] sm:$0xff]
  %v112 = vld [vmem:[%s0 + $0x2bc] sm:$0xff]
  %v113 = vld [vmem:[%s0 + $0x2c4] sm:$0xff]
  %v114 = vld [vmem:[%s0 + $0x2cc] sm:$0xf]
  %v115 = vld [vmem:[%s0 + $0x2d0] sm:$0xff]
  %v116 = vld [vmem:[%s0 + $0x2d8] sm:$0xff]
  %v117 = vld [vmem:[%s0 + $0x2e0] sm:$0xff]
  %v118 = vld [vmem:[%s0 + $0x2e8] sm:$0xff]
  %v119 = vld [vmem:[%s0 + $0x2f0] sm:$0xf]
  %v120 = vld [vmem:[%s0 + $0x2f4] sm:$0xff]
  %v121 = vld [vmem:[%s0 + $0x2fc] sm:$0xff]
  %v122 = vld [vmem:[%s0 + $0x304] sm:$0xff]
  %v123 = vld [vmem:[%s0 + $0x30c] sm:$0xff]
  %v124 = vld [vmem:[%s0 + $0x314] sm:$0xf]
  %v125 = vld [vmem:[%s0 + $0x318] sm:$0xff]
  %v126 = vld [vmem:[%s0 + $0x320] sm:$0xff]
  %v127 = vld [vmem:[%s0 + $0x328] sm:$0xff]
  %v128 = vld [vmem:[%s0 + $0x330] sm:$0xff]
  %v129 = vld [vmem:[%s0 + $0x338] sm:$0xf]
  %v130 = vld [vmem:[%s0 + $0x33c] sm:$0xff]
  %v131 = vld [vmem:[%s0 + $0x344] sm:$0xff]
  %v132 = vld [vmem:[%s0 + $0x34c] sm:$0xff]
  %v133 = vld [vmem:[%s0 + $0x354] sm:$0xff]
  %v134 = vld [vmem:[%s0 + $0x35c] sm:$0xf]
  %v135 = vld [vmem:[%s0 + $0x360] sm:$0xff]
  %v136 = vld [vmem:[%s0 + $0x368] sm:$0xff]
  %v137 = vld [vmem:[%s0 + $0x370] sm:$0xff]
  %v138 = vld [vmem:[%s0 + $0x378] sm:$0xff]
  %v139 = vld [vmem:[%s0 + $0x380] sm:$0xf]
  %v140 = vld [vmem:[%s0 + $0x384] sm:$0xff]
  %v141 = vld [vmem:[%s0 + $0x38c] sm:$0xff]
  %v142 = vld [vmem:[%s0 + $0x394] sm:$0xff]
  %v143 = vld [vmem:[%s0 + $0x39c] sm:$0xff]
  %v144 = vld [vmem:[%s0 + $0x3a4] sm:$0xf]
  %v145 = vld [vmem:[%s0 + $0x3a8] sm:$0xff]
  %v146 = vld [vmem:[%s0 + $0x3b0] sm:$0xff]
  %v147 = vld [vmem:[%s0 + $0x3b8] sm:$0xff]
  %v148 = vld [vmem:[%s0 + $0x3c0] sm:$0xff]
  %v149 = vld [vmem:[%s0 + $0x3c8] sm:$0xf]
  %v150 = vld [vmem:[%s0 + $0x3cc] sm:$0xff]
  %v151 = vld [vmem:[%s0 + $0x3d4] sm:$0xff]
  %v152 = vld [vmem:[%s0 + $0x3dc] sm:$0xff]
  %v153 = vld [vmem:[%s0 + $0x3e4] sm:$0xff]
  %v154 = vld [vmem:[%s0 + $0x3ec] sm:$0xf]
  %v155 = vld [vmem:[%s0 + $0x3f0] sm:$0xff]
  %v156 = vld [vmem:[%s0 + $0x3f8] sm:$0xff]
  %v157 = vld [vmem:[%s0 + $0x400] sm:$0xff]
  %v158 = vld [vmem:[%s0 + $0x408] sm:$0xff]
  %v159 = vld [vmem:[%s0 + $0x410] sm:$0xf]
  %v160 = vld [vmem:[%s0 + $0x414] sm:$0xff]
  %v161 = vld [vmem:[%s0 + $0x41c] sm:$0xff]
  %v162 = vld [vmem:[%s0 + $0x424] sm:$0xff]
  %v163 = vld [vmem:[%s0 + $0x42c] sm:$0xff]
  %v164 = vld [vmem:[%s0 + $0x434] sm:$0xf]
  %v165 = vld [vmem:[%s0 + $0x438] sm:$0xff]
  %v166 = vld [vmem:[%s0 + $0x440] sm:$0xff]
  %v167 = vld [vmem:[%s0 + $0x448] sm:$0xff]
  %v168 = vld [vmem:[%s0 + $0x450] sm:$0xff]
  %v169 = vld [vmem:[%s0 + $0x458] sm:$0xf]
  %v170 = vld [vmem:[%s0 + $0x45c] sm:$0xff]
  %v171 = vld [vmem:[%s0 + $0x464] sm:$0xff]
  %v172 = vld [vmem:[%s0 + $0x46c] sm:$0xff]
  %v173 = vld [vmem:[%s0 + $0x474] sm:$0xff]
  %v174 = vld [vmem:[%s0 + $0x47c] sm:$0xf]
  %v175 = vld [vmem:[%s1] sm:$0xff]
  %v176 = vld [vmem:[%s1 + $0x8] sm:$0xff]
  %v177 = vld [vmem:[%s1 + $0x10] sm:$0xff]
  %v178 = vld [vmem:[%s1 + $0x18] sm:$0xff]
  %v179 = vld [vmem:[%s1 + $0x20] sm:$0xff]
  %v180 = vld [vmem:[%s1 + $0x28] sm:$0xff]
  %v181 = vld [vmem:[%s1 + $0x30] sm:$0xff]
  %v182 = vld [vmem:[%s1 + $0x38] sm:$0xff]
  %v183 = vld [vmem:[%s1 + $0x40] sm:$0xff]
  %v184 = vld [vmem:[%s1 + $0x48] sm:$0xff]
  %v185 = vld [vmem:[%s1 + $0x50] sm:$0xff]
  %v186 = vld [vmem:[%s1 + $0x58] sm:$0xff]
  %v187 = vld [vmem:[%s1 + $0x60] sm:$0xff]
  %v188 = vld [vmem:[%s1 + $0x68] sm:$0xff]
  %v189 = vld [vmem:[%s1 + $0x70] sm:$0xff]
  %v190 = vld [vmem:[%s1 + $0x78] sm:$0xff]
  %v191 = vld [vmem:[%s1 + $0x80] sm:$0xff]
  %v192 = vld [vmem:[%s1 + $0x88] sm:$0xff]
  %v193 = vld [vmem:[%s1 + $0x90] sm:$0xff]
  %v194 = vld [vmem:[%s1 + $0x98] sm:$0xff]
  %v195 = vld [vmem:[%s1 + $0xa0] sm:$0xff]
  %v196 = vld [vmem:[%s1 + $0xa8] sm:$0xff]
  %v197 = vld [vmem:[%s1 + $0xb0] sm:$0xff]
  %v198 = vld [vmem:[%s1 + $0xb8] sm:$0xff]
  %v199 = vld [vmem:[%s1 + $0xc0] sm:$0xff]
  %v200 = vld [vmem:[%s1 + $0xc8] sm:$0xff]
  %v201 = vld [vmem:[%s1 + $0xd0] sm:$0xff]
  %v202 = vld [vmem:[%s1 + $0xd8] sm:$0xff]
  %v203 = vld [vmem:[%s1 + $0xe0] sm:$0xff]
  %v204 = vld [vmem:[%s1 + $0xe8] sm:$0xff]
  %v205 = vld [vmem:[%s1 + $0xf0] sm:$0xff]
  %v206 = vld [vmem:[%s1 + $0xf8] sm:$0xff]
  %v207 = vld [vmem:[%s1 + $0x100] sm:$0xff]
  %v208 = vld [vmem:[%s1 + $0x108] sm:$0xff]
  %v209 = vld [vmem:[%s1 + $0x110] sm:$0xff]
  %v210 = vld [vmem:[%s1 + $0x118] sm:$0xff]
  %v211 = vld [vmem:[%s1 + $0x120] sm:$0xff]
  %v212 = vld [vmem:[%s1 + $0x128] sm:$0xff]
  %v213 = vld [vmem:[%s1 + $0x130] sm:$0xff]
  %v214 = vld [vmem:[%s1 + $0x138] sm:$0xff]
  %v215 = vld [vmem:[%s1 + $0x140] sm:$0xff]
  %v216 = vld [vmem:[%s1 + $0x148] sm:$0xff]
  %v217 = vld [vmem:[%s1 + $0x150] sm:$0xff]
  %v218 = vld [vmem:[%s1 + $0x158] sm:$0xff]
  %v219 = vld [vmem:[%s1 + $0x160] sm:$0xff]
  %v220 = vld [vmem:[%s1 + $0x168] sm:$0xff]
  %v221 = vld [vmem:[%s1 + $0x170] sm:$0xff]
  %v222 = vld [vmem:[%s1 + $0x178] sm:$0xff]
  %v223 = vld [vmem:[%s1 + $0x180] sm:$0xff]
  %v224 = vld [vmem:[%s1 + $0x188] sm:$0xff]
  %v225 = vld [vmem:[%s1 + $0x190] sm:$0xff]
  %v226 = vld [vmem:[%s1 + $0x198] sm:$0xff]
  %v227 = vld [vmem:[%s1 + $0x1a0] sm:$0xff]
  %v228 = vld [vmem:[%s1 + $0x1a8] sm:$0xff]
  %v229 = vld [vmem:[%s1 + $0x1b0] sm:$0xff]
  %v230 = vld [vmem:[%s1 + $0x1b8] sm:$0xff]
  %v231 = vld [vmem:[%s1 + $0x1c0] sm:$0xff]
  %v232 = vld [vmem:[%s1 + $0x1c8] sm:$0xff]
  %v233 = vld [vmem:[%s1 + $0x1d0] sm:$0xff]
  %v234 = vld [vmem:[%s1 + $0x1d8] sm:$0xff]
  %v235 = vld [vmem:[%s1 + $0x1e0] sm:$0xff]
  %v236 = vld [vmem:[%s1 + $0x1e8] sm:$0xff]
  %v237 = vld [vmem:[%s1 + $0x1f0] sm:$0xff]
  %v238 = vld [vmem:[%s1 + $0x1f8] sm:$0xff]
  %v239 = vld [vmem:[%s1 + $0x200] sm:$0xff]
  %v240 = vld [vmem:[%s1 + $0x208] sm:$0xff]
  %v241 = vld [vmem:[%s1 + $0x210] sm:$0xff]
  %v242 = vld [vmem:[%s1 + $0x218] sm:$0xff]
  %v243 = vld [vmem:[%s1 + $0x220] sm:$0xff]
  %v244 = vld [vmem:[%s1 + $0x228] sm:$0xff]
  %v245 = vld [vmem:[%s1 + $0x230] sm:$0xff]
  %v246 = vld [vmem:[%s1 + $0x238] sm:$0xff]
  %v247 = vld [vmem:[%s1 + $0x240] sm:$0xff]
  %v248 = vld [vmem:[%s1 + $0x248] sm:$0xff]
  %v249 = vld [vmem:[%s1 + $0x250] sm:$0xff]
  %v250 = vld [vmem:[%s1 + $0x258] sm:$0xff]
  %v251 = vld [vmem:[%s1 + $0x260] sm:$0xff]
  %v252 = vld [vmem:[%s1 + $0x268] sm:$0xff]
  %v253 = vld [vmem:[%s1 + $0x270] sm:$0xff]
  %v254 = vld [vmem:[%s1 + $0x278] sm:$0xff]
  %v351 = vunpack.c.l.b16 %v15
  %v352 = vunpack.c.h.b16 %v15
  %v353 = vunpack.c.l.b16 %v16
  %v354 = vunpack.c.h.b16 %v16
  %v355 = vunpack.c.l.b16 %v17
  %v356 = vunpack.c.l.b16 %v20
  %v357 = vunpack.c.h.b16 %v20
  %v358 = vunpack.c.l.b16 %v21
  %v359 = vunpack.c.h.b16 %v21
  %v360 = vunpack.c.l.b16 %v22
  %v361 = vunpack.c.l.b16 %v25
  %v362 = vunpack.c.h.b16 %v25
  %v363 = vunpack.c.l.b16 %v26
  %v364 = vunpack.c.h.b16 %v26
  %v365 = vunpack.c.l.b16 %v27
  %v366 = vunpack.c.l.b16 %v30
  %v367 = vunpack.c.h.b16 %v30
  %v368 = vunpack.c.l.b16 %v31
  %v369 = vunpack.c.h.b16 %v31
  %v370 = vunpack.c.l.b16 %v32
  %v371 = vunpack.c.l.b16 %v35
  %v372 = vunpack.c.h.b16 %v35
  %v373 = vunpack.c.l.b16 %v36
  %v374 = vunpack.c.h.b16 %v36
  %v375 = vunpack.c.l.b16 %v37
  %v376 = vunpack.c.l.b16 %v40
  %v377 = vunpack.c.h.b16 %v40
  %v378 = vunpack.c.l.b16 %v41
  %v379 = vunpack.c.h.b16 %v41
  %v380 = vunpack.c.l.b16 %v42
  %v381 = vunpack.c.l.b16 %v45
  %v382 = vunpack.c.h.b16 %v45
  %v383 = vunpack.c.l.b16 %v46
  %v384 = vunpack.c.h.b16 %v46
  %v385 = vunpack.c.l.b16 %v47
  %v386 = vunpack.c.l.b16 %v50
  %v387 = vunpack.c.h.b16 %v50
  %v388 = vunpack.c.l.b16 %v51
  %v389 = vunpack.c.h.b16 %v51
  %v390 = vunpack.c.l.b16 %v52
  %v391 = vunpack.c.l.b16 %v55
  %v392 = vunpack.c.h.b16 %v55
  %v393 = vunpack.c.l.b16 %v56
  %v394 = vunpack.c.h.b16 %v56
  %v395 = vunpack.c.l.b16 %v57
  %v396 = vunpack.c.l.b16 %v60
  %v397 = vunpack.c.h.b16 %v60
  %v398 = vunpack.c.l.b16 %v61
  %v399 = vunpack.c.h.b16 %v61
  %v400 = vunpack.c.l.b16 %v62
  %v401 = vunpack.c.l.b16 %v65
  %v402 = vunpack.c.h.b16 %v65
  %v403 = vunpack.c.l.b16 %v66
  %v404 = vunpack.c.h.b16 %v66
  %v405 = vunpack.c.l.b16 %v67
  %v406 = vunpack.c.l.b16 %v70
  %v407 = vunpack.c.h.b16 %v70
  %v408 = vunpack.c.l.b16 %v71
  %v409 = vunpack.c.h.b16 %v71
  %v410 = vunpack.c.l.b16 %v72
  %v411 = vunpack.c.l.b16 %v75
  %v412 = vunpack.c.h.b16 %v75
  %v413 = vunpack.c.l.b16 %v76
  %v414 = vunpack.c.h.b16 %v76
  %v415 = vunpack.c.l.b16 %v77
  %v416 = vunpack.c.l.b16 %v80
  %v417 = vunpack.c.h.b16 %v80
  %v418 = vunpack.c.l.b16 %v81
  %v419 = vunpack.c.h.b16 %v81
  %v420 = vunpack.c.l.b16 %v82
  %v421 = vunpack.c.l.b16 %v85
  %v422 = vunpack.c.h.b16 %v85
  %v423 = vunpack.c.l.b16 %v86
  %v424 = vunpack.c.h.b16 %v86
  %v425 = vunpack.c.l.b16 %v87
  %v426 = vunpack.c.l.b16 %v90
  %v427 = vunpack.c.h.b16 %v90
  %v428 = vunpack.c.l.b16 %v91
  %v429 = vunpack.c.h.b16 %v91
  %v430 = vunpack.c.l.b16 %v92
  %v431 = vunpack.c.l.b16 %v95
  %v432 = vunpack.c.h.b16 %v95
  %v433 = vunpack.c.l.b16 %v96
  %v434 = vunpack.c.h.b16 %v96
  %v435 = vunpack.c.l.b16 %v97
  %v436 = vunpack.c.l.b16 %v100
  %v437 = vunpack.c.h.b16 %v100
  %v438 = vunpack.c.l.b16 %v101
  %v439 = vunpack.c.h.b16 %v101
  %v440 = vunpack.c.l.b16 %v102
  %v441 = vunpack.c.l.b16 %v105
  %v442 = vunpack.c.h.b16 %v105
  %v443 = vunpack.c.l.b16 %v106
  %v444 = vunpack.c.h.b16 %v106
  %v445 = vunpack.c.l.b16 %v107
  %v446 = vunpack.c.l.b16 %v110
  %v447 = vunpack.c.h.b16 %v110
  %v448 = vunpack.c.l.b16 %v111
  %v449 = vunpack.c.h.b16 %v111
  %v450 = vunpack.c.l.b16 %v112
  %v451 = vunpack.c.l.b16 %v115
  %v452 = vunpack.c.h.b16 %v115
  %v453 = vunpack.c.l.b16 %v116
  %v454 = vunpack.c.h.b16 %v116
  %v455 = vunpack.c.l.b16 %v117
  %v456 = vunpack.c.l.b16 %v120
  %v457 = vunpack.c.h.b16 %v120
  %v458 = vunpack.c.l.b16 %v121
  %v459 = vunpack.c.h.b16 %v121
  %v460 = vunpack.c.l.b16 %v122
  %v461 = vunpack.c.l.b16 %v125
  %v462 = vunpack.c.h.b16 %v125
  %v463 = vunpack.c.l.b16 %v126
  %v464 = vunpack.c.h.b16 %v126
  %v465 = vunpack.c.l.b16 %v127
  %v466 = vunpack.c.l.b16 %v130
  %v467 = vunpack.c.h.b16 %v130
  %v468 = vunpack.c.l.b16 %v131
  %v469 = vunpack.c.h.b16 %v131
  %v470 = vunpack.c.l.b16 %v132
  %v471 = vunpack.c.l.b16 %v135
  %v472 = vunpack.c.h.b16 %v135
  %v473 = vunpack.c.l.b16 %v136
  %v474 = vunpack.c.h.b16 %v136
  %v475 = vunpack.c.l.b16 %v137
  %v476 = vunpack.c.l.b16 %v140
  %v477 = vunpack.c.h.b16 %v140
  %v478 = vunpack.c.l.b16 %v141
  %v479 = vunpack.c.h.b16 %v141
  %v480 = vunpack.c.l.b16 %v142
  %v481 = vunpack.c.l.b16 %v145
  %v482 = vunpack.c.h.b16 %v145
  %v483 = vunpack.c.l.b16 %v146
  %v484 = vunpack.c.h.b16 %v146
  %v485 = vunpack.c.l.b16 %v147
  %v486 = vunpack.c.l.b16 %v150
  %v487 = vunpack.c.h.b16 %v150
  %v488 = vunpack.c.l.b16 %v151
  %v489 = vunpack.c.h.b16 %v151
  %v490 = vunpack.c.l.b16 %v152
  %v491 = vunpack.c.l.b16 %v155
  %v492 = vunpack.c.h.b16 %v155
  %v493 = vunpack.c.l.b16 %v156
  %v494 = vunpack.c.h.b16 %v156
  %v495 = vunpack.c.l.b16 %v157
  %v496 = vunpack.c.l.b16 %v160
  %v497 = vunpack.c.h.b16 %v160
  %v498 = vunpack.c.l.b16 %v161
  %v499 = vunpack.c.h.b16 %v161
  %v500 = vunpack.c.l.b16 %v162
  %v501 = vunpack.c.l.b16 %v165
  %v502 = vunpack.c.h.b16 %v165
  %v503 = vunpack.c.l.b16 %v166
  %v504 = vunpack.c.h.b16 %v166
  %v505 = vunpack.c.l.b16 %v167
  %v506 = vunpack.c.l.b16 %v170
  %v507 = vunpack.c.h.b16 %v170
  %v508 = vunpack.c.l.b16 %v171
  %v509 = vunpack.c.h.b16 %v171
  %v510 = vunpack.c.l.b16 %v172
  %v511 = vpack.c.b16 %v356, %v351
  %v512 = vpack.c.b16 %v357, %v352
  %v513 = vpack.c.b16 %v358, %v353
  %v514 = vpack.c.b16 %v359, %v354
  %v515 = vpack.c.b16 %v360, %v355
  %v516 = vpack.c.b16 %v366, %v361
  %v517 = vpack.c.b16 %v367, %v362
  %v518 = vpack.c.b16 %v368, %v363
  %v519 = vpack.c.b16 %v369, %v364
  %v520 = vpack.c.b16 %v370, %v365
  %v521 = vpack.c.b16 %v376, %v371
  %v522 = vpack.c.b16 %v377, %v372
  %v523 = vpack.c.b16 %v378, %v373
  %v524 = vpack.c.b16 %v379, %v374
  %v525 = vpack.c.b16 %v380, %v375
  %v526 = vpack.c.b16 %v386, %v381
  %v527 = vpack.c.b16 %v387, %v382
  %v528 = vpack.c.b16 %v388, %v383
  %v529 = vpack.c.b16 %v389, %v384
  %v530 = vpack.c.b16 %v390, %v385
  %v531 = vpack.c.b16 %v396, %v391
  %v532 = vpack.c.b16 %v397, %v392
  %v533 = vpack.c.b16 %v398, %v393
  %v534 = vpack.c.b16 %v399, %v394
  %v535 = vpack.c.b16 %v400, %v395
  %v536 = vpack.c.b16 %v406, %v401
  %v537 = vpack.c.b16 %v407, %v402
  %v538 = vpack.c.b16 %v408, %v403
  %v539 = vpack.c.b16 %v409, %v404
  %v540 = vpack.c.b16 %v410, %v405
  %v541 = vpack.c.b16 %v416, %v411
  %v542 = vpack.c.b16 %v417, %v412
  %v543 = vpack.c.b16 %v418, %v413
  %v544 = vpack.c.b16 %v419, %v414
  %v545 = vpack.c.b16 %v420, %v415
  %v546 = vpack.c.b16 %v426, %v421
  %v547 = vpack.c.b16 %v427, %v422
  %v548 = vpack.c.b16 %v428, %v423
  %v549 = vpack.c.b16 %v429, %v424
  %v550 = vpack.c.b16 %v430, %v425
  %v551 = vpack.c.b16 %v436, %v431
  %v552 = vpack.c.b16 %v437, %v432
  %v553 = vpack.c.b16 %v438, %v433
  %v554 = vpack.c.b16 %v439, %v434
  %v555 = vpack.c.b16 %v440, %v435
  %v556 = vpack.c.b16 %v446, %v441
  %v557 = vpack.c.b16 %v447, %v442
  %v558 = vpack.c.b16 %v448, %v443
  %v559 = vpack.c.b16 %v449, %v444
  %v560 = vpack.c.b16 %v450, %v445
  %v561 = vpack.c.b16 %v456, %v451
  %v562 = vpack.c.b16 %v457, %v452
  %v563 = vpack.c.b16 %v458, %v453
  %v564 = vpack.c.b16 %v459, %v454
  %v565 = vpack.c.b16 %v460, %v455
  %v566 = vpack.c.b16 %v466, %v461
  %v567 = vpack.c.b16 %v467, %v462
  %v568 = vpack.c.b16 %v468, %v463
  %v569 = vpack.c.b16 %v469, %v464
  %v570 = vpack.c.b16 %v470, %v465
  %v571 = vpack.c.b16 %v476, %v471
  %v572 = vpack.c.b16 %v477, %v472
  %v573 = vpack.c.b16 %v478, %v473
  %v574 = vpack.c.b16 %v479, %v474
  %v575 = vpack.c.b16 %v480, %v475
  %v576 = vpack.c.b16 %v486, %v481
  %v577 = vpack.c.b16 %v487, %v482
  %v578 = vpack.c.b16 %v488, %v483
  %v579 = vpack.c.b16 %v489, %v484
  %v580 = vpack.c.b16 %v490, %v485
  %v581 = vpack.c.b16 %v496, %v491
  %v582 = vpack.c.b16 %v497, %v492
  %v583 = vpack.c.b16 %v498, %v493
  %v584 = vpack.c.b16 %v499, %v494
  %v585 = vpack.c.b16 %v500, %v495
  %v586 = vpack.c.b16 %v506, %v501
  %v587 = vpack.c.b16 %v507, %v502
  %v588 = vpack.c.b16 %v508, %v503
  %v589 = vpack.c.b16 %v509, %v504
  %v590 = vpack.c.b16 %v510, %v505
  %v751 = vunpack.c.l.b16 %v175
  %v752 = vunpack.c.h.b16 %v175
  %v753 = vunpack.c.l.b16 %v176
  %v754 = vunpack.c.h.b16 %v176
  %v755 = vunpack.c.l.b16 %v177
  %v756 = vunpack.c.h.b16 %v177
  %v757 = vunpack.c.l.b16 %v178
  %v758 = vunpack.c.h.b16 %v178
  %v759 = vunpack.c.l.b16 %v179
  %v760 = vunpack.c.h.b16 %v179
  %v761 = vunpack.c.l.b16 %v180
  %v762 = vunpack.c.h.b16 %v180
  %v763 = vunpack.c.l.b16 %v181
  %v764 = vunpack.c.h.b16 %v181
  %v765 = vunpack.c.l.b16 %v182
  %v766 = vunpack.c.h.b16 %v182
  %v767 = vunpack.c.l.b16 %v183
  %v768 = vunpack.c.h.b16 %v183
  %v769 = vunpack.c.l.b16 %v184
  %v770 = vunpack.c.h.b16 %v184
  %v771 = vunpack.c.l.b16 %v185
  %v772 = vunpack.c.h.b16 %v185
  %v773 = vunpack.c.l.b16 %v186
  %v774 = vunpack.c.h.b16 %v186
  %v775 = vunpack.c.l.b16 %v187
  %v776 = vunpack.c.h.b16 %v187
  %v777 = vunpack.c.l.b16 %v188
  %v778 = vunpack.c.h.b16 %v188
  %v779 = vunpack.c.l.b16 %v189
  %v780 = vunpack.c.h.b16 %v189
  %v781 = vunpack.c.l.b16 %v190
  %v782 = vunpack.c.h.b16 %v190
  %v783 = vunpack.c.l.b16 %v191
  %v784 = vunpack.c.h.b16 %v191
  %v785 = vunpack.c.l.b16 %v192
  %v786 = vunpack.c.h.b16 %v192
  %v787 = vunpack.c.l.b16 %v193
  %v788 = vunpack.c.h.b16 %v193
  %v789 = vunpack.c.l.b16 %v194
  %v790 = vunpack.c.h.b16 %v194
  %v791 = vunpack.c.l.b16 %v195
  %v792 = vunpack.c.h.b16 %v195
  %v793 = vunpack.c.l.b16 %v196
  %v794 = vunpack.c.h.b16 %v196
  %v795 = vunpack.c.l.b16 %v197
  %v796 = vunpack.c.h.b16 %v197
  %v797 = vunpack.c.l.b16 %v198
  %v798 = vunpack.c.h.b16 %v198
  %v799 = vunpack.c.l.b16 %v199
  %v800 = vunpack.c.h.b16 %v199
  %v801 = vunpack.c.l.b16 %v200
  %v802 = vunpack.c.h.b16 %v200
  %v803 = vunpack.c.l.b16 %v201
  %v804 = vunpack.c.h.b16 %v201
  %v805 = vunpack.c.l.b16 %v202
  %v806 = vunpack.c.h.b16 %v202
  %v807 = vunpack.c.l.b16 %v203
  %v808 = vunpack.c.h.b16 %v203
  %v809 = vunpack.c.l.b16 %v204
  %v810 = vunpack.c.h.b16 %v204
  %v811 = vunpack.c.l.b16 %v205
  %v812 = vunpack.c.h.b16 %v205
  %v813 = vunpack.c.l.b16 %v206
  %v814 = vunpack.c.h.b16 %v206
  %v815 = vunpack.c.l.b16 %v207
  %v816 = vunpack.c.h.b16 %v207
  %v817 = vunpack.c.l.b16 %v208
  %v818 = vunpack.c.h.b16 %v208
  %v819 = vunpack.c.l.b16 %v209
  %v820 = vunpack.c.h.b16 %v209
  %v821 = vunpack.c.l.b16 %v210
  %v822 = vunpack.c.h.b16 %v210
  %v823 = vunpack.c.l.b16 %v211
  %v824 = vunpack.c.h.b16 %v211
  %v825 = vunpack.c.l.b16 %v212
  %v826 = vunpack.c.h.b16 %v212
  %v827 = vunpack.c.l.b16 %v213
  %v828 = vunpack.c.h.b16 %v213
  %v829 = vunpack.c.l.b16 %v214
  %v830 = vunpack.c.h.b16 %v214
  %v831 = vunpack.c.l.b16 %v215
  %v832 = vunpack.c.h.b16 %v215
  %v833 = vunpack.c.l.b16 %v216
  %v834 = vunpack.c.h.b16 %v216
  %v835 = vunpack.c.l.b16 %v217
  %v836 = vunpack.c.h.b16 %v217
  %v837 = vunpack.c.l.b16 %v218
  %v838 = vunpack.c.h.b16 %v218
  %v839 = vunpack.c.l.b16 %v219
  %v840 = vunpack.c.h.b16 %v219
  %v841 = vunpack.c.l.b16 %v220
  %v842 = vunpack.c.h.b16 %v220
  %v843 = vunpack.c.l.b16 %v221
  %v844 = vunpack.c.h.b16 %v221
  %v845 = vunpack.c.l.b16 %v222
  %v846 = vunpack.c.h.b16 %v222
  %v847 = vunpack.c.l.b16 %v223
  %v848 = vunpack.c.h.b16 %v223
  %v849 = vunpack.c.l.b16 %v224
  %v850 = vunpack.c.h.b16 %v224
  %v851 = vunpack.c.l.b16 %v225
  %v852 = vunpack.c.h.b16 %v225
  %v853 = vunpack.c.l.b16 %v226
  %v854 = vunpack.c.h.b16 %v226
  %v855 = vunpack.c.l.b16 %v227
  %v856 = vunpack.c.h.b16 %v227
  %v857 = vunpack.c.l.b16 %v228
  %v858 = vunpack.c.h.b16 %v228
  %v859 = vunpack.c.l.b16 %v229
  %v860 = vunpack.c.h.b16 %v229
  %v861 = vunpack.c.l.b16 %v230
  %v862 = vunpack.c.h.b16 %v230
  %v863 = vunpack.c.l.b16 %v231
  %v864 = vunpack.c.h.b16 %v231
  %v865 = vunpack.c.l.b16 %v232
  %v866 = vunpack.c.h.b16 %v232
  %v867 = vunpack.c.l.b16 %v233
  %v868 = vunpack.c.h.b16 %v233
  %v869 = vunpack.c.l.b16 %v234
  %v870 = vunpack.c.h.b16 %v234
  %v871 = vunpack.c.l.b16 %v235
  %v872 = vunpack.c.h.b16 %v235
  %v873 = vunpack.c.l.b16 %v236
  %v874 = vunpack.c.h.b16 %v236
  %v875 = vunpack.c.l.b16 %v237
  %v876 = vunpack.c.h.b16 %v237
  %v877 = vunpack.c.l.b16 %v238
  %v878 = vunpack.c.h.b16 %v238
  %v879 = vunpack.c.l.b16 %v239
  %v880 = vunpack.c.h.b16 %v239
  %v881 = vunpack.c.l.b16 %v240
  %v882 = vunpack.c.h.b16 %v240
  %v883 = vunpack.c.l.b16 %v241
  %v884 = vunpack.c.h.b16 %v241
  %v885 = vunpack.c.l.b16 %v242
  %v886 = vunpack.c.h.b16 %v242
  %v887 = vunpack.c.l.b16 %v243
  %v888 = vunpack.c.h.b16 %v243
  %v889 = vunpack.c.l.b16 %v244
  %v890 = vunpack.c.h.b16 %v244
  %v891 = vunpack.c.l.b16 %v245
  %v892 = vunpack.c.h.b16 %v245
  %v893 = vunpack.c.l.b16 %v246
  %v894 = vunpack.c.h.b16 %v246
  %v895 = vunpack.c.l.b16 %v247
  %v896 = vunpack.c.h.b16 %v247
  %v897 = vunpack.c.l.b16 %v248
  %v898 = vunpack.c.h.b16 %v248
  %v899 = vunpack.c.l.b16 %v249
  %v900 = vunpack.c.h.b16 %v249
  %v901 = vunpack.c.l.b16 %v250
  %v902 = vunpack.c.h.b16 %v250
  %v903 = vunpack.c.l.b16 %v251
  %v904 = vunpack.c.h.b16 %v251
  %v905 = vunpack.c.l.b16 %v252
  %v906 = vunpack.c.h.b16 %v252
  %v907 = vunpack.c.l.b16 %v253
  %v908 = vunpack.c.h.b16 %v253
  %v909 = vunpack.c.l.b16 %v254
  %v910 = vunpack.c.h.b16 %v254
  %v911 = vpack.c.b16 %v753, %v751
  %v912 = vpack.c.b16 %v754, %v752
  %v913 = vpack.c.b16 %v757, %v755
  %v914 = vpack.c.b16 %v758, %v756
  %v915 = vpack.c.b16 %v761, %v759
  %v916 = vpack.c.b16 %v762, %v760
  %v917 = vpack.c.b16 %v765, %v763
  %v918 = vpack.c.b16 %v766, %v764
  %v919 = vpack.c.b16 %v769, %v767
  %v920 = vpack.c.b16 %v770, %v768
  %v921 = vpack.c.b16 %v773, %v771
  %v922 = vpack.c.b16 %v774, %v772
  %v923 = vpack.c.b16 %v777, %v775
  %v924 = vpack.c.b16 %v778, %v776
  %v925 = vpack.c.b16 %v781, %v779
  %v926 = vpack.c.b16 %v782, %v780
  %v927 = vpack.c.b16 %v785, %v783
  %v928 = vpack.c.b16 %v786, %v784
  %v929 = vpack.c.b16 %v789, %v787
  %v930 = vpack.c.b16 %v790, %v788
  %v931 = vpack.c.b16 %v793, %v791
  %v932 = vpack.c.b16 %v794, %v792
  %v933 = vpack.c.b16 %v797, %v795
  %v934 = vpack.c.b16 %v798, %v796
  %v935 = vpack.c.b16 %v801, %v799
  %v936 = vpack.c.b16 %v802, %v800
  %v937 = vpack.c.b16 %v805, %v803
  %v938 = vpack.c.b16 %v806, %v804
  %v939 = vpack.c.b16 %v809, %v807
  %v940 = vpack.c.b16 %v810, %v808
  %v941 = vpack.c.b16 %v813, %v811
  %v942 = vpack.c.b16 %v814, %v812
  %v943 = vpack.c.b16 %v817, %v815
  %v944 = vpack.c.b16 %v818, %v816
  %v945 = vpack.c.b16 %v821, %v819
  %v946 = vpack.c.b16 %v822, %v820
  %v947 = vpack.c.b16 %v825, %v823
  %v948 = vpack.c.b16 %v826, %v824
  %v949 = vpack.c.b16 %v829, %v827
  %v950 = vpack.c.b16 %v830, %v828
  %v951 = vpack.c.b16 %v833, %v831
  %v952 = vpack.c.b16 %v834, %v832
  %v953 = vpack.c.b16 %v837, %v835
  %v954 = vpack.c.b16 %v838, %v836
  %v955 = vpack.c.b16 %v841, %v839
  %v956 = vpack.c.b16 %v842, %v840
  %v957 = vpack.c.b16 %v845, %v843
  %v958 = vpack.c.b16 %v846, %v844
  %v959 = vpack.c.b16 %v849, %v847
  %v960 = vpack.c.b16 %v850, %v848
  %v961 = vpack.c.b16 %v853, %v851
  %v962 = vpack.c.b16 %v854, %v852
  %v963 = vpack.c.b16 %v857, %v855
  %v964 = vpack.c.b16 %v858, %v856
  %v965 = vpack.c.b16 %v861, %v859
  %v966 = vpack.c.b16 %v862, %v860
  %v967 = vpack.c.b16 %v865, %v863
  %v968 = vpack.c.b16 %v866, %v864
  %v969 = vpack.c.b16 %v869, %v867
  %v970 = vpack.c.b16 %v870, %v868
  %v971 = vpack.c.b16 %v873, %v871
  %v972 = vpack.c.b16 %v874, %v872
  %v973 = vpack.c.b16 %v877, %v875
  %v974 = vpack.c.b16 %v878, %v876
  %v975 = vpack.c.b16 %v881, %v879
  %v976 = vpack.c.b16 %v882, %v880
  %v977 = vpack.c.b16 %v885, %v883
  %v978 = vpack.c.b16 %v886, %v884
  %v979 = vpack.c.b16 %v889, %v887
  %v980 = vpack.c.b16 %v890, %v888
  %v981 = vpack.c.b16 %v893, %v891
  %v982 = vpack.c.b16 %v894, %v892
  %v983 = vpack.c.b16 %v897, %v895
  %v984 = vpack.c.b16 %v898, %v896
  %v985 = vpack.c.b16 %v901, %v899
  %v986 = vpack.c.b16 %v902, %v900
  %v987 = vpack.c.b16 %v905, %v903
  %v988 = vpack.c.b16 %v906, %v904
  %v989 = vpack.c.b16 %v909, %v907
  %v990 = vpack.c.b16 %v910, %v908
  %1071 = vmatprep.subr.bf16.mxu0 %v912
  %1072 = vmatpush1.bf16.msra.mxu0 %v911
  %1073 = vmatprep.subr.bf16.mxu0 %v914
  %1074 = vmatpush1.bf16.msra.mxu0 %v913
  %1075 = vmatprep.subr.bf16.mxu0 %v916
  %1076 = vmatpush1.bf16.msra.mxu0 %v915
  %1077 = vmatprep.subr.bf16.mxu0 %v918
  %1078 = vmatpush1.bf16.msra.mxu0 %v917
  %1079 = vmatprep.subr.bf16.mxu0 %v920
  %1080 = vmatpush1.bf16.msra.mxu0 %v919
  %1081 = vmatprep.subr.bf16.mxu0 %v922
  %1082 = vmatpush1.bf16.msra.mxu0 %v921
  %1083 = vmatprep.subr.bf16.mxu0 %v924
  %1084 = vmatpush1.bf16.msra.mxu0 %v923
  %1085 = vmatprep.subr.bf16.mxu0 %v926
  %1086 = vmatpush1.bf16.msra.mxu0 %v925
  %1087 = vmatprep.subr.bf16.mxu0 %v928
  %1088 = vmatpush1.bf16.msra.mxu0 %v927
  %1089 = vmatprep.subr.bf16.mxu0 %v930
  %1090 = vmatpush1.bf16.msra.mxu0 %v929
  %1091 = vmatprep.subr.bf16.mxu0 %v932
  %1092 = vmatpush1.bf16.msra.mxu0 %v931
  %1093 = vmatprep.subr.bf16.mxu0 %v934
  %1094 = vmatpush1.bf16.msra.mxu0 %v933
  %1095 = vmatprep.subr.bf16.mxu0 %v936
  %1096 = vmatpush1.bf16.msra.mxu0 %v935
  %1097 = vmatprep.subr.bf16.mxu0 %v938
  %1098 = vmatpush1.bf16.msra.mxu0 %v937
  %1099 = vmatprep.subr.bf16.mxu0 %v940
  %1100 = vmatpush1.bf16.msra.mxu0 %v939
  %1101 = vmatprep.subr.bf16.mxu0 %v942
  %1102 = vmatpush1.bf16.msra.mxu0 %v941
  %1103 = vmatprep.mubr.bf16.mxu0 %v512
  %1104 = vmatmul.mubr.bf16.gmra.mrb[0].mxu0 %v511
  %v1105 = vpop.f32.mrb[0].mxu0
  %v1106 = vadd.f32 0.0, %v1105
  %v1107 = vpop.f32.mrb[0].mxu0
  %v1108 = vadd.f32 0.0, %v1107
  %v1109 = vpop.f32.mrb[0].mxu0
  %v1110 = vadd.f32 0.0, %v1109
  %v1111 = vpop.f32.mrb[0].mxu0
  %v1112 = vadd.f32 0.0, %v1111
  %1113 = vmatprep.mubr.bf16.mxu0 %v517
  %1114 = vmatmul.mubr.bf16.gmra.mrb[0].mxu0 %v516
  %v1115 = vpop.f32.mrb[0].mxu0
  %v1116 = vadd.f32 0.0, %v1115
  %v1117 = vpop.f32.mrb[0].mxu0
  %v1118 = vadd.f32 0.0, %v1117
  %v1119 = vpop.f32.mrb[0].mxu0
  %v1120 = vadd.f32 0.0, %v1119
  %v1121 = vpop.f32.mrb[0].mxu0
  %v1122 = vadd.f32 0.0, %v1121
  %1123 = vmatprep.mubr.bf16.mxu0 %v522
  %1124 = vmatmul.mubr.bf16.gmra.mrb[0].mxu0 %v521
  %v1125 = vpop.f32.mrb[0].mxu0
  %v1126 = vadd.f32 0.0, %v1125
  %v1127 = vpop.f32.mrb[0].mxu0
  %v1128 = vadd.f32 0.0, %v1127
  %v1129 = vpop.f32.mrb[0].mxu0
  %v1130 = vadd.f32 0.0, %v1129
  %v1131 = vpop.f32.mrb[0].mxu0
  %v1132 = vadd.f32 0.0, %v1131
  %1133 = vmatprep.mubr.bf16.mxu0 %v527
  %1134 = vmatmul.mubr.bf16.gmra.mrb[0].mxu0 %v526
  %v1135 = vpop.f32.mrb[0].mxu0
  %v1136 = vadd.f32 0.0, %v1135
  %v1137 = vpop.f32.mrb[0].mxu0
  %v1138 = vadd.f32 0.0, %v1137
  %v1139 = vpop.f32.mrb[0].mxu0
  %v1140 = vadd.f32 0.0, %v1139
  %v1141 = vpop.f32.mrb[0].mxu0
  %v1142 = vadd.f32 0.0, %v1141
  %1143 = vmatprep.mubr.bf16.mxu0 %v532
  %1144 = vmatmul.mubr.bf16.gmra.mrb[0].mxu0 %v531
  %v1145 = vpop.f32.mrb[0].mxu0
  %v1146 = vadd.f32 0.0, %v1145
  %v1147 = vpop.f32.mrb[0].mxu0
  %v1148 = vadd.f32 0.0, %v1147
  %v1149 = vpop.f32.mrb[0].mxu0
  %v1150 = vadd.f32 0.0, %v1149
  %v1151 = vpop.f32.mrb[0].mxu0
  %v1152 = vadd.f32 0.0, %v1151
  %1153 = vmatprep.mubr.bf16.mxu0 %v537
  %1154 = vmatmul.mubr.bf16.gmra.mrb[0].mxu0 %v536
  %v1155 = vpop.f32.mrb[0].mxu0
  %v1156 = vadd.f32 0.0, %v1155
  %v1157 = vpop.f32.mrb[0].mxu0
  %v1158 = vadd.f32 0.0, %v1157
  %v1159 = vpop.f32.mrb[0].mxu0
  %v1160 = vadd.f32 0.0, %v1159
  %v1161 = vpop.f32.mrb[0].mxu0
  %v1162 = vadd.f32 0.0, %v1161
  %1163 = vmatprep.mubr.bf16.mxu0 %v542
  %1164 = vmatmul.mubr.bf16.gmra.mrb[0].mxu0 %v541
  %v1165 = vpop.f32.mrb[0].mxu0
  %v1166 = vadd.f32 0.0, %v1165
  %v1167 = vpop.f32.mrb[0].mxu0
  %v1168 = vadd.f32 0.0, %v1167
  %v1169 = vpop.f32.mrb[0].mxu0
  %v1170 = vadd.f32 0.0, %v1169
  %v1171 = vpop.f32.mrb[0].mxu0
  %v1172 = vadd.f32 0.0, %v1171
  %1173 = vmatprep.mubr.bf16.mxu0 %v547
  %1174 = vmatmul.mubr.bf16.gmra.mrb[0].mxu0 %v546
  %v1175 = vpop.f32.mrb[0].mxu0
  %v1176 = vadd.f32 0.0, %v1175
  %v1177 = vpop.f32.mrb[0].mxu0
  %v1178 = vadd.f32 0.0, %v1177
  %v1179 = vpop.f32.mrb[0].mxu0
  %v1180 = vadd.f32 0.0, %v1179
  %v1181 = vpop.f32.mrb[0].mxu0
  %v1182 = vadd.f32 0.0, %v1181
  %1183 = vmatprep.mubr.bf16.mxu0 %v552
  %1184 = vmatmul.mubr.bf16.gmra.mrb[0].mxu0 %v551
  %v1185 = vpop.f32.mrb[0].mxu0
  %v1186 = vadd.f32 0.0, %v1185
  %v1187 = vpop.f32.mrb[0].mxu0
  %v1188 = vadd.f32 0.0, %v1187
  %v1189 = vpop.f32.mrb[0].mxu0
  %v1190 = vadd.f32 0.0, %v1189
  %v1191 = vpop.f32.mrb[0].mxu0
  %v1192 = vadd.f32 0.0, %v1191
  %1193 = vmatprep.mubr.bf16.mxu0 %v557
  %1194 = vmatmul.mubr.bf16.gmra.mrb[0].mxu0 %v556
  %v1195 = vpop.f32.mrb[0].mxu0
  %v1196 = vadd.f32 0.0, %v1195
  %v1197 = vpop.f32.mrb[0].mxu0
  %v1198 = vadd.f32 0.0, %v1197
  %v1199 = vpop.f32.mrb[0].mxu0
  %v1200 = vadd.f32 0.0, %v1199
  %v1201 = vpop.f32.mrb[0].mxu0
  %v1202 = vadd.f32 0.0, %v1201
  %1203 = vmatprep.mubr.bf16.mxu0 %v562
  %1204 = vmatmul.mubr.bf16.gmra.mrb[0].mxu0 %v561
  %v1205 = vpop.f32.mrb[0].mxu0
  %v1206 = vadd.f32 0.0, %v1205
  %v1207 = vpop.f32.mrb[0].mxu0
  %v1208 = vadd.f32 0.0, %v1207
  %v1209 = vpop.f32.mrb[0].mxu0
  %v1210 = vadd.f32 0.0, %v1209
  %v1211 = vpop.f32.mrb[0].mxu0
  %v1212 = vadd.f32 0.0, %v1211
  %1213 = vmatprep.mubr.bf16.mxu0 %v567
  %1214 = vmatmul.mubr.bf16.gmra.mrb[0].mxu0 %v566
  %v1215 = vpop.f32.mrb[0].mxu0
  %v1216 = vadd.f32 0.0, %v1215
  %v1217 = vpop.f32.mrb[0].mxu0
  %v1218 = vadd.f32 0.0, %v1217
  %v1219 = vpop.f32.mrb[0].mxu0
  %v1220 = vadd.f32 0.0, %v1219
  %v1221 = vpop.f32.mrb[0].mxu0
  %v1222 = vadd.f32 0.0, %v1221
  %1223 = vmatprep.mubr.bf16.mxu0 %v572
  %1224 = vmatmul.mubr.bf16.gmra.mrb[0].mxu0 %v571
  %v1225 = vpop.f32.mrb[0].mxu0
  %v1226 = vadd.f32 0.0, %v1225
  %v1227 = vpop.f32.mrb[0].mxu0
  %v1228 = vadd.f32 0.0, %v1227
  %v1229 = vpop.f32.mrb[0].mxu0
  %v1230 = vadd.f32 0.0, %v1229
  %v1231 = vpop.f32.mrb[0].mxu0
  %v1232 = vadd.f32 0.0, %v1231
  %1233 = vmatprep.mubr.bf16.mxu0 %v577
  %1234 = vmatmul.mubr.bf16.gmra.mrb[0].mxu0 %v576
  %v1235 = vpop.f32.mrb[0].mxu0
  %v1236 = vadd.f32 0.0, %v1235
  %v1237 = vpop.f32.mrb[0].mxu0
  %v1238 = vadd.f32 0.0, %v1237
  %v1239 = vpop.f32.mrb[0].mxu0
  %v1240 = vadd.f32 0.0, %v1239
  %v1241 = vpop.f32.mrb[0].mxu0
  %v1242 = vadd.f32 0.0, %v1241
  %1243 = vmatprep.mubr.bf16.mxu0 %v582
  %1244 = vmatmul.mubr.bf16.gmra.mrb[0].mxu0 %v581
  %v1245 = vpop.f32.mrb[0].mxu0
  %v1246 = vadd.f32 0.0, %v1245
  %v1247 = vpop.f32.mrb[0].mxu0
  %v1248 = vadd.f32 0.0, %v1247
  %v1249 = vpop.f32.mrb[0].mxu0
  %v1250 = vadd.f32 0.0, %v1249
  %v1251 = vpop.f32.mrb[0].mxu0
  %v1252 = vadd.f32 0.0, %v1251
  %1253 = vmatprep.mubr.bf16.mxu0 %v587
  %1254 = vmatmul.mubr.bf16.gmra.mrb[0].mxu0 %v586
  %v1255 = vpop.f32.mrb[0].mxu0
  %v1256 = vadd.f32 0.0, %v1255
  %v1257 = vpop.f32.mrb[0].mxu0
  %v1258 = vadd.f32 0.0, %v1257
  %v1259 = vpop.f32.mrb[0].mxu0
  %v1260 = vadd.f32 0.0, %v1259
  %v1261 = vpop.f32.mrb[0].mxu0
  %v1262 = vadd.f32 0.0, %v1261
  %1263 = vdwg.mxu0
  %1264 = vmatprep.subr.bf16.mxu0 %v944
  %1265 = vmatpush1.bf16.msra.mxu0 %v943
  %1266 = vmatprep.subr.bf16.mxu0 %v946
  %1267 = vmatpush1.bf16.msra.mxu0 %v945
  %1268 = vmatprep.subr.bf16.mxu0 %v948
  %1269 = vmatpush1.bf16.msra.mxu0 %v947
  %1270 = vmatprep.subr.bf16.mxu0 %v950
  %1271 = vmatpush1.bf16.msra.mxu0 %v949
  %1272 = vmatprep.subr.bf16.mxu0 %v952
  %1273 = vmatpush1.bf16.msra.mxu0 %v951
  %1274 = vmatprep.subr.bf16.mxu0 %v954
  %1275 = vmatpush1.bf16.msra.mxu0 %v953
  %1276 = vmatprep.subr.bf16.mxu0 %v956
  %1277 = vmatpush1.bf16.msra.mxu0 %v955
  %1278 = vmatprep.subr.bf16.mxu0 %v958
  %1279 = vmatpush1.bf16.msra.mxu0 %v957
  %1280 = vmatprep.subr.bf16.mxu0 %v960
  %1281 = vmatpush1.bf16.msra.mxu0 %v959
  %1282 = vmatprep.subr.bf16.mxu0 %v962
  %1283 = vmatpush1.bf16.msra.mxu0 %v961
  %1284 = vmatprep.subr.bf16.mxu0 %v964
  %1285 = vmatpush1.bf16.msra.mxu0 %v963
  %1286 = vmatprep.subr.bf16.mxu0 %v966
  %1287 = vmatpush1.bf16.msra.mxu0 %v965
  %1288 = vmatprep.subr.bf16.mxu0 %v968
  %1289 = vmatpush1.bf16.msra.mxu0 %v967
  %1290 = vmatprep.subr.bf16.mxu0 %v970
  %1291 = vmatpush1.bf16.msra.mxu0 %v969
  %1292 = vmatprep.subr.bf16.mxu0 %v972
  %1293 = vmatpush1.bf16.msra.mxu0 %v971
  %1294 = vmatprep.subr.bf16.mxu0 %v974
  %1295 = vmatpush1.bf16.msra.mxu0 %v973
  %1296 = vmatprep.mubr.bf16.mxu0 %v514
  %1297 = vmatmul.mubr.bf16.gmra.mrb[0].mxu0 %v513
  %v1298 = vpop.f32.mrb[0].mxu0
  %v1299 = vadd.f32 %v1106, %v1298
  %v1300 = vpop.f32.mrb[0].mxu0
  %v1301 = vadd.f32 %v1108, %v1300
  %v1302 = vpop.f32.mrb[0].mxu0
  %v1303 = vadd.f32 %v1110, %v1302
  %v1304 = vpop.f32.mrb[0].mxu0
  %v1305 = vadd.f32 %v1112, %v1304
  %1306 = vmatprep.mubr.bf16.mxu0 %v519
  %1307 = vmatmul.mubr.bf16.gmra.mrb[0].mxu0 %v518
  %v1308 = vpop.f32.mrb[0].mxu0
  %v1309 = vadd.f32 %v1116, %v1308
  %v1310 = vpop.f32.mrb[0].mxu0
  %v1311 = vadd.f32 %v1118, %v1310
  %v1312 = vpop.f32.mrb[0].mxu0
  %v1313 = vadd.f32 %v1120, %v1312
  %v1314 = vpop.f32.mrb[0].mxu0
  %v1315 = vadd.f32 %v1122, %v1314
  %1316 = vmatprep.mubr.bf16.mxu0 %v524
  %1317 = vmatmul.mubr.bf16.gmra.mrb[0].mxu0 %v523
  %v1318 = vpop.f32.mrb[0].mxu0
  %v1319 = vadd.f32 %v1126, %v1318
  %v1320 = vpop.f32.mrb[0].mxu0
  %v1321 = vadd.f32 %v1128, %v1320
  %v1322 = vpop.f32.mrb[0].mxu0
  %v1323 = vadd.f32 %v1130, %v1322
  %v1324 = vpop.f32.mrb[0].mxu0
  %v1325 = vadd.f32 %v1132, %v1324
  %1326 = vmatprep.mubr.bf16.mxu0 %v529
  %1327 = vmatmul.mubr.bf16.gmra.mrb[0].mxu0 %v528
  %v1328 = vpop.f32.mrb[0].mxu0
  %v1329 = vadd.f32 %v1136, %v1328
  %v1330 = vpop.f32.mrb[0].mxu0
  %v1331 = vadd.f32 %v1138, %v1330
  %v1332 = vpop.f32.mrb[0].mxu0
  %v1333 = vadd.f32 %v1140, %v1332
  %v1334 = vpop.f32.mrb[0].mxu0
  %v1335 = vadd.f32 %v1142, %v1334
  %1336 = vmatprep.mubr.bf16.mxu0 %v534
  %1337 = vmatmul.mubr.bf16.gmra.mrb[0].mxu0 %v533
  %v1338 = vpop.f32.mrb[0].mxu0
  %v1339 = vadd.f32 %v1146, %v1338
  %v1340 = vpop.f32.mrb[0].mxu0
  %v1341 = vadd.f32 %v1148, %v1340
  %v1342 = vpop.f32.mrb[0].mxu0
  %v1343 = vadd.f32 %v1150, %v1342
  %v1344 = vpop.f32.mrb[0].mxu0
  %v1345 = vadd.f32 %v1152, %v1344
  %1346 = vmatprep.mubr.bf16.mxu0 %v539
  %1347 = vmatmul.mubr.bf16.gmra.mrb[0].mxu0 %v538
  %v1348 = vpop.f32.mrb[0].mxu0
  %v1349 = vadd.f32 %v1156, %v1348
  %v1350 = vpop.f32.mrb[0].mxu0
  %v1351 = vadd.f32 %v1158, %v1350
  %v1352 = vpop.f32.mrb[0].mxu0
  %v1353 = vadd.f32 %v1160, %v1352
  %v1354 = vpop.f32.mrb[0].mxu0
  %v1355 = vadd.f32 %v1162, %v1354
  %1356 = vmatprep.mubr.bf16.mxu0 %v544
  %1357 = vmatmul.mubr.bf16.gmra.mrb[0].mxu0 %v543
  %v1358 = vpop.f32.mrb[0].mxu0
  %v1359 = vadd.f32 %v1166, %v1358
  %v1360 = vpop.f32.mrb[0].mxu0
  %v1361 = vadd.f32 %v1168, %v1360
  %v1362 = vpop.f32.mrb[0].mxu0
  %v1363 = vadd.f32 %v1170, %v1362
  %v1364 = vpop.f32.mrb[0].mxu0
  %v1365 = vadd.f32 %v1172, %v1364
  %1366 = vmatprep.mubr.bf16.mxu0 %v549
  %1367 = vmatmul.mubr.bf16.gmra.mrb[0].mxu0 %v548
  %v1368 = vpop.f32.mrb[0].mxu0
  %v1369 = vadd.f32 %v1176, %v1368
  %v1370 = vpop.f32.mrb[0].mxu0
  %v1371 = vadd.f32 %v1178, %v1370
  %v1372 = vpop.f32.mrb[0].mxu0
  %v1373 = vadd.f32 %v1180, %v1372
  %v1374 = vpop.f32.mrb[0].mxu0
  %v1375 = vadd.f32 %v1182, %v1374
  %1376 = vmatprep.mubr.bf16.mxu0 %v554
  %1377 = vmatmul.mubr.bf16.gmra.mrb[0].mxu0 %v553
  %v1378 = vpop.f32.mrb[0].mxu0
  %v1379 = vadd.f32 %v1186, %v1378
  %v1380 = vpop.f32.mrb[0].mxu0
  %v1381 = vadd.f32 %v1188, %v1380
  %v1382 = vpop.f32.mrb[0].mxu0
  %v1383 = vadd.f32 %v1190, %v1382
  %v1384 = vpop.f32.mrb[0].mxu0
  %v1385 = vadd.f32 %v1192, %v1384
  %1386 = vmatprep.mubr.bf16.mxu0 %v559
  %1387 = vmatmul.mubr.bf16.gmra.mrb[0].mxu0 %v558
  %v1388 = vpop.f32.mrb[0].mxu0
  %v1389 = vadd.f32 %v1196, %v1388
  %v1390 = vpop.f32.mrb[0].mxu0
  %v1391 = vadd.f32 %v1198, %v1390
  %v1392 = vpop.f32.mrb[0].mxu0
  %v1393 = vadd.f32 %v1200, %v1392
  %v1394 = vpop.f32.mrb[0].mxu0
  %v1395 = vadd.f32 %v1202, %v1394
  %1396 = vmatprep.mubr.bf16.mxu0 %v564
  %1397 = vmatmul.mubr.bf16.gmra.mrb[0].mxu0 %v563
  %v1398 = vpop.f32.mrb[0].mxu0
  %v1399 = vadd.f32 %v1206, %v1398
  %v1400 = vpop.f32.mrb[0].mxu0
  %v1401 = vadd.f32 %v1208, %v1400
  %v1402 = vpop.f32.mrb[0].mxu0
  %v1403 = vadd.f32 %v1210, %v1402
  %v1404 = vpop.f32.mrb[0].mxu0
  %v1405 = vadd.f32 %v1212, %v1404
  %1406 = vmatprep.mubr.bf16.mxu0 %v569
  %1407 = vmatmul.mubr.bf16.gmra.mrb[0].mxu0 %v568
  %v1408 = vpop.f32.mrb[0].mxu0
  %v1409 = vadd.f32 %v1216, %v1408
  %v1410 = vpop.f32.mrb[0].mxu0
  %v1411 = vadd.f32 %v1218, %v1410
  %v1412 = vpop.f32.mrb[0].mxu0
  %v1413 = vadd.f32 %v1220, %v1412
  %v1414 = vpop.f32.mrb[0].mxu0
  %v1415 = vadd.f32 %v1222, %v1414
  %1416 = vmatprep.mubr.bf16.mxu0 %v574
  %1417 = vmatmul.mubr.bf16.gmra.mrb[0].mxu0 %v573
  %v1418 = vpop.f32.mrb[0].mxu0
  %v1419 = vadd.f32 %v1226, %v1418
  %v1420 = vpop.f32.mrb[0].mxu0
  %v1421 = vadd.f32 %v1228, %v1420
  %v1422 = vpop.f32.mrb[0].mxu0
  %v1423 = vadd.f32 %v1230, %v1422
  %v1424 = vpop.f32.mrb[0].mxu0
  %v1425 = vadd.f32 %v1232, %v1424
  %1426 = vmatprep.mubr.bf16.mxu0 %v579
  %1427 = vmatmul.mubr.bf16.gmra.mrb[0].mxu0 %v578
  %v1428 = vpop.f32.mrb[0].mxu0
  %v1429 = vadd.f32 %v1236, %v1428
  %v1430 = vpop.f32.mrb[0].mxu0
  %v1431 = vadd.f32 %v1238, %v1430
  %v1432 = vpop.f32.mrb[0].mxu0
  %v1433 = vadd.f32 %v1240, %v1432
  %v1434 = vpop.f32.mrb[0].mxu0
  %v1435 = vadd.f32 %v1242, %v1434
  %1436 = vmatprep.mubr.bf16.mxu0 %v584
  %1437 = vmatmul.mubr.bf16.gmra.mrb[0].mxu0 %v583
  %v1438 = vpop.f32.mrb[0].mxu0
  %v1439 = vadd.f32 %v1246, %v1438
  %v1440 = vpop.f32.mrb[0].mxu0
  %v1441 = vadd.f32 %v1248, %v1440
  %v1442 = vpop.f32.mrb[0].mxu0
  %v1443 = vadd.f32 %v1250, %v1442
  %v1444 = vpop.f32.mrb[0].mxu0
  %v1445 = vadd.f32 %v1252, %v1444
  %1446 = vmatprep.mubr.bf16.mxu0 %v589
  %1447 = vmatmul.mubr.bf16.gmra.mrb[0].mxu0 %v588
  %v1448 = vpop.f32.mrb[0].mxu0
  %v1449 = vadd.f32 %v1256, %v1448
  %v1450 = vpop.f32.mrb[0].mxu0
  %v1451 = vadd.f32 %v1258, %v1450
  %v1452 = vpop.f32.mrb[0].mxu0
  %v1453 = vadd.f32 %v1260, %v1452
  %v1454 = vpop.f32.mrb[0].mxu0
  %v1455 = vadd.f32 %v1262, %v1454
  %1456 = vdwg.mxu0
  %1457 = vmatprep.subr.bf16.mxu0 %v976
  %1458 = vmatpush1.bf16.msra.mxu0 %v975
  %1459 = vmatprep.subr.bf16.mxu0 %v978
  %1460 = vmatpush1.bf16.msra.mxu0 %v977
  %1461 = vmatprep.subr.bf16.mxu0 %v980
  %1462 = vmatpush1.bf16.msra.mxu0 %v979
  %1463 = vmatprep.subr.bf16.mxu0 %v982
  %1464 = vmatpush1.bf16.msra.mxu0 %v981
  %1465 = vmatprep.subr.bf16.mxu0 %v984
  %1466 = vmatpush1.bf16.msra.mxu0 %v983
  %1467 = vmatprep.subr.bf16.mxu0 %v986
  %1468 = vmatpush1.bf16.msra.mxu0 %v985
  %1469 = vmatprep.subr.bf16.mxu0 %v988
  %1470 = vmatpush1.bf16.msra.mxu0 %v987
  %1471 = vmatprep.subr.bf16.mxu0 %v990
  %1472 = vmatpush1.bf16.msra.mxu0 %v989
  %1473 = vmatprep.subr.bf16.mxu0 0
  %1474 = vmatpush1.bf16.msra.mxu0 0
  %1475 = vmatprep.subr.bf16.mxu0 0
  %1476 = vmatpush1.bf16.msra.mxu0 0
  %1477 = vmatprep.subr.bf16.mxu0 0
  %1478 = vmatpush1.bf16.msra.mxu0 0
  %1479 = vmatprep.subr.bf16.mxu0 0
  %1480 = vmatpush1.bf16.msra.mxu0 0
  %1481 = vmatprep.subr.bf16.mxu0 0
  %1482 = vmatpush1.bf16.msra.mxu0 0
  %1483 = vmatprep.subr.bf16.mxu0 0
  %1484 = vmatpush1.bf16.msra.mxu0 0
  %1485 = vmatprep.subr.bf16.mxu0 0
  %1486 = vmatpush1.bf16.msra.mxu0 0
  %1487 = vmatprep.subr.bf16.mxu0 0
  %1488 = vmatpush1.bf16.msra.mxu0 0
  %1489 = vmatprep.mubr.bf16.mxu0 0
  %1490 = vmatmul.mubr.bf16.gmra.mrb[0].mxu0 %v515
  %v1491 = vpop.f32.mrb[0].mxu0
  %v1492 = vadd.f32 %v1299, %v1491
  %v1493 = vpop.f32.mrb[0].mxu0
  %v1494 = vadd.f32 %v1301, %v1493
  %v1495 = vpop.f32.mrb[0].mxu0
  %v1496 = vadd.f32 %v1303, %v1495
  %v1497 = vpop.f32.mrb[0].mxu0
  %v1498 = vadd.f32 %v1305, %v1497
  %1499 = vmatprep.mubr.bf16.mxu0 0
  %1500 = vmatmul.mubr.bf16.gmra.mrb[0].mxu0 %v520
  %v1501 = vpop.f32.mrb[0].mxu0
  %v1502 = vadd.f32 %v1309, %v1501
  %v1503 = vpop.f32.mrb[0].mxu0
  %v1504 = vadd.f32 %v1311, %v1503
  %v1505 = vpop.f32.mrb[0].mxu0
  %v1506 = vadd.f32 %v1313, %v1505
  %v1507 = vpop.f32.mrb[0].mxu0
  %v1508 = vadd.f32 %v1315, %v1507
  %1509 = vmatprep.mubr.bf16.mxu0 0
  %1510 = vmatmul.mubr.bf16.gmra.mrb[0].mxu0 %v525
  %v1511 = vpop.f32.mrb[0].mxu0
  %v1512 = vadd.f32 %v1319, %v1511
  %v1513 = vpop.f32.mrb[0].mxu0
  %v1514 = vadd.f32 %v1321, %v1513
  %v1515 = vpop.f32.mrb[0].mxu0
  %v1516 = vadd.f32 %v1323, %v1515
  %v1517 = vpop.f32.mrb[0].mxu0
  %v1518 = vadd.f32 %v1325, %v1517
  %1519 = vmatprep.mubr.bf16.mxu0 0
  %1520 = vmatmul.mubr.bf16.gmra.mrb[0].mxu0 %v530
  %v1521 = vpop.f32.mrb[0].mxu0
  %v1522 = vadd.f32 %v1329, %v1521
  %v1523 = vpop.f32.mrb[0].mxu0
  %v1524 = vadd.f32 %v1331, %v1523
  %v1525 = vpop.f32.mrb[0].mxu0
  %v1526 = vadd.f32 %v1333, %v1525
  %v1527 = vpop.f32.mrb[0].mxu0
  %v1528 = vadd.f32 %v1335, %v1527
  %1529 = vmatprep.mubr.bf16.mxu0 0
  %1530 = vmatmul.mubr.bf16.gmra.mrb[0].mxu0 %v535
  %v1531 = vpop.f32.mrb[0].mxu0
  %v1532 = vadd.f32 %v1339, %v1531
  %v1533 = vpop.f32.mrb[0].mxu0
  %v1534 = vadd.f32 %v1341, %v1533
  %v1535 = vpop.f32.mrb[0].mxu0
  %v1536 = vadd.f32 %v1343, %v1535
  %v1537 = vpop.f32.mrb[0].mxu0
  %v1538 = vadd.f32 %v1345, %v1537
  %1539 = vmatprep.mubr.bf16.mxu0 0
  %1540 = vmatmul.mubr.bf16.gmra.mrb[0].mxu0 %v540
  %v1541 = vpop.f32.mrb[0].mxu0
  %v1542 = vadd.f32 %v1349, %v1541
  %v1543 = vpop.f32.mrb[0].mxu0
  %v1544 = vadd.f32 %v1351, %v1543
  %v1545 = vpop.f32.mrb[0].mxu0
  %v1546 = vadd.f32 %v1353, %v1545
  %v1547 = vpop.f32.mrb[0].mxu0
  %v1548 = vadd.f32 %v1355, %v1547
  %1549 = vmatprep.mubr.bf16.mxu0 0
  %1550 = vmatmul.mubr.bf16.gmra.mrb[0].mxu0 %v545
  %v1551 = vpop.f32.mrb[0].mxu0
  %v1552 = vadd.f32 %v1359, %v1551
  %v1553 = vpop.f32.mrb[0].mxu0
  %v1554 = vadd.f32 %v1361, %v1553
  %v1555 = vpop.f32.mrb[0].mxu0
  %v1556 = vadd.f32 %v1363, %v1555
  %v1557 = vpop.f32.mrb[0].mxu0
  %v1558 = vadd.f32 %v1365, %v1557
  %1559 = vmatprep.mubr.bf16.mxu0 0
  %1560 = vmatmul.mubr.bf16.gmra.mrb[0].mxu0 %v550
  %v1561 = vpop.f32.mrb[0].mxu0
  %v1562 = vadd.f32 %v1369, %v1561
  %v1563 = vpop.f32.mrb[0].mxu0
  %v1564 = vadd.f32 %v1371, %v1563
  %v1565 = vpop.f32.mrb[0].mxu0
  %v1566 = vadd.f32 %v1373, %v1565
  %v1567 = vpop.f32.mrb[0].mxu0
  %v1568 = vadd.f32 %v1375, %v1567
  %1569 = vmatprep.mubr.bf16.mxu0 0
  %1570 = vmatmul.mubr.bf16.gmra.mrb[0].mxu0 %v555
  %v1571 = vpop.f32.mrb[0].mxu0
  %v1572 = vadd.f32 %v1379, %v1571
  %v1573 = vpop.f32.mrb[0].mxu0
  %v1574 = vadd.f32 %v1381, %v1573
  %v1575 = vpop.f32.mrb[0].mxu0
  %v1576 = vadd.f32 %v1383, %v1575
  %v1577 = vpop.f32.mrb[0].mxu0
  %v1578 = vadd.f32 %v1385, %v1577
  %1579 = vmatprep.mubr.bf16.mxu0 0
  %1580 = vmatmul.mubr.bf16.gmra.mrb[0].mxu0 %v560
  %v1581 = vpop.f32.mrb[0].mxu0
  %v1582 = vadd.f32 %v1389, %v1581
  %v1583 = vpop.f32.mrb[0].mxu0
  %v1584 = vadd.f32 %v1391, %v1583
  %v1585 = vpop.f32.mrb[0].mxu0
  %v1586 = vadd.f32 %v1393, %v1585
  %v1587 = vpop.f32.mrb[0].mxu0
  %v1588 = vadd.f32 %v1395, %v1587
  %1589 = vmatprep.mubr.bf16.mxu0 0
  %1590 = vmatmul.mubr.bf16.gmra.mrb[0].mxu0 %v565
  %v1591 = vpop.f32.mrb[0].mxu0
  %v1592 = vadd.f32 %v1399, %v1591
  %v1593 = vpop.f32.mrb[0].mxu0
  %v1594 = vadd.f32 %v1401, %v1593
  %v1595 = vpop.f32.mrb[0].mxu0
  %v1596 = vadd.f32 %v1403, %v1595
  %v1597 = vpop.f32.mrb[0].mxu0
  %v1598 = vadd.f32 %v1405, %v1597
  %1599 = vmatprep.mubr.bf16.mxu0 0
  %1600 = vmatmul.mubr.bf16.gmra.mrb[0].mxu0 %v570
  %v1601 = vpop.f32.mrb[0].mxu0
  %v1602 = vadd.f32 %v1409, %v1601
  %v1603 = vpop.f32.mrb[0].mxu0
  %v1604 = vadd.f32 %v1411, %v1603
  %v1605 = vpop.f32.mrb[0].mxu0
  %v1606 = vadd.f32 %v1413, %v1605
  %v1607 = vpop.f32.mrb[0].mxu0
  %v1608 = vadd.f32 %v1415, %v1607
  %1609 = vmatprep.mubr.bf16.mxu0 0
  %1610 = vmatmul.mubr.bf16.gmra.mrb[0].mxu0 %v575
  %v1611 = vpop.f32.mrb[0].mxu0
  %v1612 = vadd.f32 %v1419, %v1611
  %v1613 = vpop.f32.mrb[0].mxu0
  %v1614 = vadd.f32 %v1421, %v1613
  %v1615 = vpop.f32.mrb[0].mxu0
  %v1616 = vadd.f32 %v1423, %v1615
  %v1617 = vpop.f32.mrb[0].mxu0
  %v1618 = vadd.f32 %v1425, %v1617
  %1619 = vmatprep.mubr.bf16.mxu0 0
  %1620 = vmatmul.mubr.bf16.gmra.mrb[0].mxu0 %v580
  %v1621 = vpop.f32.mrb[0].mxu0
  %v1622 = vadd.f32 %v1429, %v1621
  %v1623 = vpop.f32.mrb[0].mxu0
  %v1624 = vadd.f32 %v1431, %v1623
  %v1625 = vpop.f32.mrb[0].mxu0
  %v1626 = vadd.f32 %v1433, %v1625
  %v1627 = vpop.f32.mrb[0].mxu0
  %v1628 = vadd.f32 %v1435, %v1627
  %1629 = vmatprep.mubr.bf16.mxu0 0
  %1630 = vmatmul.mubr.bf16.gmra.mrb[0].mxu0 %v585
  %v1631 = vpop.f32.mrb[0].mxu0
  %v1632 = vadd.f32 %v1439, %v1631
  %v1633 = vpop.f32.mrb[0].mxu0
  %v1634 = vadd.f32 %v1441, %v1633
  %v1635 = vpop.f32.mrb[0].mxu0
  %v1636 = vadd.f32 %v1443, %v1635
  %v1637 = vpop.f32.mrb[0].mxu0
  %v1638 = vadd.f32 %v1445, %v1637
  %1639 = vmatprep.mubr.bf16.mxu0 0
  %1640 = vmatmul.mubr.bf16.gmra.mrb[0].mxu0 %v590
  %v1641 = vpop.f32.mrb[0].mxu0
  %v1642 = vadd.f32 %v1449, %v1641
  %v1643 = vpop.f32.mrb[0].mxu0
  %v1644 = vadd.f32 %v1451, %v1643
  %v1645 = vpop.f32.mrb[0].mxu0
  %v1646 = vadd.f32 %v1453, %v1645
  %v1647 = vpop.f32.mrb[0].mxu0
  %v1648 = vadd.f32 %v1455, %v1647
  %1649 = vdwg.mxu0
  %v1682 = vunpack.c.h.b16 %v17
  %v1683 = vunpack.c.l.b16 %v18
  %v1684 = vunpack.c.h.b16 %v22
  %v1685 = vunpack.c.l.b16 %v23
  %v1686 = vunpack.c.h.b16 %v27
  %v1687 = vunpack.c.l.b16 %v28
  %v1688 = vunpack.c.h.b16 %v32
  %v1689 = vunpack.c.l.b16 %v33
  %v1690 = vunpack.c.h.b16 %v37
  %v1691 = vunpack.c.l.b16 %v38
  %v1692 = vunpack.c.h.b16 %v42
  %v1693 = vunpack.c.l.b16 %v43
  %v1694 = vunpack.c.h.b16 %v47
  %v1695 = vunpack.c.l.b16 %v48
  %v1696 = vunpack.c.h.b16 %v52
  %v1697 = vunpack.c.l.b16 %v53
  %v1698 = vunpack.c.h.b16 %v57
  %v1699 = vunpack.c.l.b16 %v58
  %v1700 = vunpack.c.h.b16 %v62
  %v1701 = vunpack.c.l.b16 %v63
  %v1702 = vunpack.c.h.b16 %v67
  %v1703 = vunpack.c.l.b16 %v68
  %v1704 = vunpack.c.h.b16 %v72
  %v1705 = vunpack.c.l.b16 %v73
  %v1706 = vunpack.c.h.b16 %v77
  %v1707 = vunpack.c.l.b16 %v78
  %v1708 = vunpack.c.h.b16 %v82
  %v1709 = vunpack.c.l.b16 %v83
  %v1710 = vunpack.c.h.b16 %v87
  %v1711 = vunpack.c.l.b16 %v88
  %v1712 = vunpack.c.h.b16 %v92
  %v1713 = vunpack.c.l.b16 %v93
  %v1714 = vunpack.c.h.b16 %v97
  %v1715 = vunpack.c.l.b16 %v98
  %v1716 = vunpack.c.h.b16 %v102
  %v1717 = vunpack.c.l.b16 %v103
  %v1718 = vunpack.c.h.b16 %v107
  %v1719 = vunpack.c.l.b16 %v108
  %v1720 = vunpack.c.h.b16 %v112
  %v1721 = vunpack.c.l.b16 %v113
  %v1722 = vunpack.c.h.b16 %v117
  %v1723 = vunpack.c.l.b16 %v118
  %v1724 = vunpack.c.h.b16 %v122
  %v1725 = vunpack.c.l.b16 %v123
  %v1726 = vunpack.c.h.b16 %v127
  %v1727 = vunpack.c.l.b16 %v128
  %v1728 = vunpack.c.h.b16 %v132
  %v1729 = vunpack.c.l.b16 %v133
  %v1730 = vunpack.c.h.b16 %v137
  %v1731 = vunpack.c.l.b16 %v138
  %v1732 = vunpack.c.h.b16 %v142
  %v1733 = vunpack.c.l.b16 %v143
  %v1734 = vunpack.c.h.b16 %v147
  %v1735 = vunpack.c.l.b16 %v148
  %v1736 = vunpack.c.h.b16 %v152
  %v1737 = vunpack.c.l.b16 %v153
  %v1738 = vunpack.c.h.b16 %v157
  %v1739 = vunpack.c.l.b16 %v158
  %v1740 = vunpack.c.h.b16 %v162
  %v1741 = vunpack.c.l.b16 %v163
  %v1742 = vunpack.c.h.b16 %v167
  %v1743 = vunpack.c.l.b16 %v168
  %v1744 = vunpack.c.h.b16 %v172
  %v1745 = vunpack.c.l.b16 %v173
  %v1746 = vpack.c.b16 %v1684, %v1682
  %v1747 = vpack.c.b16 %v1685, %v1683
  %v1748 = vpack.c.b16 %v1688, %v1686
  %v1749 = vpack.c.b16 %v1689, %v1687
  %v1750 = vpack.c.b16 %v1692, %v1690
  %v1751 = vpack.c.b16 %v1693, %v1691
  %v1752 = vpack.c.b16 %v1696, %v1694
  %v1753 = vpack.c.b16 %v1697, %v1695
  %v1754 = vpack.c.b16 %v1700, %v1698
  %v1755 = vpack.c.b16 %v1701, %v1699
  %v1756 = vpack.c.b16 %v1704, %v1702
  %v1757 = vpack.c.b16 %v1705, %v1703
  %v1758 = vpack.c.b16 %v1708, %v1706
  %v1759 = vpack.c.b16 %v1709, %v1707
  %v1760 = vpack.c.b16 %v1712, %v1710
  %v1761 = vpack.c.b16 %v1713, %v1711
  %v1762 = vpack.c.b16 %v1716, %v1714
  %v1763 = vpack.c.b16 %v1717, %v1715
  %v1764 = vpack.c.b16 %v1720, %v1718
  %v1765 = vpack.c.b16 %v1721, %v1719
  %v1766 = vpack.c.b16 %v1724, %v1722
  %v1767 = vpack.c.b16 %v1725, %v1723
  %v1768 = vpack.c.b16 %v1728, %v1726
  %v1769 = vpack.c.b16 %v1729, %v1727
  %v1770 = vpack.c.b16 %v1732, %v1730
  %v1771 = vpack.c.b16 %v1733, %v1731
  %v1772 = vpack.c.b16 %v1736, %v1734
  %v1773 = vpack.c.b16 %v1737, %v1735
  %v1774 = vpack.c.b16 %v1740, %v1738
  %v1775 = vpack.c.b16 %v1741, %v1739
  %v1776 = vpack.c.b16 %v1744, %v1742
  %v1777 = vpack.c.b16 %v1745, %v1743
  %1810 = vmatprep.subr.bf16.mxu0 %v912
  %1811 = vmatpush1.bf16.msra.mxu0 %v911
  %1812 = vmatprep.subr.bf16.mxu0 %v914
  %1813 = vmatpush1.bf16.msra.mxu0 %v913
  %1814 = vmatprep.subr.bf16.mxu0 %v916
  %1815 = vmatpush1.bf16.msra.mxu0 %v915
  %1816 = vmatprep.subr.bf16.mxu0 %v918
  %1817 = vmatpush1.bf16.msra.mxu0 %v917
  %1818 = vmatprep.subr.bf16.mxu0 %v920
  %1819 = vmatpush1.bf16.msra.mxu0 %v919
  %1820 = vmatprep.subr.bf16.mxu0 %v922
  %1821 = vmatpush1.bf16.msra.mxu0 %v921
  %1822 = vmatprep.subr.bf16.mxu0 %v924
  %1823 = vmatpush1.bf16.msra.mxu0 %v923
  %1824 = vmatprep.subr.bf16.mxu0 %v926
  %1825 = vmatpush1.bf16.msra.mxu0 %v925
  %1826 = vmatprep.subr.bf16.mxu0 %v928
  %1827 = vmatpush1.bf16.msra.mxu0 %v927
  %1828 = vmatprep.subr.bf16.mxu0 %v930
  %1829 = vmatpush1.bf16.msra.mxu0 %v929
  %1830 = vmatprep.subr.bf16.mxu0 %v932
  %1831 = vmatpush1.bf16.msra.mxu0 %v931
  %1832 = vmatprep.subr.bf16.mxu0 %v934
  %1833 = vmatpush1.bf16.msra.mxu0 %v933
  %1834 = vmatprep.subr.bf16.mxu0 %v936
  %1835 = vmatpush1.bf16.msra.mxu0 %v935
  %1836 = vmatprep.subr.bf16.mxu0 %v938
  %1837 = vmatpush1.bf16.msra.mxu0 %v937
  %1838 = vmatprep.subr.bf16.mxu0 %v940
  %1839 = vmatpush1.bf16.msra.mxu0 %v939
  %1840 = vmatprep.subr.bf16.mxu0 %v942
  %1841 = vmatpush1.bf16.msra.mxu0 %v941
  %1842 = vmatprep.mubr.bf16.mxu0 %v514
  %1843 = vmatmul.mubr.bf16.gmra.mrb[0].mxu0 %v513
  %v1844 = vpop.f32.mrb[0].mxu0
  %v1845 = vadd.f32 0.0, %v1844
  %v1846 = vpop.f32.mrb[0].mxu0
  %v1847 = vadd.f32 0.0, %v1846
  %v1848 = vpop.f32.mrb[0].mxu0
  %v1849 = vadd.f32 0.0, %v1848
  %v1850 = vpop.f32.mrb[0].mxu0
  %v1851 = vadd.f32 0.0, %v1850
  %1852 = vmatprep.mubr.bf16.mxu0 %v519
  %1853 = vmatmul.mubr.bf16.gmra.mrb[0].mxu0 %v518
  %v1854 = vpop.f32.mrb[0].mxu0
  %v1855 = vadd.f32 0.0, %v1854
  %v1856 = vpop.f32.mrb[0].mxu0
  %v1857 = vadd.f32 0.0, %v1856
  %v1858 = vpop.f32.mrb[0].mxu0
  %v1859 = vadd.f32 0.0, %v1858
  %v1860 = vpop.f32.mrb[0].mxu0
  %v1861 = vadd.f32 0.0, %v1860
  %1862 = vmatprep.mubr.bf16.mxu0 %v524
  %1863 = vmatmul.mubr.bf16.gmra.mrb[0].mxu0 %v523
  %v1864 = vpop.f32.mrb[0].mxu0
  %v1865 = vadd.f32 0.0, %v1864
  %v1866 = vpop.f32.mrb[0].mxu0
  %v1867 = vadd.f32 0.0, %v1866
  %v1868 = vpop.f32.mrb[0].mxu0
  %v1869 = vadd.f32 0.0, %v1868
  %v1870 = vpop.f32.mrb[0].mxu0
  %v1871 = vadd.f32 0.0, %v1870
  %1872 = vmatprep.mubr.bf16.mxu0 %v529
  %1873 = vmatmul.mubr.bf16.gmra.mrb[0].mxu0 %v528
  %v1874 = vpop.f32.mrb[0].mxu0
  %v1875 = vadd.f32 0.0, %v1874
  %v1876 = vpop.f32.mrb[0].mxu0
  %v1877 = vadd.f32 0.0, %v1876
  %v1878 = vpop.f32.mrb[0].mxu0
  %v1879 = vadd.f32 0.0, %v1878
  %v1880 = vpop.f32.mrb[0].mxu0
  %v1881 = vadd.f32 0.0, %v1880
  %1882 = vmatprep.mubr.bf16.mxu0 %v534
  %1883 = vmatmul.mubr.bf16.gmra.mrb[0].mxu0 %v533
  %v1884 = vpop.f32.mrb[0].mxu0
  %v1885 = vadd.f32 0.0, %v1884
  %v1886 = vpop.f32.mrb[0].mxu0
  %v1887 = vadd.f32 0.0, %v1886
  %v1888 = vpop.f32.mrb[0].mxu0
  %v1889 = vadd.f32 0.0, %v1888
  %v1890 = vpop.f32.mrb[0].mxu0
  %v1891 = vadd.f32 0.0, %v1890
  %1892 = vmatprep.mubr.bf16.mxu0 %v539
  %1893 = vmatmul.mubr.bf16.gmra.mrb[0].mxu0 %v538
  %v1894 = vpop.f32.mrb[0].mxu0
  %v1895 = vadd.f32 0.0, %v1894
  %v1896 = vpop.f32.mrb[0].mxu0
  %v1897 = vadd.f32 0.0, %v1896
  %v1898 = vpop.f32.mrb[0].mxu0
  %v1899 = vadd.f32 0.0, %v1898
  %v1900 = vpop.f32.mrb[0].mxu0
  %v1901 = vadd.f32 0.0, %v1900
  %1902 = vmatprep.mubr.bf16.mxu0 %v544
  %1903 = vmatmul.mubr.bf16.gmra.mrb[0].mxu0 %v543
  %v1904 = vpop.f32.mrb[0].mxu0
  %v1905 = vadd.f32 0.0, %v1904
  %v1906 = vpop.f32.mrb[0].mxu0
  %v1907 = vadd.f32 0.0, %v1906
  %v1908 = vpop.f32.mrb[0].mxu0
  %v1909 = vadd.f32 0.0, %v1908
  %v1910 = vpop.f32.mrb[0].mxu0
  %v1911 = vadd.f32 0.0, %v1910
  %1912 = vmatprep.mubr.bf16.mxu0 %v549
  %1913 = vmatmul.mubr.bf16.gmra.mrb[0].mxu0 %v548
  %v1914 = vpop.f32.mrb[0].mxu0
  %v1915 = vadd.f32 0.0, %v1914
  %v1916 = vpop.f32.mrb[0].mxu0
  %v1917 = vadd.f32 0.0, %v1916
  %v1918 = vpop.f32.mrb[0].mxu0
  %v1919 = vadd.f32 0.0, %v1918
  %v1920 = vpop.f32.mrb[0].mxu0
  %v1921 = vadd.f32 0.0, %v1920
  %1922 = vmatprep.mubr.bf16.mxu0 %v554
  %1923 = vmatmul.mubr.bf16.gmra.mrb[0].mxu0 %v553
  %v1924 = vpop.f32.mrb[0].mxu0
  %v1925 = vadd.f32 0.0, %v1924
  %v1926 = vpop.f32.mrb[0].mxu0
  %v1927 = vadd.f32 0.0, %v1926
  %v1928 = vpop.f32.mrb[0].mxu0
  %v1929 = vadd.f32 0.0, %v1928
  %v1930 = vpop.f32.mrb[0].mxu0
  %v1931 = vadd.f32 0.0, %v1930
  %1932 = vmatprep.mubr.bf16.mxu0 %v559
  %1933 = vmatmul.mubr.bf16.gmra.mrb[0].mxu0 %v558
  %v1934 = vpop.f32.mrb[0].mxu0
  %v1935 = vadd.f32 0.0, %v1934
  %v1936 = vpop.f32.mrb[0].mxu0
  %v1937 = vadd.f32 0.0, %v1936
  %v1938 = vpop.f32.mrb[0].mxu0
  %v1939 = vadd.f32 0.0, %v1938
  %v1940 = vpop.f32.mrb[0].mxu0
  %v1941 = vadd.f32 0.0, %v1940
  %1942 = vmatprep.mubr.bf16.mxu0 %v564
  %1943 = vmatmul.mubr.bf16.gmra.mrb[0].mxu0 %v563
  %v1944 = vpop.f32.mrb[0].mxu0
  %v1945 = vadd.f32 0.0, %v1944
  %v1946 = vpop.f32.mrb[0].mxu0
  %v1947 = vadd.f32 0.0, %v1946
  %v1948 = vpop.f32.mrb[0].mxu0
  %v1949 = vadd.f32 0.0, %v1948
  %v1950 = vpop.f32.mrb[0].mxu0
  %v1951 = vadd.f32 0.0, %v1950
  %1952 = vmatprep.mubr.bf16.mxu0 %v569
  %1953 = vmatmul.mubr.bf16.gmra.mrb[0].mxu0 %v568
  %v1954 = vpop.f32.mrb[0].mxu0
  %v1955 = vadd.f32 0.0, %v1954
  %v1956 = vpop.f32.mrb[0].mxu0
  %v1957 = vadd.f32 0.0, %v1956
  %v1958 = vpop.f32.mrb[0].mxu0
  %v1959 = vadd.f32 0.0, %v1958
  %v1960 = vpop.f32.mrb[0].mxu0
  %v1961 = vadd.f32 0.0, %v1960
  %1962 = vmatprep.mubr.bf16.mxu0 %v574
  %1963 = vmatmul.mubr.bf16.gmra.mrb[0].mxu0 %v573
  %v1964 = vpop.f32.mrb[0].mxu0
  %v1965 = vadd.f32 0.0, %v1964
  %v1966 = vpop.f32.mrb[0].mxu0
  %v1967 = vadd.f32 0.0, %v1966
  %v1968 = vpop.f32.mrb[0].mxu0
  %v1969 = vadd.f32 0.0, %v1968
  %v1970 = vpop.f32.mrb[0].mxu0
  %v1971 = vadd.f32 0.0, %v1970
  %1972 = vmatprep.mubr.bf16.mxu0 %v579
  %1973 = vmatmul.mubr.bf16.gmra.mrb[0].mxu0 %v578
  %v1974 = vpop.f32.mrb[0].mxu0
  %v1975 = vadd.f32 0.0, %v1974
  %v1976 = vpop.f32.mrb[0].mxu0
  %v1977 = vadd.f32 0.0, %v1976
  %v1978 = vpop.f32.mrb[0].mxu0
  %v1979 = vadd.f32 0.0, %v1978
  %v1980 = vpop.f32.mrb[0].mxu0
  %v1981 = vadd.f32 0.0, %v1980
  %1982 = vmatprep.mubr.bf16.mxu0 %v584
  %1983 = vmatmul.mubr.bf16.gmra.mrb[0].mxu0 %v583
  %v1984 = vpop.f32.mrb[0].mxu0
  %v1985 = vadd.f32 0.0, %v1984
  %v1986 = vpop.f32.mrb[0].mxu0
  %v1987 = vadd.f32 0.0, %v1986
  %v1988 = vpop.f32.mrb[0].mxu0
  %v1989 = vadd.f32 0.0, %v1988
  %v1990 = vpop.f32.mrb[0].mxu0
  %v1991 = vadd.f32 0.0, %v1990
  %1992 = vmatprep.mubr.bf16.mxu0 %v589
  %1993 = vmatmul.mubr.bf16.gmra.mrb[0].mxu0 %v588
  %v1994 = vpop.f32.mrb[0].mxu0
  %v1995 = vadd.f32 0.0, %v1994
  %v1996 = vpop.f32.mrb[0].mxu0
  %v1997 = vadd.f32 0.0, %v1996
  %v1998 = vpop.f32.mrb[0].mxu0
  %v1999 = vadd.f32 0.0, %v1998
  %v2000 = vpop.f32.mrb[0].mxu0
  %v2001 = vadd.f32 0.0, %v2000
  %2002 = vdwg.mxu0
  %2003 = vmatprep.subr.bf16.mxu0 %v944
  %2004 = vmatpush1.bf16.msra.mxu0 %v943
  %2005 = vmatprep.subr.bf16.mxu0 %v946
  %2006 = vmatpush1.bf16.msra.mxu0 %v945
  %2007 = vmatprep.subr.bf16.mxu0 %v948
  %2008 = vmatpush1.bf16.msra.mxu0 %v947
  %2009 = vmatprep.subr.bf16.mxu0 %v950
  %2010 = vmatpush1.bf16.msra.mxu0 %v949
  %2011 = vmatprep.subr.bf16.mxu0 %v952
  %2012 = vmatpush1.bf16.msra.mxu0 %v951
  %2013 = vmatprep.subr.bf16.mxu0 %v954
  %2014 = vmatpush1.bf16.msra.mxu0 %v953
  %2015 = vmatprep.subr.bf16.mxu0 %v956
  %2016 = vmatpush1.bf16.msra.mxu0 %v955
  %2017 = vmatprep.subr.bf16.mxu0 %v958
  %2018 = vmatpush1.bf16.msra.mxu0 %v957
  %2019 = vmatprep.subr.bf16.mxu0 %v960
  %2020 = vmatpush1.bf16.msra.mxu0 %v959
  %2021 = vmatprep.subr.bf16.mxu0 %v962
  %2022 = vmatpush1.bf16.msra.mxu0 %v961
  %2023 = vmatprep.subr.bf16.mxu0 %v964
  %2024 = vmatpush1.bf16.msra.mxu0 %v963
  %2025 = vmatprep.subr.bf16.mxu0 %v966
  %2026 = vmatpush1.bf16.msra.mxu0 %v965
  %2027 = vmatprep.subr.bf16.mxu0 %v968
  %2028 = vmatpush1.bf16.msra.mxu0 %v967
  %2029 = vmatprep.subr.bf16.mxu0 %v970
  %2030 = vmatpush1.bf16.msra.mxu0 %v969
  %2031 = vmatprep.subr.bf16.mxu0 %v972
  %2032 = vmatpush1.bf16.msra.mxu0 %v971
  %2033 = vmatprep.subr.bf16.mxu0 %v974
  %2034 = vmatpush1.bf16.msra.mxu0 %v973
  %2035 = vmatprep.mubr.bf16.mxu0 %v1746
  %2036 = vmatmul.mubr.bf16.gmra.mrb[0].mxu0 %v515
  %v2037 = vpop.f32.mrb[0].mxu0
  %v2038 = vadd.f32 %v1845, %v2037
  %v2039 = vpop.f32.mrb[0].mxu0
  %v2040 = vadd.f32 %v1847, %v2039
  %v2041 = vpop.f32.mrb[0].mxu0
  %v2042 = vadd.f32 %v1849, %v2041
  %v2043 = vpop.f32.mrb[0].mxu0
  %v2044 = vadd.f32 %v1851, %v2043
  %2045 = vmatprep.mubr.bf16.mxu0 %v1748
  %2046 = vmatmul.mubr.bf16.gmra.mrb[0].mxu0 %v520
  %v2047 = vpop.f32.mrb[0].mxu0
  %v2048 = vadd.f32 %v1855, %v2047
  %v2049 = vpop.f32.mrb[0].mxu0
  %v2050 = vadd.f32 %v1857, %v2049
  %v2051 = vpop.f32.mrb[0].mxu0
  %v2052 = vadd.f32 %v1859, %v2051
  %v2053 = vpop.f32.mrb[0].mxu0
  %v2054 = vadd.f32 %v1861, %v2053
  %2055 = vmatprep.mubr.bf16.mxu0 %v1750
  %2056 = vmatmul.mubr.bf16.gmra.mrb[0].mxu0 %v525
  %v2057 = vpop.f32.mrb[0].mxu0
  %v2058 = vadd.f32 %v1865, %v2057
  %v2059 = vpop.f32.mrb[0].mxu0
  %v2060 = vadd.f32 %v1867, %v2059
  %v2061 = vpop.f32.mrb[0].mxu0
  %v2062 = vadd.f32 %v1869, %v2061
  %v2063 = vpop.f32.mrb[0].mxu0
  %v2064 = vadd.f32 %v1871, %v2063
  %2065 = vmatprep.mubr.bf16.mxu0 %v1752
  %2066 = vmatmul.mubr.bf16.gmra.mrb[0].mxu0 %v530
  %v2067 = vpop.f32.mrb[0].mxu0
  %v2068 = vadd.f32 %v1875, %v2067
  %v2069 = vpop.f32.mrb[0].mxu0
  %v2070 = vadd.f32 %v1877, %v2069
  %v2071 = vpop.f32.mrb[0].mxu0
  %v2072 = vadd.f32 %v1879, %v2071
  %v2073 = vpop.f32.mrb[0].mxu0
  %v2074 = vadd.f32 %v1881, %v2073
  %2075 = vmatprep.mubr.bf16.mxu0 %v1754
  %2076 = vmatmul.mubr.bf16.gmra.mrb[0].mxu0 %v535
  %v2077 = vpop.f32.mrb[0].mxu0
  %v2078 = vadd.f32 %v1885, %v2077
  %v2079 = vpop.f32.mrb[0].mxu0
  %v2080 = vadd.f32 %v1887, %v2079
  %v2081 = vpop.f32.mrb[0].mxu0
  %v2082 = vadd.f32 %v1889, %v2081
  %v2083 = vpop.f32.mrb[0].mxu0
  %v2084 = vadd.f32 %v1891, %v2083
  %2085 = vmatprep.mubr.bf16.mxu0 %v1756
  %2086 = vmatmul.mubr.bf16.gmra.mrb[0].mxu0 %v540
  %v2087 = vpop.f32.mrb[0].mxu0
  %v2088 = vadd.f32 %v1895, %v2087
  %v2089 = vpop.f32.mrb[0].mxu0
  %v2090 = vadd.f32 %v1897, %v2089
  %v2091 = vpop.f32.mrb[0].mxu0
  %v2092 = vadd.f32 %v1899, %v2091
  %v2093 = vpop.f32.mrb[0].mxu0
  %v2094 = vadd.f32 %v1901, %v2093
  %2095 = vmatprep.mubr.bf16.mxu0 %v1758
  %2096 = vmatmul.mubr.bf16.gmra.mrb[0].mxu0 %v545
  %v2097 = vpop.f32.mrb[0].mxu0
  %v2098 = vadd.f32 %v1905, %v2097
  %v2099 = vpop.f32.mrb[0].mxu0
  %v2100 = vadd.f32 %v1907, %v2099
  %v2101 = vpop.f32.mrb[0].mxu0
  %v2102 = vadd.f32 %v1909, %v2101
  %v2103 = vpop.f32.mrb[0].mxu0
  %v2104 = vadd.f32 %v1911, %v2103
  %2105 = vmatprep.mubr.bf16.mxu0 %v1760
  %2106 = vmatmul.mubr.bf16.gmra.mrb[0].mxu0 %v550
  %v2107 = vpop.f32.mrb[0].mxu0
  %v2108 = vadd.f32 %v1915, %v2107
  %v2109 = vpop.f32.mrb[0].mxu0
  %v2110 = vadd.f32 %v1917, %v2109
  %v2111 = vpop.f32.mrb[0].mxu0
  %v2112 = vadd.f32 %v1919, %v2111
  %v2113 = vpop.f32.mrb[0].mxu0
  %v2114 = vadd.f32 %v1921, %v2113
  %2115 = vmatprep.mubr.bf16.mxu0 %v1762
  %2116 = vmatmul.mubr.bf16.gmra.mrb[0].mxu0 %v555
  %v2117 = vpop.f32.mrb[0].mxu0
  %v2118 = vadd.f32 %v1925, %v2117
  %v2119 = vpop.f32.mrb[0].mxu0
  %v2120 = vadd.f32 %v1927, %v2119
  %v2121 = vpop.f32.mrb[0].mxu0
  %v2122 = vadd.f32 %v1929, %v2121
  %v2123 = vpop.f32.mrb[0].mxu0
  %v2124 = vadd.f32 %v1931, %v2123
  %2125 = vmatprep.mubr.bf16.mxu0 %v1764
  %2126 = vmatmul.mubr.bf16.gmra.mrb[0].mxu0 %v560
  %v2127 = vpop.f32.mrb[0].mxu0
  %v2128 = vadd.f32 %v1935, %v2127
  %v2129 = vpop.f32.mrb[0].mxu0
  %v2130 = vadd.f32 %v1937, %v2129
  %v2131 = vpop.f32.mrb[0].mxu0
  %v2132 = vadd.f32 %v1939, %v2131
  %v2133 = vpop.f32.mrb[0].mxu0
  %v2134 = vadd.f32 %v1941, %v2133
  %2135 = vmatprep.mubr.bf16.mxu0 %v1766
  %2136 = vmatmul.mubr.bf16.gmra.mrb[0].mxu0 %v565
  %v2137 = vpop.f32.mrb[0].mxu0
  %v2138 = vadd.f32 %v1945, %v2137
  %v2139 = vpop.f32.mrb[0].mxu0
  %v2140 = vadd.f32 %v1947, %v2139
  %v2141 = vpop.f32.mrb[0].mxu0
  %v2142 = vadd.f32 %v1949, %v2141
  %v2143 = vpop.f32.mrb[0].mxu0
  %v2144 = vadd.f32 %v1951, %v2143
  %2145 = vmatprep.mubr.bf16.mxu0 %v1768
  %2146 = vmatmul.mubr.bf16.gmra.mrb[0].mxu0 %v570
  %v2147 = vpop.f32.mrb[0].mxu0
  %v2148 = vadd.f32 %v1955, %v2147
  %v2149 = vpop.f32.mrb[0].mxu0
  %v2150 = vadd.f32 %v1957, %v2149
  %v2151 = vpop.f32.mrb[0].mxu0
  %v2152 = vadd.f32 %v1959, %v2151
  %v2153 = vpop.f32.mrb[0].mxu0
  %v2154 = vadd.f32 %v1961, %v2153
  %2155 = vmatprep.mubr.bf16.mxu0 %v1770
  %2156 = vmatmul.mubr.bf16.gmra.mrb[0].mxu0 %v575
  %v2157 = vpop.f32.mrb[0].mxu0
  %v2158 = vadd.f32 %v1965, %v2157
  %v2159 = vpop.f32.mrb[0].mxu0
  %v2160 = vadd.f32 %v1967, %v2159
  %v2161 = vpop.f32.mrb[0].mxu0
  %v2162 = vadd.f32 %v1969, %v2161
  %v2163 = vpop.f32.mrb[0].mxu0
  %v2164 = vadd.f32 %v1971, %v2163
  %2165 = vmatprep.mubr.bf16.mxu0 %v1772
  %2166 = vmatmul.mubr.bf16.gmra.mrb[0].mxu0 %v580
  %v2167 = vpop.f32.mrb[0].mxu0
  %v2168 = vadd.f32 %v1975, %v2167
  %v2169 = vpop.f32.mrb[0].mxu0
  %v2170 = vadd.f32 %v1977, %v2169
  %v2171 = vpop.f32.mrb[0].mxu0
  %v2172 = vadd.f32 %v1979, %v2171
  %v2173 = vpop.f32.mrb[0].mxu0
  %v2174 = vadd.f32 %v1981, %v2173
  %2175 = vmatprep.mubr.bf16.mxu0 %v1774
  %2176 = vmatmul.mubr.bf16.gmra.mrb[0].mxu0 %v585
  %v2177 = vpop.f32.mrb[0].mxu0
  %v2178 = vadd.f32 %v1985, %v2177
  %v2179 = vpop.f32.mrb[0].mxu0
  %v2180 = vadd.f32 %v1987, %v2179
  %v2181 = vpop.f32.mrb[0].mxu0
  %v2182 = vadd.f32 %v1989, %v2181
  %v2183 = vpop.f32.mrb[0].mxu0
  %v2184 = vadd.f32 %v1991, %v2183
  %2185 = vmatprep.mubr.bf16.mxu0 %v1776
  %2186 = vmatmul.mubr.bf16.gmra.mrb[0].mxu0 %v590
  %v2187 = vpop.f32.mrb[0].mxu0
  %v2188 = vadd.f32 %v1995, %v2187
  %v2189 = vpop.f32.mrb[0].mxu0
  %v2190 = vadd.f32 %v1997, %v2189
  %v2191 = vpop.f32.mrb[0].mxu0
  %v2192 = vadd.f32 %v1999, %v2191
  %v2193 = vpop.f32.mrb[0].mxu0
  %v2194 = vadd.f32 %v2001, %v2193
  %2195 = vdwg.mxu0
  %2196 = vmatprep.subr.bf16.mxu0 %v976
  %2197 = vmatpush1.bf16.msra.mxu0 %v975
  %2198 = vmatprep.subr.bf16.mxu0 %v978
  %2199 = vmatpush1.bf16.msra.mxu0 %v977
  %2200 = vmatprep.subr.bf16.mxu0 %v980
  %2201 = vmatpush1.bf16.msra.mxu0 %v979
  %2202 = vmatprep.subr.bf16.mxu0 %v982
  %2203 = vmatpush1.bf16.msra.mxu0 %v981
  %2204 = vmatprep.subr.bf16.mxu0 %v984
  %2205 = vmatpush1.bf16.msra.mxu0 %v983
  %2206 = vmatprep.subr.bf16.mxu0 %v986
  %2207 = vmatpush1.bf16.msra.mxu0 %v985
  %2208 = vmatprep.subr.bf16.mxu0 %v988
  %2209 = vmatpush1.bf16.msra.mxu0 %v987
  %2210 = vmatprep.subr.bf16.mxu0 %v990
  %2211 = vmatpush1.bf16.msra.mxu0 %v989
  %2212 = vmatprep.subr.bf16.mxu0 0
  %2213 = vmatpush1.bf16.msra.mxu0 0
  %2214 = vmatprep.subr.bf16.mxu0 0
  %2215 = vmatpush1.bf16.msra.mxu0 0
  %2216 = vmatprep.subr.bf16.mxu0 0
  %2217 = vmatpush1.bf16.msra.mxu0 0
  %2218 = vmatprep.subr.bf16.mxu0 0
  %2219 = vmatpush1.bf16.msra.mxu0 0
  %2220 = vmatprep.subr.bf16.mxu0 0
  %2221 = vmatpush1.bf16.msra.mxu0 0
  %2222 = vmatprep.subr.bf16.mxu0 0
  %2223 = vmatpush1.bf16.msra.mxu0 0
  %2224 = vmatprep.subr.bf16.mxu0 0
  %2225 = vmatpush1.bf16.msra.mxu0 0
  %2226 = vmatprep.subr.bf16.mxu0 0
  %2227 = vmatpush1.bf16.msra.mxu0 0
  %2228 = vmatprep.mubr.bf16.mxu0 0
  %2229 = vmatmul.mubr.bf16.gmra.mrb[0].mxu0 %v1747
  %v2230 = vpop.f32.mrb[0].mxu0
  %v2231 = vadd.f32 %v2038, %v2230
  %v2232 = vpop.f32.mrb[0].mxu0
  %v2233 = vadd.f32 %v2040, %v2232
  %v2234 = vpop.f32.mrb[0].mxu0
  %v2235 = vadd.f32 %v2042, %v2234
  %v2236 = vpop.f32.mrb[0].mxu0
  %v2237 = vadd.f32 %v2044, %v2236
  %2238 = vmatprep.mubr.bf16.mxu0 0
  %2239 = vmatmul.mubr.bf16.gmra.mrb[0].mxu0 %v1749
  %v2240 = vpop.f32.mrb[0].mxu0
  %v2241 = vadd.f32 %v2048, %v2240
  %v2242 = vpop.f32.mrb[0].mxu0
  %v2243 = vadd.f32 %v2050, %v2242
  %v2244 = vpop.f32.mrb[0].mxu0
  %v2245 = vadd.f32 %v2052, %v2244
  %v2246 = vpop.f32.mrb[0].mxu0
  %v2247 = vadd.f32 %v2054, %v2246
  %2248 = vmatprep.mubr.bf16.mxu0 0
  %2249 = vmatmul.mubr.bf16.gmra.mrb[0].mxu0 %v1751
  %v2250 = vpop.f32.mrb[0].mxu0
  %v2251 = vadd.f32 %v2058, %v2250
  %v2252 = vpop.f32.mrb[0].mxu0
  %v2253 = vadd.f32 %v2060, %v2252
  %v2254 = vpop.f32.mrb[0].mxu0
  %v2255 = vadd.f32 %v2062, %v2254
  %v2256 = vpop.f32.mrb[0].mxu0
  %v2257 = vadd.f32 %v2064, %v2256
  %2258 = vmatprep.mubr.bf16.mxu0 0
  %2259 = vmatmul.mubr.bf16.gmra.mrb[0].mxu0 %v1753
  %v2260 = vpop.f32.mrb[0].mxu0
  %v2261 = vadd.f32 %v2068, %v2260
  %v2262 = vpop.f32.mrb[0].mxu0
  %v2263 = vadd.f32 %v2070, %v2262
  %v2264 = vpop.f32.mrb[0].mxu0
  %v2265 = vadd.f32 %v2072, %v2264
  %v2266 = vpop.f32.mrb[0].mxu0
  %v2267 = vadd.f32 %v2074, %v2266
  %2268 = vmatprep.mubr.bf16.mxu0 0
  %2269 = vmatmul.mubr.bf16.gmra.mrb[0].mxu0 %v1755
  %v2270 = vpop.f32.mrb[0].mxu0
  %v2271 = vadd.f32 %v2078, %v2270
  %v2272 = vpop.f32.mrb[0].mxu0
  %v2273 = vadd.f32 %v2080, %v2272
  %v2274 = vpop.f32.mrb[0].mxu0
  %v2275 = vadd.f32 %v2082, %v2274
  %v2276 = vpop.f32.mrb[0].mxu0
  %v2277 = vadd.f32 %v2084, %v2276
  %2278 = vmatprep.mubr.bf16.mxu0 0
  %2279 = vmatmul.mubr.bf16.gmra.mrb[0].mxu0 %v1757
  %v2280 = vpop.f32.mrb[0].mxu0
  %v2281 = vadd.f32 %v2088, %v2280
  %v2282 = vpop.f32.mrb[0].mxu0
  %v2283 = vadd.f32 %v2090, %v2282
  %v2284 = vpop.f32.mrb[0].mxu0
  %v2285 = vadd.f32 %v2092, %v2284
  %v2286 = vpop.f32.mrb[0].mxu0
  %v2287 = vadd.f32 %v2094, %v2286
  %2288 = vmatprep.mubr.bf16.mxu0 0
  %2289 = vmatmul.mubr.bf16.gmra.mrb[0].mxu0 %v1759
  %v2290 = vpop.f32.mrb[0].mxu0
  %v2291 = vadd.f32 %v2098, %v2290
  %v2292 = vpop.f32.mrb[0].mxu0
  %v2293 = vadd.f32 %v2100, %v2292
  %v2294 = vpop.f32.mrb[0].mxu0
  %v2295 = vadd.f32 %v2102, %v2294
  %v2296 = vpop.f32.mrb[0].mxu0
  %v2297 = vadd.f32 %v2104, %v2296
  %2298 = vmatprep.mubr.bf16.mxu0 0
  %2299 = vmatmul.mubr.bf16.gmra.mrb[0].mxu0 %v1761
  %v2300 = vpop.f32.mrb[0].mxu0
  %v2301 = vadd.f32 %v2108, %v2300
  %v2302 = vpop.f32.mrb[0].mxu0
  %v2303 = vadd.f32 %v2110, %v2302
  %v2304 = vpop.f32.mrb[0].mxu0
  %v2305 = vadd.f32 %v2112, %v2304
  %v2306 = vpop.f32.mrb[0].mxu0
  %v2307 = vadd.f32 %v2114, %v2306
  %2308 = vmatprep.mubr.bf16.mxu0 0
  %2309 = vmatmul.mubr.bf16.gmra.mrb[0].mxu0 %v1763
  %v2310 = vpop.f32.mrb[0].mxu0
  %v2311 = vadd.f32 %v2118, %v2310
  %v2312 = vpop.f32.mrb[0].mxu0
  %v2313 = vadd.f32 %v2120, %v2312
  %v2314 = vpop.f32.mrb[0].mxu0
  %v2315 = vadd.f32 %v2122, %v2314
  %v2316 = vpop.f32.mrb[0].mxu0
  %v2317 = vadd.f32 %v2124, %v2316
  %2318 = vmatprep.mubr.bf16.mxu0 0
  %2319 = vmatmul.mubr.bf16.gmra.mrb[0].mxu0 %v1765
  %v2320 = vpop.f32.mrb[0].mxu0
  %v2321 = vadd.f32 %v2128, %v2320
  %v2322 = vpop.f32.mrb[0].mxu0
  %v2323 = vadd.f32 %v2130, %v2322
  %v2324 = vpop.f32.mrb[0].mxu0
  %v2325 = vadd.f32 %v2132, %v2324
  %v2326 = vpop.f32.mrb[0].mxu0
  %v2327 = vadd.f32 %v2134, %v2326
  %2328 = vmatprep.mubr.bf16.mxu0 0
  %2329 = vmatmul.mubr.bf16.gmra.mrb[0].mxu0 %v1767
  %v2330 = vpop.f32.mrb[0].mxu0
  %v2331 = vadd.f32 %v2138, %v2330
  %v2332 = vpop.f32.mrb[0].mxu0
  %v2333 = vadd.f32 %v2140, %v2332
  %v2334 = vpop.f32.mrb[0].mxu0
  %v2335 = vadd.f32 %v2142, %v2334
  %v2336 = vpop.f32.mrb[0].mxu0
  %v2337 = vadd.f32 %v2144, %v2336
  %2338 = vmatprep.mubr.bf16.mxu0 0
  %2339 = vmatmul.mubr.bf16.gmra.mrb[0].mxu0 %v1769
  %v2340 = vpop.f32.mrb[0].mxu0
  %v2341 = vadd.f32 %v2148, %v2340
  %v2342 = vpop.f32.mrb[0].mxu0
  %v2343 = vadd.f32 %v2150, %v2342
  %v2344 = vpop.f32.mrb[0].mxu0
  %v2345 = vadd.f32 %v2152, %v2344
  %v2346 = vpop.f32.mrb[0].mxu0
  %v2347 = vadd.f32 %v2154, %v2346
  %2348 = vmatprep.mubr.bf16.mxu0 0
  %2349 = vmatmul.mubr.bf16.gmra.mrb[0].mxu0 %v1771
  %v2350 = vpop.f32.mrb[0].mxu0
  %v2351 = vadd.f32 %v2158, %v2350
  %v2352 = vpop.f32.mrb[0].mxu0
  %v2353 = vadd.f32 %v2160, %v2352
  %v2354 = vpop.f32.mrb[0].mxu0
  %v2355 = vadd.f32 %v2162, %v2354
  %v2356 = vpop.f32.mrb[0].mxu0
  %v2357 = vadd.f32 %v2164, %v2356
  %2358 = vmatprep.mubr.bf16.mxu0 0
  %2359 = vmatmul.mubr.bf16.gmra.mrb[0].mxu0 %v1773
  %v2360 = vpop.f32.mrb[0].mxu0
  %v2361 = vadd.f32 %v2168, %v2360
  %v2362 = vpop.f32.mrb[0].mxu0
  %v2363 = vadd.f32 %v2170, %v2362
  %v2364 = vpop.f32.mrb[0].mxu0
  %v2365 = vadd.f32 %v2172, %v2364
  %v2366 = vpop.f32.mrb[0].mxu0
  %v2367 = vadd.f32 %v2174, %v2366
  %2368 = vmatprep.mubr.bf16.mxu0 0
  %2369 = vmatmul.mubr.bf16.gmra.mrb[0].mxu0 %v1775
  %v2370 = vpop.f32.mrb[0].mxu0
  %v2371 = vadd.f32 %v2178, %v2370
  %v2372 = vpop.f32.mrb[0].mxu0
  %v2373 = vadd.f32 %v2180, %v2372
  %v2374 = vpop.f32.mrb[0].mxu0
  %v2375 = vadd.f32 %v2182, %v2374
  %v2376 = vpop.f32.mrb[0].mxu0
  %v2377 = vadd.f32 %v2184, %v2376
  %2378 = vmatprep.mubr.bf16.mxu0 0
  %2379 = vmatmul.mubr.bf16.gmra.mrb[0].mxu0 %v1777
  %v2380 = vpop.f32.mrb[0].mxu0
  %v2381 = vadd.f32 %v2188, %v2380
  %v2382 = vpop.f32.mrb[0].mxu0
  %v2383 = vadd.f32 %v2190, %v2382
  %v2384 = vpop.f32.mrb[0].mxu0
  %v2385 = vadd.f32 %v2192, %v2384
  %v2386 = vpop.f32.mrb[0].mxu0
  %v2387 = vadd.f32 %v2194, %v2386
  %2388 = vdwg.mxu0
  %v2421 = vunpack.c.h.b16 %v18
  %v2422 = vunpack.c.l.b16 %v19
  %v2423 = vunpack.c.h.b16 %v23
  %v2424 = vunpack.c.l.b16 %v24
  %v2425 = vunpack.c.h.b16 %v28
  %v2426 = vunpack.c.l.b16 %v29
  %v2427 = vunpack.c.h.b16 %v33
  %v2428 = vunpack.c.l.b16 %v34
  %v2429 = vunpack.c.h.b16 %v38
  %v2430 = vunpack.c.l.b16 %v39
  %v2431 = vunpack.c.h.b16 %v43
  %v2432 = vunpack.c.l.b16 %v44
  %v2433 = vunpack.c.h.b16 %v48
  %v2434 = vunpack.c.l.b16 %v49
  %v2435 = vunpack.c.h.b16 %v53
  %v2436 = vunpack.c.l.b16 %v54
  %v2437 = vunpack.c.h.b16 %v58
  %v2438 = vunpack.c.l.b16 %v59
  %v2439 = vunpack.c.h.b16 %v63
  %v2440 = vunpack.c.l.b16 %v64
  %v2441 = vunpack.c.h.b16 %v68
  %v2442 = vunpack.c.l.b16 %v69
  %v2443 = vunpack.c.h.b16 %v73
  %v2444 = vunpack.c.l.b16 %v74
  %v2445 = vunpack.c.h.b16 %v78
  %v2446 = vunpack.c.l.b16 %v79
  %v2447 = vunpack.c.h.b16 %v83
  %v2448 = vunpack.c.l.b16 %v84
  %v2449 = vunpack.c.h.b16 %v88
  %v2450 = vunpack.c.l.b16 %v89
  %v2451 = vunpack.c.h.b16 %v93
  %v2452 = vunpack.c.l.b16 %v94
  %v2453 = vunpack.c.h.b16 %v98
  %v2454 = vunpack.c.l.b16 %v99
  %v2455 = vunpack.c.h.b16 %v103
  %v2456 = vunpack.c.l.b16 %v104
  %v2457 = vunpack.c.h.b16 %v108
  %v2458 = vunpack.c.l.b16 %v109
  %v2459 = vunpack.c.h.b16 %v113
  %v2460 = vunpack.c.l.b16 %v114
  %v2461 = vunpack.c.h.b16 %v118
  %v2462 = vunpack.c.l.b16 %v119
  %v2463 = vunpack.c.h.b16 %v123
  %v2464 = vunpack.c.l.b16 %v124
  %v2465 = vunpack.c.h.b16 %v128
  %v2466 = vunpack.c.l.b16 %v129
  %v2467 = vunpack.c.h.b16 %v133
  %v2468 = vunpack.c.l.b16 %v134
  %v2469 = vunpack.c.h.b16 %v138
  %v2470 = vunpack.c.l.b16 %v139
  %v2471 = vunpack.c.h.b16 %v143
  %v2472 = vunpack.c.l.b16 %v144
  %v2473 = vunpack.c.h.b16 %v148
  %v2474 = vunpack.c.l.b16 %v149
  %v2475 = vunpack.c.h.b16 %v153
  %v2476 = vunpack.c.l.b16 %v154
  %v2477 = vunpack.c.h.b16 %v158
  %v2478 = vunpack.c.l.b16 %v159
  %v2479 = vunpack.c.h.b16 %v163
  %v2480 = vunpack.c.l.b16 %v164
  %v2481 = vunpack.c.h.b16 %v168
  %v2482 = vunpack.c.l.b16 %v169
  %v2483 = vunpack.c.h.b16 %v173
  %v2484 = vunpack.c.l.b16 %v174
  %v2485 = vpack.c.b16 %v2423, %v2421
  %v2486 = vpack.c.b16 %v2424, %v2422
  %v2487 = vpack.c.b16 %v2427, %v2425
  %v2488 = vpack.c.b16 %v2428, %v2426
  %v2489 = vpack.c.b16 %v2431, %v2429
  %v2490 = vpack.c.b16 %v2432, %v2430
  %v2491 = vpack.c.b16 %v2435, %v2433
  %v2492 = vpack.c.b16 %v2436, %v2434
  %v2493 = vpack.c.b16 %v2439, %v2437
  %v2494 = vpack.c.b16 %v2440, %v2438
  %v2495 = vpack.c.b16 %v2443, %v2441
  %v2496 = vpack.c.b16 %v2444, %v2442
  %v2497 = vpack.c.b16 %v2447, %v2445
  %v2498 = vpack.c.b16 %v2448, %v2446
  %v2499 = vpack.c.b16 %v2451, %v2449
  %v2500 = vpack.c.b16 %v2452, %v2450
  %v2501 = vpack.c.b16 %v2455, %v2453
  %v2502 = vpack.c.b16 %v2456, %v2454
  %v2503 = vpack.c.b16 %v2459, %v2457
  %v2504 = vpack.c.b16 %v2460, %v2458
  %v2505 = vpack.c.b16 %v2463, %v2461
  %v2506 = vpack.c.b16 %v2464, %v2462
  %v2507 = vpack.c.b16 %v2467, %v2465
  %v2508 = vpack.c.b16 %v2468, %v2466
  %v2509 = vpack.c.b16 %v2471, %v2469
  %v2510 = vpack.c.b16 %v2472, %v2470
  %v2511 = vpack.c.b16 %v2475, %v2473
  %v2512 = vpack.c.b16 %v2476, %v2474
  %v2513 = vpack.c.b16 %v2479, %v2477
  %v2514 = vpack.c.b16 %v2480, %v2478
  %v2515 = vpack.c.b16 %v2483, %v2481
  %v2516 = vpack.c.b16 %v2484, %v2482
  %2549 = vmatprep.subr.bf16.mxu0 %v912
  %2550 = vmatpush1.bf16.msra.mxu0 %v911
  %2551 = vmatprep.subr.bf16.mxu0 %v914
  %2552 = vmatpush1.bf16.msra.mxu0 %v913
  %2553 = vmatprep.subr.bf16.mxu0 %v916
  %2554 = vmatpush1.bf16.msra.mxu0 %v915
  %2555 = vmatprep.subr.bf16.mxu0 %v918
  %2556 = vmatpush1.bf16.msra.mxu0 %v917
  %2557 = vmatprep.subr.bf16.mxu0 %v920
  %2558 = vmatpush1.bf16.msra.mxu0 %v919
  %2559 = vmatprep.subr.bf16.mxu0 %v922
  %2560 = vmatpush1.bf16.msra.mxu0 %v921
  %2561 = vmatprep.subr.bf16.mxu0 %v924
  %2562 = vmatpush1.bf16.msra.mxu0 %v923
  %2563 = vmatprep.subr.bf16.mxu0 %v926
  %2564 = vmatpush1.bf16.msra.mxu0 %v925
  %2565 = vmatprep.subr.bf16.mxu0 %v928
  %2566 = vmatpush1.bf16.msra.mxu0 %v927
  %2567 = vmatprep.subr.bf16.mxu0 %v930
  %2568 = vmatpush1.bf16.msra.mxu0 %v929
  %2569 = vmatprep.subr.bf16.mxu0 %v932
  %2570 = vmatpush1.bf16.msra.mxu0 %v931
  %2571 = vmatprep.subr.bf16.mxu0 %v934
  %2572 = vmatpush1.bf16.msra.mxu0 %v933
  %2573 = vmatprep.subr.bf16.mxu0 %v936
  %2574 = vmatpush1.bf16.msra.mxu0 %v935
  %2575 = vmatprep.subr.bf16.mxu0 %v938
  %2576 = vmatpush1.bf16.msra.mxu0 %v937
  %2577 = vmatprep.subr.bf16.mxu0 %v940
  %2578 = vmatpush1.bf16.msra.mxu0 %v939
  %2579 = vmatprep.subr.bf16.mxu0 %v942
  %2580 = vmatpush1.bf16.msra.mxu0 %v941
  %2581 = vmatprep.mubr.bf16.mxu0 %v1746
  %2582 = vmatmul.mubr.bf16.gmra.mrb[0].mxu0 %v515
  %v2583 = vpop.f32.mrb[0].mxu0
  %v2584 = vadd.f32 0.0, %v2583
  %v2585 = vpop.f32.mrb[0].mxu0
  %v2586 = vadd.f32 0.0, %v2585
  %v2587 = vpop.f32.mrb[0].mxu0
  %v2588 = vadd.f32 0.0, %v2587
  %v2589 = vpop.f32.mrb[0].mxu0
  %v2590 = vadd.f32 0.0, %v2589
  %2591 = vmatprep.mubr.bf16.mxu0 %v1748
  %2592 = vmatmul.mubr.bf16.gmra.mrb[0].mxu0 %v520
  %v2593 = vpop.f32.mrb[0].mxu0
  %v2594 = vadd.f32 0.0, %v2593
  %v2595 = vpop.f32.mrb[0].mxu0
  %v2596 = vadd.f32 0.0, %v2595
  %v2597 = vpop.f32.mrb[0].mxu0
  %v2598 = vadd.f32 0.0, %v2597
  %v2599 = vpop.f32.mrb[0].mxu0
  %v2600 = vadd.f32 0.0, %v2599
  %2601 = vmatprep.mubr.bf16.mxu0 %v1750
  %2602 = vmatmul.mubr.bf16.gmra.mrb[0].mxu0 %v525
  %v2603 = vpop.f32.mrb[0].mxu0
  %v2604 = vadd.f32 0.0, %v2603
  %v2605 = vpop.f32.mrb[0].mxu0
  %v2606 = vadd.f32 0.0, %v2605
  %v2607 = vpop.f32.mrb[0].mxu0
  %v2608 = vadd.f32 0.0, %v2607
  %v2609 = vpop.f32.mrb[0].mxu0
  %v2610 = vadd.f32 0.0, %v2609
  %2611 = vmatprep.mubr.bf16.mxu0 %v1752
  %2612 = vmatmul.mubr.bf16.gmra.mrb[0].mxu0 %v530
  %v2613 = vpop.f32.mrb[0].mxu0
  %v2614 = vadd.f32 0.0, %v2613
  %v2615 = vpop.f32.mrb[0].mxu0
  %v2616 = vadd.f32 0.0, %v2615
  %v2617 = vpop.f32.mrb[0].mxu0
  %v2618 = vadd.f32 0.0, %v2617
  %v2619 = vpop.f32.mrb[0].mxu0
  %v2620 = vadd.f32 0.0, %v2619
  %2621 = vmatprep.mubr.bf16.mxu0 %v1754
  %2622 = vmatmul.mubr.bf16.gmra.mrb[0].mxu0 %v535
  %v2623 = vpop.f32.mrb[0].mxu0
  %v2624 = vadd.f32 0.0, %v2623
  %v2625 = vpop.f32.mrb[0].mxu0
  %v2626 = vadd.f32 0.0, %v2625
  %v2627 = vpop.f32.mrb[0].mxu0
  %v2628 = vadd.f32 0.0, %v2627
  %v2629 = vpop.f32.mrb[0].mxu0
  %v2630 = vadd.f32 0.0, %v2629
  %2631 = vmatprep.mubr.bf16.mxu0 %v1756
  %2632 = vmatmul.mubr.bf16.gmra.mrb[0].mxu0 %v540
  %v2633 = vpop.f32.mrb[0].mxu0
  %v2634 = vadd.f32 0.0, %v2633
  %v2635 = vpop.f32.mrb[0].mxu0
  %v2636 = vadd.f32 0.0, %v2635
  %v2637 = vpop.f32.mrb[0].mxu0
  %v2638 = vadd.f32 0.0, %v2637
  %v2639 = vpop.f32.mrb[0].mxu0
  %v2640 = vadd.f32 0.0, %v2639
  %2641 = vmatprep.mubr.bf16.mxu0 %v1758
  %2642 = vmatmul.mubr.bf16.gmra.mrb[0].mxu0 %v545
  %v2643 = vpop.f32.mrb[0].mxu0
  %v2644 = vadd.f32 0.0, %v2643
  %v2645 = vpop.f32.mrb[0].mxu0
  %v2646 = vadd.f32 0.0, %v2645
  %v2647 = vpop.f32.mrb[0].mxu0
  %v2648 = vadd.f32 0.0, %v2647
  %v2649 = vpop.f32.mrb[0].mxu0
  %v2650 = vadd.f32 0.0, %v2649
  %2651 = vmatprep.mubr.bf16.mxu0 %v1760
  %2652 = vmatmul.mubr.bf16.gmra.mrb[0].mxu0 %v550
  %v2653 = vpop.f32.mrb[0].mxu0
  %v2654 = vadd.f32 0.0, %v2653
  %v2655 = vpop.f32.mrb[0].mxu0
  %v2656 = vadd.f32 0.0, %v2655
  %v2657 = vpop.f32.mrb[0].mxu0
  %v2658 = vadd.f32 0.0, %v2657
  %v2659 = vpop.f32.mrb[0].mxu0
  %v2660 = vadd.f32 0.0, %v2659
  %2661 = vmatprep.mubr.bf16.mxu0 %v1762
  %2662 = vmatmul.mubr.bf16.gmra.mrb[0].mxu0 %v555
  %v2663 = vpop.f32.mrb[0].mxu0
  %v2664 = vadd.f32 0.0, %v2663
  %v2665 = vpop.f32.mrb[0].mxu0
  %v2666 = vadd.f32 0.0, %v2665
  %v2667 = vpop.f32.mrb[0].mxu0
  %v2668 = vadd.f32 0.0, %v2667
  %v2669 = vpop.f32.mrb[0].mxu0
  %v2670 = vadd.f32 0.0, %v2669
  %2671 = vmatprep.mubr.bf16.mxu0 %v1764
  %2672 = vmatmul.mubr.bf16.gmra.mrb[0].mxu0 %v560
  %v2673 = vpop.f32.mrb[0].mxu0
  %v2674 = vadd.f32 0.0, %v2673
  %v2675 = vpop.f32.mrb[0].mxu0
  %v2676 = vadd.f32 0.0, %v2675
  %v2677 = vpop.f32.mrb[0].mxu0
  %v2678 = vadd.f32 0.0, %v2677
  %v2679 = vpop.f32.mrb[0].mxu0
  %v2680 = vadd.f32 0.0, %v2679
  %2681 = vmatprep.mubr.bf16.mxu0 %v1766
  %2682 = vmatmul.mubr.bf16.gmra.mrb[0].mxu0 %v565
  %v2683 = vpop.f32.mrb[0].mxu0
  %v2684 = vadd.f32 0.0, %v2683
  %v2685 = vpop.f32.mrb[0].mxu0
  %v2686 = vadd.f32 0.0, %v2685
  %v2687 = vpop.f32.mrb[0].mxu0
  %v2688 = vadd.f32 0.0, %v2687
  %v2689 = vpop.f32.mrb[0].mxu0
  %v2690 = vadd.f32 0.0, %v2689
  %2691 = vmatprep.mubr.bf16.mxu0 %v1768
  %2692 = vmatmul.mubr.bf16.gmra.mrb[0].mxu0 %v570
  %v2693 = vpop.f32.mrb[0].mxu0
  %v2694 = vadd.f32 0.0, %v2693
  %v2695 = vpop.f32.mrb[0].mxu0
  %v2696 = vadd.f32 0.0, %v2695
  %v2697 = vpop.f32.mrb[0].mxu0
  %v2698 = vadd.f32 0.0, %v2697
  %v2699 = vpop.f32.mrb[0].mxu0
  %v2700 = vadd.f32 0.0, %v2699
  %2701 = vmatprep.mubr.bf16.mxu0 %v1770
  %2702 = vmatmul.mubr.bf16.gmra.mrb[0].mxu0 %v575
  %v2703 = vpop.f32.mrb[0].mxu0
  %v2704 = vadd.f32 0.0, %v2703
  %v2705 = vpop.f32.mrb[0].mxu0
  %v2706 = vadd.f32 0.0, %v2705
  %v2707 = vpop.f32.mrb[0].mxu0
  %v2708 = vadd.f32 0.0, %v2707
  %v2709 = vpop.f32.mrb[0].mxu0
  %v2710 = vadd.f32 0.0, %v2709
  %2711 = vmatprep.mubr.bf16.mxu0 %v1772
  %2712 = vmatmul.mubr.bf16.gmra.mrb[0].mxu0 %v580
  %v2713 = vpop.f32.mrb[0].mxu0
  %v2714 = vadd.f32 0.0, %v2713
  %v2715 = vpop.f32.mrb[0].mxu0
  %v2716 = vadd.f32 0.0, %v2715
  %v2717 = vpop.f32.mrb[0].mxu0
  %v2718 = vadd.f32 0.0, %v2717
  %v2719 = vpop.f32.mrb[0].mxu0
  %v2720 = vadd.f32 0.0, %v2719
  %2721 = vmatprep.mubr.bf16.mxu0 %v1774
  %2722 = vmatmul.mubr.bf16.gmra.mrb[0].mxu0 %v585
  %v2723 = vpop.f32.mrb[0].mxu0
  %v2724 = vadd.f32 0.0, %v2723
  %v2725 = vpop.f32.mrb[0].mxu0
  %v2726 = vadd.f32 0.0, %v2725
  %v2727 = vpop.f32.mrb[0].mxu0
  %v2728 = vadd.f32 0.0, %v2727
  %v2729 = vpop.f32.mrb[0].mxu0
  %v2730 = vadd.f32 0.0, %v2729
  %2731 = vmatprep.mubr.bf16.mxu0 %v1776
  %2732 = vmatmul.mubr.bf16.gmra.mrb[0].mxu0 %v590
  %v2733 = vpop.f32.mrb[0].mxu0
  %v2734 = vadd.f32 0.0, %v2733
  %v2735 = vpop.f32.mrb[0].mxu0
  %v2736 = vadd.f32 0.0, %v2735
  %v2737 = vpop.f32.mrb[0].mxu0
  %v2738 = vadd.f32 0.0, %v2737
  %v2739 = vpop.f32.mrb[0].mxu0
  %v2740 = vadd.f32 0.0, %v2739
  %2741 = vdwg.mxu0
  %2742 = vmatprep.subr.bf16.mxu0 %v944
  %2743 = vmatpush1.bf16.msra.mxu0 %v943
  %2744 = vmatprep.subr.bf16.mxu0 %v946
  %2745 = vmatpush1.bf16.msra.mxu0 %v945
  %2746 = vmatprep.subr.bf16.mxu0 %v948
  %2747 = vmatpush1.bf16.msra.mxu0 %v947
  %2748 = vmatprep.subr.bf16.mxu0 %v950
  %2749 = vmatpush1.bf16.msra.mxu0 %v949
  %2750 = vmatprep.subr.bf16.mxu0 %v952
  %2751 = vmatpush1.bf16.msra.mxu0 %v951
  %2752 = vmatprep.subr.bf16.mxu0 %v954
  %2753 = vmatpush1.bf16.msra.mxu0 %v953
  %2754 = vmatprep.subr.bf16.mxu0 %v956
  %2755 = vmatpush1.bf16.msra.mxu0 %v955
  %2756 = vmatprep.subr.bf16.mxu0 %v958
  %2757 = vmatpush1.bf16.msra.mxu0 %v957
  %2758 = vmatprep.subr.bf16.mxu0 %v960
  %2759 = vmatpush1.bf16.msra.mxu0 %v959
  %2760 = vmatprep.subr.bf16.mxu0 %v962
  %2761 = vmatpush1.bf16.msra.mxu0 %v961
  %2762 = vmatprep.subr.bf16.mxu0 %v964
  %2763 = vmatpush1.bf16.msra.mxu0 %v963
  %2764 = vmatprep.subr.bf16.mxu0 %v966
  %2765 = vmatpush1.bf16.msra.mxu0 %v965
  %2766 = vmatprep.subr.bf16.mxu0 %v968
  %2767 = vmatpush1.bf16.msra.mxu0 %v967
  %2768 = vmatprep.subr.bf16.mxu0 %v970
  %2769 = vmatpush1.bf16.msra.mxu0 %v969
  %2770 = vmatprep.subr.bf16.mxu0 %v972
  %2771 = vmatpush1.bf16.msra.mxu0 %v971
  %2772 = vmatprep.subr.bf16.mxu0 %v974
  %2773 = vmatpush1.bf16.msra.mxu0 %v973
  %2774 = vmatprep.mubr.bf16.mxu0 %v2485
  %2775 = vmatmul.mubr.bf16.gmra.mrb[0].mxu0 %v1747
  %v2776 = vpop.f32.mrb[0].mxu0
  %v2777 = vadd.f32 %v2584, %v2776
  %v2778 = vpop.f32.mrb[0].mxu0
  %v2779 = vadd.f32 %v2586, %v2778
  %v2780 = vpop.f32.mrb[0].mxu0
  %v2781 = vadd.f32 %v2588, %v2780
  %v2782 = vpop.f32.mrb[0].mxu0
  %v2783 = vadd.f32 %v2590, %v2782
  %2784 = vmatprep.mubr.bf16.mxu0 %v2487
  %2785 = vmatmul.mubr.bf16.gmra.mrb[0].mxu0 %v1749
  %v2786 = vpop.f32.mrb[0].mxu0
  %v2787 = vadd.f32 %v2594, %v2786
  %v2788 = vpop.f32.mrb[0].mxu0
  %v2789 = vadd.f32 %v2596, %v2788
  %v2790 = vpop.f32.mrb[0].mxu0
  %v2791 = vadd.f32 %v2598, %v2790
  %v2792 = vpop.f32.mrb[0].mxu0
  %v2793 = vadd.f32 %v2600, %v2792
  %2794 = vmatprep.mubr.bf16.mxu0 %v2489
  %2795 = vmatmul.mubr.bf16.gmra.mrb[0].mxu0 %v1751
  %v2796 = vpop.f32.mrb[0].mxu0
  %v2797 = vadd.f32 %v2604, %v2796
  %v2798 = vpop.f32.mrb[0].mxu0
  %v2799 = vadd.f32 %v2606, %v2798
  %v2800 = vpop.f32.mrb[0].mxu0
  %v2801 = vadd.f32 %v2608, %v2800
  %v2802 = vpop.f32.mrb[0].mxu0
  %v2803 = vadd.f32 %v2610, %v2802
  %2804 = vmatprep.mubr.bf16.mxu0 %v2491
  %2805 = vmatmul.mubr.bf16.gmra.mrb[0].mxu0 %v1753
  %v2806 = vpop.f32.mrb[0].mxu0
  %v2807 = vadd.f32 %v2614, %v2806
  %v2808 = vpop.f32.mrb[0].mxu0
  %v2809 = vadd.f32 %v2616, %v2808
  %v2810 = vpop.f32.mrb[0].mxu0
  %v2811 = vadd.f32 %v2618, %v2810
  %v2812 = vpop.f32.mrb[0].mxu0
  %v2813 = vadd.f32 %v2620, %v2812
  %2814 = vmatprep.mubr.bf16.mxu0 %v2493
  %2815 = vmatmul.mubr.bf16.gmra.mrb[0].mxu0 %v1755
  %v2816 = vpop.f32.mrb[0].mxu0
  %v2817 = vadd.f32 %v2624, %v2816
  %v2818 = vpop.f32.mrb[0].mxu0
  %v2819 = vadd.f32 %v2626, %v2818
  %v2820 = vpop.f32.mrb[0].mxu0
  %v2821 = vadd.f32 %v2628, %v2820
  %v2822 = vpop.f32.mrb[0].mxu0
  %v2823 = vadd.f32 %v2630, %v2822
  %2824 = vmatprep.mubr.bf16.mxu0 %v2495
  %2825 = vmatmul.mubr.bf16.gmra.mrb[0].mxu0 %v1757
  %v2826 = vpop.f32.mrb[0].mxu0
  %v2827 = vadd.f32 %v2634, %v2826
  %v2828 = vpop.f32.mrb[0].mxu0
  %v2829 = vadd.f32 %v2636, %v2828
  %v2830 = vpop.f32.mrb[0].mxu0
  %v2831 = vadd.f32 %v2638, %v2830
  %v2832 = vpop.f32.mrb[0].mxu0
  %v2833 = vadd.f32 %v2640, %v2832
  %2834 = vmatprep.mubr.bf16.mxu0 %v2497
  %2835 = vmatmul.mubr.bf16.gmra.mrb[0].mxu0 %v1759
  %v2836 = vpop.f32.mrb[0].mxu0
  %v2837 = vadd.f32 %v2644, %v2836
  %v2838 = vpop.f32.mrb[0].mxu0
  %v2839 = vadd.f32 %v2646, %v2838
  %v2840 = vpop.f32.mrb[0].mxu0
  %v2841 = vadd.f32 %v2648, %v2840
  %v2842 = vpop.f32.mrb[0].mxu0
  %v2843 = vadd.f32 %v2650, %v2842
  %2844 = vmatprep.mubr.bf16.mxu0 %v2499
  %2845 = vmatmul.mubr.bf16.gmra.mrb[0].mxu0 %v1761
  %v2846 = vpop.f32.mrb[0].mxu0
  %v2847 = vadd.f32 %v2654, %v2846
  %v2848 = vpop.f32.mrb[0].mxu0
  %v2849 = vadd.f32 %v2656, %v2848
  %v2850 = vpop.f32.mrb[0].mxu0
  %v2851 = vadd.f32 %v2658, %v2850
  %v2852 = vpop.f32.mrb[0].mxu0
  %v2853 = vadd.f32 %v2660, %v2852
  %2854 = vmatprep.mubr.bf16.mxu0 %v2501
  %2855 = vmatmul.mubr.bf16.gmra.mrb[0].mxu0 %v1763
  %v2856 = vpop.f32.mrb[0].mxu0
  %v2857 = vadd.f32 %v2664, %v2856
  %v2858 = vpop.f32.mrb[0].mxu0
  %v2859 = vadd.f32 %v2666, %v2858
  %v2860 = vpop.f32.mrb[0].mxu0
  %v2861 = vadd.f32 %v2668, %v2860
  %v2862 = vpop.f32.mrb[0].mxu0
  %v2863 = vadd.f32 %v2670, %v2862
  %2864 = vmatprep.mubr.bf16.mxu0 %v2503
  %2865 = vmatmul.mubr.bf16.gmra.mrb[0].mxu0 %v1765
  %v2866 = vpop.f32.mrb[0].mxu0
  %v2867 = vadd.f32 %v2674, %v2866
  %v2868 = vpop.f32.mrb[0].mxu0
  %v2869 = vadd.f32 %v2676, %v2868
  %v2870 = vpop.f32.mrb[0].mxu0
  %v2871 = vadd.f32 %v2678, %v2870
  %v2872 = vpop.f32.mrb[0].mxu0
  %v2873 = vadd.f32 %v2680, %v2872
  %2874 = vmatprep.mubr.bf16.mxu0 %v2505
  %2875 = vmatmul.mubr.bf16.gmra.mrb[0].mxu0 %v1767
  %v2876 = vpop.f32.mrb[0].mxu0
  %v2877 = vadd.f32 %v2684, %v2876
  %v2878 = vpop.f32.mrb[0].mxu0
  %v2879 = vadd.f32 %v2686, %v2878
  %v2880 = vpop.f32.mrb[0].mxu0
  %v2881 = vadd.f32 %v2688, %v2880
  %v2882 = vpop.f32.mrb[0].mxu0
  %v2883 = vadd.f32 %v2690, %v2882
  %2884 = vmatprep.mubr.bf16.mxu0 %v2507
  %2885 = vmatmul.mubr.bf16.gmra.mrb[0].mxu0 %v1769
  %v2886 = vpop.f32.mrb[0].mxu0
  %v2887 = vadd.f32 %v2694, %v2886
  %v2888 = vpop.f32.mrb[0].mxu0
  %v2889 = vadd.f32 %v2696, %v2888
  %v2890 = vpop.f32.mrb[0].mxu0
  %v2891 = vadd.f32 %v2698, %v2890
  %v2892 = vpop.f32.mrb[0].mxu0
  %v2893 = vadd.f32 %v2700, %v2892
  %2894 = vmatprep.mubr.bf16.mxu0 %v2509
  %2895 = vmatmul.mubr.bf16.gmra.mrb[0].mxu0 %v1771
  %v2896 = vpop.f32.mrb[0].mxu0
  %v2897 = vadd.f32 %v2704, %v2896
  %v2898 = vpop.f32.mrb[0].mxu0
  %v2899 = vadd.f32 %v2706, %v2898
  %v2900 = vpop.f32.mrb[0].mxu0
  %v2901 = vadd.f32 %v2708, %v2900
  %v2902 = vpop.f32.mrb[0].mxu0
  %v2903 = vadd.f32 %v2710, %v2902
  %2904 = vmatprep.mubr.bf16.mxu0 %v2511
  %2905 = vmatmul.mubr.bf16.gmra.mrb[0].mxu0 %v1773
  %v2906 = vpop.f32.mrb[0].mxu0
  %v2907 = vadd.f32 %v2714, %v2906
  %v2908 = vpop.f32.mrb[0].mxu0
  %v2909 = vadd.f32 %v2716, %v2908
  %v2910 = vpop.f32.mrb[0].mxu0
  %v2911 = vadd.f32 %v2718, %v2910
  %v2912 = vpop.f32.mrb[0].mxu0
  %v2913 = vadd.f32 %v2720, %v2912
  %2914 = vmatprep.mubr.bf16.mxu0 %v2513
  %2915 = vmatmul.mubr.bf16.gmra.mrb[0].mxu0 %v1775
  %v2916 = vpop.f32.mrb[0].mxu0
  %v2917 = vadd.f32 %v2724, %v2916
  %v2918 = vpop.f32.mrb[0].mxu0
  %v2919 = vadd.f32 %v2726, %v2918
  %v2920 = vpop.f32.mrb[0].mxu0
  %v2921 = vadd.f32 %v2728, %v2920
  %v2922 = vpop.f32.mrb[0].mxu0
  %v2923 = vadd.f32 %v2730, %v2922
  %2924 = vmatprep.mubr.bf16.mxu0 %v2515
  %2925 = vmatmul.mubr.bf16.gmra.mrb[0].mxu0 %v1777
  %v2926 = vpop.f32.mrb[0].mxu0
  %v2927 = vadd.f32 %v2734, %v2926
  %v2928 = vpop.f32.mrb[0].mxu0
  %v2929 = vadd.f32 %v2736, %v2928
  %v2930 = vpop.f32.mrb[0].mxu0
  %v2931 = vadd.f32 %v2738, %v2930
  %v2932 = vpop.f32.mrb[0].mxu0
  %v2933 = vadd.f32 %v2740, %v2932
  %2934 = vdwg.mxu0
  %2935 = vmatprep.subr.bf16.mxu0 %v976
  %2936 = vmatpush1.bf16.msra.mxu0 %v975
  %2937 = vmatprep.subr.bf16.mxu0 %v978
  %2938 = vmatpush1.bf16.msra.mxu0 %v977
  %2939 = vmatprep.subr.bf16.mxu0 %v980
  %2940 = vmatpush1.bf16.msra.mxu0 %v979
  %2941 = vmatprep.subr.bf16.mxu0 %v982
  %2942 = vmatpush1.bf16.msra.mxu0 %v981
  %2943 = vmatprep.subr.bf16.mxu0 %v984
  %2944 = vmatpush1.bf16.msra.mxu0 %v983
  %2945 = vmatprep.subr.bf16.mxu0 %v986
  %2946 = vmatpush1.bf16.msra.mxu0 %v985
  %2947 = vmatprep.subr.bf16.mxu0 %v988
  %2948 = vmatpush1.bf16.msra.mxu0 %v987
  %2949 = vmatprep.subr.bf16.mxu0 %v990
  %2950 = vmatpush1.bf16.msra.mxu0 %v989
  %2951 = vmatprep.subr.bf16.mxu0 0
  %2952 = vmatpush1.bf16.msra.mxu0 0
  %2953 = vmatprep.subr.bf16.mxu0 0
  %2954 = vmatpush1.bf16.msra.mxu0 0
  %2955 = vmatprep.subr.bf16.mxu0 0
  %2956 = vmatpush1.bf16.msra.mxu0 0
  %2957 = vmatprep.subr.bf16.mxu0 0
  %2958 = vmatpush1.bf16.msra.mxu0 0
  %2959 = vmatprep.subr.bf16.mxu0 0
  %2960 = vmatpush1.bf16.msra.mxu0 0
  %2961 = vmatprep.subr.bf16.mxu0 0
  %2962 = vmatpush1.bf16.msra.mxu0 0
  %2963 = vmatprep.subr.bf16.mxu0 0
  %2964 = vmatpush1.bf16.msra.mxu0 0
  %2965 = vmatprep.subr.bf16.mxu0 0
  %2966 = vmatpush1.bf16.msra.mxu0 0
  %2967 = vmatprep.mubr.bf16.mxu0 0
  %2968 = vmatmul.mubr.bf16.gmra.mrb[0].mxu0 %v2486
  %v2969 = vpop.f32.mrb[0].mxu0
  %v2970 = vadd.f32 %v2777, %v2969
  %v2971 = vpop.f32.mrb[0].mxu0
  %v2972 = vadd.f32 %v2779, %v2971
  %v2973 = vpop.f32.mrb[0].mxu0
  %v2974 = vadd.f32 %v2781, %v2973
  %v2975 = vpop.f32.mrb[0].mxu0
  %v2976 = vadd.f32 %v2783, %v2975
  %2977 = vmatprep.mubr.bf16.mxu0 0
  %2978 = vmatmul.mubr.bf16.gmra.mrb[0].mxu0 %v2488
  %v2979 = vpop.f32.mrb[0].mxu0
  %v2980 = vadd.f32 %v2787, %v2979
  %v2981 = vpop.f32.mrb[0].mxu0
  %v2982 = vadd.f32 %v2789, %v2981
  %v2983 = vpop.f32.mrb[0].mxu0
  %v2984 = vadd.f32 %v2791, %v2983
  %v2985 = vpop.f32.mrb[0].mxu0
  %v2986 = vadd.f32 %v2793, %v2985
  %2987 = vmatprep.mubr.bf16.mxu0 0
  %2988 = vmatmul.mubr.bf16.gmra.mrb[0].mxu0 %v2490
  %v2989 = vpop.f32.mrb[0].mxu0
  %v2990 = vadd.f32 %v2797, %v2989
  %v2991 = vpop.f32.mrb[0].mxu0
  %v2992 = vadd.f32 %v2799, %v2991
  %v2993 = vpop.f32.mrb[0].mxu0
  %v2994 = vadd.f32 %v2801, %v2993
  %v2995 = vpop.f32.mrb[0].mxu0
  %v2996 = vadd.f32 %v2803, %v2995
  %2997 = vmatprep.mubr.bf16.mxu0 0
  %2998 = vmatmul.mubr.bf16.gmra.mrb[0].mxu0 %v2492
  %v2999 = vpop.f32.mrb[0].mxu0
  %v3000 = vadd.f32 %v2807, %v2999
  %v3001 = vpop.f32.mrb[0].mxu0
  %v3002 = vadd.f32 %v2809, %v3001
  %v3003 = vpop.f32.mrb[0].mxu0
  %v3004 = vadd.f32 %v2811, %v3003
  %v3005 = vpop.f32.mrb[0].mxu0
  %v3006 = vadd.f32 %v2813, %v3005
  %3007 = vmatprep.mubr.bf16.mxu0 0
  %3008 = vmatmul.mubr.bf16.gmra.mrb[0].mxu0 %v2494
  %v3009 = vpop.f32.mrb[0].mxu0
  %v3010 = vadd.f32 %v2817, %v3009
  %v3011 = vpop.f32.mrb[0].mxu0
  %v3012 = vadd.f32 %v2819, %v3011
  %v3013 = vpop.f32.mrb[0].mxu0
  %v3014 = vadd.f32 %v2821, %v3013
  %v3015 = vpop.f32.mrb[0].mxu0
  %v3016 = vadd.f32 %v2823, %v3015
  %3017 = vmatprep.mubr.bf16.mxu0 0
  %3018 = vmatmul.mubr.bf16.gmra.mrb[0].mxu0 %v2496
  %v3019 = vpop.f32.mrb[0].mxu0
  %v3020 = vadd.f32 %v2827, %v3019
  %v3021 = vpop.f32.mrb[0].mxu0
  %v3022 = vadd.f32 %v2829, %v3021
  %v3023 = vpop.f32.mrb[0].mxu0
  %v3024 = vadd.f32 %v2831, %v3023
  %v3025 = vpop.f32.mrb[0].mxu0
  %v3026 = vadd.f32 %v2833, %v3025
  %3027 = vmatprep.mubr.bf16.mxu0 0
  %3028 = vmatmul.mubr.bf16.gmra.mrb[0].mxu0 %v2498
  %v3029 = vpop.f32.mrb[0].mxu0
  %v3030 = vadd.f32 %v2837, %v3029
  %v3031 = vpop.f32.mrb[0].mxu0
  %v3032 = vadd.f32 %v2839, %v3031
  %v3033 = vpop.f32.mrb[0].mxu0
  %v3034 = vadd.f32 %v2841, %v3033
  %v3035 = vpop.f32.mrb[0].mxu0
  %v3036 = vadd.f32 %v2843, %v3035
  %3037 = vmatprep.mubr.bf16.mxu0 0
  %3038 = vmatmul.mubr.bf16.gmra.mrb[0].mxu0 %v2500
  %v3039 = vpop.f32.mrb[0].mxu0
  %v3040 = vadd.f32 %v2847, %v3039
  %v3041 = vpop.f32.mrb[0].mxu0
  %v3042 = vadd.f32 %v2849, %v3041
  %v3043 = vpop.f32.mrb[0].mxu0
  %v3044 = vadd.f32 %v2851, %v3043
  %v3045 = vpop.f32.mrb[0].mxu0
  %v3046 = vadd.f32 %v2853, %v3045
  %3047 = vmatprep.mubr.bf16.mxu0 0
  %3048 = vmatmul.mubr.bf16.gmra.mrb[0].mxu0 %v2502
  %v3049 = vpop.f32.mrb[0].mxu0
  %v3050 = vadd.f32 %v2857, %v3049
  %v3051 = vpop.f32.mrb[0].mxu0
  %v3052 = vadd.f32 %v2859, %v3051
  %v3053 = vpop.f32.mrb[0].mxu0
  %v3054 = vadd.f32 %v2861, %v3053
  %v3055 = vpop.f32.mrb[0].mxu0
  %v3056 = vadd.f32 %v2863, %v3055
  %3057 = vmatprep.mubr.bf16.mxu0 0
  %3058 = vmatmul.mubr.bf16.gmra.mrb[0].mxu0 %v2504
  %v3059 = vpop.f32.mrb[0].mxu0
  %v3060 = vadd.f32 %v2867, %v3059
  %v3061 = vpop.f32.mrb[0].mxu0
  %v3062 = vadd.f32 %v2869, %v3061
  %v3063 = vpop.f32.mrb[0].mxu0
  %v3064 = vadd.f32 %v2871, %v3063
  %v3065 = vpop.f32.mrb[0].mxu0
  %v3066 = vadd.f32 %v2873, %v3065
  %3067 = vmatprep.mubr.bf16.mxu0 0
  %3068 = vmatmul.mubr.bf16.gmra.mrb[0].mxu0 %v2506
  %v3069 = vpop.f32.mrb[0].mxu0
  %v3070 = vadd.f32 %v2877, %v3069
  %v3071 = vpop.f32.mrb[0].mxu0
  %v3072 = vadd.f32 %v2879, %v3071
  %v3073 = vpop.f32.mrb[0].mxu0
  %v3074 = vadd.f32 %v2881, %v3073
  %v3075 = vpop.f32.mrb[0].mxu0
  %v3076 = vadd.f32 %v2883, %v3075
  %3077 = vmatprep.mubr.bf16.mxu0 0
  %3078 = vmatmul.mubr.bf16.gmra.mrb[0].mxu0 %v2508
  %v3079 = vpop.f32.mrb[0].mxu0
  %v3080 = vadd.f32 %v2887, %v3079
  %v3081 = vpop.f32.mrb[0].mxu0
  %v3082 = vadd.f32 %v2889, %v3081
  %v3083 = vpop.f32.mrb[0].mxu0
  %v3084 = vadd.f32 %v2891, %v3083
  %v3085 = vpop.f32.mrb[0].mxu0
  %v3086 = vadd.f32 %v2893, %v3085
  %3087 = vmatprep.mubr.bf16.mxu0 0
  %3088 = vmatmul.mubr.bf16.gmra.mrb[0].mxu0 %v2510
  %v3089 = vpop.f32.mrb[0].mxu0
  %v3090 = vadd.f32 %v2897, %v3089
  %v3091 = vpop.f32.mrb[0].mxu0
  %v3092 = vadd.f32 %v2899, %v3091
  %v3093 = vpop.f32.mrb[0].mxu0
  %v3094 = vadd.f32 %v2901, %v3093
  %v3095 = vpop.f32.mrb[0].mxu0
  %v3096 = vadd.f32 %v2903, %v3095
  %3097 = vmatprep.mubr.bf16.mxu0 0
  %3098 = vmatmul.mubr.bf16.gmra.mrb[0].mxu0 %v2512
  %v3099 = vpop.f32.mrb[0].mxu0
  %v3100 = vadd.f32 %v2907, %v3099
  %v3101 = vpop.f32.mrb[0].mxu0
  %v3102 = vadd.f32 %v2909, %v3101
  %v3103 = vpop.f32.mrb[0].mxu0
  %v3104 = vadd.f32 %v2911, %v3103
  %v3105 = vpop.f32.mrb[0].mxu0
  %v3106 = vadd.f32 %v2913, %v3105
  %3107 = vmatprep.mubr.bf16.mxu0 0
  %3108 = vmatmul.mubr.bf16.gmra.mrb[0].mxu0 %v2514
  %v3109 = vpop.f32.mrb[0].mxu0
  %v3110 = vadd.f32 %v2917, %v3109
  %v3111 = vpop.f32.mrb[0].mxu0
  %v3112 = vadd.f32 %v2919, %v3111
  %v3113 = vpop.f32.mrb[0].mxu0
  %v3114 = vadd.f32 %v2921, %v3113
  %v3115 = vpop.f32.mrb[0].mxu0
  %v3116 = vadd.f32 %v2923, %v3115
  %3117 = vmatprep.mubr.bf16.mxu0 0
  %3118 = vmatmul.mubr.bf16.gmra.mrb[0].mxu0 %v2516
  %v3119 = vpop.f32.mrb[0].mxu0
  %v3120 = vadd.f32 %v2927, %v3119
  %v3121 = vpop.f32.mrb[0].mxu0
  %v3122 = vadd.f32 %v2929, %v3121
  %v3123 = vpop.f32.mrb[0].mxu0
  %v3124 = vadd.f32 %v2931, %v3123
  %v3125 = vpop.f32.mrb[0].mxu0
  %v3126 = vadd.f32 %v2933, %v3125
  %3127 = vdwg.mxu0
  %v3128 = vmax.f32 %v1492, %v2231
  %v3129 = vmax.f32 %v1494, %v2233
  %v3130 = vmax.f32 %v1496, %v2235
  %v3131 = vmax.f32 %v1498, %v2237
  %v3132 = vmax.f32 %v1502, %v2241
  %v3133 = vmax.f32 %v1504, %v2243
  %v3134 = vmax.f32 %v1506, %v2245
  %v3135 = vmax.f32 %v1508, %v2247
  %v3136 = vmax.f32 %v1512, %v2251
  %v3137 = vmax.f32 %v1514, %v2253
  %v3138 = vmax.f32 %v1516, %v2255
  %v3139 = vmax.f32 %v1518, %v2257
  %v3140 = vmax.f32 %v1522, %v2261
  %v3141 = vmax.f32 %v1524, %v2263
  %v3142 = vmax.f32 %v1526, %v2265
  %v3143 = vmax.f32 %v1528, %v2267
  %v3144 = vmax.f32 %v1532, %v2271
  %v3145 = vmax.f32 %v1534, %v2273
  %v3146 = vmax.f32 %v1536, %v2275
  %v3147 = vmax.f32 %v1538, %v2277
  %v3148 = vmax.f32 %v1542, %v2281
  %v3149 = vmax.f32 %v1544, %v2283
  %v3150 = vmax.f32 %v1546, %v2285
  %v3151 = vmax.f32 %v1548, %v2287
  %v3152 = vmax.f32 %v1552, %v2291
  %v3153 = vmax.f32 %v1554, %v2293
  %v3154 = vmax.f32 %v1556, %v2295
  %v3155 = vmax.f32 %v1558, %v2297
  %v3156 = vmax.f32 %v1562, %v2301
  %v3157 = vmax.f32 %v1564, %v2303
  %v3158 = vmax.f32 %v1566, %v2305
  %v3159 = vmax.f32 %v1568, %v2307
  %v3160 = vmax.f32 %v1572, %v2311
  %v3161 = vmax.f32 %v1574, %v2313
  %v3162 = vmax.f32 %v1576, %v2315
  %v3163 = vmax.f32 %v1578, %v2317
  %v3164 = vmax.f32 %v1582, %v2321
  %v3165 = vmax.f32 %v1584, %v2323
  %v3166 = vmax.f32 %v1586, %v2325
  %v3167 = vmax.f32 %v1588, %v2327
  %v3168 = vmax.f32 %v1592, %v2331
  %v3169 = vmax.f32 %v1594, %v2333
  %v3170 = vmax.f32 %v1596, %v2335
  %v3171 = vmax.f32 %v1598, %v2337
  %v3172 = vmax.f32 %v1602, %v2341
  %v3173 = vmax.f32 %v1604, %v2343
  %v3174 = vmax.f32 %v1606, %v2345
  %v3175 = vmax.f32 %v1608, %v2347
  %v3176 = vmax.f32 %v1612, %v2351
  %v3177 = vmax.f32 %v1614, %v2353
  %v3178 = vmax.f32 %v1616, %v2355
  %v3179 = vmax.f32 %v1618, %v2357
  %v3180 = vmax.f32 %v1622, %v2361
  %v3181 = vmax.f32 %v1624, %v2363
  %v3182 = vmax.f32 %v1626, %v2365
  %v3183 = vmax.f32 %v1628, %v2367
  %v3184 = vmax.f32 %v1632, %v2371
  %v3185 = vmax.f32 %v1634, %v2373
  %v3186 = vmax.f32 %v1636, %v2375
  %v3187 = vmax.f32 %v1638, %v2377
  %v3188 = vmax.f32 %v1642, %v2381
  %v3189 = vmax.f32 %v1644, %v2383
  %v3190 = vmax.f32 %v1646, %v2385
  %v3191 = vmax.f32 %v1648, %v2387
  %v3192 = vmax.f32 %v3128, %v2970
  %v3193 = vmax.f32 %v3129, %v2972
  %v3194 = vmax.f32 %v3130, %v2974
  %v3195 = vmax.f32 %v3131, %v2976
  %v3196 = vmax.f32 %v3132, %v2980
  %v3197 = vmax.f32 %v3133, %v2982
  %v3198 = vmax.f32 %v3134, %v2984
  %v3199 = vmax.f32 %v3135, %v2986
  %v3200 = vmax.f32 %v3136, %v2990
  %v3201 = vmax.f32 %v3137, %v2992
  %v3202 = vmax.f32 %v3138, %v2994
  %v3203 = vmax.f32 %v3139, %v2996
  %v3204 = vmax.f32 %v3140, %v3000
  %v3205 = vmax.f32 %v3141, %v3002
  %v3206 = vmax.f32 %v3142, %v3004
  %v3207 = vmax.f32 %v3143, %v3006
  %v3208 = vmax.f32 %v3144, %v3010
  %v3209 = vmax.f32 %v3145, %v3012
  %v3210 = vmax.f32 %v3146, %v3014
  %v3211 = vmax.f32 %v3147, %v3016
  %v3212 = vmax.f32 %v3148, %v3020
  %v3213 = vmax.f32 %v3149, %v3022
  %v3214 = vmax.f32 %v3150, %v3024
  %v3215 = vmax.f32 %v3151, %v3026
  %v3216 = vmax.f32 %v3152, %v3030
  %v3217 = vmax.f32 %v3153, %v3032
  %v3218 = vmax.f32 %v3154, %v3034
  %v3219 = vmax.f32 %v3155, %v3036
  %v3220 = vmax.f32 %v3156, %v3040
  %v3221 = vmax.f32 %v3157, %v3042
  %v3222 = vmax.f32 %v3158, %v3044
  %v3223 = vmax.f32 %v3159, %v3046
  %v3224 = vmax.f32 %v3160, %v3050
  %v3225 = vmax.f32 %v3161, %v3052
  %v3226 = vmax.f32 %v3162, %v3054
  %v3227 = vmax.f32 %v3163, %v3056
  %v3228 = vmax.f32 %v3164, %v3060
  %v3229 = vmax.f32 %v3165, %v3062
  %v3230 = vmax.f32 %v3166, %v3064
  %v3231 = vmax.f32 %v3167, %v3066
  %v3232 = vmax.f32 %v3168, %v3070
  %v3233 = vmax.f32 %v3169, %v3072
  %v3234 = vmax.f32 %v3170, %v3074
  %v3235 = vmax.f32 %v3171, %v3076
  %v3236 = vmax.f32 %v3172, %v3080
  %v3237 = vmax.f32 %v3173, %v3082
  %v3238 = vmax.f32 %v3174, %v3084
  %v3239 = vmax.f32 %v3175, %v3086
  %v3240 = vmax.f32 %v3176, %v3090
  %v3241 = vmax.f32 %v3177, %v3092
  %v3242 = vmax.f32 %v3178, %v3094
  %v3243 = vmax.f32 %v3179, %v3096
  %v3244 = vmax.f32 %v3180, %v3100
  %v3245 = vmax.f32 %v3181, %v3102
  %v3246 = vmax.f32 %v3182, %v3104
  %v3247 = vmax.f32 %v3183, %v3106
  %v3248 = vmax.f32 %v3184, %v3110
  %v3249 = vmax.f32 %v3185, %v3112
  %v3250 = vmax.f32 %v3186, %v3114
  %v3251 = vmax.f32 %v3187, %v3116
  %v3252 = vmax.f32 %v3188, %v3120
  %v3253 = vmax.f32 %v3189, %v3122
  %v3254 = vmax.f32 %v3190, %v3124
  %v3255 = vmax.f32 %v3191, %v3126
  %v3256 = vld [vmem:[%s2] sm:$0x3]
  %v3258 = vlaneseq
  %v3259 = vshrl.u32 %v3258, 7
  %v3260 = vsub.s32 0, %v3259
  %v3261 = vrot.slane %v3256, %v3260
  %v3262 = vlaneseq
  %v3263 = vshrl.u32 %v3262, 7
  %v3264 = vsub.s32 1, %v3263
  %v3265 = vrot.slane %v3256, %v3264
  %v3268 = vadd.f32 %v3192, %v3261
  %v3269 = vadd.f32 %v3193, %v3265
  %v3270 = vadd.f32 %v3194, %v3261
  %v3271 = vadd.f32 %v3195, %v3265
  %v3272 = vadd.f32 %v3196, %v3261
  %v3273 = vadd.f32 %v3197, %v3265
  %v3274 = vadd.f32 %v3198, %v3261
  %v3275 = vadd.f32 %v3199, %v3265
  %v3276 = vadd.f32 %v3200, %v3261
  %v3277 = vadd.f32 %v3201, %v3265
  %v3278 = vadd.f32 %v3202, %v3261
  %v3279 = vadd.f32 %v3203, %v3265
  %v3280 = vadd.f32 %v3204, %v3261
  %v3281 = vadd.f32 %v3205, %v3265
  %v3282 = vadd.f32 %v3206, %v3261
  %v3283 = vadd.f32 %v3207, %v3265
  %v3284 = vadd.f32 %v3208, %v3261
  %v3285 = vadd.f32 %v3209, %v3265
  %v3286 = vadd.f32 %v3210, %v3261
  %v3287 = vadd.f32 %v3211, %v3265
  %v3288 = vadd.f32 %v3212, %v3261
  %v3289 = vadd.f32 %v3213, %v3265
  %v3290 = vadd.f32 %v3214, %v3261
  %v3291 = vadd.f32 %v3215, %v3265
  %v3292 = vadd.f32 %v3216, %v3261
  %v3293 = vadd.f32 %v3217, %v3265
  %v3294 = vadd.f32 %v3218, %v3261
  %v3295 = vadd.f32 %v3219, %v3265
  %v3296 = vadd.f32 %v3220, %v3261
  %v3297 = vadd.f32 %v3221, %v3265
  %v3298 = vadd.f32 %v3222, %v3261
  %v3299 = vadd.f32 %v3223, %v3265
  %v3300 = vadd.f32 %v3224, %v3261
  %v3301 = vadd.f32 %v3225, %v3265
  %v3302 = vadd.f32 %v3226, %v3261
  %v3303 = vadd.f32 %v3227, %v3265
  %v3304 = vadd.f32 %v3228, %v3261
  %v3305 = vadd.f32 %v3229, %v3265
  %v3306 = vadd.f32 %v3230, %v3261
  %v3307 = vadd.f32 %v3231, %v3265
  %v3308 = vadd.f32 %v3232, %v3261
  %v3309 = vadd.f32 %v3233, %v3265
  %v3310 = vadd.f32 %v3234, %v3261
  %v3311 = vadd.f32 %v3235, %v3265
  %v3312 = vadd.f32 %v3236, %v3261
  %v3313 = vadd.f32 %v3237, %v3265
  %v3314 = vadd.f32 %v3238, %v3261
  %v3315 = vadd.f32 %v3239, %v3265
  %v3316 = vadd.f32 %v3240, %v3261
  %v3317 = vadd.f32 %v3241, %v3265
  %v3318 = vadd.f32 %v3242, %v3261
  %v3319 = vadd.f32 %v3243, %v3265
  %v3320 = vadd.f32 %v3244, %v3261
  %v3321 = vadd.f32 %v3245, %v3265
  %v3322 = vadd.f32 %v3246, %v3261
  %v3323 = vadd.f32 %v3247, %v3265
  %v3324 = vadd.f32 %v3248, %v3261
  %v3325 = vadd.f32 %v3249, %v3265
  %v3326 = vadd.f32 %v3250, %v3261
  %v3327 = vadd.f32 %v3251, %v3265
  %v3328 = vadd.f32 %v3252, %v3261
  %v3329 = vadd.f32 %v3253, %v3265
  %v3330 = vadd.f32 %v3254, %v3261
  %v3331 = vadd.f32 %v3255, %v3265
  %vm3332 = vcmp.gt.f32.partialorder %v3268, 0.0
  %vm3333 = vcmp.gt.f32.partialorder %v3269, 0.0
  %vm3334 = vcmp.gt.f32.partialorder %v3270, 0.0
  %vm3335 = vcmp.gt.f32.partialorder %v3271, 0.0
  %vm3336 = vcmp.gt.f32.partialorder %v3272, 0.0
  %vm3337 = vcmp.gt.f32.partialorder %v3273, 0.0
  %vm3338 = vcmp.gt.f32.partialorder %v3274, 0.0
  %vm3339 = vcmp.gt.f32.partialorder %v3275, 0.0
  %vm3340 = vcmp.gt.f32.partialorder %v3276, 0.0
  %vm3341 = vcmp.gt.f32.partialorder %v3277, 0.0
  %vm3342 = vcmp.gt.f32.partialorder %v3278, 0.0
  %vm3343 = vcmp.gt.f32.partialorder %v3279, 0.0
  %vm3344 = vcmp.gt.f32.partialorder %v3280, 0.0
  %vm3345 = vcmp.gt.f32.partialorder %v3281, 0.0
  %vm3346 = vcmp.gt.f32.partialorder %v3282, 0.0
  %vm3347 = vcmp.gt.f32.partialorder %v3283, 0.0
  %vm3348 = vcmp.gt.f32.partialorder %v3284, 0.0
  %vm3349 = vcmp.gt.f32.partialorder %v3285, 0.0
  %vm3350 = vcmp.gt.f32.partialorder %v3286, 0.0
  %vm3351 = vcmp.gt.f32.partialorder %v3287, 0.0
  %vm3352 = vcmp.gt.f32.partialorder %v3288, 0.0
  %vm3353 = vcmp.gt.f32.partialorder %v3289, 0.0
  %vm3354 = vcmp.gt.f32.partialorder %v3290, 0.0
  %vm3355 = vcmp.gt.f32.partialorder %v3291, 0.0
  %vm3356 = vcmp.gt.f32.partialorder %v3292, 0.0
  %vm3357 = vcmp.gt.f32.partialorder %v3293, 0.0
  %vm3358 = vcmp.gt.f32.partialorder %v3294, 0.0
  %vm3359 = vcmp.gt.f32.partialorder %v3295, 0.0
  %vm3360 = vcmp.gt.f32.partialorder %v3296, 0.0
  %vm3361 = vcmp.gt.f32.partialorder %v3297, 0.0
  %vm3362 = vcmp.gt.f32.partialorder %v3298, 0.0
  %vm3363 = vcmp.gt.f32.partialorder %v3299, 0.0
  %vm3364 = vcmp.gt.f32.partialorder %v3300, 0.0
  %vm3365 = vcmp.gt.f32.partialorder %v3301, 0.0
  %vm3366 = vcmp.gt.f32.partialorder %v3302, 0.0
  %vm3367 = vcmp.gt.f32.partialorder %v3303, 0.0
  %vm3368 = vcmp.gt.f32.partialorder %v3304, 0.0
  %vm3369 = vcmp.gt.f32.partialorder %v3305, 0.0
  %vm3370 = vcmp.gt.f32.partialorder %v3306, 0.0
  %vm3371 = vcmp.gt.f32.partialorder %v3307, 0.0
  %vm3372 = vcmp.gt.f32.partialorder %v3308, 0.0
  %vm3373 = vcmp.gt.f32.partialorder %v3309, 0.0
  %vm3374 = vcmp.gt.f32.partialorder %v3310, 0.0
  %vm3375 = vcmp.gt.f32.partialorder %v3311, 0.0
  %vm3376 = vcmp.gt.f32.partialorder %v3312, 0.0
  %vm3377 = vcmp.gt.f32.partialorder %v3313, 0.0
  %vm3378 = vcmp.gt.f32.partialorder %v3314, 0.0
  %vm3379 = vcmp.gt.f32.partialorder %v3315, 0.0
  %vm3380 = vcmp.gt.f32.partialorder %v3316, 0.0
  %vm3381 = vcmp.gt.f32.partialorder %v3317, 0.0
  %vm3382 = vcmp.gt.f32.partialorder %v3318, 0.0
  %vm3383 = vcmp.gt.f32.partialorder %v3319, 0.0
  %vm3384 = vcmp.gt.f32.partialorder %v3320, 0.0
  %vm3385 = vcmp.gt.f32.partialorder %v3321, 0.0
  %vm3386 = vcmp.gt.f32.partialorder %v3322, 0.0
  %vm3387 = vcmp.gt.f32.partialorder %v3323, 0.0
  %vm3388 = vcmp.gt.f32.partialorder %v3324, 0.0
  %vm3389 = vcmp.gt.f32.partialorder %v3325, 0.0
  %vm3390 = vcmp.gt.f32.partialorder %v3326, 0.0
  %vm3391 = vcmp.gt.f32.partialorder %v3327, 0.0
  %vm3392 = vcmp.gt.f32.partialorder %v3328, 0.0
  %vm3393 = vcmp.gt.f32.partialorder %v3329, 0.0
  %vm3394 = vcmp.gt.f32.partialorder %v3330, 0.0
  %vm3395 = vcmp.gt.f32.partialorder %v3331, 0.0
  %v3396 = vmul.f32 %v3268, 0.01
  %v3397 = vmul.f32 %v3269, 0.01
  %v3398 = vmul.f32 %v3270, 0.01
  %v3399 = vmul.f32 %v3271, 0.01
  %v3400 = vmul.f32 %v3272, 0.01
  %v3401 = vmul.f32 %v3273, 0.01
  %v3402 = vmul.f32 %v3274, 0.01
  %v3403 = vmul.f32 %v3275, 0.01
  %v3404 = vmul.f32 %v3276, 0.01
  %v3405 = vmul.f32 %v3277, 0.01
  %v3406 = vmul.f32 %v3278, 0.01
  %v3407 = vmul.f32 %v3279, 0.01
  %v3408 = vmul.f32 %v3280, 0.01
  %v3409 = vmul.f32 %v3281, 0.01
  %v3410 = vmul.f32 %v3282, 0.01
  %v3411 = vmul.f32 %v3283, 0.01
  %v3412 = vmul.f32 %v3284, 0.01
  %v3413 = vmul.f32 %v3285, 0.01
  %v3414 = vmul.f32 %v3286, 0.01
  %v3415 = vmul.f32 %v3287, 0.01
  %v3416 = vmul.f32 %v3288, 0.01
  %v3417 = vmul.f32 %v3289, 0.01
  %v3418 = vmul.f32 %v3290, 0.01
  %v3419 = vmul.f32 %v3291, 0.01
  %v3420 = vmul.f32 %v3292, 0.01
  %v3421 = vmul.f32 %v3293, 0.01
  %v3422 = vmul.f32 %v3294, 0.01
  %v3423 = vmul.f32 %v3295, 0.01
  %v3424 = vmul.f32 %v3296, 0.01
  %v3425 = vmul.f32 %v3297, 0.01
  %v3426 = vmul.f32 %v3298, 0.01
  %v3427 = vmul.f32 %v3299, 0.01
  %v3428 = vmul.f32 %v3300, 0.01
  %v3429 = vmul.f32 %v3301, 0.01
  %v3430 = vmul.f32 %v3302, 0.01
  %v3431 = vmul.f32 %v3303, 0.01
  %v3432 = vmul.f32 %v3304, 0.01
  %v3433 = vmul.f32 %v3305, 0.01
  %v3434 = vmul.f32 %v3306, 0.01
  %v3435 = vmul.f32 %v3307, 0.01
  %v3436 = vmul.f32 %v3308, 0.01
  %v3437 = vmul.f32 %v3309, 0.01
  %v3438 = vmul.f32 %v3310, 0.01
  %v3439 = vmul.f32 %v3311, 0.01
  %v3440 = vmul.f32 %v3312, 0.01
  %v3441 = vmul.f32 %v3313, 0.01
  %v3442 = vmul.f32 %v3314, 0.01
  %v3443 = vmul.f32 %v3315, 0.01
  %v3444 = vmul.f32 %v3316, 0.01
  %v3445 = vmul.f32 %v3317, 0.01
  %v3446 = vmul.f32 %v3318, 0.01
  %v3447 = vmul.f32 %v3319, 0.01
  %v3448 = vmul.f32 %v3320, 0.01
  %v3449 = vmul.f32 %v3321, 0.01
  %v3450 = vmul.f32 %v3322, 0.01
  %v3451 = vmul.f32 %v3323, 0.01
  %v3452 = vmul.f32 %v3324, 0.01
  %v3453 = vmul.f32 %v3325, 0.01
  %v3454 = vmul.f32 %v3326, 0.01
  %v3455 = vmul.f32 %v3327, 0.01
  %v3456 = vmul.f32 %v3328, 0.01
  %v3457 = vmul.f32 %v3329, 0.01
  %v3458 = vmul.f32 %v3330, 0.01
  %v3459 = vmul.f32 %v3331, 0.01
  %v3460 = vsel %vm3332, %v3268, %v3396
  %v3461 = vsel %vm3333, %v3269, %v3397
  %v3462 = vsel %vm3334, %v3270, %v3398
  %v3463 = vsel %vm3335, %v3271, %v3399
  %v3464 = vsel %vm3336, %v3272, %v3400
  %v3465 = vsel %vm3337, %v3273, %v3401
  %v3466 = vsel %vm3338, %v3274, %v3402
  %v3467 = vsel %vm3339, %v3275, %v3403
  %v3468 = vsel %vm3340, %v3276, %v3404
  %v3469 = vsel %vm3341, %v3277, %v3405
  %v3470 = vsel %vm3342, %v3278, %v3406
  %v3471 = vsel %vm3343, %v3279, %v3407
  %v3472 = vsel %vm3344, %v3280, %v3408
  %v3473 = vsel %vm3345, %v3281, %v3409
  %v3474 = vsel %vm3346, %v3282, %v3410
  %v3475 = vsel %vm3347, %v3283, %v3411
  %v3476 = vsel %vm3348, %v3284, %v3412
  %v3477 = vsel %vm3349, %v3285, %v3413
  %v3478 = vsel %vm3350, %v3286, %v3414
  %v3479 = vsel %vm3351, %v3287, %v3415
  %v3480 = vsel %vm3352, %v3288, %v3416
  %v3481 = vsel %vm3353, %v3289, %v3417
  %v3482 = vsel %vm3354, %v3290, %v3418
  %v3483 = vsel %vm3355, %v3291, %v3419
  %v3484 = vsel %vm3356, %v3292, %v3420
  %v3485 = vsel %vm3357, %v3293, %v3421
  %v3486 = vsel %vm3358, %v3294, %v3422
  %v3487 = vsel %vm3359, %v3295, %v3423
  %v3488 = vsel %vm3360, %v3296, %v3424
  %v3489 = vsel %vm3361, %v3297, %v3425
  %v3490 = vsel %vm3362, %v3298, %v3426
  %v3491 = vsel %vm3363, %v3299, %v3427
  %v3492 = vsel %vm3364, %v3300, %v3428
  %v3493 = vsel %vm3365, %v3301, %v3429
  %v3494 = vsel %vm3366, %v3302, %v3430
  %v3495 = vsel %vm3367, %v3303, %v3431
  %v3496 = vsel %vm3368, %v3304, %v3432
  %v3497 = vsel %vm3369, %v3305, %v3433
  %v3498 = vsel %vm3370, %v3306, %v3434
  %v3499 = vsel %vm3371, %v3307, %v3435
  %v3500 = vsel %vm3372, %v3308, %v3436
  %v3501 = vsel %vm3373, %v3309, %v3437
  %v3502 = vsel %vm3374, %v3310, %v3438
  %v3503 = vsel %vm3375, %v3311, %v3439
  %v3504 = vsel %vm3376, %v3312, %v3440
  %v3505 = vsel %vm3377, %v3313, %v3441
  %v3506 = vsel %vm3378, %v3314, %v3442
  %v3507 = vsel %vm3379, %v3315, %v3443
  %v3508 = vsel %vm3380, %v3316, %v3444
  %v3509 = vsel %vm3381, %v3317, %v3445
  %v3510 = vsel %vm3382, %v3318, %v3446
  %v3511 = vsel %vm3383, %v3319, %v3447
  %v3512 = vsel %vm3384, %v3320, %v3448
  %v3513 = vsel %vm3385, %v3321, %v3449
  %v3514 = vsel %vm3386, %v3322, %v3450
  %v3515 = vsel %vm3387, %v3323, %v3451
  %v3516 = vsel %vm3388, %v3324, %v3452
  %v3517 = vsel %vm3389, %v3325, %v3453
  %v3518 = vsel %vm3390, %v3326, %v3454
  %v3519 = vsel %vm3391, %v3327, %v3455
  %v3520 = vsel %vm3392, %v3328, %v3456
  %v3521 = vsel %vm3393, %v3329, %v3457
  %v3522 = vsel %vm3394, %v3330, %v3458
  %v3523 = vsel %vm3395, %v3331, %v3459
  %v3524 = vpack.c.bf16 %v3462, %v3460
  %v3525 = vpack.c.bf16 %v3463, %v3461
  %v3526 = vpack.c.bf16 %v3466, %v3464
  %v3527 = vpack.c.bf16 %v3467, %v3465
  %v3528 = vpack.c.bf16 %v3470, %v3468
  %v3529 = vpack.c.bf16 %v3471, %v3469
  %v3530 = vpack.c.bf16 %v3474, %v3472
  %v3531 = vpack.c.bf16 %v3475, %v3473
  %v3532 = vpack.c.bf16 %v3478, %v3476
  %v3533 = vpack.c.bf16 %v3479, %v3477
  %v3534 = vpack.c.bf16 %v3482, %v3480
  %v3535 = vpack.c.bf16 %v3483, %v3481
  %v3536 = vpack.c.bf16 %v3486, %v3484
  %v3537 = vpack.c.bf16 %v3487, %v3485
  %v3538 = vpack.c.bf16 %v3490, %v3488
  %v3539 = vpack.c.bf16 %v3491, %v3489
  %v3540 = vpack.c.bf16 %v3494, %v3492
  %v3541 = vpack.c.bf16 %v3495, %v3493
  %v3542 = vpack.c.bf16 %v3498, %v3496
  %v3543 = vpack.c.bf16 %v3499, %v3497
  %v3544 = vpack.c.bf16 %v3502, %v3500
  %v3545 = vpack.c.bf16 %v3503, %v3501
  %v3546 = vpack.c.bf16 %v3506, %v3504
  %v3547 = vpack.c.bf16 %v3507, %v3505
  %v3548 = vpack.c.bf16 %v3510, %v3508
  %v3549 = vpack.c.bf16 %v3511, %v3509
  %v3550 = vpack.c.bf16 %v3514, %v3512
  %v3551 = vpack.c.bf16 %v3515, %v3513
  %v3552 = vpack.c.bf16 %v3518, %v3516
  %v3553 = vpack.c.bf16 %v3519, %v3517
  %v3554 = vpack.c.bf16 %v3522, %v3520
  %v3555 = vpack.c.bf16 %v3523, %v3521
  %v3588 = vunpack.c.l.b16 %v3524
  %v3589 = vunpack.c.l.b16 %v3525
  %v3590 = vunpack.c.h.b16 %v3524
  %v3591 = vunpack.c.h.b16 %v3525
  %v3592 = vunpack.c.l.b16 %v3526
  %v3593 = vunpack.c.l.b16 %v3527
  %v3594 = vunpack.c.h.b16 %v3526
  %v3595 = vunpack.c.h.b16 %v3527
  %v3596 = vunpack.c.l.b16 %v3528
  %v3597 = vunpack.c.l.b16 %v3529
  %v3598 = vunpack.c.h.b16 %v3528
  %v3599 = vunpack.c.h.b16 %v3529
  %v3600 = vunpack.c.l.b16 %v3530
  %v3601 = vunpack.c.l.b16 %v3531
  %v3602 = vunpack.c.h.b16 %v3530
  %v3603 = vunpack.c.h.b16 %v3531
  %v3604 = vunpack.c.l.b16 %v3532
  %v3605 = vunpack.c.l.b16 %v3533
  %v3606 = vunpack.c.h.b16 %v3532
  %v3607 = vunpack.c.h.b16 %v3533
  %v3608 = vunpack.c.l.b16 %v3534
  %v3609 = vunpack.c.l.b16 %v3535
  %v3610 = vunpack.c.h.b16 %v3534
  %v3611 = vunpack.c.h.b16 %v3535
  %v3612 = vunpack.c.l.b16 %v3536
  %v3613 = vunpack.c.l.b16 %v3537
  %v3614 = vunpack.c.h.b16 %v3536
  %v3615 = vunpack.c.h.b16 %v3537
  %v3616 = vunpack.c.l.b16 %v3538
  %v3617 = vunpack.c.l.b16 %v3539
  %v3618 = vunpack.c.h.b16 %v3538
  %v3619 = vunpack.c.h.b16 %v3539
  %v3620 = vunpack.c.l.b16 %v3540
  %v3621 = vunpack.c.l.b16 %v3541
  %v3622 = vunpack.c.h.b16 %v3540
  %v3623 = vunpack.c.h.b16 %v3541
  %v3624 = vunpack.c.l.b16 %v3542
  %v3625 = vunpack.c.l.b16 %v3543
  %v3626 = vunpack.c.h.b16 %v3542
  %v3627 = vunpack.c.h.b16 %v3543
  %v3628 = vunpack.c.l.b16 %v3544
  %v3629 = vunpack.c.l.b16 %v3545
  %v3630 = vunpack.c.h.b16 %v3544
  %v3631 = vunpack.c.h.b16 %v3545
  %v3632 = vunpack.c.l.b16 %v3546
  %v3633 = vunpack.c.l.b16 %v3547
  %v3634 = vunpack.c.h.b16 %v3546
  %v3635 = vunpack.c.h.b16 %v3547
  %v3636 = vunpack.c.l.b16 %v3548
  %v3637 = vunpack.c.l.b16 %v3549
  %v3638 = vunpack.c.h.b16 %v3548
  %v3639 = vunpack.c.h.b16 %v3549
  %v3640 = vunpack.c.l.b16 %v3550
  %v3641 = vunpack.c.l.b16 %v3551
  %v3642 = vunpack.c.h.b16 %v3550
  %v3643 = vunpack.c.h.b16 %v3551
  %v3644 = vunpack.c.l.b16 %v3552
  %v3645 = vunpack.c.l.b16 %v3553
  %v3646 = vunpack.c.h.b16 %v3552
  %v3647 = vunpack.c.h.b16 %v3553
  %v3648 = vunpack.c.l.b16 %v3554
  %v3649 = vunpack.c.l.b16 %v3555
  %v3650 = vunpack.c.h.b16 %v3554
  %v3651 = vunpack.c.h.b16 %v3555
  %v3652 = vpack.c.b16 %v3589, %v3588
  %v3653 = vpack.c.b16 %v3591, %v3590
  %v3654 = vpack.c.b16 %v3593, %v3592
  %v3655 = vpack.c.b16 %v3595, %v3594
  %v3656 = vpack.c.b16 %v3597, %v3596
  %v3657 = vpack.c.b16 %v3599, %v3598
  %v3658 = vpack.c.b16 %v3601, %v3600
  %v3659 = vpack.c.b16 %v3603, %v3602
  %v3660 = vpack.c.b16 %v3605, %v3604
  %v3661 = vpack.c.b16 %v3607, %v3606
  %v3662 = vpack.c.b16 %v3609, %v3608
  %v3663 = vpack.c.b16 %v3611, %v3610
  %v3664 = vpack.c.b16 %v3613, %v3612
  %v3665 = vpack.c.b16 %v3615, %v3614
  %v3666 = vpack.c.b16 %v3617, %v3616
  %v3667 = vpack.c.b16 %v3619, %v3618
  %v3668 = vpack.c.b16 %v3621, %v3620
  %v3669 = vpack.c.b16 %v3623, %v3622
  %v3670 = vpack.c.b16 %v3625, %v3624
  %v3671 = vpack.c.b16 %v3627, %v3626
  %v3672 = vpack.c.b16 %v3629, %v3628
  %v3673 = vpack.c.b16 %v3631, %v3630
  %v3674 = vpack.c.b16 %v3633, %v3632
  %v3675 = vpack.c.b16 %v3635, %v3634
  %v3676 = vpack.c.b16 %v3637, %v3636
  %v3677 = vpack.c.b16 %v3639, %v3638
  %v3678 = vpack.c.b16 %v3641, %v3640
  %v3679 = vpack.c.b16 %v3643, %v3642
  %v3680 = vpack.c.b16 %v3645, %v3644
  %v3681 = vpack.c.b16 %v3647, %v3646
  %v3682 = vpack.c.b16 %v3649, %v3648
  %v3683 = vpack.c.b16 %v3651, %v3650
  %3716 = vst [vmem:[%s3] sm:$0xff] %v3652
  %3717 = vst [vmem:[%s3 + $0x8] sm:$0xff] %v3653
  %3718 = vst [vmem:[%s3 + $0x10] sm:$0xff] %v3654
  %3719 = vst [vmem:[%s3 + $0x18] sm:$0xff] %v3655
  %3720 = vst [vmem:[%s3 + $0x20] sm:$0xff] %v3656
  %3721 = vst [vmem:[%s3 + $0x28] sm:$0xff] %v3657
  %3722 = vst [vmem:[%s3 + $0x30] sm:$0xff] %v3658
  %3723 = vst [vmem:[%s3 + $0x38] sm:$0xff] %v3659
  %3724 = vst [vmem:[%s3 + $0x40] sm:$0xff] %v3660
  %3725 = vst [vmem:[%s3 + $0x48] sm:$0xff] %v3661
  %3726 = vst [vmem:[%s3 + $0x50] sm:$0xff] %v3662
  %3727 = vst [vmem:[%s3 + $0x58] sm:$0xff] %v3663
  %3728 = vst [vmem:[%s3 + $0x60] sm:$0xff] %v3664
  %3729 = vst [vmem:[%s3 + $0x68] sm:$0xff] %v3665
  %3730 = vst [vmem:[%s3 + $0x70] sm:$0xff] %v3666
  %3731 = vst [vmem:[%s3 + $0x78] sm:$0xff] %v3667
  %3732 = vst [vmem:[%s3 + $0x80] sm:$0xff] %v3668
  %3733 = vst [vmem:[%s3 + $0x88] sm:$0xff] %v3669
  %3734 = vst [vmem:[%s3 + $0x90] sm:$0xff] %v3670
  %3735 = vst [vmem:[%s3 + $0x98] sm:$0xff] %v3671
  %3736 = vst [vmem:[%s3 + $0xa0] sm:$0xff] %v3672
  %3737 = vst [vmem:[%s3 + $0xa8] sm:$0xff] %v3673
  %3738 = vst [vmem:[%s3 + $0xb0] sm:$0xff] %v3674
  %3739 = vst [vmem:[%s3 + $0xb8] sm:$0xff] %v3675
  %3740 = vst [vmem:[%s3 + $0xc0] sm:$0xff] %v3676
  %3741 = vst [vmem:[%s3 + $0xc8] sm:$0xff] %v3677
  %3742 = vst [vmem:[%s3 + $0xd0] sm:$0xff] %v3678
  %3743 = vst [vmem:[%s3 + $0xd8] sm:$0xff] %v3679
  %3744 = vst [vmem:[%s3 + $0xe0] sm:$0xff] %v3680
  %3745 = vst [vmem:[%s3 + $0xe8] sm:$0xff] %v3681
  %3746 = vst [vmem:[%s3 + $0xf0] sm:$0xff] %v3682
  %3747 = vst [vmem:[%s3 + $0xf8] sm:$0xff] %v3683
  // Predicated region
  $region14: #{forward.4} parent=0 // pred_check
    _
  $region15: #{forward.4} parent=0 // pred_check_branch
    %3749 = sbr.rel (0) target = $region17
  $region16: #{forward.4} parent=0 // pred_region
    _
  $region17: #{forward.4} parent=0 // pred_fallthru
    _
  // Predicated region
  $region18: #{forward.4} parent=0 // pred_check
    _
  $region19: #{forward.4} parent=0 // pred_check_branch
    %3751 = sbr.rel (0) target = $region21
  $region20: #{forward.4} parent=0 // pred_region
    _
  $region21: #{forward.4} parent=0 // pred_fallthru
    _

// kernel: forward.5
$region0: #{forward.5}
  #allocation0 [shape = 'u32[]', space=smem, size = 0x4, offset = 0x4, fixed_abs, tag = 'smem constant byte address 0x4 - core index']
  #allocation1 [shape = 'u32[144,128]{1,0:T(1,128)}', space=vmem, size = 0x12000, scoped, tag = 'internal scratch']
  #allocation2 [shape = 'bf16[96,2048]{1,0:T(16,128)(2,1)}', space=vmem, size = 0x60000, scoped, tag = 'scratch operand']
  %s0 = inlined_call_operand.vmem [shape: bf16[6,16,256], index: 0, kind: input, shape index: {}]
  %s1 = inlined_call_operand.vmem [shape: bf16[256,2048], index: 1, kind: input, shape index: {}]
  %s2 = inlined_call_operand.vmem [shape: f32[1,2048], index: 2, kind: input, shape index: {}]
  %s3 = inlined_call_operand.vmem [shape: bf16[256,1024], index: 3, kind: input, shape index: {}]
  %s4 = inlined_call_operand.vmem [shape: bf16[256,1024], index: 4, kind: input, shape index: {}]
  %s5 = inlined_call_operand.vmem [shape: bf16[512,256], index: 5, kind: input, shape index: {}]
  %s6 = inlined_call_operand.vmem [shape: f32[1,256], index: 6, kind: input, shape index: {}]
  %s7 = inlined_call_operand.vmem [shape: bf16[256,128], index: 7, kind: input, shape index: {}]
  %s8 = inlined_call_operand.vmem [shape: f32[1,128], index: 8, kind: input, shape index: {}]
  %s9 = inlined_call_operand.vmem [shape: f32[16,128], index: 9, kind: output, shape index: {}]
  %s10 = sld [smem:[#allocation0]]
  $region53: #{forward.5} parent=0
    _
  %s12 = ssub.s32 1, %s10
  %s13 = scalar_select 0, %s12, %s10
  // Predicated region
  $region2: #{forward.5} parent=0 // pred_check
    _
  $region3: #{forward.5} parent=0 // pred_check_branch
    %15 = sbr.rel (0) target = $region5
  $region4: #{forward.5} parent=0 // pred_region
    _
  $region5: #{forward.5} parent=0 // pred_fallthru
    _
  // Predicated region
  $region6: #{forward.5} parent=0 // pred_check
    _
  $region7: #{forward.5} parent=0 // pred_check_branch
    %17 = sbr.rel (0) target = $region9
  $region8: #{forward.5} parent=0 // pred_region
    _
  $region9: #{forward.5} parent=0 // pred_fallthru
    _
  // Predicated region
  $region10: #{forward.5} parent=0 // pred_check
    _
  $region11: #{forward.5} parent=0 // pred_check_branch
    %19 = sbr.rel (0) target = $region13
  $region12: #{forward.5} parent=0 // pred_region
    _
  $region13: #{forward.5} parent=0 // pred_fallthru
    _
  // Predicated region
  $region14: #{forward.5} parent=0 // pred_check
    _
  $region15: #{forward.5} parent=0 // pred_check_branch
    %21 = sbr.rel (0) target = $region17
  $region16: #{forward.5} parent=0 // pred_region
    _
  $region17: #{forward.5} parent=0 // pred_fallthru
    _
  // Predicated region
  $region18: #{forward.5} parent=0 // pred_check
    _
  $region19: #{forward.5} parent=0 // pred_check_branch
    %23 = sbr.rel (0) target = $region21
  $region20: #{forward.5} parent=0 // pred_region
    _
  $region21: #{forward.5} parent=0 // pred_fallthru
    _
  // Predicated region
  $region22: #{forward.5} parent=0 // pred_check
    _
  $region23: #{forward.5} parent=0 // pred_check_branch
    %25 = sbr.rel (0) target = $region25
  $region24: #{forward.5} parent=0 // pred_region
    _
  $region25: #{forward.5} parent=0 // pred_fallthru
    _
  // Predicated region
  $region26: #{forward.5} parent=0 // pred_check
    _
  $region27: #{forward.5} parent=0 // pred_check_branch
    %27 = sbr.rel (0) target = $region29
  $region28: #{forward.5} parent=0 // pred_region
    _
  $region29: #{forward.5} parent=0 // pred_fallthru
    _
  // Predicated region
  $region30: #{forward.5} parent=0 // pred_check
    _
  $region31: #{forward.5} parent=0 // pred_check_branch
    %29 = sbr.rel (0) target = $region33
  $region32: #{forward.5} parent=0 // pred_region
    _
  $region33: #{forward.5} parent=0 // pred_fallthru
    _
  // Predicated region
  $region34: #{forward.5} parent=0 // pred_check
    _
  $region35: #{forward.5} parent=0 // pred_check_branch
    %31 = sbr.rel (0) target = $region37
  $region36: #{forward.5} parent=0 // pred_region
    _
  $region37: #{forward.5} parent=0 // pred_fallthru
    _
  %v33 = vld [vmem:[%s0] sm:$0xff]
  %v34 = vld [vmem:[%s0 + $0x8] sm:$0xff]
  %v35 = vld [vmem:[%s0 + $0x10] sm:$0xff]
  %v36 = vld [vmem:[%s0 + $0x18] sm:$0xff]
  %v37 = vld [vmem:[%s0 + $0x20] sm:$0xff]
  %v38 = vld [vmem:[%s0 + $0x28] sm:$0xff]
  %v39 = vld [vmem:[%s0 + $0x30] sm:$0xff]
  %v40 = vld [vmem:[%s0 + $0x38] sm:$0xff]
  %v41 = vld [vmem:[%s0 + $0x40] sm:$0xff]
  %v42 = vld [vmem:[%s0 + $0x48] sm:$0xff]
  %v43 = vld [vmem:[%s0 + $0x50] sm:$0xff]
  %v44 = vld [vmem:[%s0 + $0x58] sm:$0xff]
  %v45 = vld [vmem:[%s1] sm:$0xff]
  %v46 = vld [vmem:[%s1 + $0x8] sm:$0xff]
  %v47 = vld [vmem:[%s1 + $0x10] sm:$0xff]
  %v48 = vld [vmem:[%s1 + $0x18] sm:$0xff]
  %v49 = vld [vmem:[%s1 + $0x20] sm:$0xff]
  %v50 = vld [vmem:[%s1 + $0x28] sm:$0xff]
  %v51 = vld [vmem:[%s1 + $0x30] sm:$0xff]
  %v52 = vld [vmem:[%s1 + $0x38] sm:$0xff]
  %v53 = vld [vmem:[%s1 + $0x40] sm:$0xff]
  %v54 = vld [vmem:[%s1 + $0x48] sm:$0xff]
  %v55 = vld [vmem:[%s1 + $0x50] sm:$0xff]
  %v56 = vld [vmem:[%s1 + $0x58] sm:$0xff]
  %v57 = vld [vmem:[%s1 + $0x60] sm:$0xff]
  %v58 = vld [vmem:[%s1 + $0x68] sm:$0xff]
  %v59 = vld [vmem:[%s1 + $0x70] sm:$0xff]
  %v60 = vld [vmem:[%s1 + $0x78] sm:$0xff]
  %v61 = vld [vmem:[%s1 + $0x80] sm:$0xff]
  %v62 = vld [vmem:[%s1 + $0x88] sm:$0xff]
  %v63 = vld [vmem:[%s1 + $0x90] sm:$0xff]
  %v64 = vld [vmem:[%s1 + $0x98] sm:$0xff]
  %v65 = vld [vmem:[%s1 + $0xa0] sm:$0xff]
  %v66 = vld [vmem:[%s1 + $0xa8] sm:$0xff]
  %v67 = vld [vmem:[%s1 + $0xb0] sm:$0xff]
  %v68 = vld [vmem:[%s1 + $0xb8] sm:$0xff]
  %v69 = vld [vmem:[%s1 + $0xc0] sm:$0xff]
  %v70 = vld [vmem:[%s1 + $0xc8] sm:$0xff]
  %v71 = vld [vmem:[%s1 + $0xd0] sm:$0xff]
  %v72 = vld [vmem:[%s1 + $0xd8] sm:$0xff]
  %v73 = vld [vmem:[%s1 + $0xe0] sm:$0xff]
  %v74 = vld [vmem:[%s1 + $0xe8] sm:$0xff]
  %v75 = vld [vmem:[%s1 + $0xf0] sm:$0xff]
  %v76 = vld [vmem:[%s1 + $0xf8] sm:$0xff]
  %v77 = vld [vmem:[%s1 + $0x100] sm:$0xff]
  %v78 = vld [vmem:[%s1 + $0x108] sm:$0xff]
  %v79 = vld [vmem:[%s1 + $0x110] sm:$0xff]
  %v80 = vld [vmem:[%s1 + $0x118] sm:$0xff]
  %v81 = vld [vmem:[%s1 + $0x120] sm:$0xff]
  %v82 = vld [vmem:[%s1 + $0x128] sm:$0xff]
  %v83 = vld [vmem:[%s1 + $0x130] sm:$0xff]
  %v84 = vld [vmem:[%s1 + $0x138] sm:$0xff]
  %v85 = vld [vmem:[%s1 + $0x140] sm:$0xff]
  %v86 = vld [vmem:[%s1 + $0x148] sm:$0xff]
  %v87 = vld [vmem:[%s1 + $0x150] sm:$0xff]
  %v88 = vld [vmem:[%s1 + $0x158] sm:$0xff]
  %v89 = vld [vmem:[%s1 + $0x160] sm:$0xff]
  %v90 = vld [vmem:[%s1 + $0x168] sm:$0xff]
  %v91 = vld [vmem:[%s1 + $0x170] sm:$0xff]
  %v92 = vld [vmem:[%s1 + $0x178] sm:$0xff]
  %v93 = vld [vmem:[%s1 + $0x180] sm:$0xff]
  %v94 = vld [vmem:[%s1 + $0x188] sm:$0xff]
  %v95 = vld [vmem:[%s1 + $0x190] sm:$0xff]
  %v96 = vld [vmem:[%s1 + $0x198] sm:$0xff]
  %v97 = vld [vmem:[%s1 + $0x1a0] sm:$0xff]
  %v98 = vld [vmem:[%s1 + $0x1a8] sm:$0xff]
  %v99 = vld [vmem:[%s1 + $0x1b0] sm:$0xff]
  %v100 = vld [vmem:[%s1 + $0x1b8] sm:$0xff]
  %v101 = vld [vmem:[%s1 + $0x1c0] sm:$0xff]
  %v102 = vld [vmem:[%s1 + $0x1c8] sm:$0xff]
  %v103 = vld [vmem:[%s1 + $0x1d0] sm:$0xff]
  %v104 = vld [vmem:[%s1 + $0x1d8] sm:$0xff]
  %v105 = vld [vmem:[%s1 + $0x1e0] sm:$0xff]
  %v106 = vld [vmem:[%s1 + $0x1e8] sm:$0xff]
  %v107 = vld [vmem:[%s1 + $0x1f0] sm:$0xff]
  %v108 = vld [vmem:[%s1 + $0x1f8] sm:$0xff]
  %v109 = vld [vmem:[%s1 + $0x200] sm:$0xff]
  %v110 = vld [vmem:[%s1 + $0x208] sm:$0xff]
  %v111 = vld [vmem:[%s1 + $0x210] sm:$0xff]
  %v112 = vld [vmem:[%s1 + $0x218] sm:$0xff]
  %v113 = vld [vmem:[%s1 + $0x220] sm:$0xff]
  %v114 = vld [vmem:[%s1 + $0x228] sm:$0xff]
  %v115 = vld [vmem:[%s1 + $0x230] sm:$0xff]
  %v116 = vld [vmem:[%s1 + $0x238] sm:$0xff]
  %v117 = vld [vmem:[%s1 + $0x240] sm:$0xff]
  %v118 = vld [vmem:[%s1 + $0x248] sm:$0xff]
  %v119 = vld [vmem:[%s1 + $0x250] sm:$0xff]
  %v120 = vld [vmem:[%s1 + $0x258] sm:$0xff]
  %v121 = vld [vmem:[%s1 + $0x260] sm:$0xff]
  %v122 = vld [vmem:[%s1 + $0x268] sm:$0xff]
  %v123 = vld [vmem:[%s1 + $0x270] sm:$0xff]
  %v124 = vld [vmem:[%s1 + $0x278] sm:$0xff]
  %v125 = vld [vmem:[%s1 + $0x280] sm:$0xff]
  %v126 = vld [vmem:[%s1 + $0x288] sm:$0xff]
  %v127 = vld [vmem:[%s1 + $0x290] sm:$0xff]
  %v128 = vld [vmem:[%s1 + $0x298] sm:$0xff]
  %v129 = vld [vmem:[%s1 + $0x2a0] sm:$0xff]
  %v130 = vld [vmem:[%s1 + $0x2a8] sm:$0xff]
  %v131 = vld [vmem:[%s1 + $0x2b0] sm:$0xff]
  %v132 = vld [vmem:[%s1 + $0x2b8] sm:$0xff]
  %v133 = vld [vmem:[%s1 + $0x2c0] sm:$0xff]
  %v134 = vld [vmem:[%s1 + $0x2c8] sm:$0xff]
  %v135 = vld [vmem:[%s1 + $0x2d0] sm:$0xff]
  %v136 = vld [vmem:[%s1 + $0x2d8] sm:$0xff]
  %v137 = vld [vmem:[%s1 + $0x2e0] sm:$0xff]
  %v138 = vld [vmem:[%s1 + $0x2e8] sm:$0xff]
  %v139 = vld [vmem:[%s1 + $0x2f0] sm:$0xff]
  %v140 = vld [vmem:[%s1 + $0x2f8] sm:$0xff]
  %v141 = vld [vmem:[%s1 + $0x300] sm:$0xff]
  %v142 = vld [vmem:[%s1 + $0x308] sm:$0xff]
  %v143 = vld [vmem:[%s1 + $0x310] sm:$0xff]
  %v144 = vld [vmem:[%s1 + $0x318] sm:$0xff]
  %v145 = vld [vmem:[%s1 + $0x320] sm:$0xff]
  %v146 = vld [vmem:[%s1 + $0x328] sm:$0xff]
  %v147 = vld [vmem:[%s1 + $0x330] sm:$0xff]
  %v148 = vld [vmem:[%s1 + $0x338] sm:$0xff]
  %v149 = vld [vmem:[%s1 + $0x340] sm:$0xff]
  %v150 = vld [vmem:[%s1 + $0x348] sm:$0xff]
  %v151 = vld [vmem:[%s1 + $0x350] sm:$0xff]
  %v152 = vld [vmem:[%s1 + $0x358] sm:$0xff]
  %v153 = vld [vmem:[%s1 + $0x360] sm:$0xff]
  %v154 = vld [vmem:[%s1 + $0x368] sm:$0xff]
  %v155 = vld [vmem:[%s1 + $0x370] sm:$0xff]
  %v156 = vld [vmem:[%s1 + $0x378] sm:$0xff]
  %v157 = vld [vmem:[%s1 + $0x380] sm:$0xff]
  %v158 = vld [vmem:[%s1 + $0x388] sm:$0xff]
  %v159 = vld [vmem:[%s1 + $0x390] sm:$0xff]
  %v160 = vld [vmem:[%s1 + $0x398] sm:$0xff]
  %v161 = vld [vmem:[%s1 + $0x3a0] sm:$0xff]
  %v162 = vld [vmem:[%s1 + $0x3a8] sm:$0xff]
  %v163 = vld [vmem:[%s1 + $0x3b0] sm:$0xff]
  %v164 = vld [vmem:[%s1 + $0x3b8] sm:$0xff]
  %v165 = vld [vmem:[%s1 + $0x3c0] sm:$0xff]
  %v166 = vld [vmem:[%s1 + $0x3c8] sm:$0xff]
  %v167 = vld [vmem:[%s1 + $0x3d0] sm:$0xff]
  %v168 = vld [vmem:[%s1 + $0x3d8] sm:$0xff]
  %v169 = vld [vmem:[%s1 + $0x3e0] sm:$0xff]
  %v170 = vld [vmem:[%s1 + $0x3e8] sm:$0xff]
  %v171 = vld [vmem:[%s1 + $0x3f0] sm:$0xff]
  %v172 = vld [vmem:[%s1 + $0x3f8] sm:$0xff]
  %v173 = vld [vmem:[%s1 + $0x400] sm:$0xff]
  %v174 = vld [vmem:[%s1 + $0x408] sm:$0xff]
  %v175 = vld [vmem:[%s1 + $0x410] sm:$0xff]
  %v176 = vld [vmem:[%s1 + $0x418] sm:$0xff]
  %v177 = vld [vmem:[%s1 + $0x420] sm:$0xff]
  %v178 = vld [vmem:[%s1 + $0x428] sm:$0xff]
  %v179 = vld [vmem:[%s1 + $0x430] sm:$0xff]
  %v180 = vld [vmem:[%s1 + $0x438] sm:$0xff]
  %v181 = vld [vmem:[%s1 + $0x440] sm:$0xff]
  %v182 = vld [vmem:[%s1 + $0x448] sm:$0xff]
  %v183 = vld [vmem:[%s1 + $0x450] sm:$0xff]
  %v184 = vld [vmem:[%s1 + $0x458] sm:$0xff]
  %v185 = vld [vmem:[%s1 + $0x460] sm:$0xff]
  %v186 = vld [vmem:[%s1 + $0x468] sm:$0xff]
  %v187 = vld [vmem:[%s1 + $0x470] sm:$0xff]
  %v188 = vld [vmem:[%s1 + $0x478] sm:$0xff]
  %v189 = vld [vmem:[%s1 + $0x480] sm:$0xff]
  %v190 = vld [vmem:[%s1 + $0x488] sm:$0xff]
  %v191 = vld [vmem:[%s1 + $0x490] sm:$0xff]
  %v192 = vld [vmem:[%s1 + $0x498] sm:$0xff]
  %v193 = vld [vmem:[%s1 + $0x4a0] sm:$0xff]
  %v194 = vld [vmem:[%s1 + $0x4a8] sm:$0xff]
  %v195 = vld [vmem:[%s1 + $0x4b0] sm:$0xff]
  %v196 = vld [vmem:[%s1 + $0x4b8] sm:$0xff]
  %v197 = vld [vmem:[%s1 + $0x4c0] sm:$0xff]
  %v198 = vld [vmem:[%s1 + $0x4c8] sm:$0xff]
  %v199 = vld [vmem:[%s1 + $0x4d0] sm:$0xff]
  %v200 = vld [vmem:[%s1 + $0x4d8] sm:$0xff]
  %v201 = vld [vmem:[%s1 + $0x4e0] sm:$0xff]
  %v202 = vld [vmem:[%s1 + $0x4e8] sm:$0xff]
  %v203 = vld [vmem:[%s1 + $0x4f0] sm:$0xff]
  %v204 = vld [vmem:[%s1 + $0x4f8] sm:$0xff]
  %v205 = vld [vmem:[%s1 + $0x500] sm:$0xff]
  %v206 = vld [vmem:[%s1 + $0x508] sm:$0xff]
  %v207 = vld [vmem:[%s1 + $0x510] sm:$0xff]
  %v208 = vld [vmem:[%s1 + $0x518] sm:$0xff]
  %v209 = vld [vmem:[%s1 + $0x520] sm:$0xff]
  %v210 = vld [vmem:[%s1 + $0x528] sm:$0xff]
  %v211 = vld [vmem:[%s1 + $0x530] sm:$0xff]
  %v212 = vld [vmem:[%s1 + $0x538] sm:$0xff]
  %v213 = vld [vmem:[%s1 + $0x540] sm:$0xff]
  %v214 = vld [vmem:[%s1 + $0x548] sm:$0xff]
  %v215 = vld [vmem:[%s1 + $0x550] sm:$0xff]
  %v216 = vld [vmem:[%s1 + $0x558] sm:$0xff]
  %v217 = vld [vmem:[%s1 + $0x560] sm:$0xff]
  %v218 = vld [vmem:[%s1 + $0x568] sm:$0xff]
  %v219 = vld [vmem:[%s1 + $0x570] sm:$0xff]
  %v220 = vld [vmem:[%s1 + $0x578] sm:$0xff]
  %v221 = vld [vmem:[%s1 + $0x580] sm:$0xff]
  %v222 = vld [vmem:[%s1 + $0x588] sm:$0xff]
  %v223 = vld [vmem:[%s1 + $0x590] sm:$0xff]
  %v224 = vld [vmem:[%s1 + $0x598] sm:$0xff]
  %v225 = vld [vmem:[%s1 + $0x5a0] sm:$0xff]
  %v226 = vld [vmem:[%s1 + $0x5a8] sm:$0xff]
  %v227 = vld [vmem:[%s1 + $0x5b0] sm:$0xff]
  %v228 = vld [vmem:[%s1 + $0x5b8] sm:$0xff]
  %v229 = vld [vmem:[%s1 + $0x5c0] sm:$0xff]
  %v230 = vld [vmem:[%s1 + $0x5c8] sm:$0xff]
  %v231 = vld [vmem:[%s1 + $0x5d0] sm:$0xff]
  %v232 = vld [vmem:[%s1 + $0x5d8] sm:$0xff]
  %v233 = vld [vmem:[%s1 + $0x5e0] sm:$0xff]
  %v234 = vld [vmem:[%s1 + $0x5e8] sm:$0xff]
  %v235 = vld [vmem:[%s1 + $0x5f0] sm:$0xff]
  %v236 = vld [vmem:[%s1 + $0x5f8] sm:$0xff]
  %v237 = vld [vmem:[%s1 + $0x600] sm:$0xff]
  %v238 = vld [vmem:[%s1 + $0x608] sm:$0xff]
  %v239 = vld [vmem:[%s1 + $0x610] sm:$0xff]
  %v240 = vld [vmem:[%s1 + $0x618] sm:$0xff]
  %v241 = vld [vmem:[%s1 + $0x620] sm:$0xff]
  %v242 = vld [vmem:[%s1 + $0x628] sm:$0xff]
  %v243 = vld [vmem:[%s1 + $0x630] sm:$0xff]
  %v244 = vld [vmem:[%s1 + $0x638] sm:$0xff]
  %v245 = vld [vmem:[%s1 + $0x640] sm:$0xff]
  %v246 = vld [vmem:[%s1 + $0x648] sm:$0xff]
  %v247 = vld [vmem:[%s1 + $0x650] sm:$0xff]
  %v248 = vld [vmem:[%s1 + $0x658] sm:$0xff]
  %v249 = vld [vmem:[%s1 + $0x660] sm:$0xff]
  %v250 = vld [vmem:[%s1 + $0x668] sm:$0xff]
  %v251 = vld [vmem:[%s1 + $0x670] sm:$0xff]
  %v252 = vld [vmem:[%s1 + $0x678] sm:$0xff]
  %v253 = vld [vmem:[%s1 + $0x680] sm:$0xff]
  %v254 = vld [vmem:[%s1 + $0x688] sm:$0xff]
  %v255 = vld [vmem:[%s1 + $0x690] sm:$0xff]
  %v256 = vld [vmem:[%s1 + $0x698] sm:$0xff]
  %v257 = vld [vmem:[%s1 + $0x6a0] sm:$0xff]
  %v258 = vld [vmem:[%s1 + $0x6a8] sm:$0xff]
  %v259 = vld [vmem:[%s1 + $0x6b0] sm:$0xff]
  %v260 = vld [vmem:[%s1 + $0x6b8] sm:$0xff]
  %v261 = vld [vmem:[%s1 + $0x6c0] sm:$0xff]
  %v262 = vld [vmem:[%s1 + $0x6c8] sm:$0xff]
  %v263 = vld [vmem:[%s1 + $0x6d0] sm:$0xff]
  %v264 = vld [vmem:[%s1 + $0x6d8] sm:$0xff]
  %v265 = vld [vmem:[%s1 + $0x6e0] sm:$0xff]
  %v266 = vld [vmem:[%s1 + $0x6e8] sm:$0xff]
  %v267 = vld [vmem:[%s1 + $0x6f0] sm:$0xff]
  %v268 = vld [vmem:[%s1 + $0x6f8] sm:$0xff]
  %v269 = vld [vmem:[%s1 + $0x700] sm:$0xff]
  %v270 = vld [vmem:[%s1 + $0x708] sm:$0xff]
  %v271 = vld [vmem:[%s1 + $0x710] sm:$0xff]
  %v272 = vld [vmem:[%s1 + $0x718] sm:$0xff]
  %v273 = vld [vmem:[%s1 + $0x720] sm:$0xff]
  %v274 = vld [vmem:[%s1 + $0x728] sm:$0xff]
  %v275 = vld [vmem:[%s1 + $0x730] sm:$0xff]
  %v276 = vld [vmem:[%s1 + $0x738] sm:$0xff]
  %v277 = vld [vmem:[%s1 + $0x740] sm:$0xff]
  %v278 = vld [vmem:[%s1 + $0x748] sm:$0xff]
  %v279 = vld [vmem:[%s1 + $0x750] sm:$0xff]
  %v280 = vld [vmem:[%s1 + $0x758] sm:$0xff]
  %v281 = vld [vmem:[%s1 + $0x760] sm:$0xff]
  %v282 = vld [vmem:[%s1 + $0x768] sm:$0xff]
  %v283 = vld [vmem:[%s1 + $0x770] sm:$0xff]
  %v284 = vld [vmem:[%s1 + $0x778] sm:$0xff]
  %v285 = vld [vmem:[%s1 + $0x780] sm:$0xff]
  %v286 = vld [vmem:[%s1 + $0x788] sm:$0xff]
  %v287 = vld [vmem:[%s1 + $0x790] sm:$0xff]
  %v288 = vld [vmem:[%s1 + $0x798] sm:$0xff]
  %v289 = vld [vmem:[%s1 + $0x7a0] sm:$0xff]
  %v290 = vld [vmem:[%s1 + $0x7a8] sm:$0xff]
  %v291 = vld [vmem:[%s1 + $0x7b0] sm:$0xff]
  %v292 = vld [vmem:[%s1 + $0x7b8] sm:$0xff]
  %v293 = vld [vmem:[%s1 + $0x7c0] sm:$0xff]
  %v294 = vld [vmem:[%s1 + $0x7c8] sm:$0xff]
  %v295 = vld [vmem:[%s1 + $0x7d0] sm:$0xff]
  %v296 = vld [vmem:[%s1 + $0x7d8] sm:$0xff]
  %v297 = vld [vmem:[%s1 + $0x7e0] sm:$0xff]
  %v298 = vld [vmem:[%s1 + $0x7e8] sm:$0xff]
  %v299 = vld [vmem:[%s1 + $0x7f0] sm:$0xff]
  %v300 = vld [vmem:[%s1 + $0x7f8] sm:$0xff]
  %v301 = vld [vmem:[%s2] sm:$0xff]
  %v302 = vld [vmem:[%s2 + $0x8] sm:$0xff]
  %v305 = vlaneseq
  %v306 = vshrl.u32 %v305, 7
  %v307 = vsub.s32 0, %v306
  %v308 = vrot.slane %v301, %v307
  %v309 = vlaneseq
  %v310 = vshrl.u32 %v309, 7
  %v311 = vsub.s32 1, %v310
  %v312 = vrot.slane %v301, %v311
  %v313 = vlaneseq
  %v314 = vshrl.u32 %v313, 7
  %v315 = vsub.s32 2, %v314
  %v316 = vrot.slane %v301, %v315
  %v317 = vlaneseq
  %v318 = vshrl.u32 %v317, 7
  %v319 = vsub.s32 3, %v318
  %v320 = vrot.slane %v301, %v319
  %v321 = vlaneseq
  %v322 = vshrl.u32 %v321, 7
  %v323 = vsub.s32 4, %v322
  %v324 = vrot.slane %v301, %v323
  %v325 = vlaneseq
  %v326 = vshrl.u32 %v325, 7
  %v327 = vsub.s32 5, %v326
  %v328 = vrot.slane %v301, %v327
  %v329 = vlaneseq
  %v330 = vshrl.u32 %v329, 7
  %v331 = vsub.s32 6, %v330
  %v332 = vrot.slane %v301, %v331
  %v333 = vlaneseq
  %v334 = vshrl.u32 %v333, 7
  %v335 = vsub.s32 7, %v334
  %v336 = vrot.slane %v301, %v335
  %v337 = vlaneseq
  %v338 = vshrl.u32 %v337, 7
  %v339 = vsub.s32 0, %v338
  %v340 = vrot.slane %v302, %v339
  %v341 = vlaneseq
  %v342 = vshrl.u32 %v341, 7
  %v343 = vsub.s32 1, %v342
  %v344 = vrot.slane %v302, %v343
  %v345 = vlaneseq
  %v346 = vshrl.u32 %v345, 7
  %v347 = vsub.s32 2, %v346
  %v348 = vrot.slane %v302, %v347
  %v349 = vlaneseq
  %v350 = vshrl.u32 %v349, 7
  %v351 = vsub.s32 3, %v350
  %v352 = vrot.slane %v302, %v351
  %v353 = vlaneseq
  %v354 = vshrl.u32 %v353, 7
  %v355 = vsub.s32 4, %v354
  %v356 = vrot.slane %v302, %v355
  %v357 = vlaneseq
  %v358 = vshrl.u32 %v357, 7
  %v359 = vsub.s32 5, %v358
  %v360 = vrot.slane %v302, %v359
  %v361 = vlaneseq
  %v362 = vshrl.u32 %v361, 7
  %v363 = vsub.s32 6, %v362
  %v364 = vrot.slane %v302, %v363
  %v365 = vlaneseq
  %v366 = vshrl.u32 %v365, 7
  %v367 = vsub.s32 7, %v366
  %v368 = vrot.slane %v302, %v367
  %v397 = vunpack.c.l.b16 %v33
  %v398 = vunpack.c.h.b16 %v33
  %v399 = vunpack.c.l.b16 %v34
  %v400 = vunpack.c.h.b16 %v34
  %v401 = vunpack.c.l.b16 %v35
  %v402 = vunpack.c.h.b16 %v35
  %v403 = vunpack.c.l.b16 %v36
  %v404 = vunpack.c.h.b16 %v36
  %v405 = vunpack.c.l.b16 %v37
  %v406 = vunpack.c.h.b16 %v37
  %v407 = vunpack.c.l.b16 %v38
  %v408 = vunpack.c.h.b16 %v38
  %v409 = vunpack.c.l.b16 %v39
  %v410 = vunpack.c.h.b16 %v39
  %v411 = vunpack.c.l.b16 %v40
  %v412 = vunpack.c.h.b16 %v40
  %v413 = vunpack.c.l.b16 %v41
  %v414 = vunpack.c.h.b16 %v41
  %v415 = vunpack.c.l.b16 %v42
  %v416 = vunpack.c.h.b16 %v42
  %v417 = vunpack.c.l.b16 %v43
  %v418 = vunpack.c.h.b16 %v43
  %v419 = vunpack.c.l.b16 %v44
  %v420 = vunpack.c.h.b16 %v44
  %v421 = vpack.c.b16 %v399, %v397
  %v422 = vpack.c.b16 %v400, %v398
  %v423 = vpack.c.b16 %v403, %v401
  %v424 = vpack.c.b16 %v404, %v402
  %v425 = vpack.c.b16 %v407, %v405
  %v426 = vpack.c.b16 %v408, %v406
  %v427 = vpack.c.b16 %v411, %v409
  %v428 = vpack.c.b16 %v412, %v410
  %v429 = vpack.c.b16 %v415, %v413
  %v430 = vpack.c.b16 %v416, %v414
  %v431 = vpack.c.b16 %v419, %v417
  %v432 = vpack.c.b16 %v420, %v418
  %v701 = vunpack.c.l.b16 %v45
  %v702 = vunpack.c.h.b16 %v45
  %v703 = vunpack.c.l.b16 %v46
  %v704 = vunpack.c.h.b16 %v46
  %v705 = vunpack.c.l.b16 %v47
  %v706 = vunpack.c.h.b16 %v47
  %v707 = vunpack.c.l.b16 %v48
  %v708 = vunpack.c.h.b16 %v48
  %v709 = vunpack.c.l.b16 %v49
  %v710 = vunpack.c.h.b16 %v49
  %v711 = vunpack.c.l.b16 %v50
  %v712 = vunpack.c.h.b16 %v50
  %v713 = vunpack.c.l.b16 %v51
  %v714 = vunpack.c.h.b16 %v51
  %v715 = vunpack.c.l.b16 %v52
  %v716 = vunpack.c.h.b16 %v52
  %v717 = vunpack.c.l.b16 %v53
  %v718 = vunpack.c.h.b16 %v53
  %v719 = vunpack.c.l.b16 %v54
  %v720 = vunpack.c.h.b16 %v54
  %v721 = vunpack.c.l.b16 %v55
  %v722 = vunpack.c.h.b16 %v55
  %v723 = vunpack.c.l.b16 %v56
  %v724 = vunpack.c.h.b16 %v56
  %v725 = vunpack.c.l.b16 %v57
  %v726 = vunpack.c.h.b16 %v57
  %v727 = vunpack.c.l.b16 %v58
  %v728 = vunpack.c.h.b16 %v58
  %v729 = vunpack.c.l.b16 %v59
  %v730 = vunpack.c.h.b16 %v59
  %v731 = vunpack.c.l.b16 %v60
  %v732 = vunpack.c.h.b16 %v60
  %v733 = vunpack.c.l.b16 %v61
  %v734 = vunpack.c.h.b16 %v61
  %v735 = vunpack.c.l.b16 %v62
  %v736 = vunpack.c.h.b16 %v62
  %v737 = vunpack.c.l.b16 %v63
  %v738 = vunpack.c.h.b16 %v63
  %v739 = vunpack.c.l.b16 %v64
  %v740 = vunpack.c.h.b16 %v64
  %v741 = vunpack.c.l.b16 %v65
  %v742 = vunpack.c.h.b16 %v65
  %v743 = vunpack.c.l.b16 %v66
  %v744 = vunpack.c.h.b16 %v66
  %v745 = vunpack.c.l.b16 %v67
  %v746 = vunpack.c.h.b16 %v67
  %v747 = vunpack.c.l.b16 %v68
  %v748 = vunpack.c.h.b16 %v68
  %v749 = vunpack.c.l.b16 %v69
  %v750 = vunpack.c.h.b16 %v69
  %v751 = vunpack.c.l.b16 %v70
  %v752 = vunpack.c.h.b16 %v70
  %v753 = vunpack.c.l.b16 %v71
  %v754 = vunpack.c.h.b16 %v71
  %v755 = vunpack.c.l.b16 %v72
  %v756 = vunpack.c.h.b16 %v72
  %v757 = vunpack.c.l.b16 %v73
  %v758 = vunpack.c.h.b16 %v73
  %v759 = vunpack.c.l.b16 %v74
  %v760 = vunpack.c.h.b16 %v74
  %v761 = vunpack.c.l.b16 %v75
  %v762 = vunpack.c.h.b16 %v75
  %v763 = vunpack.c.l.b16 %v76
  %v764 = vunpack.c.h.b16 %v76
  %v765 = vunpack.c.l.b16 %v77
  %v766 = vunpack.c.h.b16 %v77
  %v767 = vunpack.c.l.b16 %v78
  %v768 = vunpack.c.h.b16 %v78
  %v769 = vunpack.c.l.b16 %v79
  %v770 = vunpack.c.h.b16 %v79
  %v771 = vunpack.c.l.b16 %v80
  %v772 = vunpack.c.h.b16 %v80
  %v773 = vunpack.c.l.b16 %v81
  %v774 = vunpack.c.h.b16 %v81
  %v775 = vunpack.c.l.b16 %v82
  %v776 = vunpack.c.h.b16 %v82
  %v777 = vunpack.c.l.b16 %v83
  %v778 = vunpack.c.h.b16 %v83
  %v779 = vunpack.c.l.b16 %v84
  %v780 = vunpack.c.h.b16 %v84
  %v781 = vunpack.c.l.b16 %v85
  %v782 = vunpack.c.h.b16 %v85
  %v783 = vunpack.c.l.b16 %v86
  %v784 = vunpack.c.h.b16 %v86
  %v785 = vunpack.c.l.b16 %v87
  %v786 = vunpack.c.h.b16 %v87
  %v787 = vunpack.c.l.b16 %v88
  %v788 = vunpack.c.h.b16 %v88
  %v789 = vunpack.c.l.b16 %v89
  %v790 = vunpack.c.h.b16 %v89
  %v791 = vunpack.c.l.b16 %v90
  %v792 = vunpack.c.h.b16 %v90
  %v793 = vunpack.c.l.b16 %v91
  %v794 = vunpack.c.h.b16 %v91
  %v795 = vunpack.c.l.b16 %v92
  %v796 = vunpack.c.h.b16 %v92
  %v797 = vunpack.c.l.b16 %v93
  %v798 = vunpack.c.h.b16 %v93
  %v799 = vunpack.c.l.b16 %v94
  %v800 = vunpack.c.h.b16 %v94
  %v801 = vunpack.c.l.b16 %v95
  %v802 = vunpack.c.h.b16 %v95
  %v803 = vunpack.c.l.b16 %v96
  %v804 = vunpack.c.h.b16 %v96
  %v805 = vunpack.c.l.b16 %v97
  %v806 = vunpack.c.h.b16 %v97
  %v807 = vunpack.c.l.b16 %v98
  %v808 = vunpack.c.h.b16 %v98
  %v809 = vunpack.c.l.b16 %v99
  %v810 = vunpack.c.h.b16 %v99
  %v811 = vunpack.c.l.b16 %v100
  %v812 = vunpack.c.h.b16 %v100
  %v813 = vunpack.c.l.b16 %v101
  %v814 = vunpack.c.h.b16 %v101
  %v815 = vunpack.c.l.b16 %v102
  %v816 = vunpack.c.h.b16 %v102
  %v817 = vunpack.c.l.b16 %v103
  %v818 = vunpack.c.h.b16 %v103
  %v819 = vunpack.c.l.b16 %v104
  %v820 = vunpack.c.h.b16 %v104
  %v821 = vunpack.c.l.b16 %v105
  %v822 = vunpack.c.h.b16 %v105
  %v823 = vunpack.c.l.b16 %v106
  %v824 = vunpack.c.h.b16 %v106
  %v825 = vunpack.c.l.b16 %v107
  %v826 = vunpack.c.h.b16 %v107
  %v827 = vunpack.c.l.b16 %v108
  %v828 = vunpack.c.h.b16 %v108
  %v829 = vunpack.c.l.b16 %v109
  %v830 = vunpack.c.h.b16 %v109
  %v831 = vunpack.c.l.b16 %v110
  %v832 = vunpack.c.h.b16 %v110
  %v833 = vunpack.c.l.b16 %v111
  %v834 = vunpack.c.h.b16 %v111
  %v835 = vunpack.c.l.b16 %v112
  %v836 = vunpack.c.h.b16 %v112
  %v837 = vunpack.c.l.b16 %v113
  %v838 = vunpack.c.h.b16 %v113
  %v839 = vunpack.c.l.b16 %v114
  %v840 = vunpack.c.h.b16 %v114
  %v841 = vunpack.c.l.b16 %v115
  %v842 = vunpack.c.h.b16 %v115
  %v843 = vunpack.c.l.b16 %v116
  %v844 = vunpack.c.h.b16 %v116
  %v845 = vunpack.c.l.b16 %v117
  %v846 = vunpack.c.h.b16 %v117
  %v847 = vunpack.c.l.b16 %v118
  %v848 = vunpack.c.h.b16 %v118
  %v849 = vunpack.c.l.b16 %v119
  %v850 = vunpack.c.h.b16 %v119
  %v851 = vunpack.c.l.b16 %v120
  %v852 = vunpack.c.h.b16 %v120
  %v853 = vunpack.c.l.b16 %v121
  %v854 = vunpack.c.h.b16 %v121
  %v855 = vunpack.c.l.b16 %v122
  %v856 = vunpack.c.h.b16 %v122
  %v857 = vunpack.c.l.b16 %v123
  %v858 = vunpack.c.h.b16 %v123
  %v859 = vunpack.c.l.b16 %v124
  %v860 = vunpack.c.h.b16 %v124
  %v861 = vunpack.c.l.b16 %v125
  %v862 = vunpack.c.h.b16 %v125
  %v863 = vunpack.c.l.b16 %v126
  %v864 = vunpack.c.h.b16 %v126
  %v865 = vunpack.c.l.b16 %v127
  %v866 = vunpack.c.h.b16 %v127
  %v867 = vunpack.c.l.b16 %v128
  %v868 = vunpack.c.h.b16 %v128
  %v869 = vunpack.c.l.b16 %v129
  %v870 = vunpack.c.h.b16 %v129
  %v871 = vunpack.c.l.b16 %v130
  %v872 = vunpack.c.h.b16 %v130
  %v873 = vunpack.c.l.b16 %v131
  %v874 = vunpack.c.h.b16 %v131
  %v875 = vunpack.c.l.b16 %v132
  %v876 = vunpack.c.h.b16 %v132
  %v877 = vunpack.c.l.b16 %v133
  %v878 = vunpack.c.h.b16 %v133
  %v879 = vunpack.c.l.b16 %v134
  %v880 = vunpack.c.h.b16 %v134
  %v881 = vunpack.c.l.b16 %v135
  %v882 = vunpack.c.h.b16 %v135
  %v883 = vunpack.c.l.b16 %v136
  %v884 = vunpack.c.h.b16 %v136
  %v885 = vunpack.c.l.b16 %v137
  %v886 = vunpack.c.h.b16 %v137
  %v887 = vunpack.c.l.b16 %v138
  %v888 = vunpack.c.h.b16 %v138
  %v889 = vunpack.c.l.b16 %v139
  %v890 = vunpack.c.h.b16 %v139
  %v891 = vunpack.c.l.b16 %v140
  %v892 = vunpack.c.h.b16 %v140
  %v893 = vunpack.c.l.b16 %v141
  %v894 = vunpack.c.h.b16 %v141
  %v895 = vunpack.c.l.b16 %v142
  %v896 = vunpack.c.h.b16 %v142
  %v897 = vunpack.c.l.b16 %v143
  %v898 = vunpack.c.h.b16 %v143
  %v899 = vunpack.c.l.b16 %v144
  %v900 = vunpack.c.h.b16 %v144
  %v901 = vunpack.c.l.b16 %v145
  %v902 = vunpack.c.h.b16 %v145
  %v903 = vunpack.c.l.b16 %v146
  %v904 = vunpack.c.h.b16 %v146
  %v905 = vunpack.c.l.b16 %v147
  %v906 = vunpack.c.h.b16 %v147
  %v907 = vunpack.c.l.b16 %v148
  %v908 = vunpack.c.h.b16 %v148
  %v909 = vunpack.c.l.b16 %v149
  %v910 = vunpack.c.h.b16 %v149
  %v911 = vunpack.c.l.b16 %v150
  %v912 = vunpack.c.h.b16 %v150
  %v913 = vunpack.c.l.b16 %v151
  %v914 = vunpack.c.h.b16 %v151
  %v915 = vunpack.c.l.b16 %v152
  %v916 = vunpack.c.h.b16 %v152
  %v917 = vunpack.c.l.b16 %v153
  %v918 = vunpack.c.h.b16 %v153
  %v919 = vunpack.c.l.b16 %v154
  %v920 = vunpack.c.h.b16 %v154
  %v921 = vunpack.c.l.b16 %v155
  %v922 = vunpack.c.h.b16 %v155
  %v923 = vunpack.c.l.b16 %v156
  %v924 = vunpack.c.h.b16 %v156
  %v925 = vunpack.c.l.b16 %v157
  %v926 = vunpack.c.h.b16 %v157
  %v927 = vunpack.c.l.b16 %v158
  %v928 = vunpack.c.h.b16 %v158
  %v929 = vunpack.c.l.b16 %v159
  %v930 = vunpack.c.h.b16 %v159
  %v931 = vunpack.c.l.b16 %v160
  %v932 = vunpack.c.h.b16 %v160
  %v933 = vunpack.c.l.b16 %v161
  %v934 = vunpack.c.h.b16 %v161
  %v935 = vunpack.c.l.b16 %v162
  %v936 = vunpack.c.h.b16 %v162
  %v937 = vunpack.c.l.b16 %v163
  %v938 = vunpack.c.h.b16 %v163
  %v939 = vunpack.c.l.b16 %v164
  %v940 = vunpack.c.h.b16 %v164
  %v941 = vunpack.c.l.b16 %v165
  %v942 = vunpack.c.h.b16 %v165
  %v943 = vunpack.c.l.b16 %v166
  %v944 = vunpack.c.h.b16 %v166
  %v945 = vunpack.c.l.b16 %v167
  %v946 = vunpack.c.h.b16 %v167
  %v947 = vunpack.c.l.b16 %v168
  %v948 = vunpack.c.h.b16 %v168
  %v949 = vunpack.c.l.b16 %v169
  %v950 = vunpack.c.h.b16 %v169
  %v951 = vunpack.c.l.b16 %v170
  %v952 = vunpack.c.h.b16 %v170
  %v953 = vunpack.c.l.b16 %v171
  %v954 = vunpack.c.h.b16 %v171
  %v955 = vunpack.c.l.b16 %v172
  %v956 = vunpack.c.h.b16 %v172
  %v957 = vunpack.c.l.b16 %v173
  %v958 = vunpack.c.h.b16 %v173
  %v959 = vunpack.c.l.b16 %v174
  %v960 = vunpack.c.h.b16 %v174
  %v961 = vunpack.c.l.b16 %v175
  %v962 = vunpack.c.h.b16 %v175
  %v963 = vunpack.c.l.b16 %v176
  %v964 = vunpack.c.h.b16 %v176
  %v965 = vunpack.c.l.b16 %v177
  %v966 = vunpack.c.h.b16 %v177
  %v967 = vunpack.c.l.b16 %v178
  %v968 = vunpack.c.h.b16 %v178
  %v969 = vunpack.c.l.b16 %v179
  %v970 = vunpack.c.h.b16 %v179
  %v971 = vunpack.c.l.b16 %v180
  %v972 = vunpack.c.h.b16 %v180
  %v973 = vunpack.c.l.b16 %v181
  %v974 = vunpack.c.h.b16 %v181
  %v975 = vunpack.c.l.b16 %v182
  %v976 = vunpack.c.h.b16 %v182
  %v977 = vunpack.c.l.b16 %v183
  %v978 = vunpack.c.h.b16 %v183
  %v979 = vunpack.c.l.b16 %v184
  %v980 = vunpack.c.h.b16 %v184
  %v981 = vunpack.c.l.b16 %v185
  %v982 = vunpack.c.h.b16 %v185
  %v983 = vunpack.c.l.b16 %v186
  %v984 = vunpack.c.h.b16 %v186
  %v985 = vunpack.c.l.b16 %v187
  %v986 = vunpack.c.h.b16 %v187
  %v987 = vunpack.c.l.b16 %v188
  %v988 = vunpack.c.h.b16 %v188
  %v989 = vunpack.c.l.b16 %v189
  %v990 = vunpack.c.h.b16 %v189
  %v991 = vunpack.c.l.b16 %v190
  %v992 = vunpack.c.h.b16 %v190
  %v993 = vunpack.c.l.b16 %v191
  %v994 = vunpack.c.h.b16 %v191
  %v995 = vunpack.c.l.b16 %v192
  %v996 = vunpack.c.h.b16 %v192
  %v997 = vunpack.c.l.b16 %v193
  %v998 = vunpack.c.h.b16 %v193
  %v999 = vunpack.c.l.b16 %v194
  %v1000 = vunpack.c.h.b16 %v194
  %v1001 = vunpack.c.l.b16 %v195
  %v1002 = vunpack.c.h.b16 %v195
  %v1003 = vunpack.c.l.b16 %v196
  %v1004 = vunpack.c.h.b16 %v196
  %v1005 = vunpack.c.l.b16 %v197
  %v1006 = vunpack.c.h.b16 %v197
  %v1007 = vunpack.c.l.b16 %v198
  %v1008 = vunpack.c.h.b16 %v198
  %v1009 = vunpack.c.l.b16 %v199
  %v1010 = vunpack.c.h.b16 %v199
  %v1011 = vunpack.c.l.b16 %v200
  %v1012 = vunpack.c.h.b16 %v200
  %v1013 = vunpack.c.l.b16 %v201
  %v1014 = vunpack.c.h.b16 %v201
  %v1015 = vunpack.c.l.b16 %v202
  %v1016 = vunpack.c.h.b16 %v202
  %v1017 = vunpack.c.l.b16 %v203
  %v1018 = vunpack.c.h.b16 %v203
  %v1019 = vunpack.c.l.b16 %v204
  %v1020 = vunpack.c.h.b16 %v204
  %v1021 = vunpack.c.l.b16 %v205
  %v1022 = vunpack.c.h.b16 %v205
  %v1023 = vunpack.c.l.b16 %v206
  %v1024 = vunpack.c.h.b16 %v206
  %v1025 = vunpack.c.l.b16 %v207
  %v1026 = vunpack.c.h.b16 %v207
  %v1027 = vunpack.c.l.b16 %v208
  %v1028 = vunpack.c.h.b16 %v208
  %v1029 = vunpack.c.l.b16 %v209
  %v1030 = vunpack.c.h.b16 %v209
  %v1031 = vunpack.c.l.b16 %v210
  %v1032 = vunpack.c.h.b16 %v210
  %v1033 = vunpack.c.l.b16 %v211
  %v1034 = vunpack.c.h.b16 %v211
  %v1035 = vunpack.c.l.b16 %v212
  %v1036 = vunpack.c.h.b16 %v212
  %v1037 = vunpack.c.l.b16 %v213
  %v1038 = vunpack.c.h.b16 %v213
  %v1039 = vunpack.c.l.b16 %v214
  %v1040 = vunpack.c.h.b16 %v214
  %v1041 = vunpack.c.l.b16 %v215
  %v1042 = vunpack.c.h.b16 %v215
  %v1043 = vunpack.c.l.b16 %v216
  %v1044 = vunpack.c.h.b16 %v216
  %v1045 = vunpack.c.l.b16 %v217
  %v1046 = vunpack.c.h.b16 %v217
  %v1047 = vunpack.c.l.b16 %v218
  %v1048 = vunpack.c.h.b16 %v218
  %v1049 = vunpack.c.l.b16 %v219
  %v1050 = vunpack.c.h.b16 %v219
  %v1051 = vunpack.c.l.b16 %v220
  %v1052 = vunpack.c.h.b16 %v220
  %v1053 = vunpack.c.l.b16 %v221
  %v1054 = vunpack.c.h.b16 %v221
  %v1055 = vunpack.c.l.b16 %v222
  %v1056 = vunpack.c.h.b16 %v222
  %v1057 = vunpack.c.l.b16 %v223
  %v1058 = vunpack.c.h.b16 %v223
  %v1059 = vunpack.c.l.b16 %v224
  %v1060 = vunpack.c.h.b16 %v224
  %v1061 = vunpack.c.l.b16 %v225
  %v1062 = vunpack.c.h.b16 %v225
  %v1063 = vunpack.c.l.b16 %v226
  %v1064 = vunpack.c.h.b16 %v226
  %v1065 = vunpack.c.l.b16 %v227
  %v1066 = vunpack.c.h.b16 %v227
  %v1067 = vunpack.c.l.b16 %v228
  %v1068 = vunpack.c.h.b16 %v228
  %v1069 = vunpack.c.l.b16 %v229
  %v1070 = vunpack.c.h.b16 %v229
  %v1071 = vunpack.c.l.b16 %v230
  %v1072 = vunpack.c.h.b16 %v230
  %v1073 = vunpack.c.l.b16 %v231
  %v1074 = vunpack.c.h.b16 %v231
  %v1075 = vunpack.c.l.b16 %v232
  %v1076 = vunpack.c.h.b16 %v232
  %v1077 = vunpack.c.l.b16 %v233
  %v1078 = vunpack.c.h.b16 %v233
  %v1079 = vunpack.c.l.b16 %v234
  %v1080 = vunpack.c.h.b16 %v234
  %v1081 = vunpack.c.l.b16 %v235
  %v1082 = vunpack.c.h.b16 %v235
  %v1083 = vunpack.c.l.b16 %v236
  %v1084 = vunpack.c.h.b16 %v236
  %v1085 = vunpack.c.l.b16 %v237
  %v1086 = vunpack.c.h.b16 %v237
  %v1087 = vunpack.c.l.b16 %v238
  %v1088 = vunpack.c.h.b16 %v238
  %v1089 = vunpack.c.l.b16 %v239
  %v1090 = vunpack.c.h.b16 %v239
  %v1091 = vunpack.c.l.b16 %v240
  %v1092 = vunpack.c.h.b16 %v240
  %v1093 = vunpack.c.l.b16 %v241
  %v1094 = vunpack.c.h.b16 %v241
  %v1095 = vunpack.c.l.b16 %v242
  %v1096 = vunpack.c.h.b16 %v242
  %v1097 = vunpack.c.l.b16 %v243
  %v1098 = vunpack.c.h.b16 %v243
  %v1099 = vunpack.c.l.b16 %v244
  %v1100 = vunpack.c.h.b16 %v244
  %v1101 = vunpack.c.l.b16 %v245
  %v1102 = vunpack.c.h.b16 %v245
  %v1103 = vunpack.c.l.b16 %v246
  %v1104 = vunpack.c.h.b16 %v246
  %v1105 = vunpack.c.l.b16 %v247
  %v1106 = vunpack.c.h.b16 %v247
  %v1107 = vunpack.c.l.b16 %v248
  %v1108 = vunpack.c.h.b16 %v248
  %v1109 = vunpack.c.l.b16 %v249
  %v1110 = vunpack.c.h.b16 %v249
  %v1111 = vunpack.c.l.b16 %v250
  %v1112 = vunpack.c.h.b16 %v250
  %v1113 = vunpack.c.l.b16 %v251
  %v1114 = vunpack.c.h.b16 %v251
  %v1115 = vunpack.c.l.b16 %v252
  %v1116 = vunpack.c.h.b16 %v252
  %v1117 = vunpack.c.l.b16 %v253
  %v1118 = vunpack.c.h.b16 %v253
  %v1119 = vunpack.c.l.b16 %v254
  %v1120 = vunpack.c.h.b16 %v254
  %v1121 = vunpack.c.l.b16 %v255
  %v1122 = vunpack.c.h.b16 %v255
  %v1123 = vunpack.c.l.b16 %v256
  %v1124 = vunpack.c.h.b16 %v256
  %v1125 = vunpack.c.l.b16 %v257
  %v1126 = vunpack.c.h.b16 %v257
  %v1127 = vunpack.c.l.b16 %v258
  %v1128 = vunpack.c.h.b16 %v258
  %v1129 = vunpack.c.l.b16 %v259
  %v1130 = vunpack.c.h.b16 %v259
  %v1131 = vunpack.c.l.b16 %v260
  %v1132 = vunpack.c.h.b16 %v260
  %v1133 = vunpack.c.l.b16 %v261
  %v1134 = vunpack.c.h.b16 %v261
  %v1135 = vunpack.c.l.b16 %v262
  %v1136 = vunpack.c.h.b16 %v262
  %v1137 = vunpack.c.l.b16 %v263
  %v1138 = vunpack.c.h.b16 %v263
  %v1139 = vunpack.c.l.b16 %v264
  %v1140 = vunpack.c.h.b16 %v264
  %v1141 = vunpack.c.l.b16 %v265
  %v1142 = vunpack.c.h.b16 %v265
  %v1143 = vunpack.c.l.b16 %v266
  %v1144 = vunpack.c.h.b16 %v266
  %v1145 = vunpack.c.l.b16 %v267
  %v1146 = vunpack.c.h.b16 %v267
  %v1147 = vunpack.c.l.b16 %v268
  %v1148 = vunpack.c.h.b16 %v268
  %v1149 = vunpack.c.l.b16 %v269
  %v1150 = vunpack.c.h.b16 %v269
  %v1151 = vunpack.c.l.b16 %v270
  %v1152 = vunpack.c.h.b16 %v270
  %v1153 = vunpack.c.l.b16 %v271
  %v1154 = vunpack.c.h.b16 %v271
  %v1155 = vunpack.c.l.b16 %v272
  %v1156 = vunpack.c.h.b16 %v272
  %v1157 = vunpack.c.l.b16 %v273
  %v1158 = vunpack.c.h.b16 %v273
  %v1159 = vunpack.c.l.b16 %v274
  %v1160 = vunpack.c.h.b16 %v274
  %v1161 = vunpack.c.l.b16 %v275
  %v1162 = vunpack.c.h.b16 %v275
  %v1163 = vunpack.c.l.b16 %v276
  %v1164 = vunpack.c.h.b16 %v276
  %v1165 = vunpack.c.l.b16 %v277
  %v1166 = vunpack.c.h.b16 %v277
  %v1167 = vunpack.c.l.b16 %v278
  %v1168 = vunpack.c.h.b16 %v278
  %v1169 = vunpack.c.l.b16 %v279
  %v1170 = vunpack.c.h.b16 %v279
  %v1171 = vunpack.c.l.b16 %v280
  %v1172 = vunpack.c.h.b16 %v280
  %v1173 = vunpack.c.l.b16 %v281
  %v1174 = vunpack.c.h.b16 %v281
  %v1175 = vunpack.c.l.b16 %v282
  %v1176 = vunpack.c.h.b16 %v282
  %v1177 = vunpack.c.l.b16 %v283
  %v1178 = vunpack.c.h.b16 %v283
  %v1179 = vunpack.c.l.b16 %v284
  %v1180 = vunpack.c.h.b16 %v284
  %v1181 = vunpack.c.l.b16 %v285
  %v1182 = vunpack.c.h.b16 %v285
  %v1183 = vunpack.c.l.b16 %v286
  %v1184 = vunpack.c.h.b16 %v286
  %v1185 = vunpack.c.l.b16 %v287
  %v1186 = vunpack.c.h.b16 %v287
  %v1187 = vunpack.c.l.b16 %v288
  %v1188 = vunpack.c.h.b16 %v288
  %v1189 = vunpack.c.l.b16 %v289
  %v1190 = vunpack.c.h.b16 %v289
  %v1191 = vunpack.c.l.b16 %v290
  %v1192 = vunpack.c.h.b16 %v290
  %v1193 = vunpack.c.l.b16 %v291
  %v1194 = vunpack.c.h.b16 %v291
  %v1195 = vunpack.c.l.b16 %v292
  %v1196 = vunpack.c.h.b16 %v292
  %v1197 = vunpack.c.l.b16 %v293
  %v1198 = vunpack.c.h.b16 %v293
  %v1199 = vunpack.c.l.b16 %v294
  %v1200 = vunpack.c.h.b16 %v294
  %v1201 = vunpack.c.l.b16 %v295
  %v1202 = vunpack.c.h.b16 %v295
  %v1203 = vunpack.c.l.b16 %v296
  %v1204 = vunpack.c.h.b16 %v296
  %v1205 = vunpack.c.l.b16 %v297
  %v1206 = vunpack.c.h.b16 %v297
  %v1207 = vunpack.c.l.b16 %v298
  %v1208 = vunpack.c.h.b16 %v298
  %v1209 = vunpack.c.l.b16 %v299
  %v1210 = vunpack.c.h.b16 %v299
  %v1211 = vunpack.c.l.b16 %v300
  %v1212 = vunpack.c.h.b16 %v300
  %v1213 = vpack.c.b16 %v717, %v701
  %v1214 = vpack.c.b16 %v718, %v702
  %v1215 = vpack.c.b16 %v719, %v703
  %v1216 = vpack.c.b16 %v720, %v704
  %v1217 = vpack.c.b16 %v721, %v705
  %v1218 = vpack.c.b16 %v722, %v706
  %v1219 = vpack.c.b16 %v723, %v707
  %v1220 = vpack.c.b16 %v724, %v708
  %v1221 = vpack.c.b16 %v725, %v709
  %v1222 = vpack.c.b16 %v726, %v710
  %v1223 = vpack.c.b16 %v727, %v711
  %v1224 = vpack.c.b16 %v728, %v712
  %v1225 = vpack.c.b16 %v729, %v713
  %v1226 = vpack.c.b16 %v730, %v714
  %v1227 = vpack.c.b16 %v731, %v715
  %v1228 = vpack.c.b16 %v732, %v716
  %v1229 = vpack.c.b16 %v749, %v733
  %v1230 = vpack.c.b16 %v750, %v734
  %v1231 = vpack.c.b16 %v751, %v735
  %v1232 = vpack.c.b16 %v752, %v736
  %v1233 = vpack.c.b16 %v753, %v737
  %v1234 = vpack.c.b16 %v754, %v738
  %v1235 = vpack.c.b16 %v755, %v739
  %v1236 = vpack.c.b16 %v756, %v740
  %v1237 = vpack.c.b16 %v757, %v741
  %v1238 = vpack.c.b16 %v758, %v742
  %v1239 = vpack.c.b16 %v759, %v743
  %v1240 = vpack.c.b16 %v760, %v744
  %v1241 = vpack.c.b16 %v761, %v745
  %v1242 = vpack.c.b16 %v762, %v746
  %v1243 = vpack.c.b16 %v763, %v747
  %v1244 = vpack.c.b16 %v764, %v748
  %v1245 = vpack.c.b16 %v781, %v765
  %v1246 = vpack.c.b16 %v782, %v766
  %v1247 = vpack.c.b16 %v783, %v767
  %v1248 = vpack.c.b16 %v784, %v768
  %v1249 = vpack.c.b16 %v785, %v769
  %v1250 = vpack.c.b16 %v786, %v770
  %v1251 = vpack.c.b16 %v787, %v771
  %v1252 = vpack.c.b16 %v788, %v772
  %v1253 = vpack.c.b16 %v789, %v773
  %v1254 = vpack.c.b16 %v790, %v774
  %v1255 = vpack.c.b16 %v791, %v775
  %v1256 = vpack.c.b16 %v792, %v776
  %v1257 = vpack.c.b16 %v793, %v777
  %v1258 = vpack.c.b16 %v794, %v778
  %v1259 = vpack.c.b16 %v795, %v779
  %v1260 = vpack.c.b16 %v796, %v780
  %v1261 = vpack.c.b16 %v813, %v797
  %v1262 = vpack.c.b16 %v814, %v798
  %v1263 = vpack.c.b16 %v815, %v799
  %v1264 = vpack.c.b16 %v816, %v800
  %v1265 = vpack.c.b16 %v817, %v801
  %v1266 = vpack.c.b16 %v818, %v802
  %v1267 = vpack.c.b16 %v819, %v803
  %v1268 = vpack.c.b16 %v820, %v804
  %v1269 = vpack.c.b16 %v821, %v805
  %v1270 = vpack.c.b16 %v822, %v806
  %v1271 = vpack.c.b16 %v823, %v807
  %v1272 = vpack.c.b16 %v824, %v808
  %v1273 = vpack.c.b16 %v825, %v809
  %v1274 = vpack.c.b16 %v826, %v810
  %v1275 = vpack.c.b16 %v827, %v811
  %v1276 = vpack.c.b16 %v828, %v812
  %v1277 = vpack.c.b16 %v845, %v829
  %v1278 = vpack.c.b16 %v846, %v830
  %v1279 = vpack.c.b16 %v847, %v831
  %v1280 = vpack.c.b16 %v848, %v832
  %v1281 = vpack.c.b16 %v849, %v833
  %v1282 = vpack.c.b16 %v850, %v834
  %v1283 = vpack.c.b16 %v851, %v835
  %v1284 = vpack.c.b16 %v852, %v836
  %v1285 = vpack.c.b16 %v853, %v837
  %v1286 = vpack.c.b16 %v854, %v838
  %v1287 = vpack.c.b16 %v855, %v839
  %v1288 = vpack.c.b16 %v856, %v840
  %v1289 = vpack.c.b16 %v857, %v841
  %v1290 = vpack.c.b16 %v858, %v842
  %v1291 = vpack.c.b16 %v859, %v843
  %v1292 = vpack.c.b16 %v860, %v844
  %v1293 = vpack.c.b16 %v877, %v861
  %v1294 = vpack.c.b16 %v878, %v862
  %v1295 = vpack.c.b16 %v879, %v863
  %v1296 = vpack.c.b16 %v880, %v864
  %v1297 = vpack.c.b16 %v881, %v865
  %v1298 = vpack.c.b16 %v882, %v866
  %v1299 = vpack.c.b16 %v883, %v867
  %v1300 = vpack.c.b16 %v884, %v868
  %v1301 = vpack.c.b16 %v885, %v869
  %v1302 = vpack.c.b16 %v886, %v870
  %v1303 = vpack.c.b16 %v887, %v871
  %v1304 = vpack.c.b16 %v888, %v872
  %v1305 = vpack.c.b16 %v889, %v873
  %v1306 = vpack.c.b16 %v890, %v874
  %v1307 = vpack.c.b16 %v891, %v875
  %v1308 = vpack.c.b16 %v892, %v876
  %v1309 = vpack.c.b16 %v909, %v893
  %v1310 = vpack.c.b16 %v910, %v894
  %v1311 = vpack.c.b16 %v911, %v895
  %v1312 = vpack.c.b16 %v912, %v896
  %v1313 = vpack.c.b16 %v913, %v897
  %v1314 = vpack.c.b16 %v914, %v898
  %v1315 = vpack.c.b16 %v915, %v899
  %v1316 = vpack.c.b16 %v916, %v900
  %v1317 = vpack.c.b16 %v917, %v901
  %v1318 = vpack.c.b16 %v918, %v902
  %v1319 = vpack.c.b16 %v919, %v903
  %v1320 = vpack.c.b16 %v920, %v904
  %v1321 = vpack.c.b16 %v921, %v905
  %v1322 = vpack.c.b16 %v922, %v906
  %v1323 = vpack.c.b16 %v923, %v907
  %v1324 = vpack.c.b16 %v924, %v908
  %v1325 = vpack.c.b16 %v941, %v925
  %v1326 = vpack.c.b16 %v942, %v926
  %v1327 = vpack.c.b16 %v943, %v927
  %v1328 = vpack.c.b16 %v944, %v928
  %v1329 = vpack.c.b16 %v945, %v929
  %v1330 = vpack.c.b16 %v946, %v930
  %v1331 = vpack.c.b16 %v947, %v931
  %v1332 = vpack.c.b16 %v948, %v932
  %v1333 = vpack.c.b16 %v949, %v933
  %v1334 = vpack.c.b16 %v950, %v934
  %v1335 = vpack.c.b16 %v951, %v935
  %v1336 = vpack.c.b16 %v952, %v936
  %v1337 = vpack.c.b16 %v953, %v937
  %v1338 = vpack.c.b16 %v954, %v938
  %v1339 = vpack.c.b16 %v955, %v939
  %v1340 = vpack.c.b16 %v956, %v940
  %v1341 = vpack.c.b16 %v973, %v957
  %v1342 = vpack.c.b16 %v974, %v958
  %v1343 = vpack.c.b16 %v975, %v959
  %v1344 = vpack.c.b16 %v976, %v960
  %v1345 = vpack.c.b16 %v977, %v961
  %v1346 = vpack.c.b16 %v978, %v962
  %v1347 = vpack.c.b16 %v979, %v963
  %v1348 = vpack.c.b16 %v980, %v964
  %v1349 = vpack.c.b16 %v981, %v965
  %v1350 = vpack.c.b16 %v982, %v966
  %v1351 = vpack.c.b16 %v983, %v967
  %v1352 = vpack.c.b16 %v984, %v968
  %v1353 = vpack.c.b16 %v985, %v969
  %v1354 = vpack.c.b16 %v986, %v970
  %v1355 = vpack.c.b16 %v987, %v971
  %v1356 = vpack.c.b16 %v988, %v972
  %v1357 = vpack.c.b16 %v1005, %v989
  %v1358 = vpack.c.b16 %v1006, %v990
  %v1359 = vpack.c.b16 %v1007, %v991
  %v1360 = vpack.c.b16 %v1008, %v992
  %v1361 = vpack.c.b16 %v1009, %v993
  %v1362 = vpack.c.b16 %v1010, %v994
  %v1363 = vpack.c.b16 %v1011, %v995
  %v1364 = vpack.c.b16 %v1012, %v996
  %v1365 = vpack.c.b16 %v1013, %v997
  %v1366 = vpack.c.b16 %v1014, %v998
  %v1367 = vpack.c.b16 %v1015, %v999
  %v1368 = vpack.c.b16 %v1016, %v1000
  %v1369 = vpack.c.b16 %v1017, %v1001
  %v1370 = vpack.c.b16 %v1018, %v1002
  %v1371 = vpack.c.b16 %v1019, %v1003
  %v1372 = vpack.c.b16 %v1020, %v1004
  %v1373 = vpack.c.b16 %v1037, %v1021
  %v1374 = vpack.c.b16 %v1038, %v1022
  %v1375 = vpack.c.b16 %v1039, %v1023
  %v1376 = vpack.c.b16 %v1040, %v1024
  %v1377 = vpack.c.b16 %v1041, %v1025
  %v1378 = vpack.c.b16 %v1042, %v1026
  %v1379 = vpack.c.b16 %v1043, %v1027
  %v1380 = vpack.c.b16 %v1044, %v1028
  %v1381 = vpack.c.b16 %v1045, %v1029
  %v1382 = vpack.c.b16 %v1046, %v1030
  %v1383 = vpack.c.b16 %v1047, %v1031
  %v1384 = vpack.c.b16 %v1048, %v1032
  %v1385 = vpack.c.b16 %v1049, %v1033
  %v1386 = vpack.c.b16 %v1050, %v1034
  %v1387 = vpack.c.b16 %v1051, %v1035
  %v1388 = vpack.c.b16 %v1052, %v1036
  %v1389 = vpack.c.b16 %v1069, %v1053
  %v1390 = vpack.c.b16 %v1070, %v1054
  %v1391 = vpack.c.b16 %v1071, %v1055
  %v1392 = vpack.c.b16 %v1072, %v1056
  %v1393 = vpack.c.b16 %v1073, %v1057
  %v1394 = vpack.c.b16 %v1074, %v1058
  %v1395 = vpack.c.b16 %v1075, %v1059
  %v1396 = vpack.c.b16 %v1076, %v1060
  %v1397 = vpack.c.b16 %v1077, %v1061
  %v1398 = vpack.c.b16 %v1078, %v1062
  %v1399 = vpack.c.b16 %v1079, %v1063
  %v1400 = vpack.c.b16 %v1080, %v1064
  %v1401 = vpack.c.b16 %v1081, %v1065
  %v1402 = vpack.c.b16 %v1082, %v1066
  %v1403 = vpack.c.b16 %v1083, %v1067
  %v1404 = vpack.c.b16 %v1084, %v1068
  %v1405 = vpack.c.b16 %v1101, %v1085
  %v1406 = vpack.c.b16 %v1102, %v1086
  %v1407 = vpack.c.b16 %v1103, %v1087
  %v1408 = vpack.c.b16 %v1104, %v1088
  %v1409 = vpack.c.b16 %v1105, %v1089
  %v1410 = vpack.c.b16 %v1106, %v1090
  %v1411 = vpack.c.b16 %v1107, %v1091
  %v1412 = vpack.c.b16 %v1108, %v1092
  %v1413 = vpack.c.b16 %v1109, %v1093
  %v1414 = vpack.c.b16 %v1110, %v1094
  %v1415 = vpack.c.b16 %v1111, %v1095
  %v1416 = vpack.c.b16 %v1112, %v1096
  %v1417 = vpack.c.b16 %v1113, %v1097
  %v1418 = vpack.c.b16 %v1114, %v1098
  %v1419 = vpack.c.b16 %v1115, %v1099
  %v1420 = vpack.c.b16 %v1116, %v1100
  %v1421 = vpack.c.b16 %v1133, %v1117
  %v1422 = vpack.c.b16 %v1134, %v1118
  %v1423 = vpack.c.b16 %v1135, %v1119
  %v1424 = vpack.c.b16 %v1136, %v1120
  %v1425 = vpack.c.b16 %v1137, %v1121
  %v1426 = vpack.c.b16 %v1138, %v1122
  %v1427 = vpack.c.b16 %v1139, %v1123
  %v1428 = vpack.c.b16 %v1140, %v1124
  %v1429 = vpack.c.b16 %v1141, %v1125
  %v1430 = vpack.c.b16 %v1142, %v1126
  %v1431 = vpack.c.b16 %v1143, %v1127
  %v1432 = vpack.c.b16 %v1144, %v1128
  %v1433 = vpack.c.b16 %v1145, %v1129
  %v1434 = vpack.c.b16 %v1146, %v1130
  %v1435 = vpack.c.b16 %v1147, %v1131
  %v1436 = vpack.c.b16 %v1148, %v1132
  %v1437 = vpack.c.b16 %v1165, %v1149
  %v1438 = vpack.c.b16 %v1166, %v1150
  %v1439 = vpack.c.b16 %v1167, %v1151
  %v1440 = vpack.c.b16 %v1168, %v1152
  %v1441 = vpack.c.b16 %v1169, %v1153
  %v1442 = vpack.c.b16 %v1170, %v1154
  %v1443 = vpack.c.b16 %v1171, %v1155
  %v1444 = vpack.c.b16 %v1172, %v1156
  %v1445 = vpack.c.b16 %v1173, %v1157
  %v1446 = vpack.c.b16 %v1174, %v1158
  %v1447 = vpack.c.b16 %v1175, %v1159
  %v1448 = vpack.c.b16 %v1176, %v1160
  %v1449 = vpack.c.b16 %v1177, %v1161
  %v1450 = vpack.c.b16 %v1178, %v1162
  %v1451 = vpack.c.b16 %v1179, %v1163
  %v1452 = vpack.c.b16 %v1180, %v1164
  %v1453 = vpack.c.b16 %v1197, %v1181
  %v1454 = vpack.c.b16 %v1198, %v1182
  %v1455 = vpack.c.b16 %v1199, %v1183
  %v1456 = vpack.c.b16 %v1200, %v1184
  %v1457 = vpack.c.b16 %v1201, %v1185
  %v1458 = vpack.c.b16 %v1202, %v1186
  %v1459 = vpack.c.b16 %v1203, %v1187
  %v1460 = vpack.c.b16 %v1204, %v1188
  %v1461 = vpack.c.b16 %v1205, %v1189
  %v1462 = vpack.c.b16 %v1206, %v1190
  %v1463 = vpack.c.b16 %v1207, %v1191
  %v1464 = vpack.c.b16 %v1208, %v1192
  %v1465 = vpack.c.b16 %v1209, %v1193
  %v1466 = vpack.c.b16 %v1210, %v1194
  %v1467 = vpack.c.b16 %v1211, %v1195
  %v1468 = vpack.c.b16 %v1212, %v1196
  %1725 = vmatprep.subr.bf16.mxu0 %v1214
  %1726 = vmatpush1.bf16.msra.mxu0 %v1213
  %1727 = vmatprep.subr.bf16.mxu0 %v1230
  %1728 = vmatpush1.bf16.msra.mxu0 %v1229
  %1729 = vmatprep.subr.bf16.mxu0 %v1246
  %1730 = vmatpush1.bf16.msra.mxu0 %v1245
  %1731 = vmatprep.subr.bf16.mxu0 %v1262
  %1732 = vmatpush1.bf16.msra.mxu0 %v1261
  %1733 = vmatprep.subr.bf16.mxu0 %v1278
  %1734 = vmatpush1.bf16.msra.mxu0 %v1277
  %1735 = vmatprep.subr.bf16.mxu0 %v1294
  %1736 = vmatpush1.bf16.msra.mxu0 %v1293
  %1737 = vmatprep.subr.bf16.mxu0 %v1310
  %1738 = vmatpush1.bf16.msra.mxu0 %v1309
  %1739 = vmatprep.subr.bf16.mxu0 %v1326
  %1740 = vmatpush1.bf16.msra.mxu0 %v1325
  %1741 = vmatprep.subr.bf16.mxu0 %v1342
  %1742 = vmatpush1.bf16.msra.mxu0 %v1341
  %1743 = vmatprep.subr.bf16.mxu0 %v1358
  %1744 = vmatpush1.bf16.msra.mxu0 %v1357
  %1745 = vmatprep.subr.bf16.mxu0 %v1374
  %1746 = vmatpush1.bf16.msra.mxu0 %v1373
  %1747 = vmatprep.subr.bf16.mxu0 %v1390
  %1748 = vmatpush1.bf16.msra.mxu0 %v1389
  %1749 = vmatprep.subr.bf16.mxu0 %v1406
  %1750 = vmatpush1.bf16.msra.mxu0 %v1405
  %1751 = vmatprep.subr.bf16.mxu0 %v1422
  %1752 = vmatpush1.bf16.msra.mxu0 %v1421
  %1753 = vmatprep.subr.bf16.mxu0 %v1438
  %1754 = vmatpush1.bf16.msra.mxu0 %v1437
  %1755 = vmatprep.subr.bf16.mxu0 %v1454
  %1756 = vmatpush1.bf16.msra.mxu0 %v1453
  %1757 = vmatprep.mubr.bf16.mxu0 %v422
  %1758 = vmatmul.mubr.bf16.gmra.mrb[0].mxu0 %v421
  %v1759 = vpop.f32.mrb[0].mxu0
  %v1760 = vadd.f32 %v308, %v1759
  %v1761 = vpop.f32.mrb[0].mxu0
  %v1762 = vadd.f32 %v312, %v1761
  %v1763 = vpop.f32.mrb[0].mxu0
  %v1764 = vadd.f32 %v308, %v1763
  %v1765 = vpop.f32.mrb[0].mxu0
  %v1766 = vadd.f32 %v312, %v1765
  %1767 = vmatprep.mubr.bf16.mxu0 %v424
  %1768 = vmatmul.mubr.bf16.gmra.mrb[0].mxu0 %v423
  %v1769 = vpop.f32.mrb[0].mxu0
  %v1770 = vadd.f32 %v308, %v1769
  %v1771 = vpop.f32.mrb[0].mxu0
  %v1772 = vadd.f32 %v312, %v1771
  %v1773 = vpop.f32.mrb[0].mxu0
  %v1774 = vadd.f32 %v308, %v1773
  %v1775 = vpop.f32.mrb[0].mxu0
  %v1776 = vadd.f32 %v312, %v1775
  %1777 = vmatprep.mubr.bf16.mxu0 %v426
  %1778 = vmatmul.mubr.bf16.gmra.mrb[0].mxu0 %v425
  %v1779 = vpop.f32.mrb[0].mxu0
  %v1780 = vadd.f32 %v308, %v1779
  %v1781 = vpop.f32.mrb[0].mxu0
  %v1782 = vadd.f32 %v312, %v1781
  %v1783 = vpop.f32.mrb[0].mxu0
  %v1784 = vadd.f32 %v308, %v1783
  %v1785 = vpop.f32.mrb[0].mxu0
  %v1786 = vadd.f32 %v312, %v1785
  %1787 = vmatprep.mubr.bf16.mxu0 %v428
  %1788 = vmatmul.mubr.bf16.gmra.mrb[0].mxu0 %v427
  %v1789 = vpop.f32.mrb[0].mxu0
  %v1790 = vadd.f32 %v308, %v1789
  %v1791 = vpop.f32.mrb[0].mxu0
  %v1792 = vadd.f32 %v312, %v1791
  %v1793 = vpop.f32.mrb[0].mxu0
  %v1794 = vadd.f32 %v308, %v1793
  %v1795 = vpop.f32.mrb[0].mxu0
  %v1796 = vadd.f32 %v312, %v1795
  %1797 = vmatprep.mubr.bf16.mxu0 %v430
  %1798 = vmatmul.mubr.bf16.gmra.mrb[0].mxu0 %v429
  %v1799 = vpop.f32.mrb[0].mxu0
  %v1800 = vadd.f32 %v308, %v1799
  %v1801 = vpop.f32.mrb[0].mxu0
  %v1802 = vadd.f32 %v312, %v1801
  %v1803 = vpop.f32.mrb[0].mxu0
  %v1804 = vadd.f32 %v308, %v1803
  %v1805 = vpop.f32.mrb[0].mxu0
  %v1806 = vadd.f32 %v312, %v1805
  %1807 = vmatprep.mubr.bf16.mxu0 %v432
  %1808 = vmatmul.mubr.bf16.gmra.mrb[0].mxu0 %v431
  %v1809 = vpop.f32.mrb[0].mxu0
  %v1810 = vadd.f32 %v308, %v1809
  %v1811 = vpop.f32.mrb[0].mxu0
  %v1812 = vadd.f32 %v312, %v1811
  %v1813 = vpop.f32.mrb[0].mxu0
  %v1814 = vadd.f32 %v308, %v1813
  %v1815 = vpop.f32.mrb[0].mxu0
  %v1816 = vadd.f32 %v312, %v1815
  %1817 = vdwg.mxu0
  %1818 = vmatprep.subr.bf16.mxu0 %v1216
  %1819 = vmatpush1.bf16.msra.mxu0 %v1215
  %1820 = vmatprep.subr.bf16.mxu0 %v1232
  %1821 = vmatpush1.bf16.msra.mxu0 %v1231
  %1822 = vmatprep.subr.bf16.mxu0 %v1248
  %1823 = vmatpush1.bf16.msra.mxu0 %v1247
  %1824 = vmatprep.subr.bf16.mxu0 %v1264
  %1825 = vmatpush1.bf16.msra.mxu0 %v1263
  %1826 = vmatprep.subr.bf16.mxu0 %v1280
  %1827 = vmatpush1.bf16.msra.mxu0 %v1279
  %1828 = vmatprep.subr.bf16.mxu0 %v1296
  %1829 = vmatpush1.bf16.msra.mxu0 %v1295
  %1830 = vmatprep.subr.bf16.mxu0 %v1312
  %1831 = vmatpush1.bf16.msra.mxu0 %v1311
  %1832 = vmatprep.subr.bf16.mxu0 %v1328
  %1833 = vmatpush1.bf16.msra.mxu0 %v1327
  %1834 = vmatprep.subr.bf16.mxu0 %v1344
  %1835 = vmatpush1.bf16.msra.mxu0 %v1343
  %1836 = vmatprep.subr.bf16.mxu0 %v1360
  %1837 = vmatpush1.bf16.msra.mxu0 %v1359
  %1838 = vmatprep.subr.bf16.mxu0 %v1376
  %1839 = vmatpush1.bf16.msra.mxu0 %v1375
  %1840 = vmatprep.subr.bf16.mxu0 %v1392
  %1841 = vmatpush1.bf16.msra.mxu0 %v1391
  %1842 = vmatprep.subr.bf16.mxu0 %v1408
  %1843 = vmatpush1.bf16.msra.mxu0 %v1407
  %1844 = vmatprep.subr.bf16.mxu0 %v1424
  %1845 = vmatpush1.bf16.msra.mxu0 %v1423
  %1846 = vmatprep.subr.bf16.mxu0 %v1440
  %1847 = vmatpush1.bf16.msra.mxu0 %v1439
  %1848 = vmatprep.subr.bf16.mxu0 %v1456
  %1849 = vmatpush1.bf16.msra.mxu0 %v1455
  %1850 = vmatprep.mubr.bf16.mxu0 %v422
  %1851 = vmatmul.mubr.bf16.gmra.mrb[0].mxu0 %v421
  %v1852 = vpop.f32.mrb[0].mxu0
  %v1853 = vadd.f32 %v316, %v1852
  %v1854 = vpop.f32.mrb[0].mxu0
  %v1855 = vadd.f32 %v320, %v1854
  %v1856 = vpop.f32.mrb[0].mxu0
  %v1857 = vadd.f32 %v316, %v1856
  %v1858 = vpop.f32.mrb[0].mxu0
  %v1859 = vadd.f32 %v320, %v1858
  %1860 = vmatprep.mubr.bf16.mxu0 %v424
  %1861 = vmatmul.mubr.bf16.gmra.mrb[0].mxu0 %v423
  %v1862 = vpop.f32.mrb[0].mxu0
  %v1863 = vadd.f32 %v316, %v1862
  %v1864 = vpop.f32.mrb[0].mxu0
  %v1865 = vadd.f32 %v320, %v1864
  %v1866 = vpop.f32.mrb[0].mxu0
  %v1867 = vadd.f32 %v316, %v1866
  %v1868 = vpop.f32.mrb[0].mxu0
  %v1869 = vadd.f32 %v320, %v1868
  %1870 = vmatprep.mubr.bf16.mxu0 %v426
  %1871 = vmatmul.mubr.bf16.gmra.mrb[0].mxu0 %v425
  %v1872 = vpop.f32.mrb[0].mxu0
  %v1873 = vadd.f32 %v316, %v1872
  %v1874 = vpop.f32.mrb[0].mxu0
  %v1875 = vadd.f32 %v320, %v1874
  %v1876 = vpop.f32.mrb[0].mxu0
  %v1877 = vadd.f32 %v316, %v1876
  %v1878 = vpop.f32.mrb[0].mxu0
  %v1879 = vadd.f32 %v320, %v1878
  %1880 = vmatprep.mubr.bf16.mxu0 %v428
  %1881 = vmatmul.mubr.bf16.gmra.mrb[0].mxu0 %v427
  %v1882 = vpop.f32.mrb[0].mxu0
  %v1883 = vadd.f32 %v316, %v1882
  %v1884 = vpop.f32.mrb[0].mxu0
  %v1885 = vadd.f32 %v320, %v1884
  %v1886 = vpop.f32.mrb[0].mxu0
  %v1887 = vadd.f32 %v316, %v1886
  %v1888 = vpop.f32.mrb[0].mxu0
  %v1889 = vadd.f32 %v320, %v1888
  %1890 = vmatprep.mubr.bf16.mxu0 %v430
  %1891 = vmatmul.mubr.bf16.gmra.mrb[0].mxu0 %v429
  %v1892 = vpop.f32.mrb[0].mxu0
  %v1893 = vadd.f32 %v316, %v1892
  %v1894 = vpop.f32.mrb[0].mxu0
  %v1895 = vadd.f32 %v320, %v1894
  %v1896 = vpop.f32.mrb[0].mxu0
  %v1897 = vadd.f32 %v316, %v1896
  %v1898 = vpop.f32.mrb[0].mxu0
  %v1899 = vadd.f32 %v320, %v1898
  %1900 = vmatprep.mubr.bf16.mxu0 %v432
  %1901 = vmatmul.mubr.bf16.gmra.mrb[0].mxu0 %v431
  %v1902 = vpop.f32.mrb[0].mxu0
  %v1903 = vadd.f32 %v316, %v1902
  %v1904 = vpop.f32.mrb[0].mxu0
  %v1905 = vadd.f32 %v320, %v1904
  %v1906 = vpop.f32.mrb[0].mxu0
  %v1907 = vadd.f32 %v316, %v1906
  %v1908 = vpop.f32.mrb[0].mxu0
  %v1909 = vadd.f32 %v320, %v1908
  %1910 = vdwg.mxu0
  %1911 = vmatprep.subr.bf16.mxu0 %v1218
  %1912 = vmatpush1.bf16.msra.mxu0 %v1217
  %1913 = vmatprep.subr.bf16.mxu0 %v1234
  %1914 = vmatpush1.bf16.msra.mxu0 %v1233
  %1915 = vmatprep.subr.bf16.mxu0 %v1250
  %1916 = vmatpush1.bf16.msra.mxu0 %v1249
  %1917 = vmatprep.subr.bf16.mxu0 %v1266
  %1918 = vmatpush1.bf16.msra.mxu0 %v1265
  %1919 = vmatprep.subr.bf16.mxu0 %v1282
  %1920 = vmatpush1.bf16.msra.mxu0 %v1281
  %1921 = vmatprep.subr.bf16.mxu0 %v1298
  %1922 = vmatpush1.bf16.msra.mxu0 %v1297
  %1923 = vmatprep.subr.bf16.mxu0 %v1314
  %1924 = vmatpush1.bf16.msra.mxu0 %v1313
  %1925 = vmatprep.subr.bf16.mxu0 %v1330
  %1926 = vmatpush1.bf16.msra.mxu0 %v1329
  %1927 = vmatprep.subr.bf16.mxu0 %v1346
  %1928 = vmatpush1.bf16.msra.mxu0 %v1345
  %1929 = vmatprep.subr.bf16.mxu0 %v1362
  %1930 = vmatpush1.bf16.msra.mxu0 %v1361
  %1931 = vmatprep.subr.bf16.mxu0 %v1378
  %1932 = vmatpush1.bf16.msra.mxu0 %v1377
  %1933 = vmatprep.subr.bf16.mxu0 %v1394
  %1934 = vmatpush1.bf16.msra.mxu0 %v1393
  %1935 = vmatprep.subr.bf16.mxu0 %v1410
  %1936 = vmatpush1.bf16.msra.mxu0 %v1409
  %1937 = vmatprep.subr.bf16.mxu0 %v1426
  %1938 = vmatpush1.bf16.msra.mxu0 %v1425
  %1939 = vmatprep.subr.bf16.mxu0 %v1442
  %1940 = vmatpush1.bf16.msra.mxu0 %v1441
  %1941 = vmatprep.subr.bf16.mxu0 %v1458
  %1942 = vmatpush1.bf16.msra.mxu0 %v1457
  %1943 = vmatprep.mubr.bf16.mxu0 %v422
  %1944 = vmatmul.mubr.bf16.gmra.mrb[0].mxu0 %v421
  %v1945 = vpop.f32.mrb[0].mxu0
  %v1946 = vadd.f32 %v324, %v1945
  %v1947 = vpop.f32.mrb[0].mxu0
  %v1948 = vadd.f32 %v328, %v1947
  %v1949 = vpop.f32.mrb[0].mxu0
  %v1950 = vadd.f32 %v324, %v1949
  %v1951 = vpop.f32.mrb[0].mxu0
  %v1952 = vadd.f32 %v328, %v1951
  %1953 = vmatprep.mubr.bf16.mxu0 %v424
  %1954 = vmatmul.mubr.bf16.gmra.mrb[0].mxu0 %v423
  %v1955 = vpop.f32.mrb[0].mxu0
  %v1956 = vadd.f32 %v324, %v1955
  %v1957 = vpop.f32.mrb[0].mxu0
  %v1958 = vadd.f32 %v328, %v1957
  %v1959 = vpop.f32.mrb[0].mxu0
  %v1960 = vadd.f32 %v324, %v1959
  %v1961 = vpop.f32.mrb[0].mxu0
  %v1962 = vadd.f32 %v328, %v1961
  %1963 = vmatprep.mubr.bf16.mxu0 %v426
  %1964 = vmatmul.mubr.bf16.gmra.mrb[0].mxu0 %v425
  %v1965 = vpop.f32.mrb[0].mxu0
  %v1966 = vadd.f32 %v324, %v1965
  %v1967 = vpop.f32.mrb[0].mxu0
  %v1968 = vadd.f32 %v328, %v1967
  %v1969 = vpop.f32.mrb[0].mxu0
  %v1970 = vadd.f32 %v324, %v1969
  %v1971 = vpop.f32.mrb[0].mxu0
  %v1972 = vadd.f32 %v328, %v1971
  %1973 = vmatprep.mubr.bf16.mxu0 %v428
  %1974 = vmatmul.mubr.bf16.gmra.mrb[0].mxu0 %v427
  %v1975 = vpop.f32.mrb[0].mxu0
  %v1976 = vadd.f32 %v324, %v1975
  %v1977 = vpop.f32.mrb[0].mxu0
  %v1978 = vadd.f32 %v328, %v1977
  %v1979 = vpop.f32.mrb[0].mxu0
  %v1980 = vadd.f32 %v324, %v1979
  %v1981 = vpop.f32.mrb[0].mxu0
  %v1982 = vadd.f32 %v328, %v1981
  %1983 = vmatprep.mubr.bf16.mxu0 %v430
  %1984 = vmatmul.mubr.bf16.gmra.mrb[0].mxu0 %v429
  %v1985 = vpop.f32.mrb[0].mxu0
  %v1986 = vadd.f32 %v324, %v1985
  %v1987 = vpop.f32.mrb[0].mxu0
  %v1988 = vadd.f32 %v328, %v1987
  %v1989 = vpop.f32.mrb[0].mxu0
  %v1990 = vadd.f32 %v324, %v1989
  %v1991 = vpop.f32.mrb[0].mxu0
  %v1992 = vadd.f32 %v328, %v1991
  %1993 = vmatprep.mubr.bf16.mxu0 %v432
  %1994 = vmatmul.mubr.bf16.gmra.mrb[0].mxu0 %v431
  %v1995 = vpop.f32.mrb[0].mxu0
  %v1996 = vadd.f32 %v324, %v1995
  %v1997 = vpop.f32.mrb[0].mxu0
  %v1998 = vadd.f32 %v328, %v1997
  %v1999 = vpop.f32.mrb[0].mxu0
  %v2000 = vadd.f32 %v324, %v1999
  %v2001 = vpop.f32.mrb[0].mxu0
  %v2002 = vadd.f32 %v328, %v2001
  %2003 = vdwg.mxu0
  %2004 = vmatprep.subr.bf16.mxu0 %v1220
  %2005 = vmatpush1.bf16.msra.mxu0 %v1219
  %2006 = vmatprep.subr.bf16.mxu0 %v1236
  %2007 = vmatpush1.bf16.msra.mxu0 %v1235
  %2008 = vmatprep.subr.bf16.mxu0 %v1252
  %2009 = vmatpush1.bf16.msra.mxu0 %v1251
  %2010 = vmatprep.subr.bf16.mxu0 %v1268
  %2011 = vmatpush1.bf16.msra.mxu0 %v1267
  %2012 = vmatprep.subr.bf16.mxu0 %v1284
  %2013 = vmatpush1.bf16.msra.mxu0 %v1283
  %2014 = vmatprep.subr.bf16.mxu0 %v1300
  %2015 = vmatpush1.bf16.msra.mxu0 %v1299
  %2016 = vmatprep.subr.bf16.mxu0 %v1316
  %2017 = vmatpush1.bf16.msra.mxu0 %v1315
  %2018 = vmatprep.subr.bf16.mxu0 %v1332
  %2019 = vmatpush1.bf16.msra.mxu0 %v1331
  %2020 = vmatprep.subr.bf16.mxu0 %v1348
  %2021 = vmatpush1.bf16.msra.mxu0 %v1347
  %2022 = vmatprep.subr.bf16.mxu0 %v1364
  %2023 = vmatpush1.bf16.msra.mxu0 %v1363
  %2024 = vmatprep.subr.bf16.mxu0 %v1380
  %2025 = vmatpush1.bf16.msra.mxu0 %v1379
  %2026 = vmatprep.subr.bf16.mxu0 %v1396
  %2027 = vmatpush1.bf16.msra.mxu0 %v1395
  %2028 = vmatprep.subr.bf16.mxu0 %v1412
  %2029 = vmatpush1.bf16.msra.mxu0 %v1411
  %2030 = vmatprep.subr.bf16.mxu0 %v1428
  %2031 = vmatpush1.bf16.msra.mxu0 %v1427
  %2032 = vmatprep.subr.bf16.mxu0 %v1444
  %2033 = vmatpush1.bf16.msra.mxu0 %v1443
  %2034 = vmatprep.subr.bf16.mxu0 %v1460
  %2035 = vmatpush1.bf16.msra.mxu0 %v1459
  %2036 = vmatprep.mubr.bf16.mxu0 %v422
  %2037 = vmatmul.mubr.bf16.gmra.mrb[0].mxu0 %v421
  %v2038 = vpop.f32.mrb[0].mxu0
  %v2039 = vadd.f32 %v332, %v2038
  %v2040 = vpop.f32.mrb[0].mxu0
  %v2041 = vadd.f32 %v336, %v2040
  %v2042 = vpop.f32.mrb[0].mxu0
  %v2043 = vadd.f32 %v332, %v2042
  %v2044 = vpop.f32.mrb[0].mxu0
  %v2045 = vadd.f32 %v336, %v2044
  %2046 = vmatprep.mubr.bf16.mxu0 %v424
  %2047 = vmatmul.mubr.bf16.gmra.mrb[0].mxu0 %v423
  %v2048 = vpop.f32.mrb[0].mxu0
  %v2049 = vadd.f32 %v332, %v2048
  %v2050 = vpop.f32.mrb[0].mxu0
  %v2051 = vadd.f32 %v336, %v2050
  %v2052 = vpop.f32.mrb[0].mxu0
  %v2053 = vadd.f32 %v332, %v2052
  %v2054 = vpop.f32.mrb[0].mxu0
  %v2055 = vadd.f32 %v336, %v2054
  %2056 = vmatprep.mubr.bf16.mxu0 %v426
  %2057 = vmatmul.mubr.bf16.gmra.mrb[0].mxu0 %v425
  %v2058 = vpop.f32.mrb[0].mxu0
  %v2059 = vadd.f32 %v332, %v2058
  %v2060 = vpop.f32.mrb[0].mxu0
  %v2061 = vadd.f32 %v336, %v2060
  %v2062 = vpop.f32.mrb[0].mxu0
  %v2063 = vadd.f32 %v332, %v2062
  %v2064 = vpop.f32.mrb[0].mxu0
  %v2065 = vadd.f32 %v336, %v2064
  %2066 = vmatprep.mubr.bf16.mxu0 %v428
  %2067 = vmatmul.mubr.bf16.gmra.mrb[0].mxu0 %v427
  %v2068 = vpop.f32.mrb[0].mxu0
  %v2069 = vadd.f32 %v332, %v2068
  %v2070 = vpop.f32.mrb[0].mxu0
  %v2071 = vadd.f32 %v336, %v2070
  %v2072 = vpop.f32.mrb[0].mxu0
  %v2073 = vadd.f32 %v332, %v2072
  %v2074 = vpop.f32.mrb[0].mxu0
  %v2075 = vadd.f32 %v336, %v2074
  %2076 = vmatprep.mubr.bf16.mxu0 %v430
  %2077 = vmatmul.mubr.bf16.gmra.mrb[0].mxu0 %v429
  %v2078 = vpop.f32.mrb[0].mxu0
  %v2079 = vadd.f32 %v332, %v2078
  %v2080 = vpop.f32.mrb[0].mxu0
  %v2081 = vadd.f32 %v336, %v2080
  %v2082 = vpop.f32.mrb[0].mxu0
  %v2083 = vadd.f32 %v332, %v2082
  %v2084 = vpop.f32.mrb[0].mxu0
  %v2085 = vadd.f32 %v336, %v2084
  %2086 = vmatprep.mubr.bf16.mxu0 %v432
  %2087 = vmatmul.mubr.bf16.gmra.mrb[0].mxu0 %v431
  %v2088 = vpop.f32.mrb[0].mxu0
  %v2089 = vadd.f32 %v332, %v2088
  %v2090 = vpop.f32.mrb[0].mxu0
  %v2091 = vadd.f32 %v336, %v2090
  %v2092 = vpop.f32.mrb[0].mxu0
  %v2093 = vadd.f32 %v332, %v2092
  %v2094 = vpop.f32.mrb[0].mxu0
  %v2095 = vadd.f32 %v336, %v2094
  %2096 = vdwg.mxu0
  %2097 = vmatprep.subr.bf16.mxu0 %v1222
  %2098 = vmatpush1.bf16.msra.mxu0 %v1221
  %2099 = vmatprep.subr.bf16.mxu0 %v1238
  %2100 = vmatpush1.bf16.msra.mxu0 %v1237
  %2101 = vmatprep.subr.bf16.mxu0 %v1254
  %2102 = vmatpush1.bf16.msra.mxu0 %v1253
  %2103 = vmatprep.subr.bf16.mxu0 %v1270
  %2104 = vmatpush1.bf16.msra.mxu0 %v1269
  %2105 = vmatprep.subr.bf16.mxu0 %v1286
  %2106 = vmatpush1.bf16.msra.mxu0 %v1285
  %2107 = vmatprep.subr.bf16.mxu0 %v1302
  %2108 = vmatpush1.bf16.msra.mxu0 %v1301
  %2109 = vmatprep.subr.bf16.mxu0 %v1318
  %2110 = vmatpush1.bf16.msra.mxu0 %v1317
  %2111 = vmatprep.subr.bf16.mxu0 %v1334
  %2112 = vmatpush1.bf16.msra.mxu0 %v1333
  %2113 = vmatprep.subr.bf16.mxu0 %v1350
  %2114 = vmatpush1.bf16.msra.mxu0 %v1349
  %2115 = vmatprep.subr.bf16.mxu0 %v1366
  %2116 = vmatpush1.bf16.msra.mxu0 %v1365
  %2117 = vmatprep.subr.bf16.mxu0 %v1382
  %2118 = vmatpush1.bf16.msra.mxu0 %v1381
  %2119 = vmatprep.subr.bf16.mxu0 %v1398
  %2120 = vmatpush1.bf16.msra.mxu0 %v1397
  %2121 = vmatprep.subr.bf16.mxu0 %v1414
  %2122 = vmatpush1.bf16.msra.mxu0 %v1413
  %2123 = vmatprep.subr.bf16.mxu0 %v1430
  %2124 = vmatpush1.bf16.msra.mxu0 %v1429
  %2125 = vmatprep.subr.bf16.mxu0 %v1446
  %2126 = vmatpush1.bf16.msra.mxu0 %v1445
  %2127 = vmatprep.subr.bf16.mxu0 %v1462
  %2128 = vmatpush1.bf16.msra.mxu0 %v1461
  %2129 = vmatprep.mubr.bf16.mxu0 %v422
  %2130 = vmatmul.mubr.bf16.gmra.mrb[0].mxu0 %v421
  %v2131 = vpop.f32.mrb[0].mxu0
  %v2132 = vadd.f32 %v340, %v2131
  %v2133 = vpop.f32.mrb[0].mxu0
  %v2134 = vadd.f32 %v344, %v2133
  %v2135 = vpop.f32.mrb[0].mxu0
  %v2136 = vadd.f32 %v340, %v2135
  %v2137 = vpop.f32.mrb[0].mxu0
  %v2138 = vadd.f32 %v344, %v2137
  %2139 = vmatprep.mubr.bf16.mxu0 %v424
  %2140 = vmatmul.mubr.bf16.gmra.mrb[0].mxu0 %v423
  %v2141 = vpop.f32.mrb[0].mxu0
  %v2142 = vadd.f32 %v340, %v2141
  %v2143 = vpop.f32.mrb[0].mxu0
  %v2144 = vadd.f32 %v344, %v2143
  %v2145 = vpop.f32.mrb[0].mxu0
  %v2146 = vadd.f32 %v340, %v2145
  %v2147 = vpop.f32.mrb[0].mxu0
  %v2148 = vadd.f32 %v344, %v2147
  %2149 = vmatprep.mubr.bf16.mxu0 %v426
  %2150 = vmatmul.mubr.bf16.gmra.mrb[0].mxu0 %v425
  %v2151 = vpop.f32.mrb[0].mxu0
  %v2152 = vadd.f32 %v340, %v2151
  %v2153 = vpop.f32.mrb[0].mxu0
  %v2154 = vadd.f32 %v344, %v2153
  %v2155 = vpop.f32.mrb[0].mxu0
  %v2156 = vadd.f32 %v340, %v2155
  %v2157 = vpop.f32.mrb[0].mxu0
  %v2158 = vadd.f32 %v344, %v2157
  %2159 = vmatprep.mubr.bf16.mxu0 %v428
  %2160 = vmatmul.mubr.bf16.gmra.mrb[0].mxu0 %v427
  %v2161 = vpop.f32.mrb[0].mxu0
  %v2162 = vadd.f32 %v340, %v2161
  %v2163 = vpop.f32.mrb[0].mxu0
  %v2164 = vadd.f32 %v344, %v2163
  %v2165 = vpop.f32.mrb[0].mxu0
  %v2166 = vadd.f32 %v340, %v2165
  %v2167 = vpop.f32.mrb[0].mxu0
  %v2168 = vadd.f32 %v344, %v2167
  %2169 = vmatprep.mubr.bf16.mxu0 %v430
  %2170 = vmatmul.mubr.bf16.gmra.mrb[0].mxu0 %v429
  %v2171 = vpop.f32.mrb[0].mxu0
  %v2172 = vadd.f32 %v340, %v2171
  %v2173 = vpop.f32.mrb[0].mxu0
  %v2174 = vadd.f32 %v344, %v2173
  %v2175 = vpop.f32.mrb[0].mxu0
  %v2176 = vadd.f32 %v340, %v2175
  %v2177 = vpop.f32.mrb[0].mxu0
  %v2178 = vadd.f32 %v344, %v2177
  %2179 = vmatprep.mubr.bf16.mxu0 %v432
  %2180 = vmatmul.mubr.bf16.gmra.mrb[0].mxu0 %v431
  %v2181 = vpop.f32.mrb[0].mxu0
  %v2182 = vadd.f32 %v340, %v2181
  %v2183 = vpop.f32.mrb[0].mxu0
  %v2184 = vadd.f32 %v344, %v2183
  %v2185 = vpop.f32.mrb[0].mxu0
  %v2186 = vadd.f32 %v340, %v2185
  %v2187 = vpop.f32.mrb[0].mxu0
  %v2188 = vadd.f32 %v344, %v2187
  %2189 = vdwg.mxu0
  %2190 = vmatprep.subr.bf16.mxu0 %v1224
  %2191 = vmatpush1.bf16.msra.mxu0 %v1223
  %2192 = vmatprep.subr.bf16.mxu0 %v1240
  %2193 = vmatpush1.bf16.msra.mxu0 %v1239
  %2194 = vmatprep.subr.bf16.mxu0 %v1256
  %2195 = vmatpush1.bf16.msra.mxu0 %v1255
  %2196 = vmatprep.subr.bf16.mxu0 %v1272
  %2197 = vmatpush1.bf16.msra.mxu0 %v1271
  %2198 = vmatprep.subr.bf16.mxu0 %v1288
  %2199 = vmatpush1.bf16.msra.mxu0 %v1287
  %2200 = vmatprep.subr.bf16.mxu0 %v1304
  %2201 = vmatpush1.bf16.msra.mxu0 %v1303
  %2202 = vmatprep.subr.bf16.mxu0 %v1320
  %2203 = vmatpush1.bf16.msra.mxu0 %v1319
  %2204 = vmatprep.subr.bf16.mxu0 %v1336
  %2205 = vmatpush1.bf16.msra.mxu0 %v1335
  %2206 = vmatprep.subr.bf16.mxu0 %v1352
  %2207 = vmatpush1.bf16.msra.mxu0 %v1351
  %2208 = vmatprep.subr.bf16.mxu0 %v1368
  %2209 = vmatpush1.bf16.msra.mxu0 %v1367
  %2210 = vmatprep.subr.bf16.mxu0 %v1384
  %2211 = vmatpush1.bf16.msra.mxu0 %v1383
  %2212 = vmatprep.subr.bf16.mxu0 %v1400
  %2213 = vmatpush1.bf16.msra.mxu0 %v1399
  %2214 = vmatprep.subr.bf16.mxu0 %v1416
  %2215 = vmatpush1.bf16.msra.mxu0 %v1415
  %2216 = vmatprep.subr.bf16.mxu0 %v1432
  %2217 = vmatpush1.bf16.msra.mxu0 %v1431
  %2218 = vmatprep.subr.bf16.mxu0 %v1448
  %2219 = vmatpush1.bf16.msra.mxu0 %v1447
  %2220 = vmatprep.subr.bf16.mxu0 %v1464
  %2221 = vmatpush1.bf16.msra.mxu0 %v1463
  %2222 = vmatprep.mubr.bf16.mxu0 %v422
  %2223 = vmatmul.mubr.bf16.gmra.mrb[0].mxu0 %v421
  %v2224 = vpop.f32.mrb[0].mxu0
  %v2225 = vadd.f32 %v348, %v2224
  %v2226 = vpop.f32.mrb[0].mxu0
  %v2227 = vadd.f32 %v352, %v2226
  %v2228 = vpop.f32.mrb[0].mxu0
  %v2229 = vadd.f32 %v348, %v2228
  %v2230 = vpop.f32.mrb[0].mxu0
  %v2231 = vadd.f32 %v352, %v2230
  %2232 = vmatprep.mubr.bf16.mxu0 %v424
  %2233 = vmatmul.mubr.bf16.gmra.mrb[0].mxu0 %v423
  %v2234 = vpop.f32.mrb[0].mxu0
  %v2235 = vadd.f32 %v348, %v2234
  %v2236 = vpop.f32.mrb[0].mxu0
  %v2237 = vadd.f32 %v352, %v2236
  %v2238 = vpop.f32.mrb[0].mxu0
  %v2239 = vadd.f32 %v348, %v2238
  %v2240 = vpop.f32.mrb[0].mxu0
  %v2241 = vadd.f32 %v352, %v2240
  %2242 = vmatprep.mubr.bf16.mxu0 %v426
  %2243 = vmatmul.mubr.bf16.gmra.mrb[0].mxu0 %v425
  %v2244 = vpop.f32.mrb[0].mxu0
  %v2245 = vadd.f32 %v348, %v2244
  %v2246 = vpop.f32.mrb[0].mxu0
  %v2247 = vadd.f32 %v352, %v2246
  %v2248 = vpop.f32.mrb[0].mxu0
  %v2249 = vadd.f32 %v348, %v2248
  %v2250 = vpop.f32.mrb[0].mxu0
  %v2251 = vadd.f32 %v352, %v2250
  %2252 = vmatprep.mubr.bf16.mxu0 %v428
  %2253 = vmatmul.mubr.bf16.gmra.mrb[0].mxu0 %v427
  %v2254 = vpop.f32.mrb[0].mxu0
  %v2255 = vadd.f32 %v348, %v2254
  %v2256 = vpop.f32.mrb[0].mxu0
  %v2257 = vadd.f32 %v352, %v2256
  %v2258 = vpop.f32.mrb[0].mxu0
  %v2259 = vadd.f32 %v348, %v2258
  %v2260 = vpop.f32.mrb[0].mxu0
  %v2261 = vadd.f32 %v352, %v2260
  %2262 = vmatprep.mubr.bf16.mxu0 %v430
  %2263 = vmatmul.mubr.bf16.gmra.mrb[0].mxu0 %v429
  %v2264 = vpop.f32.mrb[0].mxu0
  %v2265 = vadd.f32 %v348, %v2264
  %v2266 = vpop.f32.mrb[0].mxu0
  %v2267 = vadd.f32 %v352, %v2266
  %v2268 = vpop.f32.mrb[0].mxu0
  %v2269 = vadd.f32 %v348, %v2268
  %v2270 = vpop.f32.mrb[0].mxu0
  %v2271 = vadd.f32 %v352, %v2270
  %2272 = vmatprep.mubr.bf16.mxu0 %v432
  %2273 = vmatmul.mubr.bf16.gmra.mrb[0].mxu0 %v431
  %v2274 = vpop.f32.mrb[0].mxu0
  %v2275 = vadd.f32 %v348, %v2274
  %v2276 = vpop.f32.mrb[0].mxu0
  %v2277 = vadd.f32 %v352, %v2276
  %v2278 = vpop.f32.mrb[0].mxu0
  %v2279 = vadd.f32 %v348, %v2278
  %v2280 = vpop.f32.mrb[0].mxu0
  %v2281 = vadd.f32 %v352, %v2280
  %2282 = vdwg.mxu0
  %2283 = vmatprep.subr.bf16.mxu0 %v1226
  %2284 = vmatpush1.bf16.msra.mxu0 %v1225
  %2285 = vmatprep.subr.bf16.mxu0 %v1242
  %2286 = vmatpush1.bf16.msra.mxu0 %v1241
  %2287 = vmatprep.subr.bf16.mxu0 %v1258
  %2288 = vmatpush1.bf16.msra.mxu0 %v1257
  %2289 = vmatprep.subr.bf16.mxu0 %v1274
  %2290 = vmatpush1.bf16.msra.mxu0 %v1273
  %2291 = vmatprep.subr.bf16.mxu0 %v1290
  %2292 = vmatpush1.bf16.msra.mxu0 %v1289
  %2293 = vmatprep.subr.bf16.mxu0 %v1306
  %2294 = vmatpush1.bf16.msra.mxu0 %v1305
  %2295 = vmatprep.subr.bf16.mxu0 %v1322
  %2296 = vmatpush1.bf16.msra.mxu0 %v1321
  %2297 = vmatprep.subr.bf16.mxu0 %v1338
  %2298 = vmatpush1.bf16.msra.mxu0 %v1337
  %2299 = vmatprep.subr.bf16.mxu0 %v1354
  %2300 = vmatpush1.bf16.msra.mxu0 %v1353
  %2301 = vmatprep.subr.bf16.mxu0 %v1370
  %2302 = vmatpush1.bf16.msra.mxu0 %v1369
  %2303 = vmatprep.subr.bf16.mxu0 %v1386
  %2304 = vmatpush1.bf16.msra.mxu0 %v1385
  %2305 = vmatprep.subr.bf16.mxu0 %v1402
  %2306 = vmatpush1.bf16.msra.mxu0 %v1401
  %2307 = vmatprep.subr.bf16.mxu0 %v1418
  %2308 = vmatpush1.bf16.msra.mxu0 %v1417
  %2309 = vmatprep.subr.bf16.mxu0 %v1434
  %2310 = vmatpush1.bf16.msra.mxu0 %v1433
  %2311 = vmatprep.subr.bf16.mxu0 %v1450
  %2312 = vmatpush1.bf16.msra.mxu0 %v1449
  %2313 = vmatprep.subr.bf16.mxu0 %v1466
  %2314 = vmatpush1.bf16.msra.mxu0 %v1465
  %2315 = vmatprep.mubr.bf16.mxu0 %v422
  %2316 = vmatmul.mubr.bf16.gmra.mrb[0].mxu0 %v421
  %v2317 = vpop.f32.mrb[0].mxu0
  %v2318 = vadd.f32 %v356, %v2317
  %v2319 = vpop.f32.mrb[0].mxu0
  %v2320 = vadd.f32 %v360, %v2319
  %v2321 = vpop.f32.mrb[0].mxu0
  %v2322 = vadd.f32 %v356, %v2321
  %v2323 = vpop.f32.mrb[0].mxu0
  %v2324 = vadd.f32 %v360, %v2323
  %2325 = vmatprep.mubr.bf16.mxu0 %v424
  %2326 = vmatmul.mubr.bf16.gmra.mrb[0].mxu0 %v423
  %v2327 = vpop.f32.mrb[0].mxu0
  %v2328 = vadd.f32 %v356, %v2327
  %v2329 = vpop.f32.mrb[0].mxu0
  %v2330 = vadd.f32 %v360, %v2329
  %v2331 = vpop.f32.mrb[0].mxu0
  %v2332 = vadd.f32 %v356, %v2331
  %v2333 = vpop.f32.mrb[0].mxu0
  %v2334 = vadd.f32 %v360, %v2333
  %2335 = vmatprep.mubr.bf16.mxu0 %v426
  %2336 = vmatmul.mubr.bf16.gmra.mrb[0].mxu0 %v425
  %v2337 = vpop.f32.mrb[0].mxu0
  %v2338 = vadd.f32 %v356, %v2337
  %v2339 = vpop.f32.mrb[0].mxu0
  %v2340 = vadd.f32 %v360, %v2339
  %v2341 = vpop.f32.mrb[0].mxu0
  %v2342 = vadd.f32 %v356, %v2341
  %v2343 = vpop.f32.mrb[0].mxu0
  %v2344 = vadd.f32 %v360, %v2343
  %2345 = vmatprep.mubr.bf16.mxu0 %v428
  %2346 = vmatmul.mubr.bf16.gmra.mrb[0].mxu0 %v427
  %v2347 = vpop.f32.mrb[0].mxu0
  %v2348 = vadd.f32 %v356, %v2347
  %v2349 = vpop.f32.mrb[0].mxu0
  %v2350 = vadd.f32 %v360, %v2349
  %v2351 = vpop.f32.mrb[0].mxu0
  %v2352 = vadd.f32 %v356, %v2351
  %v2353 = vpop.f32.mrb[0].mxu0
  %v2354 = vadd.f32 %v360, %v2353
  %2355 = vmatprep.mubr.bf16.mxu0 %v430
  %2356 = vmatmul.mubr.bf16.gmra.mrb[0].mxu0 %v429
  %v2357 = vpop.f32.mrb[0].mxu0
  %v2358 = vadd.f32 %v356, %v2357
  %v2359 = vpop.f32.mrb[0].mxu0
  %v2360 = vadd.f32 %v360, %v2359
  %v2361 = vpop.f32.mrb[0].mxu0
  %v2362 = vadd.f32 %v356, %v2361
  %v2363 = vpop.f32.mrb[0].mxu0
  %v2364 = vadd.f32 %v360, %v2363
  %2365 = vmatprep.mubr.bf16.mxu0 %v432
  %2366 = vmatmul.mubr.bf16.gmra.mrb[0].mxu0 %v431
  %v2367 = vpop.f32.mrb[0].mxu0
  %v2368 = vadd.f32 %v356, %v2367
  %v2369 = vpop.f32.mrb[0].mxu0
  %v2370 = vadd.f32 %v360, %v2369
  %v2371 = vpop.f32.mrb[0].mxu0
  %v2372 = vadd.f32 %v356, %v2371
  %v2373 = vpop.f32.mrb[0].mxu0
  %v2374 = vadd.f32 %v360, %v2373
  %2375 = vdwg.mxu0
  %2376 = vmatprep.subr.bf16.mxu0 %v1228
  %2377 = vmatpush1.bf16.msra.mxu0 %v1227
  %2378 = vmatprep.subr.bf16.mxu0 %v1244
  %2379 = vmatpush1.bf16.msra.mxu0 %v1243
  %2380 = vmatprep.subr.bf16.mxu0 %v1260
  %2381 = vmatpush1.bf16.msra.mxu0 %v1259
  %2382 = vmatprep.subr.bf16.mxu0 %v1276
  %2383 = vmatpush1.bf16.msra.mxu0 %v1275
  %2384 = vmatprep.subr.bf16.mxu0 %v1292
  %2385 = vmatpush1.bf16.msra.mxu0 %v1291
  %2386 = vmatprep.subr.bf16.mxu0 %v1308
  %2387 = vmatpush1.bf16.msra.mxu0 %v1307
  %2388 = vmatprep.subr.bf16.mxu0 %v1324
  %2389 = vmatpush1.bf16.msra.mxu0 %v1323
  %2390 = vmatprep.subr.bf16.mxu0 %v1340
  %2391 = vmatpush1.bf16.msra.mxu0 %v1339
  %2392 = vmatprep.subr.bf16.mxu0 %v1356
  %2393 = vmatpush1.bf16.msra.mxu0 %v1355
  %2394 = vmatprep.subr.bf16.mxu0 %v1372
  %2395 = vmatpush1.bf16.msra.mxu0 %v1371
  %2396 = vmatprep.subr.bf16.mxu0 %v1388
  %2397 = vmatpush1.bf16.msra.mxu0 %v1387
  %2398 = vmatprep.subr.bf16.mxu0 %v1404
  %2399 = vmatpush1.bf16.msra.mxu0 %v1403
  %2400 = vmatprep.subr.bf16.mxu0 %v1420
  %2401 = vmatpush1.bf16.msra.mxu0 %v1419
  %2402 = vmatprep.subr.bf16.mxu0 %v1436
  %2403 = vmatpush1.bf16.msra.mxu0 %v1435
  %2404 = vmatprep.subr.bf16.mxu0 %v1452
  %2405 = vmatpush1.bf16.msra.mxu0 %v1451
  %2406 = vmatprep.subr.bf16.mxu0 %v1468
  %2407 = vmatpush1.bf16.msra.mxu0 %v1467
  %2408 = vmatprep.mubr.bf16.mxu0 %v422
  %2409 = vmatmul.mubr.bf16.gmra.mrb[0].mxu0 %v421
  %v2410 = vpop.f32.mrb[0].mxu0
  %v2411 = vadd.f32 %v364, %v2410
  %v2412 = vpop.f32.mrb[0].mxu0
  %v2413 = vadd.f32 %v368, %v2412
  %v2414 = vpop.f32.mrb[0].mxu0
  %v2415 = vadd.f32 %v364, %v2414
  %v2416 = vpop.f32.mrb[0].mxu0
  %v2417 = vadd.f32 %v368, %v2416
  %2418 = vmatprep.mubr.bf16.mxu0 %v424
  %2419 = vmatmul.mubr.bf16.gmra.mrb[0].mxu0 %v423
  %v2420 = vpop.f32.mrb[0].mxu0
  %v2421 = vadd.f32 %v364, %v2420
  %v2422 = vpop.f32.mrb[0].mxu0
  %v2423 = vadd.f32 %v368, %v2422
  %v2424 = vpop.f32.mrb[0].mxu0
  %v2425 = vadd.f32 %v364, %v2424
  %v2426 = vpop.f32.mrb[0].mxu0
  %v2427 = vadd.f32 %v368, %v2426
  %2428 = vmatprep.mubr.bf16.mxu0 %v426
  %2429 = vmatmul.mubr.bf16.gmra.mrb[0].mxu0 %v425
  %v2430 = vpop.f32.mrb[0].mxu0
  %v2431 = vadd.f32 %v364, %v2430
  %v2432 = vpop.f32.mrb[0].mxu0
  %v2433 = vadd.f32 %v368, %v2432
  %v2434 = vpop.f32.mrb[0].mxu0
  %v2435 = vadd.f32 %v364, %v2434
  %v2436 = vpop.f32.mrb[0].mxu0
  %v2437 = vadd.f32 %v368, %v2436
  %2438 = vmatprep.mubr.bf16.mxu0 %v428
  %2439 = vmatmul.mubr.bf16.gmra.mrb[0].mxu0 %v427
  %v2440 = vpop.f32.mrb[0].mxu0
  %v2441 = vadd.f32 %v364, %v2440
  %v2442 = vpop.f32.mrb[0].mxu0
  %v2443 = vadd.f32 %v368, %v2442
  %v2444 = vpop.f32.mrb[0].mxu0
  %v2445 = vadd.f32 %v364, %v2444
  %v2446 = vpop.f32.mrb[0].mxu0
  %v2447 = vadd.f32 %v368, %v2446
  %2448 = vmatprep.mubr.bf16.mxu0 %v430
  %2449 = vmatmul.mubr.bf16.gmra.mrb[0].mxu0 %v429
  %v2450 = vpop.f32.mrb[0].mxu0
  %v2451 = vadd.f32 %v364, %v2450
  %v2452 = vpop.f32.mrb[0].mxu0
  %v2453 = vadd.f32 %v368, %v2452
  %v2454 = vpop.f32.mrb[0].mxu0
  %v2455 = vadd.f32 %v364, %v2454
  %v2456 = vpop.f32.mrb[0].mxu0
  %v2457 = vadd.f32 %v368, %v2456
  %2458 = vmatprep.mubr.bf16.mxu0 %v432
  %2459 = vmatmul.mubr.bf16.gmra.mrb[0].mxu0 %v431
  %v2460 = vpop.f32.mrb[0].mxu0
  %v2461 = vadd.f32 %v364, %v2460
  %v2462 = vpop.f32.mrb[0].mxu0
  %v2463 = vadd.f32 %v368, %v2462
  %v2464 = vpop.f32.mrb[0].mxu0
  %v2465 = vadd.f32 %v364, %v2464
  %v2466 = vpop.f32.mrb[0].mxu0
  %v2467 = vadd.f32 %v368, %v2466
  %2468 = vdwg.mxu0
  %v2469 = vpack.c.bf16 %v1764, %v1760
  %v2470 = vpack.c.bf16 %v1766, %v1762
  %v2471 = vpack.c.bf16 %v1857, %v1853
  %v2472 = vpack.c.bf16 %v1859, %v1855
  %v2473 = vpack.c.bf16 %v1950, %v1946
  %v2474 = vpack.c.bf16 %v1952, %v1948
  %v2475 = vpack.c.bf16 %v2043, %v2039
  %v2476 = vpack.c.bf16 %v2045, %v2041
  %v2477 = vpack.c.bf16 %v2136, %v2132
  %v2478 = vpack.c.bf16 %v2138, %v2134
  %v2479 = vpack.c.bf16 %v2229, %v2225
  %v2480 = vpack.c.bf16 %v2231, %v2227
  %v2481 = vpack.c.bf16 %v2322, %v2318
  %v2482 = vpack.c.bf16 %v2324, %v2320
  %v2483 = vpack.c.bf16 %v2415, %v2411
  %v2484 = vpack.c.bf16 %v2417, %v2413
  %v2485 = vpack.c.bf16 %v1774, %v1770
  %v2486 = vpack.c.bf16 %v1776, %v1772
  %v2487 = vpack.c.bf16 %v1867, %v1863
  %v2488 = vpack.c.bf16 %v1869, %v1865
  %v2489 = vpack.c.bf16 %v1960, %v1956
  %v2490 = vpack.c.bf16 %v1962, %v1958
  %v2491 = vpack.c.bf16 %v2053, %v2049
  %v2492 = vpack.c.bf16 %v2055, %v2051
  %v2493 = vpack.c.bf16 %v2146, %v2142
  %v2494 = vpack.c.bf16 %v2148, %v2144
  %v2495 = vpack.c.bf16 %v2239, %v2235
  %v2496 = vpack.c.bf16 %v2241, %v2237
  %v2497 = vpack.c.bf16 %v2332, %v2328
  %v2498 = vpack.c.bf16 %v2334, %v2330
  %v2499 = vpack.c.bf16 %v2425, %v2421
  %v2500 = vpack.c.bf16 %v2427, %v2423
  %v2501 = vpack.c.bf16 %v1784, %v1780
  %v2502 = vpack.c.bf16 %v1786, %v1782
  %v2503 = vpack.c.bf16 %v1877, %v1873
  %v2504 = vpack.c.bf16 %v1879, %v1875
  %v2505 = vpack.c.bf16 %v1970, %v1966
  %v2506 = vpack.c.bf16 %v1972, %v1968
  %v2507 = vpack.c.bf16 %v2063, %v2059
  %v2508 = vpack.c.bf16 %v2065, %v2061
  %v2509 = vpack.c.bf16 %v2156, %v2152
  %v2510 = vpack.c.bf16 %v2158, %v2154
  %v2511 = vpack.c.bf16 %v2249, %v2245
  %v2512 = vpack.c.bf16 %v2251, %v2247
  %v2513 = vpack.c.bf16 %v2342, %v2338
  %v2514 = vpack.c.bf16 %v2344, %v2340
  %v2515 = vpack.c.bf16 %v2435, %v2431
  %v2516 = vpack.c.bf16 %v2437, %v2433
  %v2517 = vpack.c.bf16 %v1794, %v1790
  %v2518 = vpack.c.bf16 %v1796, %v1792
  %v2519 = vpack.c.bf16 %v1887, %v1883
  %v2520 = vpack.c.bf16 %v1889, %v1885
  %v2521 = vpack.c.bf16 %v1980, %v1976
  %v2522 = vpack.c.bf16 %v1982, %v1978
  %v2523 = vpack.c.bf16 %v2073, %v2069
  %v2524 = vpack.c.bf16 %v2075, %v2071
  %v2525 = vpack.c.bf16 %v2166, %v2162
  %v2526 = vpack.c.bf16 %v2168, %v2164
  %v2527 = vpack.c.bf16 %v2259, %v2255
  %v2528 = vpack.c.bf16 %v2261, %v2257
  %v2529 = vpack.c.bf16 %v2352, %v2348
  %v2530 = vpack.c.bf16 %v2354, %v2350
  %v2531 = vpack.c.bf16 %v2445, %v2441
  %v2532 = vpack.c.bf16 %v2447, %v2443
  %v2533 = vpack.c.bf16 %v1804, %v1800
  %v2534 = vpack.c.bf16 %v1806, %v1802
  %v2535 = vpack.c.bf16 %v1897, %v1893
  %v2536 = vpack.c.bf16 %v1899, %v1895
  %v2537 = vpack.c.bf16 %v1990, %v1986
  %v2538 = vpack.c.bf16 %v1992, %v1988
  %v2539 = vpack.c.bf16 %v2083, %v2079
  %v2540 = vpack.c.bf16 %v2085, %v2081
  %v2541 = vpack.c.bf16 %v2176, %v2172
  %v2542 = vpack.c.bf16 %v2178, %v2174
  %v2543 = vpack.c.bf16 %v2269, %v2265
  %v2544 = vpack.c.bf16 %v2271, %v2267
  %v2545 = vpack.c.bf16 %v2362, %v2358
  %v2546 = vpack.c.bf16 %v2364, %v2360
  %v2547 = vpack.c.bf16 %v2455, %v2451
  %v2548 = vpack.c.bf16 %v2457, %v2453
  %v2549 = vpack.c.bf16 %v1814, %v1810
  %v2550 = vpack.c.bf16 %v1816, %v1812
  %v2551 = vpack.c.bf16 %v1907, %v1903
  %v2552 = vpack.c.bf16 %v1909, %v1905
  %v2553 = vpack.c.bf16 %v2000, %v1996
  %v2554 = vpack.c.bf16 %v2002, %v1998
  %v2555 = vpack.c.bf16 %v2093, %v2089
  %v2556 = vpack.c.bf16 %v2095, %v2091
  %v2557 = vpack.c.bf16 %v2186, %v2182
  %v2558 = vpack.c.bf16 %v2188, %v2184
  %v2559 = vpack.c.bf16 %v2279, %v2275
  %v2560 = vpack.c.bf16 %v2281, %v2277
  %v2561 = vpack.c.bf16 %v2372, %v2368
  %v2562 = vpack.c.bf16 %v2374, %v2370
  %v2563 = vpack.c.bf16 %v2465, %v2461
  %v2564 = vpack.c.bf16 %v2467, %v2463
  %2565 = vst [vmem:[#allocation2] sm:$0xff] %v2469
  %2566 = vst [vmem:[#allocation2 + $0x8] sm:$0xff] %v2470
  %2567 = vst [vmem:[#allocation2 + $0x10] sm:$0xff] %v2471
  %2568 = vst [vmem:[#allocation2 + $0x18] sm:$0xff] %v2472
  %2569 = vst [vmem:[#allocation2 + $0x20] sm:$0xff] %v2473
  %2570 = vst [vmem:[#allocation2 + $0x28] sm:$0xff] %v2474
  %2571 = vst [vmem:[#allocation2 + $0x30] sm:$0xff] %v2475
  %2572 = vst [vmem:[#allocation2 + $0x38] sm:$0xff] %v2476
  %2573 = vst [vmem:[#allocation2 + $0x40] sm:$0xff] %v2477
  %2574 = vst [vmem:[#allocation2 + $0x48] sm:$0xff] %v2478
  %2575 = vst [vmem:[#allocation2 + $0x50] sm:$0xff] %v2479
  %2576 = vst [vmem:[#allocation2 + $0x58] sm:$0xff] %v2480
  %2577 = vst [vmem:[#allocation2 + $0x60] sm:$0xff] %v2481
  %2578 = vst [vmem:[#allocation2 + $0x68] sm:$0xff] %v2482
  %2579 = vst [vmem:[#allocation2 + $0x70] sm:$0xff] %v2483
  %2580 = vst [vmem:[#allocation2 + $0x78] sm:$0xff] %v2484
  %2581 = vst [vmem:[#allocation2 + $0x80] sm:$0xff] %v2485
  %2582 = vst [vmem:[#allocation2 + $0x88] sm:$0xff] %v2486
  %2583 = vst [vmem:[#allocation2 + $0x90] sm:$0xff] %v2487
  %2584 = vst [vmem:[#allocation2 + $0x98] sm:$0xff] %v2488
  %2585 = vst [vmem:[#allocation2 + $0xa0] sm:$0xff] %v2489
  %2586 = vst [vmem:[#allocation2 + $0xa8] sm:$0xff] %v2490
  %2587 = vst [vmem:[#allocation2 + $0xb0] sm:$0xff] %v2491
  %2588 = vst [vmem:[#allocation2 + $0xb8] sm:$0xff] %v2492
  %2589 = vst [vmem:[#allocation2 + $0xc0] sm:$0xff] %v2493
  %2590 = vst [vmem:[#allocation2 + $0xc8] sm:$0xff] %v2494
  %2591 = vst [vmem:[#allocation2 + $0xd0] sm:$0xff] %v2495
  %2592 = vst [vmem:[#allocation2 + $0xd8] sm:$0xff] %v2496
  %2593 = vst [vmem:[#allocation2 + $0xe0] sm:$0xff] %v2497
  %2594 = vst [vmem:[#allocation2 + $0xe8] sm:$0xff] %v2498
  %2595 = vst [vmem:[#allocation2 + $0xf0] sm:$0xff] %v2499
  %2596 = vst [vmem:[#allocation2 + $0xf8] sm:$0xff] %v2500
  %2597 = vst [vmem:[#allocation2 + $0x100] sm:$0xff] %v2501
  %2598 = vst [vmem:[#allocation2 + $0x108] sm:$0xff] %v2502
  %2599 = vst [vmem:[#allocation2 + $0x110] sm:$0xff] %v2503
  %2600 = vst [vmem:[#allocation2 + $0x118] sm:$0xff] %v2504
  %2601 = vst [vmem:[#allocation2 + $0x120] sm:$0xff] %v2505
  %2602 = vst [vmem:[#allocation2 + $0x128] sm:$0xff] %v2506
  %2603 = vst [vmem:[#allocation2 + $0x130] sm:$0xff] %v2507
  %2604 = vst [vmem:[#allocation2 + $0x138] sm:$0xff] %v2508
  %2605 = vst [vmem:[#allocation2 + $0x140] sm:$0xff] %v2509
  %2606 = vst [vmem:[#allocation2 + $0x148] sm:$0xff] %v2510
  %2607 = vst [vmem:[#allocation2 + $0x150] sm:$0xff] %v2511
  %2608 = vst [vmem:[#allocation2 + $0x158] sm:$0xff] %v2512
  %2609 = vst [vmem:[#allocation2 + $0x160] sm:$0xff] %v2513
  %2610 = vst [vmem:[#allocation2 + $0x168] sm:$0xff] %v2514
  %2611 = vst [vmem:[#allocation2 + $0x170] sm:$0xff] %v2515
  %2612 = vst [vmem:[#allocation2 + $0x178] sm:$0xff] %v2516
  %2613 = vst [vmem:[#allocation2 + $0x180] sm:$0xff] %v2517
  %2614 = vst [vmem:[#allocation2 + $0x188] sm:$0xff] %v2518
  %2615 = vst [vmem:[#allocation2 + $0x190] sm:$0xff] %v2519
  %2616 = vst [vmem:[#allocation2 + $0x198] sm:$0xff] %v2520
  %2617 = vst [vmem:[#allocation2 + $0x1a0] sm:$0xff] %v2521
  %2618 = vst [vmem:[#allocation2 + $0x1a8] sm:$0xff] %v2522
  %2619 = vst [vmem:[#allocation2 + $0x1b0] sm:$0xff] %v2523
  %2620 = vst [vmem:[#allocation2 + $0x1b8] sm:$0xff] %v2524
  %2621 = vst [vmem:[#allocation2 + $0x1c0] sm:$0xff] %v2525
  %2622 = vst [vmem:[#allocation2 + $0x1c8] sm:$0xff] %v2526
  %2623 = vst [vmem:[#allocation2 + $0x1d0] sm:$0xff] %v2527
  %2624 = vst [vmem:[#allocation2 + $0x1d8] sm:$0xff] %v2528
  %2625 = vst [vmem:[#allocation2 + $0x1e0] sm:$0xff] %v2529
  %2626 = vst [vmem:[#allocation2 + $0x1e8] sm:$0xff] %v2530
  %2627 = vst [vmem:[#allocation2 + $0x1f0] sm:$0xff] %v2531
  %2628 = vst [vmem:[#allocation2 + $0x1f8] sm:$0xff] %v2532
  %2629 = vst [vmem:[#allocation2 + $0x200] sm:$0xff] %v2533
  %2630 = vst [vmem:[#allocation2 + $0x208] sm:$0xff] %v2534
  %2631 = vst [vmem:[#allocation2 + $0x210] sm:$0xff] %v2535
  %2632 = vst [vmem:[#allocation2 + $0x218] sm:$0xff] %v2536
  %2633 = vst [vmem:[#allocation2 + $0x220] sm:$0xff] %v2537
  %2634 = vst [vmem:[#allocation2 + $0x228] sm:$0xff] %v2538
  %2635 = vst [vmem:[#allocation2 + $0x230] sm:$0xff] %v2539
  %2636 = vst [vmem:[#allocation2 + $0x238] sm:$0xff] %v2540
  %2637 = vst [vmem:[#allocation2 + $0x240] sm:$0xff] %v2541
  %2638 = vst [vmem:[#allocation2 + $0x248] sm:$0xff] %v2542
  %2639 = vst [vmem:[#allocation2 + $0x250] sm:$0xff] %v2543
  %2640 = vst [vmem:[#allocation2 + $0x258] sm:$0xff] %v2544
  %2641 = vst [vmem:[#allocation2 + $0x260] sm:$0xff] %v2545
  %2642 = vst [vmem:[#allocation2 + $0x268] sm:$0xff] %v2546
  %2643 = vst [vmem:[#allocation2 + $0x270] sm:$0xff] %v2547
  %2644 = vst [vmem:[#allocation2 + $0x278] sm:$0xff] %v2548
  %2645 = vst [vmem:[#allocation2 + $0x280] sm:$0xff] %v2549
  %2646 = vst [vmem:[#allocation2 + $0x288] sm:$0xff] %v2550
  %2647 = vst [vmem:[#allocation2 + $0x290] sm:$0xff] %v2551
  %2648 = vst [vmem:[#allocation2 + $0x298] sm:$0xff] %v2552
  %2649 = vst [vmem:[#allocation2 + $0x2a0] sm:$0xff] %v2553
  %2650 = vst [vmem:[#allocation2 + $0x2a8] sm:$0xff] %v2554
  %2651 = vst [vmem:[#allocation2 + $0x2b0] sm:$0xff] %v2555
  %2652 = vst [vmem:[#allocation2 + $0x2b8] sm:$0xff] %v2556
  %2653 = vst [vmem:[#allocation2 + $0x2c0] sm:$0xff] %v2557
  %2654 = vst [vmem:[#allocation2 + $0x2c8] sm:$0xff] %v2558
  %2655 = vst [vmem:[#allocation2 + $0x2d0] sm:$0xff] %v2559
  %2656 = vst [vmem:[#allocation2 + $0x2d8] sm:$0xff] %v2560
  %2657 = vst [vmem:[#allocation2 + $0x2e0] sm:$0xff] %v2561
  %2658 = vst [vmem:[#allocation2 + $0x2e8] sm:$0xff] %v2562
  %2659 = vst [vmem:[#allocation2 + $0x2f0] sm:$0xff] %v2563
  %2660 = vst [vmem:[#allocation2 + $0x2f8] sm:$0xff] %v2564
  loop: start=0, step=1, limit=6
  $region38: #{forward.5} parent=0 // loop_pre_header
    _
  $region39: #{forward.5} parent=0 // loop_header
    %s2662 = sphi 0, %s2666
    %p2663 = scmp.ge.s32.totalorder %s2662, 6
    %v2667 = vphi 0.0, %v4752
    %v2668 = vphi 0.0, %v4753
    %v2669 = vphi 0.0, %v4754
    %v2670 = vphi 0.0, %v4755
    %v2671 = vphi 0.0, %v4744
    %v2672 = vphi 0.0, %v4745
    %v2673 = vphi 0.0, %v4746
    %v2674 = vphi 0.0, %v4747
    %v2675 = vphi 0.0, %v4848
    %v2676 = vphi 0.0, %v4849
    %v2677 = vphi 0.0, %v4850
    %v2678 = vphi 0.0, %v4851
    %v2679 = vphi 0.0, %v4840
    %v2680 = vphi 0.0, %v4841
    %v2681 = vphi 0.0, %v4842
    %v2682 = vphi 0.0, %v4843
  $region40: #{forward.5} parent=0 // loop_header_branch
    %2665 = sbr.rel (%p2663) target = $region44
  $region41: #{forward.5} parent=0 // loop_body
    %v2683 = vpack.c.bf16 %v2669, %v2667
    %v2684 = vpack.c.bf16 %v2670, %v2668
    %v2685 = vld [vmem:[%s3] sm:$0xff]
    %v2686 = vld [vmem:[%s3 + $0x8] sm:$0xff]
    %v2687 = vld [vmem:[%s3 + $0x10] sm:$0xff]
    %v2688 = vld [vmem:[%s3 + $0x18] sm:$0xff]
    %v2689 = vld [vmem:[%s3 + $0x20] sm:$0xff]
    %v2690 = vld [vmem:[%s3 + $0x28] sm:$0xff]
    %v2691 = vld [vmem:[%s3 + $0x30] sm:$0xff]
    %v2692 = vld [vmem:[%s3 + $0x38] sm:$0xff]
    %v2693 = vld [vmem:[%s3 + $0x40] sm:$0xff]
    %v2694 = vld [vmem:[%s3 + $0x48] sm:$0xff]
    %v2695 = vld [vmem:[%s3 + $0x50] sm:$0xff]
    %v2696 = vld [vmem:[%s3 + $0x58] sm:$0xff]
    %v2697 = vld [vmem:[%s3 + $0x60] sm:$0xff]
    %v2698 = vld [vmem:[%s3 + $0x68] sm:$0xff]
    %v2699 = vld [vmem:[%s3 + $0x70] sm:$0xff]
    %v2700 = vld [vmem:[%s3 + $0x78] sm:$0xff]
    %v2701 = vld [vmem:[%s3 + $0x80] sm:$0xff]
    %v2702 = vld [vmem:[%s3 + $0x88] sm:$0xff]
    %v2703 = vld [vmem:[%s3 + $0x90] sm:$0xff]
    %v2704 = vld [vmem:[%s3 + $0x98] sm:$0xff]
    %v2705 = vld [vmem:[%s3 + $0xa0] sm:$0xff]
    %v2706 = vld [vmem:[%s3 + $0xa8] sm:$0xff]
    %v2707 = vld [vmem:[%s3 + $0xb0] sm:$0xff]
    %v2708 = vld [vmem:[%s3 + $0xb8] sm:$0xff]
    %v2709 = vld [vmem:[%s3 + $0xc0] sm:$0xff]
    %v2710 = vld [vmem:[%s3 + $0xc8] sm:$0xff]
    %v2711 = vld [vmem:[%s3 + $0xd0] sm:$0xff]
    %v2712 = vld [vmem:[%s3 + $0xd8] sm:$0xff]
    %v2713 = vld [vmem:[%s3 + $0xe0] sm:$0xff]
    %v2714 = vld [vmem:[%s3 + $0xe8] sm:$0xff]
    %v2715 = vld [vmem:[%s3 + $0xf0] sm:$0xff]
    %v2716 = vld [vmem:[%s3 + $0xf8] sm:$0xff]
    %v2717 = vld [vmem:[%s3 + $0x100] sm:$0xff]
    %v2718 = vld [vmem:[%s3 + $0x108] sm:$0xff]
    %v2719 = vld [vmem:[%s3 + $0x110] sm:$0xff]
    %v2720 = vld [vmem:[%s3 + $0x118] sm:$0xff]
    %v2721 = vld [vmem:[%s3 + $0x120] sm:$0xff]
    %v2722 = vld [vmem:[%s3 + $0x128] sm:$0xff]
    %v2723 = vld [vmem:[%s3 + $0x130] sm:$0xff]
    %v2724 = vld [vmem:[%s3 + $0x138] sm:$0xff]
    %v2725 = vld [vmem:[%s3 + $0x140] sm:$0xff]
    %v2726 = vld [vmem:[%s3 + $0x148] sm:$0xff]
    %v2727 = vld [vmem:[%s3 + $0x150] sm:$0xff]
    %v2728 = vld [vmem:[%s3 + $0x158] sm:$0xff]
    %v2729 = vld [vmem:[%s3 + $0x160] sm:$0xff]
    %v2730 = vld [vmem:[%s3 + $0x168] sm:$0xff]
    %v2731 = vld [vmem:[%s3 + $0x170] sm:$0xff]
    %v2732 = vld [vmem:[%s3 + $0x178] sm:$0xff]
    %v2733 = vld [vmem:[%s3 + $0x180] sm:$0xff]
    %v2734 = vld [vmem:[%s3 + $0x188] sm:$0xff]
    %v2735 = vld [vmem:[%s3 + $0x190] sm:$0xff]
    %v2736 = vld [vmem:[%s3 + $0x198] sm:$0xff]
    %v2737 = vld [vmem:[%s3 + $0x1a0] sm:$0xff]
    %v2738 = vld [vmem:[%s3 + $0x1a8] sm:$0xff]
    %v2739 = vld [vmem:[%s3 + $0x1b0] sm:$0xff]
    %v2740 = vld [vmem:[%s3 + $0x1b8] sm:$0xff]
    %v2741 = vld [vmem:[%s3 + $0x1c0] sm:$0xff]
    %v2742 = vld [vmem:[%s3 + $0x1c8] sm:$0xff]
    %v2743 = vld [vmem:[%s3 + $0x1d0] sm:$0xff]
    %v2744 = vld [vmem:[%s3 + $0x1d8] sm:$0xff]
    %v2745 = vld [vmem:[%s3 + $0x1e0] sm:$0xff]
    %v2746 = vld [vmem:[%s3 + $0x1e8] sm:$0xff]
    %v2747 = vld [vmem:[%s3 + $0x1f0] sm:$0xff]
    %v2748 = vld [vmem:[%s3 + $0x1f8] sm:$0xff]
    %v2749 = vld [vmem:[%s3 + $0x200] sm:$0xff]
    %v2750 = vld [vmem:[%s3 + $0x208] sm:$0xff]
    %v2751 = vld [vmem:[%s3 + $0x210] sm:$0xff]
    %v2752 = vld [vmem:[%s3 + $0x218] sm:$0xff]
    %v2753 = vld [vmem:[%s3 + $0x220] sm:$0xff]
    %v2754 = vld [vmem:[%s3 + $0x228] sm:$0xff]
    %v2755 = vld [vmem:[%s3 + $0x230] sm:$0xff]
    %v2756 = vld [vmem:[%s3 + $0x238] sm:$0xff]
    %v2757 = vld [vmem:[%s3 + $0x240] sm:$0xff]
    %v2758 = vld [vmem:[%s3 + $0x248] sm:$0xff]
    %v2759 = vld [vmem:[%s3 + $0x250] sm:$0xff]
    %v2760 = vld [vmem:[%s3 + $0x258] sm:$0xff]
    %v2761 = vld [vmem:[%s3 + $0x260] sm:$0xff]
    %v2762 = vld [vmem:[%s3 + $0x268] sm:$0xff]
    %v2763 = vld [vmem:[%s3 + $0x270] sm:$0xff]
    %v2764 = vld [vmem:[%s3 + $0x278] sm:$0xff]
    %v2765 = vld [vmem:[%s3 + $0x280] sm:$0xff]
    %v2766 = vld [vmem:[%s3 + $0x288] sm:$0xff]
    %v2767 = vld [vmem:[%s3 + $0x290] sm:$0xff]
    %v2768 = vld [vmem:[%s3 + $0x298] sm:$0xff]
    %v2769 = vld [vmem:[%s3 + $0x2a0] sm:$0xff]
    %v2770 = vld [vmem:[%s3 + $0x2a8] sm:$0xff]
    %v2771 = vld [vmem:[%s3 + $0x2b0] sm:$0xff]
    %v2772 = vld [vmem:[%s3 + $0x2b8] sm:$0xff]
    %v2773 = vld [vmem:[%s3 + $0x2c0] sm:$0xff]
    %v2774 = vld [vmem:[%s3 + $0x2c8] sm:$0xff]
    %v2775 = vld [vmem:[%s3 + $0x2d0] sm:$0xff]
    %v2776 = vld [vmem:[%s3 + $0x2d8] sm:$0xff]
    %v2777 = vld [vmem:[%s3 + $0x2e0] sm:$0xff]
    %v2778 = vld [vmem:[%s3 + $0x2e8] sm:$0xff]
    %v2779 = vld [vmem:[%s3 + $0x2f0] sm:$0xff]
    %v2780 = vld [vmem:[%s3 + $0x2f8] sm:$0xff]
    %v2781 = vld [vmem:[%s3 + $0x300] sm:$0xff]
    %v2782 = vld [vmem:[%s3 + $0x308] sm:$0xff]
    %v2783 = vld [vmem:[%s3 + $0x310] sm:$0xff]
    %v2784 = vld [vmem:[%s3 + $0x318] sm:$0xff]
    %v2785 = vld [vmem:[%s3 + $0x320] sm:$0xff]
    %v2786 = vld [vmem:[%s3 + $0x328] sm:$0xff]
    %v2787 = vld [vmem:[%s3 + $0x330] sm:$0xff]
    %v2788 = vld [vmem:[%s3 + $0x338] sm:$0xff]
    %v2789 = vld [vmem:[%s3 + $0x340] sm:$0xff]
    %v2790 = vld [vmem:[%s3 + $0x348] sm:$0xff]
    %v2791 = vld [vmem:[%s3 + $0x350] sm:$0xff]
    %v2792 = vld [vmem:[%s3 + $0x358] sm:$0xff]
    %v2793 = vld [vmem:[%s3 + $0x360] sm:$0xff]
    %v2794 = vld [vmem:[%s3 + $0x368] sm:$0xff]
    %v2795 = vld [vmem:[%s3 + $0x370] sm:$0xff]
    %v2796 = vld [vmem:[%s3 + $0x378] sm:$0xff]
    %v2797 = vld [vmem:[%s3 + $0x380] sm:$0xff]
    %v2798 = vld [vmem:[%s3 + $0x388] sm:$0xff]
    %v2799 = vld [vmem:[%s3 + $0x390] sm:$0xff]
    %v2800 = vld [vmem:[%s3 + $0x398] sm:$0xff]
    %v2801 = vld [vmem:[%s3 + $0x3a0] sm:$0xff]
    %v2802 = vld [vmem:[%s3 + $0x3a8] sm:$0xff]
    %v2803 = vld [vmem:[%s3 + $0x3b0] sm:$0xff]
    %v2804 = vld [vmem:[%s3 + $0x3b8] sm:$0xff]
    %v2805 = vld [vmem:[%s3 + $0x3c0] sm:$0xff]
    %v2806 = vld [vmem:[%s3 + $0x3c8] sm:$0xff]
    %v2807 = vld [vmem:[%s3 + $0x3d0] sm:$0xff]
    %v2808 = vld [vmem:[%s3 + $0x3d8] sm:$0xff]
    %v2809 = vld [vmem:[%s3 + $0x3e0] sm:$0xff]
    %v2810 = vld [vmem:[%s3 + $0x3e8] sm:$0xff]
    %v2811 = vld [vmem:[%s3 + $0x3f0] sm:$0xff]
    %v2812 = vld [vmem:[%s3 + $0x3f8] sm:$0xff]
    %v2941 = vunpack.c.l.b16 %v2685
    %v2942 = vunpack.c.h.b16 %v2685
    %v2943 = vunpack.c.l.b16 %v2686
    %v2944 = vunpack.c.h.b16 %v2686
    %v2945 = vunpack.c.l.b16 %v2687
    %v2946 = vunpack.c.h.b16 %v2687
    %v2947 = vunpack.c.l.b16 %v2688
    %v2948 = vunpack.c.h.b16 %v2688
    %v2949 = vunpack.c.l.b16 %v2689
    %v2950 = vunpack.c.h.b16 %v2689
    %v2951 = vunpack.c.l.b16 %v2690
    %v2952 = vunpack.c.h.b16 %v2690
    %v2953 = vunpack.c.l.b16 %v2691
    %v2954 = vunpack.c.h.b16 %v2691
    %v2955 = vunpack.c.l.b16 %v2692
    %v2956 = vunpack.c.h.b16 %v2692
    %v2957 = vunpack.c.l.b16 %v2693
    %v2958 = vunpack.c.h.b16 %v2693
    %v2959 = vunpack.c.l.b16 %v2694
    %v2960 = vunpack.c.h.b16 %v2694
    %v2961 = vunpack.c.l.b16 %v2695
    %v2962 = vunpack.c.h.b16 %v2695
    %v2963 = vunpack.c.l.b16 %v2696
    %v2964 = vunpack.c.h.b16 %v2696
    %v2965 = vunpack.c.l.b16 %v2697
    %v2966 = vunpack.c.h.b16 %v2697
    %v2967 = vunpack.c.l.b16 %v2698
    %v2968 = vunpack.c.h.b16 %v2698
    %v2969 = vunpack.c.l.b16 %v2699
    %v2970 = vunpack.c.h.b16 %v2699
    %v2971 = vunpack.c.l.b16 %v2700
    %v2972 = vunpack.c.h.b16 %v2700
    %v2973 = vunpack.c.l.b16 %v2701
    %v2974 = vunpack.c.h.b16 %v2701
    %v2975 = vunpack.c.l.b16 %v2702
    %v2976 = vunpack.c.h.b16 %v2702
    %v2977 = vunpack.c.l.b16 %v2703
    %v2978 = vunpack.c.h.b16 %v2703
    %v2979 = vunpack.c.l.b16 %v2704
    %v2980 = vunpack.c.h.b16 %v2704
    %v2981 = vunpack.c.l.b16 %v2705
    %v2982 = vunpack.c.h.b16 %v2705
    %v2983 = vunpack.c.l.b16 %v2706
    %v2984 = vunpack.c.h.b16 %v2706
    %v2985 = vunpack.c.l.b16 %v2707
    %v2986 = vunpack.c.h.b16 %v2707
    %v2987 = vunpack.c.l.b16 %v2708
    %v2988 = vunpack.c.h.b16 %v2708
    %v2989 = vunpack.c.l.b16 %v2709
    %v2990 = vunpack.c.h.b16 %v2709
    %v2991 = vunpack.c.l.b16 %v2710
    %v2992 = vunpack.c.h.b16 %v2710
    %v2993 = vunpack.c.l.b16 %v2711
    %v2994 = vunpack.c.h.b16 %v2711
    %v2995 = vunpack.c.l.b16 %v2712
    %v2996 = vunpack.c.h.b16 %v2712
    %v2997 = vunpack.c.l.b16 %v2713
    %v2998 = vunpack.c.h.b16 %v2713
    %v2999 = vunpack.c.l.b16 %v2714
    %v3000 = vunpack.c.h.b16 %v2714
    %v3001 = vunpack.c.l.b16 %v2715
    %v3002 = vunpack.c.h.b16 %v2715
    %v3003 = vunpack.c.l.b16 %v2716
    %v3004 = vunpack.c.h.b16 %v2716
    %v3005 = vunpack.c.l.b16 %v2717
    %v3006 = vunpack.c.h.b16 %v2717
    %v3007 = vunpack.c.l.b16 %v2718
    %v3008 = vunpack.c.h.b16 %v2718
    %v3009 = vunpack.c.l.b16 %v2719
    %v3010 = vunpack.c.h.b16 %v2719
    %v3011 = vunpack.c.l.b16 %v2720
    %v3012 = vunpack.c.h.b16 %v2720
    %v3013 = vunpack.c.l.b16 %v2721
    %v3014 = vunpack.c.h.b16 %v2721
    %v3015 = vunpack.c.l.b16 %v2722
    %v3016 = vunpack.c.h.b16 %v2722
    %v3017 = vunpack.c.l.b16 %v2723
    %v3018 = vunpack.c.h.b16 %v2723
    %v3019 = vunpack.c.l.b16 %v2724
    %v3020 = vunpack.c.h.b16 %v2724
    %v3021 = vunpack.c.l.b16 %v2725
    %v3022 = vunpack.c.h.b16 %v2725
    %v3023 = vunpack.c.l.b16 %v2726
    %v3024 = vunpack.c.h.b16 %v2726
    %v3025 = vunpack.c.l.b16 %v2727
    %v3026 = vunpack.c.h.b16 %v2727
    %v3027 = vunpack.c.l.b16 %v2728
    %v3028 = vunpack.c.h.b16 %v2728
    %v3029 = vunpack.c.l.b16 %v2729
    %v3030 = vunpack.c.h.b16 %v2729
    %v3031 = vunpack.c.l.b16 %v2730
    %v3032 = vunpack.c.h.b16 %v2730
    %v3033 = vunpack.c.l.b16 %v2731
    %v3034 = vunpack.c.h.b16 %v2731
    %v3035 = vunpack.c.l.b16 %v2732
    %v3036 = vunpack.c.h.b16 %v2732
    %v3037 = vunpack.c.l.b16 %v2733
    %v3038 = vunpack.c.h.b16 %v2733
    %v3039 = vunpack.c.l.b16 %v2734
    %v3040 = vunpack.c.h.b16 %v2734
    %v3041 = vunpack.c.l.b16 %v2735
    %v3042 = vunpack.c.h.b16 %v2735
    %v3043 = vunpack.c.l.b16 %v2736
    %v3044 = vunpack.c.h.b16 %v2736
    %v3045 = vunpack.c.l.b16 %v2737
    %v3046 = vunpack.c.h.b16 %v2737
    %v3047 = vunpack.c.l.b16 %v2738
    %v3048 = vunpack.c.h.b16 %v2738
    %v3049 = vunpack.c.l.b16 %v2739
    %v3050 = vunpack.c.h.b16 %v2739
    %v3051 = vunpack.c.l.b16 %v2740
    %v3052 = vunpack.c.h.b16 %v2740
    %v3053 = vunpack.c.l.b16 %v2741
    %v3054 = vunpack.c.h.b16 %v2741
    %v3055 = vunpack.c.l.b16 %v2742
    %v3056 = vunpack.c.h.b16 %v2742
    %v3057 = vunpack.c.l.b16 %v2743
    %v3058 = vunpack.c.h.b16 %v2743
    %v3059 = vunpack.c.l.b16 %v2744
    %v3060 = vunpack.c.h.b16 %v2744
    %v3061 = vunpack.c.l.b16 %v2745
    %v3062 = vunpack.c.h.b16 %v2745
    %v3063 = vunpack.c.l.b16 %v2746
    %v3064 = vunpack.c.h.b16 %v2746
    %v3065 = vunpack.c.l.b16 %v2747
    %v3066 = vunpack.c.h.b16 %v2747
    %v3067 = vunpack.c.l.b16 %v2748
    %v3068 = vunpack.c.h.b16 %v2748
    %v3069 = vunpack.c.l.b16 %v2749
    %v3070 = vunpack.c.h.b16 %v2749
    %v3071 = vunpack.c.l.b16 %v2750
    %v3072 = vunpack.c.h.b16 %v2750
    %v3073 = vunpack.c.l.b16 %v2751
    %v3074 = vunpack.c.h.b16 %v2751
    %v3075 = vunpack.c.l.b16 %v2752
    %v3076 = vunpack.c.h.b16 %v2752
    %v3077 = vunpack.c.l.b16 %v2753
    %v3078 = vunpack.c.h.b16 %v2753
    %v3079 = vunpack.c.l.b16 %v2754
    %v3080 = vunpack.c.h.b16 %v2754
    %v3081 = vunpack.c.l.b16 %v2755
    %v3082 = vunpack.c.h.b16 %v2755
    %v3083 = vunpack.c.l.b16 %v2756
    %v3084 = vunpack.c.h.b16 %v2756
    %v3085 = vunpack.c.l.b16 %v2757
    %v3086 = vunpack.c.h.b16 %v2757
    %v3087 = vunpack.c.l.b16 %v2758
    %v3088 = vunpack.c.h.b16 %v2758
    %v3089 = vunpack.c.l.b16 %v2759
    %v3090 = vunpack.c.h.b16 %v2759
    %v3091 = vunpack.c.l.b16 %v2760
    %v3092 = vunpack.c.h.b16 %v2760
    %v3093 = vunpack.c.l.b16 %v2761
    %v3094 = vunpack.c.h.b16 %v2761
    %v3095 = vunpack.c.l.b16 %v2762
    %v3096 = vunpack.c.h.b16 %v2762
    %v3097 = vunpack.c.l.b16 %v2763
    %v3098 = vunpack.c.h.b16 %v2763
    %v3099 = vunpack.c.l.b16 %v2764
    %v3100 = vunpack.c.h.b16 %v2764
    %v3101 = vunpack.c.l.b16 %v2765
    %v3102 = vunpack.c.h.b16 %v2765
    %v3103 = vunpack.c.l.b16 %v2766
    %v3104 = vunpack.c.h.b16 %v2766
    %v3105 = vunpack.c.l.b16 %v2767
    %v3106 = vunpack.c.h.b16 %v2767
    %v3107 = vunpack.c.l.b16 %v2768
    %v3108 = vunpack.c.h.b16 %v2768
    %v3109 = vunpack.c.l.b16 %v2769
    %v3110 = vunpack.c.h.b16 %v2769
    %v3111 = vunpack.c.l.b16 %v2770
    %v3112 = vunpack.c.h.b16 %v2770
    %v3113 = vunpack.c.l.b16 %v2771
    %v3114 = vunpack.c.h.b16 %v2771
    %v3115 = vunpack.c.l.b16 %v2772
    %v3116 = vunpack.c.h.b16 %v2772
    %v3117 = vunpack.c.l.b16 %v2773
    %v3118 = vunpack.c.h.b16 %v2773
    %v3119 = vunpack.c.l.b16 %v2774
    %v3120 = vunpack.c.h.b16 %v2774
    %v3121 = vunpack.c.l.b16 %v2775
    %v3122 = vunpack.c.h.b16 %v2775
    %v3123 = vunpack.c.l.b16 %v2776
    %v3124 = vunpack.c.h.b16 %v2776
    %v3125 = vunpack.c.l.b16 %v2777
    %v3126 = vunpack.c.h.b16 %v2777
    %v3127 = vunpack.c.l.b16 %v2778
    %v3128 = vunpack.c.h.b16 %v2778
    %v3129 = vunpack.c.l.b16 %v2779
    %v3130 = vunpack.c.h.b16 %v2779
    %v3131 = vunpack.c.l.b16 %v2780
    %v3132 = vunpack.c.h.b16 %v2780
    %v3133 = vunpack.c.l.b16 %v2781
    %v3134 = vunpack.c.h.b16 %v2781
    %v3135 = vunpack.c.l.b16 %v2782
    %v3136 = vunpack.c.h.b16 %v2782
    %v3137 = vunpack.c.l.b16 %v2783
    %v3138 = vunpack.c.h.b16 %v2783
    %v3139 = vunpack.c.l.b16 %v2784
    %v3140 = vunpack.c.h.b16 %v2784
    %v3141 = vunpack.c.l.b16 %v2785
    %v3142 = vunpack.c.h.b16 %v2785
    %v3143 = vunpack.c.l.b16 %v2786
    %v3144 = vunpack.c.h.b16 %v2786
    %v3145 = vunpack.c.l.b16 %v2787
    %v3146 = vunpack.c.h.b16 %v2787
    %v3147 = vunpack.c.l.b16 %v2788
    %v3148 = vunpack.c.h.b16 %v2788
    %v3149 = vunpack.c.l.b16 %v2789
    %v3150 = vunpack.c.h.b16 %v2789
    %v3151 = vunpack.c.l.b16 %v2790
    %v3152 = vunpack.c.h.b16 %v2790
    %v3153 = vunpack.c.l.b16 %v2791
    %v3154 = vunpack.c.h.b16 %v2791
    %v3155 = vunpack.c.l.b16 %v2792
    %v3156 = vunpack.c.h.b16 %v2792
    %v3157 = vunpack.c.l.b16 %v2793
    %v3158 = vunpack.c.h.b16 %v2793
    %v3159 = vunpack.c.l.b16 %v2794
    %v3160 = vunpack.c.h.b16 %v2794
    %v3161 = vunpack.c.l.b16 %v2795
    %v3162 = vunpack.c.h.b16 %v2795
    %v3163 = vunpack.c.l.b16 %v2796
    %v3164 = vunpack.c.h.b16 %v2796
    %v3165 = vunpack.c.l.b16 %v2797
    %v3166 = vunpack.c.h.b16 %v2797
    %v3167 = vunpack.c.l.b16 %v2798
    %v3168 = vunpack.c.h.b16 %v2798
    %v3169 = vunpack.c.l.b16 %v2799
    %v3170 = vunpack.c.h.b16 %v2799
    %v3171 = vunpack.c.l.b16 %v2800
    %v3172 = vunpack.c.h.b16 %v2800
    %v3173 = vunpack.c.l.b16 %v2801
    %v3174 = vunpack.c.h.b16 %v2801
    %v3175 = vunpack.c.l.b16 %v2802
    %v3176 = vunpack.c.h.b16 %v2802
    %v3177 = vunpack.c.l.b16 %v2803
    %v3178 = vunpack.c.h.b16 %v2803
    %v3179 = vunpack.c.l.b16 %v2804
    %v3180 = vunpack.c.h.b16 %v2804
    %v3181 = vunpack.c.l.b16 %v2805
    %v3182 = vunpack.c.h.b16 %v2805
    %v3183 = vunpack.c.l.b16 %v2806
    %v3184 = vunpack.c.h.b16 %v2806
    %v3185 = vunpack.c.l.b16 %v2807
    %v3186 = vunpack.c.h.b16 %v2807
    %v3187 = vunpack.c.l.b16 %v2808
    %v3188 = vunpack.c.h.b16 %v2808
    %v3189 = vunpack.c.l.b16 %v2809
    %v3190 = vunpack.c.h.b16 %v2809
    %v3191 = vunpack.c.l.b16 %v2810
    %v3192 = vunpack.c.h.b16 %v2810
    %v3193 = vunpack.c.l.b16 %v2811
    %v3194 = vunpack.c.h.b16 %v2811
    %v3195 = vunpack.c.l.b16 %v2812
    %v3196 = vunpack.c.h.b16 %v2812
    %v3197 = vpack.c.b16 %v2949, %v2941
    %v3198 = vpack.c.b16 %v2950, %v2942
    %v3199 = vpack.c.b16 %v2951, %v2943
    %v3200 = vpack.c.b16 %v2952, %v2944
    %v3201 = vpack.c.b16 %v2953, %v2945
    %v3202 = vpack.c.b16 %v2954, %v2946
    %v3203 = vpack.c.b16 %v2955, %v2947
    %v3204 = vpack.c.b16 %v2956, %v2948
    %v3205 = vpack.c.b16 %v2965, %v2957
    %v3206 = vpack.c.b16 %v2966, %v2958
    %v3207 = vpack.c.b16 %v2967, %v2959
    %v3208 = vpack.c.b16 %v2968, %v2960
    %v3209 = vpack.c.b16 %v2969, %v2961
    %v3210 = vpack.c.b16 %v2970, %v2962
    %v3211 = vpack.c.b16 %v2971, %v2963
    %v3212 = vpack.c.b16 %v2972, %v2964
    %v3213 = vpack.c.b16 %v2981, %v2973
    %v3214 = vpack.c.b16 %v2982, %v2974
    %v3215 = vpack.c.b16 %v2983, %v2975
    %v3216 = vpack.c.b16 %v2984, %v2976
    %v3217 = vpack.c.b16 %v2985, %v2977
    %v3218 = vpack.c.b16 %v2986, %v2978
    %v3219 = vpack.c.b16 %v2987, %v2979
    %v3220 = vpack.c.b16 %v2988, %v2980
    %v3221 = vpack.c.b16 %v2997, %v2989
    %v3222 = vpack.c.b16 %v2998, %v2990
    %v3223 = vpack.c.b16 %v2999, %v2991
    %v3224 = vpack.c.b16 %v3000, %v2992
    %v3225 = vpack.c.b16 %v3001, %v2993
    %v3226 = vpack.c.b16 %v3002, %v2994
    %v3227 = vpack.c.b16 %v3003, %v2995
    %v3228 = vpack.c.b16 %v3004, %v2996
    %v3229 = vpack.c.b16 %v3013, %v3005
    %v3230 = vpack.c.b16 %v3014, %v3006
    %v3231 = vpack.c.b16 %v3015, %v3007
    %v3232 = vpack.c.b16 %v3016, %v3008
    %v3233 = vpack.c.b16 %v3017, %v3009
    %v3234 = vpack.c.b16 %v3018, %v3010
    %v3235 = vpack.c.b16 %v3019, %v3011
    %v3236 = vpack.c.b16 %v3020, %v3012
    %v3237 = vpack.c.b16 %v3029, %v3021
    %v3238 = vpack.c.b16 %v3030, %v3022
    %v3239 = vpack.c.b16 %v3031, %v3023
    %v3240 = vpack.c.b16 %v3032, %v3024
    %v3241 = vpack.c.b16 %v3033, %v3025
    %v3242 = vpack.c.b16 %v3034, %v3026
    %v3243 = vpack.c.b16 %v3035, %v3027
    %v3244 = vpack.c.b16 %v3036, %v3028
    %v3245 = vpack.c.b16 %v3045, %v3037
    %v3246 = vpack.c.b16 %v3046, %v3038
    %v3247 = vpack.c.b16 %v3047, %v3039
    %v3248 = vpack.c.b16 %v3048, %v3040
    %v3249 = vpack.c.b16 %v3049, %v3041
    %v3250 = vpack.c.b16 %v3050, %v3042
    %v3251 = vpack.c.b16 %v3051, %v3043
    %v3252 = vpack.c.b16 %v3052, %v3044
    %v3253 = vpack.c.b16 %v3061, %v3053
    %v3254 = vpack.c.b16 %v3062, %v3054
    %v3255 = vpack.c.b16 %v3063, %v3055
    %v3256 = vpack.c.b16 %v3064, %v3056
    %v3257 = vpack.c.b16 %v3065, %v3057
    %v3258 = vpack.c.b16 %v3066, %v3058
    %v3259 = vpack.c.b16 %v3067, %v3059
    %v3260 = vpack.c.b16 %v3068, %v3060
    %v3261 = vpack.c.b16 %v3077, %v3069
    %v3262 = vpack.c.b16 %v3078, %v3070
    %v3263 = vpack.c.b16 %v3079, %v3071
    %v3264 = vpack.c.b16 %v3080, %v3072
    %v3265 = vpack.c.b16 %v3081, %v3073
    %v3266 = vpack.c.b16 %v3082, %v3074
    %v3267 = vpack.c.b16 %v3083, %v3075
    %v3268 = vpack.c.b16 %v3084, %v3076
    %v3269 = vpack.c.b16 %v3093, %v3085
    %v3270 = vpack.c.b16 %v3094, %v3086
    %v3271 = vpack.c.b16 %v3095, %v3087
    %v3272 = vpack.c.b16 %v3096, %v3088
    %v3273 = vpack.c.b16 %v3097, %v3089
    %v3274 = vpack.c.b16 %v3098, %v3090
    %v3275 = vpack.c.b16 %v3099, %v3091
    %v3276 = vpack.c.b16 %v3100, %v3092
    %v3277 = vpack.c.b16 %v3109, %v3101
    %v3278 = vpack.c.b16 %v3110, %v3102
    %v3279 = vpack.c.b16 %v3111, %v3103
    %v3280 = vpack.c.b16 %v3112, %v3104
    %v3281 = vpack.c.b16 %v3113, %v3105
    %v3282 = vpack.c.b16 %v3114, %v3106
    %v3283 = vpack.c.b16 %v3115, %v3107
    %v3284 = vpack.c.b16 %v3116, %v3108
    %v3285 = vpack.c.b16 %v3125, %v3117
    %v3286 = vpack.c.b16 %v3126, %v3118
    %v3287 = vpack.c.b16 %v3127, %v3119
    %v3288 = vpack.c.b16 %v3128, %v3120
    %v3289 = vpack.c.b16 %v3129, %v3121
    %v3290 = vpack.c.b16 %v3130, %v3122
    %v3291 = vpack.c.b16 %v3131, %v3123
    %v3292 = vpack.c.b16 %v3132, %v3124
    %v3293 = vpack.c.b16 %v3141, %v3133
    %v3294 = vpack.c.b16 %v3142, %v3134
    %v3295 = vpack.c.b16 %v3143, %v3135
    %v3296 = vpack.c.b16 %v3144, %v3136
    %v3297 = vpack.c.b16 %v3145, %v3137
    %v3298 = vpack.c.b16 %v3146, %v3138
    %v3299 = vpack.c.b16 %v3147, %v3139
    %v3300 = vpack.c.b16 %v3148, %v3140
    %v3301 = vpack.c.b16 %v3157, %v3149
    %v3302 = vpack.c.b16 %v3158, %v3150
    %v3303 = vpack.c.b16 %v3159, %v3151
    %v3304 = vpack.c.b16 %v3160, %v3152
    %v3305 = vpack.c.b16 %v3161, %v3153
    %v3306 = vpack.c.b16 %v3162, %v3154
    %v3307 = vpack.c.b16 %v3163, %v3155
    %v3308 = vpack.c.b16 %v3164, %v3156
    %v3309 = vpack.c.b16 %v3173, %v3165
    %v3310 = vpack.c.b16 %v3174, %v3166
    %v3311 = vpack.c.b16 %v3175, %v3167
    %v3312 = vpack.c.b16 %v3176, %v3168
    %v3313 = vpack.c.b16 %v3177, %v3169
    %v3314 = vpack.c.b16 %v3178, %v3170
    %v3315 = vpack.c.b16 %v3179, %v3171
    %v3316 = vpack.c.b16 %v3180, %v3172
    %v3317 = vpack.c.b16 %v3189, %v3181
    %v3318 = vpack.c.b16 %v3190, %v3182
    %v3319 = vpack.c.b16 %v3191, %v3183
    %v3320 = vpack.c.b16 %v3192, %v3184
    %v3321 = vpack.c.b16 %v3193, %v3185
    %v3322 = vpack.c.b16 %v3194, %v3186
    %v3323 = vpack.c.b16 %v3195, %v3187
    %v3324 = vpack.c.b16 %v3196, %v3188
    %3453 = vmatprep.subr.bf16.mxu0 %v3198
    %3454 = vmatpush1.bf16.msra.mxu0 %v3197
    %3455 = vmatprep.subr.bf16.mxu0 %v3206
    %3456 = vmatpush1.bf16.msra.mxu0 %v3205
    %3457 = vmatprep.subr.bf16.mxu0 %v3214
    %3458 = vmatpush1.bf16.msra.mxu0 %v3213
    %3459 = vmatprep.subr.bf16.mxu0 %v3222
    %3460 = vmatpush1.bf16.msra.mxu0 %v3221
    %3461 = vmatprep.subr.bf16.mxu0 %v3230
    %3462 = vmatpush1.bf16.msra.mxu0 %v3229
    %3463 = vmatprep.subr.bf16.mxu0 %v3238
    %3464 = vmatpush1.bf16.msra.mxu0 %v3237
    %3465 = vmatprep.subr.bf16.mxu0 %v3246
    %3466 = vmatpush1.bf16.msra.mxu0 %v3245
    %3467 = vmatprep.subr.bf16.mxu0 %v3254
    %3468 = vmatpush1.bf16.msra.mxu0 %v3253
    %3469 = vmatprep.subr.bf16.mxu0 %v3262
    %3470 = vmatpush1.bf16.msra.mxu0 %v3261
    %3471 = vmatprep.subr.bf16.mxu0 %v3270
    %3472 = vmatpush1.bf16.msra.mxu0 %v3269
    %3473 = vmatprep.subr.bf16.mxu0 %v3278
    %3474 = vmatpush1.bf16.msra.mxu0 %v3277
    %3475 = vmatprep.subr.bf16.mxu0 %v3286
    %3476 = vmatpush1.bf16.msra.mxu0 %v3285
    %3477 = vmatprep.subr.bf16.mxu0 %v3294
    %3478 = vmatpush1.bf16.msra.mxu0 %v3293
    %3479 = vmatprep.subr.bf16.mxu0 %v3302
    %3480 = vmatpush1.bf16.msra.mxu0 %v3301
    %3481 = vmatprep.subr.bf16.mxu0 %v3310
    %3482 = vmatpush1.bf16.msra.mxu0 %v3309
    %3483 = vmatprep.subr.bf16.mxu0 %v3318
    %3484 = vmatpush1.bf16.msra.mxu0 %v3317
    %3485 = vmatprep.mubr.bf16.mxu0 %v2684
    %3486 = vmatmul.mubr.bf16.gmra.mrb[0].mxu0 %v2683
    %v3487 = vpop.f32.mrb[0].mxu0
    %v3488 = vadd.f32 0.0, %v3487
    %v3489 = vpop.f32.mrb[0].mxu0
    %v3490 = vadd.f32 0.0, %v3489
    %v3491 = vpop.f32.mrb[0].mxu0
    %v3492 = vadd.f32 0.0, %v3491
    %v3493 = vpop.f32.mrb[0].mxu0
    %v3494 = vadd.f32 0.0, %v3493
    %3495 = vdwg.mxu0
    %3496 = vmatprep.subr.bf16.mxu0 %v3200
    %3497 = vmatpush1.bf16.msra.mxu0 %v3199
    %3498 = vmatprep.subr.bf16.mxu0 %v3208
    %3499 = vmatpush1.bf16.msra.mxu0 %v3207
    %3500 = vmatprep.subr.bf16.mxu0 %v3216
    %3501 = vmatpush1.bf16.msra.mxu0 %v3215
    %3502 = vmatprep.subr.bf16.mxu0 %v3224
    %3503 = vmatpush1.bf16.msra.mxu0 %v3223
    %3504 = vmatprep.subr.bf16.mxu0 %v3232
    %3505 = vmatpush1.bf16.msra.mxu0 %v3231
    %3506 = vmatprep.subr.bf16.mxu0 %v3240
    %3507 = vmatpush1.bf16.msra.mxu0 %v3239
    %3508 = vmatprep.subr.bf16.mxu0 %v3248
    %3509 = vmatpush1.bf16.msra.mxu0 %v3247
    %3510 = vmatprep.subr.bf16.mxu0 %v3256
    %3511 = vmatpush1.bf16.msra.mxu0 %v3255
    %3512 = vmatprep.subr.bf16.mxu0 %v3264
    %3513 = vmatpush1.bf16.msra.mxu0 %v3263
    %3514 = vmatprep.subr.bf16.mxu0 %v3272
    %3515 = vmatpush1.bf16.msra.mxu0 %v3271
    %3516 = vmatprep.subr.bf16.mxu0 %v3280
    %3517 = vmatpush1.bf16.msra.mxu0 %v3279
    %3518 = vmatprep.subr.bf16.mxu0 %v3288
    %3519 = vmatpush1.bf16.msra.mxu0 %v3287
    %3520 = vmatprep.subr.bf16.mxu0 %v3296
    %3521 = vmatpush1.bf16.msra.mxu0 %v3295
    %3522 = vmatprep.subr.bf16.mxu0 %v3304
    %3523 = vmatpush1.bf16.msra.mxu0 %v3303
    %3524 = vmatprep.subr.bf16.mxu0 %v3312
    %3525 = vmatpush1.bf16.msra.mxu0 %v3311
    %3526 = vmatprep.subr.bf16.mxu0 %v3320
    %3527 = vmatpush1.bf16.msra.mxu0 %v3319
    %3528 = vmatprep.mubr.bf16.mxu0 %v2684
    %3529 = vmatmul.mubr.bf16.gmra.mrb[0].mxu0 %v2683
    %v3530 = vpop.f32.mrb[0].mxu0
    %v3531 = vadd.f32 0.0, %v3530
    %v3532 = vpop.f32.mrb[0].mxu0
    %v3533 = vadd.f32 0.0, %v3532
    %v3534 = vpop.f32.mrb[0].mxu0
    %v3535 = vadd.f32 0.0, %v3534
    %v3536 = vpop.f32.mrb[0].mxu0
    %v3537 = vadd.f32 0.0, %v3536
    %3538 = vdwg.mxu0
    %3539 = vmatprep.subr.bf16.mxu0 %v3202
    %3540 = vmatpush1.bf16.msra.mxu0 %v3201
    %3541 = vmatprep.subr.bf16.mxu0 %v3210
    %3542 = vmatpush1.bf16.msra.mxu0 %v3209
    %3543 = vmatprep.subr.bf16.mxu0 %v3218
    %3544 = vmatpush1.bf16.msra.mxu0 %v3217
    %3545 = vmatprep.subr.bf16.mxu0 %v3226
    %3546 = vmatpush1.bf16.msra.mxu0 %v3225
    %3547 = vmatprep.subr.bf16.mxu0 %v3234
    %3548 = vmatpush1.bf16.msra.mxu0 %v3233
    %3549 = vmatprep.subr.bf16.mxu0 %v3242
    %3550 = vmatpush1.bf16.msra.mxu0 %v3241
    %3551 = vmatprep.subr.bf16.mxu0 %v3250
    %3552 = vmatpush1.bf16.msra.mxu0 %v3249
    %3553 = vmatprep.subr.bf16.mxu0 %v3258
    %3554 = vmatpush1.bf16.msra.mxu0 %v3257
    %3555 = vmatprep.subr.bf16.mxu0 %v3266
    %3556 = vmatpush1.bf16.msra.mxu0 %v3265
    %3557 = vmatprep.subr.bf16.mxu0 %v3274
    %3558 = vmatpush1.bf16.msra.mxu0 %v3273
    %3559 = vmatprep.subr.bf16.mxu0 %v3282
    %3560 = vmatpush1.bf16.msra.mxu0 %v3281
    %3561 = vmatprep.subr.bf16.mxu0 %v3290
    %3562 = vmatpush1.bf16.msra.mxu0 %v3289
    %3563 = vmatprep.subr.bf16.mxu0 %v3298
    %3564 = vmatpush1.bf16.msra.mxu0 %v3297
    %3565 = vmatprep.subr.bf16.mxu0 %v3306
    %3566 = vmatpush1.bf16.msra.mxu0 %v3305
    %3567 = vmatprep.subr.bf16.mxu0 %v3314
    %3568 = vmatpush1.bf16.msra.mxu0 %v3313
    %3569 = vmatprep.subr.bf16.mxu0 %v3322
    %3570 = vmatpush1.bf16.msra.mxu0 %v3321
    %3571 = vmatprep.mubr.bf16.mxu0 %v2684
    %3572 = vmatmul.mubr.bf16.gmra.mrb[0].mxu0 %v2683
    %v3573 = vpop.f32.mrb[0].mxu0
    %v3574 = vadd.f32 0.0, %v3573
    %v3575 = vpop.f32.mrb[0].mxu0
    %v3576 = vadd.f32 0.0, %v3575
    %v3577 = vpop.f32.mrb[0].mxu0
    %v3578 = vadd.f32 0.0, %v3577
    %v3579 = vpop.f32.mrb[0].mxu0
    %v3580 = vadd.f32 0.0, %v3579
    %3581 = vdwg.mxu0
    %3582 = vmatprep.subr.bf16.mxu0 %v3204
    %3583 = vmatpush1.bf16.msra.mxu0 %v3203
    %3584 = vmatprep.subr.bf16.mxu0 %v3212
    %3585 = vmatpush1.bf16.msra.mxu0 %v3211
    %3586 = vmatprep.subr.bf16.mxu0 %v3220
    %3587 = vmatpush1.bf16.msra.mxu0 %v3219
    %3588 = vmatprep.subr.bf16.mxu0 %v3228
    %3589 = vmatpush1.bf16.msra.mxu0 %v3227
    %3590 = vmatprep.subr.bf16.mxu0 %v3236
    %3591 = vmatpush1.bf16.msra.mxu0 %v3235
    %3592 = vmatprep.subr.bf16.mxu0 %v3244
    %3593 = vmatpush1.bf16.msra.mxu0 %v3243
    %3594 = vmatprep.subr.bf16.mxu0 %v3252
    %3595 = vmatpush1.bf16.msra.mxu0 %v3251
    %3596 = vmatprep.subr.bf16.mxu0 %v3260
    %3597 = vmatpush1.bf16.msra.mxu0 %v3259
    %3598 = vmatprep.subr.bf16.mxu0 %v3268
    %3599 = vmatpush1.bf16.msra.mxu0 %v3267
    %3600 = vmatprep.subr.bf16.mxu0 %v3276
    %3601 = vmatpush1.bf16.msra.mxu0 %v3275
    %3602 = vmatprep.subr.bf16.mxu0 %v3284
    %3603 = vmatpush1.bf16.msra.mxu0 %v3283
    %3604 = vmatprep.subr.bf16.mxu0 %v3292
    %3605 = vmatpush1.bf16.msra.mxu0 %v3291
    %3606 = vmatprep.subr.bf16.mxu0 %v3300
    %3607 = vmatpush1.bf16.msra.mxu0 %v3299
    %3608 = vmatprep.subr.bf16.mxu0 %v3308
    %3609 = vmatpush1.bf16.msra.mxu0 %v3307
    %3610 = vmatprep.subr.bf16.mxu0 %v3316
    %3611 = vmatpush1.bf16.msra.mxu0 %v3315
    %3612 = vmatprep.subr.bf16.mxu0 %v3324
    %3613 = vmatpush1.bf16.msra.mxu0 %v3323
    %3614 = vmatprep.mubr.bf16.mxu0 %v2684
    %3615 = vmatmul.mubr.bf16.gmra.mrb[0].mxu0 %v2683
    %v3616 = vpop.f32.mrb[0].mxu0
    %v3617 = vadd.f32 0.0, %v3616
    %v3618 = vpop.f32.mrb[0].mxu0
    %v3619 = vadd.f32 0.0, %v3618
    %v3620 = vpop.f32.mrb[0].mxu0
    %v3621 = vadd.f32 0.0, %v3620
    %v3622 = vpop.f32.mrb[0].mxu0
    %v3623 = vadd.f32 0.0, %v3622
    %3624 = vdwg.mxu0
    %v3625 = vpack.c.bf16 %v2677, %v2675
    %v3626 = vpack.c.bf16 %v2678, %v2676
    %v3627 = vld [vmem:[%s4] sm:$0xff]
    %v3628 = vld [vmem:[%s4 + $0x8] sm:$0xff]
    %v3629 = vld [vmem:[%s4 + $0x10] sm:$0xff]
    %v3630 = vld [vmem:[%s4 + $0x18] sm:$0xff]
    %v3631 = vld [vmem:[%s4 + $0x20] sm:$0xff]
    %v3632 = vld [vmem:[%s4 + $0x28] sm:$0xff]
    %v3633 = vld [vmem:[%s4 + $0x30] sm:$0xff]
    %v3634 = vld [vmem:[%s4 + $0x38] sm:$0xff]
    %v3635 = vld [vmem:[%s4 + $0x40] sm:$0xff]
    %v3636 = vld [vmem:[%s4 + $0x48] sm:$0xff]
    %v3637 = vld [vmem:[%s4 + $0x50] sm:$0xff]
    %v3638 = vld [vmem:[%s4 + $0x58] sm:$0xff]
    %v3639 = vld [vmem:[%s4 + $0x60] sm:$0xff]
    %v3640 = vld [vmem:[%s4 + $0x68] sm:$0xff]
    %v3641 = vld [vmem:[%s4 + $0x70] sm:$0xff]
    %v3642 = vld [vmem:[%s4 + $0x78] sm:$0xff]
    %v3643 = vld [vmem:[%s4 + $0x80] sm:$0xff]
    %v3644 = vld [vmem:[%s4 + $0x88] sm:$0xff]
    %v3645 = vld [vmem:[%s4 + $0x90] sm:$0xff]
    %v3646 = vld [vmem:[%s4 + $0x98] sm:$0xff]
    %v3647 = vld [vmem:[%s4 + $0xa0] sm:$0xff]
    %v3648 = vld [vmem:[%s4 + $0xa8] sm:$0xff]
    %v3649 = vld [vmem:[%s4 + $0xb0] sm:$0xff]
    %v3650 = vld [vmem:[%s4 + $0xb8] sm:$0xff]
    %v3651 = vld [vmem:[%s4 + $0xc0] sm:$0xff]
    %v3652 = vld [vmem:[%s4 + $0xc8] sm:$0xff]
    %v3653 = vld [vmem:[%s4 + $0xd0] sm:$0xff]
    %v3654 = vld [vmem:[%s4 + $0xd8] sm:$0xff]
    %v3655 = vld [vmem:[%s4 + $0xe0] sm:$0xff]
    %v3656 = vld [vmem:[%s4 + $0xe8] sm:$0xff]
    %v3657 = vld [vmem:[%s4 + $0xf0] sm:$0xff]
    %v3658 = vld [vmem:[%s4 + $0xf8] sm:$0xff]
    %v3659 = vld [vmem:[%s4 + $0x100] sm:$0xff]
    %v3660 = vld [vmem:[%s4 + $0x108] sm:$0xff]
    %v3661 = vld [vmem:[%s4 + $0x110] sm:$0xff]
    %v3662 = vld [vmem:[%s4 + $0x118] sm:$0xff]
    %v3663 = vld [vmem:[%s4 + $0x120] sm:$0xff]
    %v3664 = vld [vmem:[%s4 + $0x128] sm:$0xff]
    %v3665 = vld [vmem:[%s4 + $0x130] sm:$0xff]
    %v3666 = vld [vmem:[%s4 + $0x138] sm:$0xff]
    %v3667 = vld [vmem:[%s4 + $0x140] sm:$0xff]
    %v3668 = vld [vmem:[%s4 + $0x148] sm:$0xff]
    %v3669 = vld [vmem:[%s4 + $0x150] sm:$0xff]
    %v3670 = vld [vmem:[%s4 + $0x158] sm:$0xff]
    %v3671 = vld [vmem:[%s4 + $0x160] sm:$0xff]
    %v3672 = vld [vmem:[%s4 + $0x168] sm:$0xff]
    %v3673 = vld [vmem:[%s4 + $0x170] sm:$0xff]
    %v3674 = vld [vmem:[%s4 + $0x178] sm:$0xff]
    %v3675 = vld [vmem:[%s4 + $0x180] sm:$0xff]
    %v3676 = vld [vmem:[%s4 + $0x188] sm:$0xff]
    %v3677 = vld [vmem:[%s4 + $0x190] sm:$0xff]
    %v3678 = vld [vmem:[%s4 + $0x198] sm:$0xff]
    %v3679 = vld [vmem:[%s4 + $0x1a0] sm:$0xff]
    %v3680 = vld [vmem:[%s4 + $0x1a8] sm:$0xff]
    %v3681 = vld [vmem:[%s4 + $0x1b0] sm:$0xff]
    %v3682 = vld [vmem:[%s4 + $0x1b8] sm:$0xff]
    %v3683 = vld [vmem:[%s4 + $0x1c0] sm:$0xff]
    %v3684 = vld [vmem:[%s4 + $0x1c8] sm:$0xff]
    %v3685 = vld [vmem:[%s4 + $0x1d0] sm:$0xff]
    %v3686 = vld [vmem:[%s4 + $0x1d8] sm:$0xff]
    %v3687 = vld [vmem:[%s4 + $0x1e0] sm:$0xff]
    %v3688 = vld [vmem:[%s4 + $0x1e8] sm:$0xff]
    %v3689 = vld [vmem:[%s4 + $0x1f0] sm:$0xff]
    %v3690 = vld [vmem:[%s4 + $0x1f8] sm:$0xff]
    %v3691 = vld [vmem:[%s4 + $0x200] sm:$0xff]
    %v3692 = vld [vmem:[%s4 + $0x208] sm:$0xff]
    %v3693 = vld [vmem:[%s4 + $0x210] sm:$0xff]
    %v3694 = vld [vmem:[%s4 + $0x218] sm:$0xff]
    %v3695 = vld [vmem:[%s4 + $0x220] sm:$0xff]
    %v3696 = vld [vmem:[%s4 + $0x228] sm:$0xff]
    %v3697 = vld [vmem:[%s4 + $0x230] sm:$0xff]
    %v3698 = vld [vmem:[%s4 + $0x238] sm:$0xff]
    %v3699 = vld [vmem:[%s4 + $0x240] sm:$0xff]
    %v3700 = vld [vmem:[%s4 + $0x248] sm:$0xff]
    %v3701 = vld [vmem:[%s4 + $0x250] sm:$0xff]
    %v3702 = vld [vmem:[%s4 + $0x258] sm:$0xff]
    %v3703 = vld [vmem:[%s4 + $0x260] sm:$0xff]
    %v3704 = vld [vmem:[%s4 + $0x268] sm:$0xff]
    %v3705 = vld [vmem:[%s4 + $0x270] sm:$0xff]
    %v3706 = vld [vmem:[%s4 + $0x278] sm:$0xff]
    %v3707 = vld [vmem:[%s4 + $0x280] sm:$0xff]
    %v3708 = vld [vmem:[%s4 + $0x288] sm:$0xff]
    %v3709 = vld [vmem:[%s4 + $0x290] sm:$0xff]
    %v3710 = vld [vmem:[%s4 + $0x298] sm:$0xff]
    %v3711 = vld [vmem:[%s4 + $0x2a0] sm:$0xff]
    %v3712 = vld [vmem:[%s4 + $0x2a8] sm:$0xff]
    %v3713 = vld [vmem:[%s4 + $0x2b0] sm:$0xff]
    %v3714 = vld [vmem:[%s4 + $0x2b8] sm:$0xff]
    %v3715 = vld [vmem:[%s4 + $0x2c0] sm:$0xff]
    %v3716 = vld [vmem:[%s4 + $0x2c8] sm:$0xff]
    %v3717 = vld [vmem:[%s4 + $0x2d0] sm:$0xff]
    %v3718 = vld [vmem:[%s4 + $0x2d8] sm:$0xff]
    %v3719 = vld [vmem:[%s4 + $0x2e0] sm:$0xff]
    %v3720 = vld [vmem:[%s4 + $0x2e8] sm:$0xff]
    %v3721 = vld [vmem:[%s4 + $0x2f0] sm:$0xff]
    %v3722 = vld [vmem:[%s4 + $0x2f8] sm:$0xff]
    %v3723 = vld [vmem:[%s4 + $0x300] sm:$0xff]
    %v3724 = vld [vmem:[%s4 + $0x308] sm:$0xff]
    %v3725 = vld [vmem:[%s4 + $0x310] sm:$0xff]
    %v3726 = vld [vmem:[%s4 + $0x318] sm:$0xff]
    %v3727 = vld [vmem:[%s4 + $0x320] sm:$0xff]
    %v3728 = vld [vmem:[%s4 + $0x328] sm:$0xff]
    %v3729 = vld [vmem:[%s4 + $0x330] sm:$0xff]
    %v3730 = vld [vmem:[%s4 + $0x338] sm:$0xff]
    %v3731 = vld [vmem:[%s4 + $0x340] sm:$0xff]
    %v3732 = vld [vmem:[%s4 + $0x348] sm:$0xff]
    %v3733 = vld [vmem:[%s4 + $0x350] sm:$0xff]
    %v3734 = vld [vmem:[%s4 + $0x358] sm:$0xff]
    %v3735 = vld [vmem:[%s4 + $0x360] sm:$0xff]
    %v3736 = vld [vmem:[%s4 + $0x368] sm:$0xff]
    %v3737 = vld [vmem:[%s4 + $0x370] sm:$0xff]
    %v3738 = vld [vmem:[%s4 + $0x378] sm:$0xff]
    %v3739 = vld [vmem:[%s4 + $0x380] sm:$0xff]
    %v3740 = vld [vmem:[%s4 + $0x388] sm:$0xff]
    %v3741 = vld [vmem:[%s4 + $0x390] sm:$0xff]
    %v3742 = vld [vmem:[%s4 + $0x398] sm:$0xff]
    %v3743 = vld [vmem:[%s4 + $0x3a0] sm:$0xff]
    %v3744 = vld [vmem:[%s4 + $0x3a8] sm:$0xff]
    %v3745 = vld [vmem:[%s4 + $0x3b0] sm:$0xff]
    %v3746 = vld [vmem:[%s4 + $0x3b8] sm:$0xff]
    %v3747 = vld [vmem:[%s4 + $0x3c0] sm:$0xff]
    %v3748 = vld [vmem:[%s4 + $0x3c8] sm:$0xff]
    %v3749 = vld [vmem:[%s4 + $0x3d0] sm:$0xff]
    %v3750 = vld [vmem:[%s4 + $0x3d8] sm:$0xff]
    %v3751 = vld [vmem:[%s4 + $0x3e0] sm:$0xff]
    %v3752 = vld [vmem:[%s4 + $0x3e8] sm:$0xff]
    %v3753 = vld [vmem:[%s4 + $0x3f0] sm:$0xff]
    %v3754 = vld [vmem:[%s4 + $0x3f8] sm:$0xff]
    %v3883 = vunpack.c.l.b16 %v3627
    %v3884 = vunpack.c.h.b16 %v3627
    %v3885 = vunpack.c.l.b16 %v3628
    %v3886 = vunpack.c.h.b16 %v3628
    %v3887 = vunpack.c.l.b16 %v3629
    %v3888 = vunpack.c.h.b16 %v3629
    %v3889 = vunpack.c.l.b16 %v3630
    %v3890 = vunpack.c.h.b16 %v3630
    %v3891 = vunpack.c.l.b16 %v3631
    %v3892 = vunpack.c.h.b16 %v3631
    %v3893 = vunpack.c.l.b16 %v3632
    %v3894 = vunpack.c.h.b16 %v3632
    %v3895 = vunpack.c.l.b16 %v3633
    %v3896 = vunpack.c.h.b16 %v3633
    %v3897 = vunpack.c.l.b16 %v3634
    %v3898 = vunpack.c.h.b16 %v3634
    %v3899 = vunpack.c.l.b16 %v3635
    %v3900 = vunpack.c.h.b16 %v3635
    %v3901 = vunpack.c.l.b16 %v3636
    %v3902 = vunpack.c.h.b16 %v3636
    %v3903 = vunpack.c.l.b16 %v3637
    %v3904 = vunpack.c.h.b16 %v3637
    %v3905 = vunpack.c.l.b16 %v3638
    %v3906 = vunpack.c.h.b16 %v3638
    %v3907 = vunpack.c.l.b16 %v3639
    %v3908 = vunpack.c.h.b16 %v3639
    %v3909 = vunpack.c.l.b16 %v3640
    %v3910 = vunpack.c.h.b16 %v3640
    %v3911 = vunpack.c.l.b16 %v3641
    %v3912 = vunpack.c.h.b16 %v3641
    %v3913 = vunpack.c.l.b16 %v3642
    %v3914 = vunpack.c.h.b16 %v3642
    %v3915 = vunpack.c.l.b16 %v3643
    %v3916 = vunpack.c.h.b16 %v3643
    %v3917 = vunpack.c.l.b16 %v3644
    %v3918 = vunpack.c.h.b16 %v3644
    %v3919 = vunpack.c.l.b16 %v3645
    %v3920 = vunpack.c.h.b16 %v3645
    %v3921 = vunpack.c.l.b16 %v3646
    %v3922 = vunpack.c.h.b16 %v3646
    %v3923 = vunpack.c.l.b16 %v3647
    %v3924 = vunpack.c.h.b16 %v3647
    %v3925 = vunpack.c.l.b16 %v3648
    %v3926 = vunpack.c.h.b16 %v3648
    %v3927 = vunpack.c.l.b16 %v3649
    %v3928 = vunpack.c.h.b16 %v3649
    %v3929 = vunpack.c.l.b16 %v3650
    %v3930 = vunpack.c.h.b16 %v3650
    %v3931 = vunpack.c.l.b16 %v3651
    %v3932 = vunpack.c.h.b16 %v3651
    %v3933 = vunpack.c.l.b16 %v3652
    %v3934 = vunpack.c.h.b16 %v3652
    %v3935 = vunpack.c.l.b16 %v3653
    %v3936 = vunpack.c.h.b16 %v3653
    %v3937 = vunpack.c.l.b16 %v3654
    %v3938 = vunpack.c.h.b16 %v3654
    %v3939 = vunpack.c.l.b16 %v3655
    %v3940 = vunpack.c.h.b16 %v3655
    %v3941 = vunpack.c.l.b16 %v3656
    %v3942 = vunpack.c.h.b16 %v3656
    %v3943 = vunpack.c.l.b16 %v3657
    %v3944 = vunpack.c.h.b16 %v3657
    %v3945 = vunpack.c.l.b16 %v3658
    %v3946 = vunpack.c.h.b16 %v3658
    %v3947 = vunpack.c.l.b16 %v3659
    %v3948 = vunpack.c.h.b16 %v3659
    %v3949 = vunpack.c.l.b16 %v3660
    %v3950 = vunpack.c.h.b16 %v3660
    %v3951 = vunpack.c.l.b16 %v3661
    %v3952 = vunpack.c.h.b16 %v3661
    %v3953 = vunpack.c.l.b16 %v3662
    %v3954 = vunpack.c.h.b16 %v3662
    %v3955 = vunpack.c.l.b16 %v3663
    %v3956 = vunpack.c.h.b16 %v3663
    %v3957 = vunpack.c.l.b16 %v3664
    %v3958 = vunpack.c.h.b16 %v3664
    %v3959 = vunpack.c.l.b16 %v3665
    %v3960 = vunpack.c.h.b16 %v3665
    %v3961 = vunpack.c.l.b16 %v3666
    %v3962 = vunpack.c.h.b16 %v3666
    %v3963 = vunpack.c.l.b16 %v3667
    %v3964 = vunpack.c.h.b16 %v3667
    %v3965 = vunpack.c.l.b16 %v3668
    %v3966 = vunpack.c.h.b16 %v3668
    %v3967 = vunpack.c.l.b16 %v3669
    %v3968 = vunpack.c.h.b16 %v3669
    %v3969 = vunpack.c.l.b16 %v3670
    %v3970 = vunpack.c.h.b16 %v3670
    %v3971 = vunpack.c.l.b16 %v3671
    %v3972 = vunpack.c.h.b16 %v3671
    %v3973 = vunpack.c.l.b16 %v3672
    %v3974 = vunpack.c.h.b16 %v3672
    %v3975 = vunpack.c.l.b16 %v3673
    %v3976 = vunpack.c.h.b16 %v3673
    %v3977 = vunpack.c.l.b16 %v3674
    %v3978 = vunpack.c.h.b16 %v3674
    %v3979 = vunpack.c.l.b16 %v3675
    %v3980 = vunpack.c.h.b16 %v3675
    %v3981 = vunpack.c.l.b16 %v3676
    %v3982 = vunpack.c.h.b16 %v3676
    %v3983 = vunpack.c.l.b16 %v3677
    %v3984 = vunpack.c.h.b16 %v3677
    %v3985 = vunpack.c.l.b16 %v3678
    %v3986 = vunpack.c.h.b16 %v3678
    %v3987 = vunpack.c.l.b16 %v3679
    %v3988 = vunpack.c.h.b16 %v3679
    %v3989 = vunpack.c.l.b16 %v3680
    %v3990 = vunpack.c.h.b16 %v3680
    %v3991 = vunpack.c.l.b16 %v3681
    %v3992 = vunpack.c.h.b16 %v3681
    %v3993 = vunpack.c.l.b16 %v3682
    %v3994 = vunpack.c.h.b16 %v3682
    %v3995 = vunpack.c.l.b16 %v3683
    %v3996 = vunpack.c.h.b16 %v3683
    %v3997 = vunpack.c.l.b16 %v3684
    %v3998 = vunpack.c.h.b16 %v3684
    %v3999 = vunpack.c.l.b16 %v3685
    %v4000 = vunpack.c.h.b16 %v3685
    %v4001 = vunpack.c.l.b16 %v3686
    %v4002 = vunpack.c.h.b16 %v3686
    %v4003 = vunpack.c.l.b16 %v3687
    %v4004 = vunpack.c.h.b16 %v3687
    %v4005 = vunpack.c.l.b16 %v3688
    %v4006 = vunpack.c.h.b16 %v3688
    %v4007 = vunpack.c.l.b16 %v3689
    %v4008 = vunpack.c.h.b16 %v3689
    %v4009 = vunpack.c.l.b16 %v3690
    %v4010 = vunpack.c.h.b16 %v3690
    %v4011 = vunpack.c.l.b16 %v3691
    %v4012 = vunpack.c.h.b16 %v3691
    %v4013 = vunpack.c.l.b16 %v3692
    %v4014 = vunpack.c.h.b16 %v3692
    %v4015 = vunpack.c.l.b16 %v3693
    %v4016 = vunpack.c.h.b16 %v3693
    %v4017 = vunpack.c.l.b16 %v3694
    %v4018 = vunpack.c.h.b16 %v3694
    %v4019 = vunpack.c.l.b16 %v3695
    %v4020 = vunpack.c.h.b16 %v3695
    %v4021 = vunpack.c.l.b16 %v3696
    %v4022 = vunpack.c.h.b16 %v3696
    %v4023 = vunpack.c.l.b16 %v3697
    %v4024 = vunpack.c.h.b16 %v3697
    %v4025 = vunpack.c.l.b16 %v3698
    %v4026 = vunpack.c.h.b16 %v3698
    %v4027 = vunpack.c.l.b16 %v3699
    %v4028 = vunpack.c.h.b16 %v3699
    %v4029 = vunpack.c.l.b16 %v3700
    %v4030 = vunpack.c.h.b16 %v3700
    %v4031 = vunpack.c.l.b16 %v3701
    %v4032 = vunpack.c.h.b16 %v3701
    %v4033 = vunpack.c.l.b16 %v3702
    %v4034 = vunpack.c.h.b16 %v3702
    %v4035 = vunpack.c.l.b16 %v3703
    %v4036 = vunpack.c.h.b16 %v3703
    %v4037 = vunpack.c.l.b16 %v3704
    %v4038 = vunpack.c.h.b16 %v3704
    %v4039 = vunpack.c.l.b16 %v3705
    %v4040 = vunpack.c.h.b16 %v3705
    %v4041 = vunpack.c.l.b16 %v3706
    %v4042 = vunpack.c.h.b16 %v3706
    %v4043 = vunpack.c.l.b16 %v3707
    %v4044 = vunpack.c.h.b16 %v3707
    %v4045 = vunpack.c.l.b16 %v3708
    %v4046 = vunpack.c.h.b16 %v3708
    %v4047 = vunpack.c.l.b16 %v3709
    %v4048 = vunpack.c.h.b16 %v3709
    %v4049 = vunpack.c.l.b16 %v3710
    %v4050 = vunpack.c.h.b16 %v3710
    %v4051 = vunpack.c.l.b16 %v3711
    %v4052 = vunpack.c.h.b16 %v3711
    %v4053 = vunpack.c.l.b16 %v3712
    %v4054 = vunpack.c.h.b16 %v3712
    %v4055 = vunpack.c.l.b16 %v3713
    %v4056 = vunpack.c.h.b16 %v3713
    %v4057 = vunpack.c.l.b16 %v3714
    %v4058 = vunpack.c.h.b16 %v3714
    %v4059 = vunpack.c.l.b16 %v3715
    %v4060 = vunpack.c.h.b16 %v3715
    %v4061 = vunpack.c.l.b16 %v3716
    %v4062 = vunpack.c.h.b16 %v3716
    %v4063 = vunpack.c.l.b16 %v3717
    %v4064 = vunpack.c.h.b16 %v3717
    %v4065 = vunpack.c.l.b16 %v3718
    %v4066 = vunpack.c.h.b16 %v3718
    %v4067 = vunpack.c.l.b16 %v3719
    %v4068 = vunpack.c.h.b16 %v3719
    %v4069 = vunpack.c.l.b16 %v3720
    %v4070 = vunpack.c.h.b16 %v3720
    %v4071 = vunpack.c.l.b16 %v3721
    %v4072 = vunpack.c.h.b16 %v3721
    %v4073 = vunpack.c.l.b16 %v3722
    %v4074 = vunpack.c.h.b16 %v3722
    %v4075 = vunpack.c.l.b16 %v3723
    %v4076 = vunpack.c.h.b16 %v3723
    %v4077 = vunpack.c.l.b16 %v3724
    %v4078 = vunpack.c.h.b16 %v3724
    %v4079 = vunpack.c.l.b16 %v3725
    %v4080 = vunpack.c.h.b16 %v3725
    %v4081 = vunpack.c.l.b16 %v3726
    %v4082 = vunpack.c.h.b16 %v3726
    %v4083 = vunpack.c.l.b16 %v3727
    %v4084 = vunpack.c.h.b16 %v3727
    %v4085 = vunpack.c.l.b16 %v3728
    %v4086 = vunpack.c.h.b16 %v3728
    %v4087 = vunpack.c.l.b16 %v3729
    %v4088 = vunpack.c.h.b16 %v3729
    %v4089 = vunpack.c.l.b16 %v3730
    %v4090 = vunpack.c.h.b16 %v3730
    %v4091 = vunpack.c.l.b16 %v3731
    %v4092 = vunpack.c.h.b16 %v3731
    %v4093 = vunpack.c.l.b16 %v3732
    %v4094 = vunpack.c.h.b16 %v3732
    %v4095 = vunpack.c.l.b16 %v3733
    %v4096 = vunpack.c.h.b16 %v3733
    %v4097 = vunpack.c.l.b16 %v3734
    %v4098 = vunpack.c.h.b16 %v3734
    %v4099 = vunpack.c.l.b16 %v3735
    %v4100 = vunpack.c.h.b16 %v3735
    %v4101 = vunpack.c.l.b16 %v3736
    %v4102 = vunpack.c.h.b16 %v3736
    %v4103 = vunpack.c.l.b16 %v3737
    %v4104 = vunpack.c.h.b16 %v3737
    %v4105 = vunpack.c.l.b16 %v3738
    %v4106 = vunpack.c.h.b16 %v3738
    %v4107 = vunpack.c.l.b16 %v3739
    %v4108 = vunpack.c.h.b16 %v3739
    %v4109 = vunpack.c.l.b16 %v3740
    %v4110 = vunpack.c.h.b16 %v3740
    %v4111 = vunpack.c.l.b16 %v3741
    %v4112 = vunpack.c.h.b16 %v3741
    %v4113 = vunpack.c.l.b16 %v3742
    %v4114 = vunpack.c.h.b16 %v3742
    %v4115 = vunpack.c.l.b16 %v3743
    %v4116 = vunpack.c.h.b16 %v3743
    %v4117 = vunpack.c.l.b16 %v3744
    %v4118 = vunpack.c.h.b16 %v3744
    %v4119 = vunpack.c.l.b16 %v3745
    %v4120 = vunpack.c.h.b16 %v3745
    %v4121 = vunpack.c.l.b16 %v3746
    %v4122 = vunpack.c.h.b16 %v3746
    %v4123 = vunpack.c.l.b16 %v3747
    %v4124 = vunpack.c.h.b16 %v3747
    %v4125 = vunpack.c.l.b16 %v3748
    %v4126 = vunpack.c.h.b16 %v3748
    %v4127 = vunpack.c.l.b16 %v3749
    %v4128 = vunpack.c.h.b16 %v3749
    %v4129 = vunpack.c.l.b16 %v3750
    %v4130 = vunpack.c.h.b16 %v3750
    %v4131 = vunpack.c.l.b16 %v3751
    %v4132 = vunpack.c.h.b16 %v3751
    %v4133 = vunpack.c.l.b16 %v3752
    %v4134 = vunpack.c.h.b16 %v3752
    %v4135 = vunpack.c.l.b16 %v3753
    %v4136 = vunpack.c.h.b16 %v3753
    %v4137 = vunpack.c.l.b16 %v3754
    %v4138 = vunpack.c.h.b16 %v3754
    %v4139 = vpack.c.b16 %v3891, %v3883
    %v4140 = vpack.c.b16 %v3892, %v3884
    %v4141 = vpack.c.b16 %v3893, %v3885
    %v4142 = vpack.c.b16 %v3894, %v3886
    %v4143 = vpack.c.b16 %v3895, %v3887
    %v4144 = vpack.c.b16 %v3896, %v3888
    %v4145 = vpack.c.b16 %v3897, %v3889
    %v4146 = vpack.c.b16 %v3898, %v3890
    %v4147 = vpack.c.b16 %v3907, %v3899
    %v4148 = vpack.c.b16 %v3908, %v3900
    %v4149 = vpack.c.b16 %v3909, %v3901
    %v4150 = vpack.c.b16 %v3910, %v3902
    %v4151 = vpack.c.b16 %v3911, %v3903
    %v4152 = vpack.c.b16 %v3912, %v3904
    %v4153 = vpack.c.b16 %v3913, %v3905
    %v4154 = vpack.c.b16 %v3914, %v3906
    %v4155 = vpack.c.b16 %v3923, %v3915
    %v4156 = vpack.c.b16 %v3924, %v3916
    %v4157 = vpack.c.b16 %v3925, %v3917
    %v4158 = vpack.c.b16 %v3926, %v3918
    %v4159 = vpack.c.b16 %v3927, %v3919
    %v4160 = vpack.c.b16 %v3928, %v3920
    %v4161 = vpack.c.b16 %v3929, %v3921
    %v4162 = vpack.c.b16 %v3930, %v3922
    %v4163 = vpack.c.b16 %v3939, %v3931
    %v4164 = vpack.c.b16 %v3940, %v3932
    %v4165 = vpack.c.b16 %v3941, %v3933
    %v4166 = vpack.c.b16 %v3942, %v3934
    %v4167 = vpack.c.b16 %v3943, %v3935
    %v4168 = vpack.c.b16 %v3944, %v3936
    %v4169 = vpack.c.b16 %v3945, %v3937
    %v4170 = vpack.c.b16 %v3946, %v3938
    %v4171 = vpack.c.b16 %v3955, %v3947
    %v4172 = vpack.c.b16 %v3956, %v3948
    %v4173 = vpack.c.b16 %v3957, %v3949
    %v4174 = vpack.c.b16 %v3958, %v3950
    %v4175 = vpack.c.b16 %v3959, %v3951
    %v4176 = vpack.c.b16 %v3960, %v3952
    %v4177 = vpack.c.b16 %v3961, %v3953
    %v4178 = vpack.c.b16 %v3962, %v3954
    %v4179 = vpack.c.b16 %v3971, %v3963
    %v4180 = vpack.c.b16 %v3972, %v3964
    %v4181 = vpack.c.b16 %v3973, %v3965
    %v4182 = vpack.c.b16 %v3974, %v3966
    %v4183 = vpack.c.b16 %v3975, %v3967
    %v4184 = vpack.c.b16 %v3976, %v3968
    %v4185 = vpack.c.b16 %v3977, %v3969
    %v4186 = vpack.c.b16 %v3978, %v3970
    %v4187 = vpack.c.b16 %v3987, %v3979
    %v4188 = vpack.c.b16 %v3988, %v3980
    %v4189 = vpack.c.b16 %v3989, %v3981
    %v4190 = vpack.c.b16 %v3990, %v3982
    %v4191 = vpack.c.b16 %v3991, %v3983
    %v4192 = vpack.c.b16 %v3992, %v3984
    %v4193 = vpack.c.b16 %v3993, %v3985
    %v4194 = vpack.c.b16 %v3994, %v3986
    %v4195 = vpack.c.b16 %v4003, %v3995
    %v4196 = vpack.c.b16 %v4004, %v3996
    %v4197 = vpack.c.b16 %v4005, %v3997
    %v4198 = vpack.c.b16 %v4006, %v3998
    %v4199 = vpack.c.b16 %v4007, %v3999
    %v4200 = vpack.c.b16 %v4008, %v4000
    %v4201 = vpack.c.b16 %v4009, %v4001
    %v4202 = vpack.c.b16 %v4010, %v4002
    %v4203 = vpack.c.b16 %v4019, %v4011
    %v4204 = vpack.c.b16 %v4020, %v4012
    %v4205 = vpack.c.b16 %v4021, %v4013
    %v4206 = vpack.c.b16 %v4022, %v4014
    %v4207 = vpack.c.b16 %v4023, %v4015
    %v4208 = vpack.c.b16 %v4024, %v4016
    %v4209 = vpack.c.b16 %v4025, %v4017
    %v4210 = vpack.c.b16 %v4026, %v4018
    %v4211 = vpack.c.b16 %v4035, %v4027
    %v4212 = vpack.c.b16 %v4036, %v4028
    %v4213 = vpack.c.b16 %v4037, %v4029
    %v4214 = vpack.c.b16 %v4038, %v4030
    %v4215 = vpack.c.b16 %v4039, %v4031
    %v4216 = vpack.c.b16 %v4040, %v4032
    %v4217 = vpack.c.b16 %v4041, %v4033
    %v4218 = vpack.c.b16 %v4042, %v4034
    %v4219 = vpack.c.b16 %v4051, %v4043
    %v4220 = vpack.c.b16 %v4052, %v4044
    %v4221 = vpack.c.b16 %v4053, %v4045
    %v4222 = vpack.c.b16 %v4054, %v4046
    %v4223 = vpack.c.b16 %v4055, %v4047
    %v4224 = vpack.c.b16 %v4056, %v4048
    %v4225 = vpack.c.b16 %v4057, %v4049
    %v4226 = vpack.c.b16 %v4058, %v4050
    %v4227 = vpack.c.b16 %v4067, %v4059
    %v4228 = vpack.c.b16 %v4068, %v4060
    %v4229 = vpack.c.b16 %v4069, %v4061
    %v4230 = vpack.c.b16 %v4070, %v4062
    %v4231 = vpack.c.b16 %v4071, %v4063
    %v4232 = vpack.c.b16 %v4072, %v4064
    %v4233 = vpack.c.b16 %v4073, %v4065
    %v4234 = vpack.c.b16 %v4074, %v4066
    %v4235 = vpack.c.b16 %v4083, %v4075
    %v4236 = vpack.c.b16 %v4084, %v4076
    %v4237 = vpack.c.b16 %v4085, %v4077
    %v4238 = vpack.c.b16 %v4086, %v4078
    %v4239 = vpack.c.b16 %v4087, %v4079
    %v4240 = vpack.c.b16 %v4088, %v4080
    %v4241 = vpack.c.b16 %v4089, %v4081
    %v4242 = vpack.c.b16 %v4090, %v4082
    %v4243 = vpack.c.b16 %v4099, %v4091
    %v4244 = vpack.c.b16 %v4100, %v4092
    %v4245 = vpack.c.b16 %v4101, %v4093
    %v4246 = vpack.c.b16 %v4102, %v4094
    %v4247 = vpack.c.b16 %v4103, %v4095
    %v4248 = vpack.c.b16 %v4104, %v4096
    %v4249 = vpack.c.b16 %v4105, %v4097
    %v4250 = vpack.c.b16 %v4106, %v4098
    %v4251 = vpack.c.b16 %v4115, %v4107
    %v4252 = vpack.c.b16 %v4116, %v4108
    %v4253 = vpack.c.b16 %v4117, %v4109
    %v4254 = vpack.c.b16 %v4118, %v4110
    %v4255 = vpack.c.b16 %v4119, %v4111
    %v4256 = vpack.c.b16 %v4120, %v4112
    %v4257 = vpack.c.b16 %v4121, %v4113
    %v4258 = vpack.c.b16 %v4122, %v4114
    %v4259 = vpack.c.b16 %v4131, %v4123
    %v4260 = vpack.c.b16 %v4132, %v4124
    %v4261 = vpack.c.b16 %v4133, %v4125
    %v4262 = vpack.c.b16 %v4134, %v4126
    %v4263 = vpack.c.b16 %v4135, %v4127
    %v4264 = vpack.c.b16 %v4136, %v4128
    %v4265 = vpack.c.b16 %v4137, %v4129
    %v4266 = vpack.c.b16 %v4138, %v4130
    %4395 = vmatprep.subr.bf16.mxu0 %v4140
    %4396 = vmatpush1.bf16.msra.mxu0 %v4139
    %4397 = vmatprep.subr.bf16.mxu0 %v4148
    %4398 = vmatpush1.bf16.msra.mxu0 %v4147
    %4399 = vmatprep.subr.bf16.mxu0 %v4156
    %4400 = vmatpush1.bf16.msra.mxu0 %v4155
    %4401 = vmatprep.subr.bf16.mxu0 %v4164
    %4402 = vmatpush1.bf16.msra.mxu0 %v4163
    %4403 = vmatprep.subr.bf16.mxu0 %v4172
    %4404 = vmatpush1.bf16.msra.mxu0 %v4171
    %4405 = vmatprep.subr.bf16.mxu0 %v4180
    %4406 = vmatpush1.bf16.msra.mxu0 %v4179
    %4407 = vmatprep.subr.bf16.mxu0 %v4188
    %4408 = vmatpush1.bf16.msra.mxu0 %v4187
    %4409 = vmatprep.subr.bf16.mxu0 %v4196
    %4410 = vmatpush1.bf16.msra.mxu0 %v4195
    %4411 = vmatprep.subr.bf16.mxu0 %v4204
    %4412 = vmatpush1.bf16.msra.mxu0 %v4203
    %4413 = vmatprep.subr.bf16.mxu0 %v4212
    %4414 = vmatpush1.bf16.msra.mxu0 %v4211
    %4415 = vmatprep.subr.bf16.mxu0 %v4220
    %4416 = vmatpush1.bf16.msra.mxu0 %v4219
    %4417 = vmatprep.subr.bf16.mxu0 %v4228
    %4418 = vmatpush1.bf16.msra.mxu0 %v4227
    %4419 = vmatprep.subr.bf16.mxu0 %v4236
    %4420 = vmatpush1.bf16.msra.mxu0 %v4235
    %4421 = vmatprep.subr.bf16.mxu0 %v4244
    %4422 = vmatpush1.bf16.msra.mxu0 %v4243
    %4423 = vmatprep.subr.bf16.mxu0 %v4252
    %4424 = vmatpush1.bf16.msra.mxu0 %v4251
    %4425 = vmatprep.subr.bf16.mxu0 %v4260
    %4426 = vmatpush1.bf16.msra.mxu0 %v4259
    %4427 = vmatprep.mubr.bf16.mxu0 %v3626
    %4428 = vmatmul.mubr.bf16.gmra.mrb[0].mxu0 %v3625
    %v4429 = vpop.f32.mrb[0].mxu0
    %v4430 = vadd.f32 0.0, %v4429
    %v4431 = vpop.f32.mrb[0].mxu0
    %v4432 = vadd.f32 0.0, %v4431
    %v4433 = vpop.f32.mrb[0].mxu0
    %v4434 = vadd.f32 0.0, %v4433
    %v4435 = vpop.f32.mrb[0].mxu0
    %v4436 = vadd.f32 0.0, %v4435
    %4437 = vdwg.mxu0
    %4438 = vmatprep.subr.bf16.mxu0 %v4142
    %4439 = vmatpush1.bf16.msra.mxu0 %v4141
    %4440 = vmatprep.subr.bf16.mxu0 %v4150
    %4441 = vmatpush1.bf16.msra.mxu0 %v4149
    %4442 = vmatprep.subr.bf16.mxu0 %v4158
    %4443 = vmatpush1.bf16.msra.mxu0 %v4157
    %4444 = vmatprep.subr.bf16.mxu0 %v4166
    %4445 = vmatpush1.bf16.msra.mxu0 %v4165
    %4446 = vmatprep.subr.bf16.mxu0 %v4174
    %4447 = vmatpush1.bf16.msra.mxu0 %v4173
    %4448 = vmatprep.subr.bf16.mxu0 %v4182
    %4449 = vmatpush1.bf16.msra.mxu0 %v4181
    %4450 = vmatprep.subr.bf16.mxu0 %v4190
    %4451 = vmatpush1.bf16.msra.mxu0 %v4189
    %4452 = vmatprep.subr.bf16.mxu0 %v4198
    %4453 = vmatpush1.bf16.msra.mxu0 %v4197
    %4454 = vmatprep.subr.bf16.mxu0 %v4206
    %4455 = vmatpush1.bf16.msra.mxu0 %v4205
    %4456 = vmatprep.subr.bf16.mxu0 %v4214
    %4457 = vmatpush1.bf16.msra.mxu0 %v4213
    %4458 = vmatprep.subr.bf16.mxu0 %v4222
    %4459 = vmatpush1.bf16.msra.mxu0 %v4221
    %4460 = vmatprep.subr.bf16.mxu0 %v4230
    %4461 = vmatpush1.bf16.msra.mxu0 %v4229
    %4462 = vmatprep.subr.bf16.mxu0 %v4238
    %4463 = vmatpush1.bf16.msra.mxu0 %v4237
    %4464 = vmatprep.subr.bf16.mxu0 %v4246
    %4465 = vmatpush1.bf16.msra.mxu0 %v4245
    %4466 = vmatprep.subr.bf16.mxu0 %v4254
    %4467 = vmatpush1.bf16.msra.mxu0 %v4253
    %4468 = vmatprep.subr.bf16.mxu0 %v4262
    %4469 = vmatpush1.bf16.msra.mxu0 %v4261
    %4470 = vmatprep.mubr.bf16.mxu0 %v3626
    %4471 = vmatmul.mubr.bf16.gmra.mrb[0].mxu0 %v3625
    %v4472 = vpop.f32.mrb[0].mxu0
    %v4473 = vadd.f32 0.0, %v4472
    %v4474 = vpop.f32.mrb[0].mxu0
    %v4475 = vadd.f32 0.0, %v4474
    %v4476 = vpop.f32.mrb[0].mxu0
    %v4477 = vadd.f32 0.0, %v4476
    %v4478 = vpop.f32.mrb[0].mxu0
    %v4479 = vadd.f32 0.0, %v4478
    %4480 = vdwg.mxu0
    %4481 = vmatprep.subr.bf16.mxu0 %v4144
    %4482 = vmatpush1.bf16.msra.mxu0 %v4143
    %4483 = vmatprep.subr.bf16.mxu0 %v4152
    %4484 = vmatpush1.bf16.msra.mxu0 %v4151
    %4485 = vmatprep.subr.bf16.mxu0 %v4160
    %4486 = vmatpush1.bf16.msra.mxu0 %v4159
    %4487 = vmatprep.subr.bf16.mxu0 %v4168
    %4488 = vmatpush1.bf16.msra.mxu0 %v4167
    %4489 = vmatprep.subr.bf16.mxu0 %v4176
    %4490 = vmatpush1.bf16.msra.mxu0 %v4175
    %4491 = vmatprep.subr.bf16.mxu0 %v4184
    %4492 = vmatpush1.bf16.msra.mxu0 %v4183
    %4493 = vmatprep.subr.bf16.mxu0 %v4192
    %4494 = vmatpush1.bf16.msra.mxu0 %v4191
    %4495 = vmatprep.subr.bf16.mxu0 %v4200
    %4496 = vmatpush1.bf16.msra.mxu0 %v4199
    %4497 = vmatprep.subr.bf16.mxu0 %v4208
    %4498 = vmatpush1.bf16.msra.mxu0 %v4207
    %4499 = vmatprep.subr.bf16.mxu0 %v4216
    %4500 = vmatpush1.bf16.msra.mxu0 %v4215
    %4501 = vmatprep.subr.bf16.mxu0 %v4224
    %4502 = vmatpush1.bf16.msra.mxu0 %v4223
    %4503 = vmatprep.subr.bf16.mxu0 %v4232
    %4504 = vmatpush1.bf16.msra.mxu0 %v4231
    %4505 = vmatprep.subr.bf16.mxu0 %v4240
    %4506 = vmatpush1.bf16.msra.mxu0 %v4239
    %4507 = vmatprep.subr.bf16.mxu0 %v4248
    %4508 = vmatpush1.bf16.msra.mxu0 %v4247
    %4509 = vmatprep.subr.bf16.mxu0 %v4256
    %4510 = vmatpush1.bf16.msra.mxu0 %v4255
    %4511 = vmatprep.subr.bf16.mxu0 %v4264
    %4512 = vmatpush1.bf16.msra.mxu0 %v4263
    %4513 = vmatprep.mubr.bf16.mxu0 %v3626
    %4514 = vmatmul.mubr.bf16.gmra.mrb[0].mxu0 %v3625
    %v4515 = vpop.f32.mrb[0].mxu0
    %v4516 = vadd.f32 0.0, %v4515
    %v4517 = vpop.f32.mrb[0].mxu0
    %v4518 = vadd.f32 0.0, %v4517
    %v4519 = vpop.f32.mrb[0].mxu0
    %v4520 = vadd.f32 0.0, %v4519
    %v4521 = vpop.f32.mrb[0].mxu0
    %v4522 = vadd.f32 0.0, %v4521
    %4523 = vdwg.mxu0
    %4524 = vmatprep.subr.bf16.mxu0 %v4146
    %4525 = vmatpush1.bf16.msra.mxu0 %v4145
    %4526 = vmatprep.subr.bf16.mxu0 %v4154
    %4527 = vmatpush1.bf16.msra.mxu0 %v4153
    %4528 = vmatprep.subr.bf16.mxu0 %v4162
    %4529 = vmatpush1.bf16.msra.mxu0 %v4161
    %4530 = vmatprep.subr.bf16.mxu0 %v4170
    %4531 = vmatpush1.bf16.msra.mxu0 %v4169
    %4532 = vmatprep.subr.bf16.mxu0 %v4178
    %4533 = vmatpush1.bf16.msra.mxu0 %v4177
    %4534 = vmatprep.subr.bf16.mxu0 %v4186
    %4535 = vmatpush1.bf16.msra.mxu0 %v4185
    %4536 = vmatprep.subr.bf16.mxu0 %v4194
    %4537 = vmatpush1.bf16.msra.mxu0 %v4193
    %4538 = vmatprep.subr.bf16.mxu0 %v4202
    %4539 = vmatpush1.bf16.msra.mxu0 %v4201
    %4540 = vmatprep.subr.bf16.mxu0 %v4210
    %4541 = vmatpush1.bf16.msra.mxu0 %v4209
    %4542 = vmatprep.subr.bf16.mxu0 %v4218
    %4543 = vmatpush1.bf16.msra.mxu0 %v4217
    %4544 = vmatprep.subr.bf16.mxu0 %v4226
    %4545 = vmatpush1.bf16.msra.mxu0 %v4225
    %4546 = vmatprep.subr.bf16.mxu0 %v4234
    %4547 = vmatpush1.bf16.msra.mxu0 %v4233
    %4548 = vmatprep.subr.bf16.mxu0 %v4242
    %4549 = vmatpush1.bf16.msra.mxu0 %v4241
    %4550 = vmatprep.subr.bf16.mxu0 %v4250
    %4551 = vmatpush1.bf16.msra.mxu0 %v4249
    %4552 = vmatprep.subr.bf16.mxu0 %v4258
    %4553 = vmatpush1.bf16.msra.mxu0 %v4257
    %4554 = vmatprep.subr.bf16.mxu0 %v4266
    %4555 = vmatpush1.bf16.msra.mxu0 %v4265
    %4556 = vmatprep.mubr.bf16.mxu0 %v3626
    %4557 = vmatmul.mubr.bf16.gmra.mrb[0].mxu0 %v3625
    %v4558 = vpop.f32.mrb[0].mxu0
    %v4559 = vadd.f32 0.0, %v4558
    %v4560 = vpop.f32.mrb[0].mxu0
    %v4561 = vadd.f32 0.0, %v4560
    %v4562 = vpop.f32.mrb[0].mxu0
    %v4563 = vadd.f32 0.0, %v4562
    %v4564 = vpop.f32.mrb[0].mxu0
    %v4565 = vadd.f32 0.0, %v4564
    %4566 = vdwg.mxu0
    %s4567 = smul.u32 %s2662, 16
    %s4568 = ssub.s32 5, %s2662
    %s4569 = smul.u32 %s4568, 16
    %s4570 = sshra.s32 %s4567, 4
    %s4571 = sand.u32 %s4567, 15
    %s4572 = smul.u32 %s4570, 16
    %s4573 = smul.addr %s4572, 8
    %s4574 = scalar_lea.vmem [#allocation2], %s4573
    %v4575 = vld [vmem:[%s4574] sm:$0xff]
    %v4576 = vld [vmem:[%s4574 + $0x8] sm:$0xff]
    %v4577 = vld [vmem:[%s4574 + $0x10] sm:$0xff]
    %v4578 = vld [vmem:[%s4574 + $0x18] sm:$0xff]
    %v4579 = vld [vmem:[%s4574 + $0x20] sm:$0xff]
    %v4580 = vld [vmem:[%s4574 + $0x28] sm:$0xff]
    %v4581 = vld [vmem:[%s4574 + $0x30] sm:$0xff]
    %v4582 = vld [vmem:[%s4574 + $0x38] sm:$0xff]
    %v4583 = vunpack.c.l.bf16 %v4575
    %v4584 = vunpack.c.l.bf16 %v4576
    %v4585 = vunpack.c.l.bf16 %v4577
    %v4586 = vunpack.c.l.bf16 %v4578
    %v4587 = vunpack.c.l.bf16 %v4579
    %v4588 = vunpack.c.l.bf16 %v4580
    %v4589 = vunpack.c.l.bf16 %v4581
    %v4590 = vunpack.c.l.bf16 %v4582
    %v4591 = vunpack.c.h.bf16 %v4575
    %v4592 = vunpack.c.h.bf16 %v4576
    %v4593 = vunpack.c.h.bf16 %v4577
    %v4594 = vunpack.c.h.bf16 %v4578
    %v4595 = vunpack.c.h.bf16 %v4579
    %v4596 = vunpack.c.h.bf16 %v4580
    %v4597 = vunpack.c.h.bf16 %v4581
    %v4598 = vunpack.c.h.bf16 %v4582
    %v4599 = vadd.f32 %v4583, %v3488
    %v4600 = vadd.f32 %v4584, %v3490
    %v4601 = vadd.f32 %v4585, %v3531
    %v4602 = vadd.f32 %v4586, %v3533
    %v4603 = vadd.f32 %v4587, %v3574
    %v4604 = vadd.f32 %v4588, %v3576
    %v4605 = vadd.f32 %v4589, %v3617
    %v4606 = vadd.f32 %v4590, %v3619
    %v4607 = vadd.f32 %v4591, %v3492
    %v4608 = vadd.f32 %v4592, %v3494
    %v4609 = vadd.f32 %v4593, %v3535
    %v4610 = vadd.f32 %v4594, %v3537
    %v4611 = vadd.f32 %v4595, %v3578
    %v4612 = vadd.f32 %v4596, %v3580
    %v4613 = vadd.f32 %v4597, %v3621
    %v4614 = vadd.f32 %v4598, %v3623
    %s4615 = sshra.s32 %s4569, 4
    %s4616 = sand.u32 %s4569, 15
    %s4617 = smul.u32 %s4615, 16
    %s4618 = smul.addr %s4617, 8
    %s4619 = scalar_lea.vmem [#allocation2], %s4618
    %v4620 = vld [vmem:[%s4619 + $0x40] sm:$0xff]
    %v4621 = vld [vmem:[%s4619 + $0x48] sm:$0xff]
    %v4622 = vld [vmem:[%s4619 + $0x50] sm:$0xff]
    %v4623 = vld [vmem:[%s4619 + $0x58] sm:$0xff]
    %v4624 = vld [vmem:[%s4619 + $0x60] sm:$0xff]
    %v4625 = vld [vmem:[%s4619 + $0x68] sm:$0xff]
    %v4626 = vld [vmem:[%s4619 + $0x70] sm:$0xff]
    %v4627 = vld [vmem:[%s4619 + $0x78] sm:$0xff]
    %v4628 = vunpack.c.l.bf16 %v4620
    %v4629 = vunpack.c.l.bf16 %v4621
    %v4630 = vunpack.c.l.bf16 %v4622
    %v4631 = vunpack.c.l.bf16 %v4623
    %v4632 = vunpack.c.l.bf16 %v4624
    %v4633 = vunpack.c.l.bf16 %v4625
    %v4634 = vunpack.c.l.bf16 %v4626
    %v4635 = vunpack.c.l.bf16 %v4627
    %v4636 = vunpack.c.h.bf16 %v4620
    %v4637 = vunpack.c.h.bf16 %v4621
    %v4638 = vunpack.c.h.bf16 %v4622
    %v4639 = vunpack.c.h.bf16 %v4623
    %v4640 = vunpack.c.h.bf16 %v4624
    %v4641 = vunpack.c.h.bf16 %v4625
    %v4642 = vunpack.c.h.bf16 %v4626
    %v4643 = vunpack.c.h.bf16 %v4627
    %v4644 = vadd.f32 %v4628, %v4430
    %v4645 = vadd.f32 %v4629, %v4432
    %v4646 = vadd.f32 %v4630, %v4473
    %v4647 = vadd.f32 %v4631, %v4475
    %v4648 = vadd.f32 %v4632, %v4516
    %v4649 = vadd.f32 %v4633, %v4518
    %v4650 = vadd.f32 %v4634, %v4559
    %v4651 = vadd.f32 %v4635, %v4561
    %v4652 = vadd.f32 %v4636, %v4434
    %v4653 = vadd.f32 %v4637, %v4436
    %v4654 = vadd.f32 %v4638, %v4477
    %v4655 = vadd.f32 %v4639, %v4479
    %v4656 = vadd.f32 %v4640, %v4520
    %v4657 = vadd.f32 %v4641, %v4522
    %v4658 = vadd.f32 %v4642, %v4563
    %v4659 = vadd.f32 %v4643, %v4565
    %v4660 = vxor.u32 %v4599, 2147483648
    %v4661 = vxor.u32 %v4600, 2147483648
    %v4662 = vxor.u32 %v4607, 2147483648
    %v4663 = vxor.u32 %v4608, 2147483648
    %v4664 = vmul.f32 %v4660, 1.442695
    %v4665 = vpow.pop %v4664
    %v4666 = vmul.f32 %v4661, 1.442695
    %v4667 = vpow.pop %v4666
    %v4668 = vmul.f32 %v4662, 1.442695
    %v4669 = vpow.pop %v4668
    %v4670 = vmul.f32 %v4663, 1.442695
    %v4671 = vpow.pop %v4670
    %v4672 = vadd.f32 %v4665, 1.0
    %v4673 = vadd.f32 %v4667, 1.0
    %v4674 = vadd.f32 %v4669, 1.0
    %v4675 = vadd.f32 %v4671, 1.0
    %v4676 = vrcp.pop %v4672
    %v4677 = vmul.f32 1.0, %v4676
    %v4678 = vrcp.pop %v4673
    %v4679 = vmul.f32 1.0, %v4678
    %v4680 = vrcp.pop %v4674
    %v4681 = vmul.f32 1.0, %v4680
    %v4682 = vrcp.pop %v4675
    %v4683 = vmul.f32 1.0, %v4682
    %v4684 = vxor.u32 %v4601, 2147483648
    %v4685 = vxor.u32 %v4602, 2147483648
    %v4686 = vxor.u32 %v4609, 2147483648
    %v4687 = vxor.u32 %v4610, 2147483648
    %v4688 = vmul.f32 %v4684, 1.442695
    %v4689 = vpow.pop %v4688
    %v4690 = vmul.f32 %v4685, 1.442695
    %v4691 = vpow.pop %v4690
    %v4692 = vmul.f32 %v4686, 1.442695
    %v4693 = vpow.pop %v4692
    %v4694 = vmul.f32 %v4687, 1.442695
    %v4695 = vpow.pop %v4694
    %v4696 = vadd.f32 %v4689, 1.0
    %v4697 = vadd.f32 %v4691, 1.0
    %v4698 = vadd.f32 %v4693, 1.0
    %v4699 = vadd.f32 %v4695, 1.0
    %v4700 = vrcp.pop %v4696
    %v4701 = vmul.f32 1.0, %v4700
    %v4702 = vrcp.pop %v4697
    %v4703 = vmul.f32 1.0, %v4702
    %v4704 = vrcp.pop %v4698
    %v4705 = vmul.f32 1.0, %v4704
    %v4706 = vrcp.pop %v4699
    %v4707 = vmul.f32 1.0, %v4706
    %v4708 = vtanh.pop %v4603
    %v4709 = vtanh.pop %v4604
    %v4710 = vtanh.pop %v4611
    %v4711 = vtanh.pop %v4612
    %v4712 = vxor.u32 %v4605, 2147483648
    %v4713 = vxor.u32 %v4606, 2147483648
    %v4714 = vxor.u32 %v4613, 2147483648
    %v4715 = vxor.u32 %v4614, 2147483648
    %v4716 = vmul.f32 %v4712, 1.442695
    %v4717 = vpow.pop %v4716
    %v4718 = vmul.f32 %v4713, 1.442695
    %v4719 = vpow.pop %v4718
    %v4720 = vmul.f32 %v4714, 1.442695
    %v4721 = vpow.pop %v4720
    %v4722 = vmul.f32 %v4715, 1.442695
    %v4723 = vpow.pop %v4722
    %v4724 = vadd.f32 %v4717, 1.0
    %v4725 = vadd.f32 %v4719, 1.0
    %v4726 = vadd.f32 %v4721, 1.0
    %v4727 = vadd.f32 %v4723, 1.0
    %v4728 = vrcp.pop %v4724
    %v4729 = vmul.f32 1.0, %v4728
    %v4730 = vrcp.pop %v4725
    %v4731 = vmul.f32 1.0, %v4730
    %v4732 = vrcp.pop %v4726
    %v4733 = vmul.f32 1.0, %v4732
    %v4734 = vrcp.pop %v4727
    %v4735 = vmul.f32 1.0, %v4734
    %v4736 = vmul.f32 %v4701, %v2671
    %v4737 = vmul.f32 %v4703, %v2672
    %v4738 = vmul.f32 %v4705, %v2673
    %v4739 = vmul.f32 %v4707, %v2674
    %v4740 = vmul.f32 %v4677, %v4708
    %v4741 = vmul.f32 %v4679, %v4709
    %v4742 = vmul.f32 %v4681, %v4710
    %v4743 = vmul.f32 %v4683, %v4711
    %v4744 = vadd.f32 %v4736, %v4740
    %v4745 = vadd.f32 %v4737, %v4741
    %v4746 = vadd.f32 %v4738, %v4742
    %v4747 = vadd.f32 %v4739, %v4743
    %v4748 = vtanh.pop %v4744
    %v4749 = vtanh.pop %v4745
    %v4750 = vtanh.pop %v4746
    %v4751 = vtanh.pop %v4747
    %v4752 = vmul.f32 %v4729, %v4748
    %v4753 = vmul.f32 %v4731, %v4749
    %v4754 = vmul.f32 %v4733, %v4750
    %v4755 = vmul.f32 %v4735, %v4751
    %v4756 = vxor.u32 %v4644, 2147483648
    %v4757 = vxor.u32 %v4645, 2147483648
    %v4758 = vxor.u32 %v4652, 2147483648
    %v4759 = vxor.u32 %v4653, 2147483648
    %v4760 = vmul.f32 %v4756, 1.442695
    %v4761 = vpow.pop %v4760
    %v4762 = vmul.f32 %v4757, 1.442695
    %v4763 = vpow.pop %v4762
    %v4764 = vmul.f32 %v4758, 1.442695
    %v4765 = vpow.pop %v4764
    %v4766 = vmul.f32 %v4759, 1.442695
    %v4767 = vpow.pop %v4766
    %v4768 = vadd.f32 %v4761, 1.0
    %v4769 = vadd.f32 %v4763, 1.0
    %v4770 = vadd.f32 %v4765, 1.0
    %v4771 = vadd.f32 %v4767, 1.0
    %v4772 = vrcp.pop %v4768
    %v4773 = vmul.f32 1.0, %v4772
    %v4774 = vrcp.pop %v4769
    %v4775 = vmul.f32 1.0, %v4774
    %v4776 = vrcp.pop %v4770
    %v4777 = vmul.f32 1.0, %v4776
    %v4778 = vrcp.pop %v4771
    %v4779 = vmul.f32 1.0, %v4778
    %v4780 = vxor.u32 %v4646, 2147483648
    %v4781 = vxor.u32 %v4647, 2147483648
    %v4782 = vxor.u32 %v4654, 2147483648
    %v4783 = vxor.u32 %v4655, 2147483648
    %v4784 = vmul.f32 %v4780, 1.442695
    %v4785 = vpow.pop %v4784
    %v4786 = vmul.f32 %v4781, 1.442695
    %v4787 = vpow.pop %v4786
    %v4788 = vmul.f32 %v4782, 1.442695
    %v4789 = vpow.pop %v4788
    %v4790 = vmul.f32 %v4783, 1.442695
    %v4791 = vpow.pop %v4790
    %v4792 = vadd.f32 %v4785, 1.0
    %v4793 = vadd.f32 %v4787, 1.0
    %v4794 = vadd.f32 %v4789, 1.0
    %v4795 = vadd.f32 %v4791, 1.0
    %v4796 = vrcp.pop %v4792
    %v4797 = vmul.f32 1.0, %v4796
    %v4798 = vrcp.pop %v4793
    %v4799 = vmul.f32 1.0, %v4798
    %v4800 = vrcp.pop %v4794
    %v4801 = vmul.f32 1.0, %v4800
    %v4802 = vrcp.pop %v4795
    %v4803 = vmul.f32 1.0, %v4802
    %v4804 = vtanh.pop %v4648
    %v4805 = vtanh.pop %v4649
    %v4806 = vtanh.pop %v4656
    %v4807 = vtanh.pop %v4657
    %v4808 = vxor.u32 %v4650, 2147483648
    %v4809 = vxor.u32 %v4651, 2147483648
    %v4810 = vxor.u32 %v4658, 2147483648
    %v4811 = vxor.u32 %v4659, 2147483648
    %v4812 = vmul.f32 %v4808, 1.442695
    %v4813 = vpow.pop %v4812
    %v4814 = vmul.f32 %v4809, 1.442695
    %v4815 = vpow.pop %v4814
    %v4816 = vmul.f32 %v4810, 1.442695
    %v4817 = vpow.pop %v4816
    %v4818 = vmul.f32 %v4811, 1.442695
    %v4819 = vpow.pop %v4818
    %v4820 = vadd.f32 %v4813, 1.0
    %v4821 = vadd.f32 %v4815, 1.0
    %v4822 = vadd.f32 %v4817, 1.0
    %v4823 = vadd.f32 %v4819, 1.0
    %v4824 = vrcp.pop %v4820
    %v4825 = vmul.f32 1.0, %v4824
    %v4826 = vrcp.pop %v4821
    %v4827 = vmul.f32 1.0, %v4826
    %v4828 = vrcp.pop %v4822
    %v4829 = vmul.f32 1.0, %v4828
    %v4830 = vrcp.pop %v4823
    %v4831 = vmul.f32 1.0, %v4830
    %v4832 = vmul.f32 %v4797, %v2679
    %v4833 = vmul.f32 %v4799, %v2680
    %v4834 = vmul.f32 %v4801, %v2681
    %v4835 = vmul.f32 %v4803, %v2682
    %v4836 = vmul.f32 %v4773, %v4804
    %v4837 = vmul.f32 %v4775, %v4805
    %v4838 = vmul.f32 %v4777, %v4806
    %v4839 = vmul.f32 %v4779, %v4807
    %v4840 = vadd.f32 %v4832, %v4836
    %v4841 = vadd.f32 %v4833, %v4837
    %v4842 = vadd.f32 %v4834, %v4838
    %v4843 = vadd.f32 %v4835, %v4839
    %v4844 = vtanh.pop %v4840
    %v4845 = vtanh.pop %v4841
    %v4846 = vtanh.pop %v4842
    %v4847 = vtanh.pop %v4843
    %v4848 = vmul.f32 %v4825, %v4844
    %v4849 = vmul.f32 %v4827, %v4845
    %v4850 = vmul.f32 %v4829, %v4846
    %v4851 = vmul.f32 %v4831, %v4847
  $region42: #{forward.5} parent=0 // loop_footer
    %s2666 = sadd.s32 1, %s2662
  $region43: #{forward.5} parent=0 // loop_footer_branch
    %2661 = sbr.rel target = $region39
  $region44: #{forward.5} parent=0 // loop_exit
    _
  %v4852 = vpack.c.bf16 %v2669, %v2667
  %v4853 = vpack.c.bf16 %v2670, %v2668
  %v4854 = vpack.c.bf16 %v2677, %v2675
  %v4855 = vpack.c.bf16 %v2678, %v2676
  %v4856 = vld [vmem:[%s5] sm:$0xff]
  %v4857 = vld [vmem:[%s5 + $0x8] sm:$0xff]
  %v4858 = vld [vmem:[%s5 + $0x10] sm:$0xff]
  %v4859 = vld [vmem:[%s5 + $0x18] sm:$0xff]
  %v4860 = vld [vmem:[%s5 + $0x20] sm:$0xff]
  %v4861 = vld [vmem:[%s5 + $0x28] sm:$0xff]
  %v4862 = vld [vmem:[%s5 + $0x30] sm:$0xff]
  %v4863 = vld [vmem:[%s5 + $0x38] sm:$0xff]
  %v4864 = vld [vmem:[%s5 + $0x40] sm:$0xff]
  %v4865 = vld [vmem:[%s5 + $0x48] sm:$0xff]
  %v4866 = vld [vmem:[%s5 + $0x50] sm:$0xff]
  %v4867 = vld [vmem:[%s5 + $0x58] sm:$0xff]
  %v4868 = vld [vmem:[%s5 + $0x60] sm:$0xff]
  %v4869 = vld [vmem:[%s5 + $0x68] sm:$0xff]
  %v4870 = vld [vmem:[%s5 + $0x70] sm:$0xff]
  %v4871 = vld [vmem:[%s5 + $0x78] sm:$0xff]
  %v4872 = vld [vmem:[%s5 + $0x80] sm:$0xff]
  %v4873 = vld [vmem:[%s5 + $0x88] sm:$0xff]
  %v4874 = vld [vmem:[%s5 + $0x90] sm:$0xff]
  %v4875 = vld [vmem:[%s5 + $0x98] sm:$0xff]
  %v4876 = vld [vmem:[%s5 + $0xa0] sm:$0xff]
  %v4877 = vld [vmem:[%s5 + $0xa8] sm:$0xff]
  %v4878 = vld [vmem:[%s5 + $0xb0] sm:$0xff]
  %v4879 = vld [vmem:[%s5 + $0xb8] sm:$0xff]
  %v4880 = vld [vmem:[%s5 + $0xc0] sm:$0xff]
  %v4881 = vld [vmem:[%s5 + $0xc8] sm:$0xff]
  %v4882 = vld [vmem:[%s5 + $0xd0] sm:$0xff]
  %v4883 = vld [vmem:[%s5 + $0xd8] sm:$0xff]
  %v4884 = vld [vmem:[%s5 + $0xe0] sm:$0xff]
  %v4885 = vld [vmem:[%s5 + $0xe8] sm:$0xff]
  %v4886 = vld [vmem:[%s5 + $0xf0] sm:$0xff]
  %v4887 = vld [vmem:[%s5 + $0xf8] sm:$0xff]
  %v4888 = vld [vmem:[%s5 + $0x100] sm:$0xff]
  %v4889 = vld [vmem:[%s5 + $0x108] sm:$0xff]
  %v4890 = vld [vmem:[%s5 + $0x110] sm:$0xff]
  %v4891 = vld [vmem:[%s5 + $0x118] sm:$0xff]
  %v4892 = vld [vmem:[%s5 + $0x120] sm:$0xff]
  %v4893 = vld [vmem:[%s5 + $0x128] sm:$0xff]
  %v4894 = vld [vmem:[%s5 + $0x130] sm:$0xff]
  %v4895 = vld [vmem:[%s5 + $0x138] sm:$0xff]
  %v4896 = vld [vmem:[%s5 + $0x140] sm:$0xff]
  %v4897 = vld [vmem:[%s5 + $0x148] sm:$0xff]
  %v4898 = vld [vmem:[%s5 + $0x150] sm:$0xff]
  %v4899 = vld [vmem:[%s5 + $0x158] sm:$0xff]
  %v4900 = vld [vmem:[%s5 + $0x160] sm:$0xff]
  %v4901 = vld [vmem:[%s5 + $0x168] sm:$0xff]
  %v4902 = vld [vmem:[%s5 + $0x170] sm:$0xff]
  %v4903 = vld [vmem:[%s5 + $0x178] sm:$0xff]
  %v4904 = vld [vmem:[%s5 + $0x180] sm:$0xff]
  %v4905 = vld [vmem:[%s5 + $0x188] sm:$0xff]
  %v4906 = vld [vmem:[%s5 + $0x190] sm:$0xff]
  %v4907 = vld [vmem:[%s5 + $0x198] sm:$0xff]
  %v4908 = vld [vmem:[%s5 + $0x1a0] sm:$0xff]
  %v4909 = vld [vmem:[%s5 + $0x1a8] sm:$0xff]
  %v4910 = vld [vmem:[%s5 + $0x1b0] sm:$0xff]
  %v4911 = vld [vmem:[%s5 + $0x1b8] sm:$0xff]
  %v4912 = vld [vmem:[%s5 + $0x1c0] sm:$0xff]
  %v4913 = vld [vmem:[%s5 + $0x1c8] sm:$0xff]
  %v4914 = vld [vmem:[%s5 + $0x1d0] sm:$0xff]
  %v4915 = vld [vmem:[%s5 + $0x1d8] sm:$0xff]
  %v4916 = vld [vmem:[%s5 + $0x1e0] sm:$0xff]
  %v4917 = vld [vmem:[%s5 + $0x1e8] sm:$0xff]
  %v4918 = vld [vmem:[%s5 + $0x1f0] sm:$0xff]
  %v4919 = vld [vmem:[%s5 + $0x1f8] sm:$0xff]
  %v4920 = vld [vmem:[%s6] sm:$0x3]
  %v4922 = vlaneseq
  %v4923 = vshrl.u32 %v4922, 7
  %v4924 = vsub.s32 0, %v4923
  %v4925 = vrot.slane %v4920, %v4924
  %v4926 = vlaneseq
  %v4927 = vshrl.u32 %v4926, 7
  %v4928 = vsub.s32 1, %v4927
  %v4929 = vrot.slane %v4920, %v4928
  %v4996 = vunpack.c.l.b16 %v4856
  %v4997 = vunpack.c.h.b16 %v4856
  %v4998 = vunpack.c.l.b16 %v4857
  %v4999 = vunpack.c.h.b16 %v4857
  %v5000 = vunpack.c.l.b16 %v4858
  %v5001 = vunpack.c.h.b16 %v4858
  %v5002 = vunpack.c.l.b16 %v4859
  %v5003 = vunpack.c.h.b16 %v4859
  %v5004 = vunpack.c.l.b16 %v4860
  %v5005 = vunpack.c.h.b16 %v4860
  %v5006 = vunpack.c.l.b16 %v4861
  %v5007 = vunpack.c.h.b16 %v4861
  %v5008 = vunpack.c.l.b16 %v4862
  %v5009 = vunpack.c.h.b16 %v4862
  %v5010 = vunpack.c.l.b16 %v4863
  %v5011 = vunpack.c.h.b16 %v4863
  %v5012 = vunpack.c.l.b16 %v4864
  %v5013 = vunpack.c.h.b16 %v4864
  %v5014 = vunpack.c.l.b16 %v4865
  %v5015 = vunpack.c.h.b16 %v4865
  %v5016 = vunpack.c.l.b16 %v4866
  %v5017 = vunpack.c.h.b16 %v4866
  %v5018 = vunpack.c.l.b16 %v4867
  %v5019 = vunpack.c.h.b16 %v4867
  %v5020 = vunpack.c.l.b16 %v4868
  %v5021 = vunpack.c.h.b16 %v4868
  %v5022 = vunpack.c.l.b16 %v4869
  %v5023 = vunpack.c.h.b16 %v4869
  %v5024 = vunpack.c.l.b16 %v4870
  %v5025 = vunpack.c.h.b16 %v4870
  %v5026 = vunpack.c.l.b16 %v4871
  %v5027 = vunpack.c.h.b16 %v4871
  %v5028 = vunpack.c.l.b16 %v4872
  %v5029 = vunpack.c.h.b16 %v4872
  %v5030 = vunpack.c.l.b16 %v4873
  %v5031 = vunpack.c.h.b16 %v4873
  %v5032 = vunpack.c.l.b16 %v4874
  %v5033 = vunpack.c.h.b16 %v4874
  %v5034 = vunpack.c.l.b16 %v4875
  %v5035 = vunpack.c.h.b16 %v4875
  %v5036 = vunpack.c.l.b16 %v4876
  %v5037 = vunpack.c.h.b16 %v4876
  %v5038 = vunpack.c.l.b16 %v4877
  %v5039 = vunpack.c.h.b16 %v4877
  %v5040 = vunpack.c.l.b16 %v4878
  %v5041 = vunpack.c.h.b16 %v4878
  %v5042 = vunpack.c.l.b16 %v4879
  %v5043 = vunpack.c.h.b16 %v4879
  %v5044 = vunpack.c.l.b16 %v4880
  %v5045 = vunpack.c.h.b16 %v4880
  %v5046 = vunpack.c.l.b16 %v4881
  %v5047 = vunpack.c.h.b16 %v4881
  %v5048 = vunpack.c.l.b16 %v4882
  %v5049 = vunpack.c.h.b16 %v4882
  %v5050 = vunpack.c.l.b16 %v4883
  %v5051 = vunpack.c.h.b16 %v4883
  %v5052 = vunpack.c.l.b16 %v4884
  %v5053 = vunpack.c.h.b16 %v4884
  %v5054 = vunpack.c.l.b16 %v4885
  %v5055 = vunpack.c.h.b16 %v4885
  %v5056 = vunpack.c.l.b16 %v4886
  %v5057 = vunpack.c.h.b16 %v4886
  %v5058 = vunpack.c.l.b16 %v4887
  %v5059 = vunpack.c.h.b16 %v4887
  %v5060 = vunpack.c.l.b16 %v4888
  %v5061 = vunpack.c.h.b16 %v4888
  %v5062 = vunpack.c.l.b16 %v4889
  %v5063 = vunpack.c.h.b16 %v4889
  %v5064 = vunpack.c.l.b16 %v4890
  %v5065 = vunpack.c.h.b16 %v4890
  %v5066 = vunpack.c.l.b16 %v4891
  %v5067 = vunpack.c.h.b16 %v4891
  %v5068 = vunpack.c.l.b16 %v4892
  %v5069 = vunpack.c.h.b16 %v4892
  %v5070 = vunpack.c.l.b16 %v4893
  %v5071 = vunpack.c.h.b16 %v4893
  %v5072 = vunpack.c.l.b16 %v4894
  %v5073 = vunpack.c.h.b16 %v4894
  %v5074 = vunpack.c.l.b16 %v4895
  %v5075 = vunpack.c.h.b16 %v4895
  %v5076 = vunpack.c.l.b16 %v4896
  %v5077 = vunpack.c.h.b16 %v4896
  %v5078 = vunpack.c.l.b16 %v4897
  %v5079 = vunpack.c.h.b16 %v4897
  %v5080 = vunpack.c.l.b16 %v4898
  %v5081 = vunpack.c.h.b16 %v4898
  %v5082 = vunpack.c.l.b16 %v4899
  %v5083 = vunpack.c.h.b16 %v4899
  %v5084 = vunpack.c.l.b16 %v4900
  %v5085 = vunpack.c.h.b16 %v4900
  %v5086 = vunpack.c.l.b16 %v4901
  %v5087 = vunpack.c.h.b16 %v4901
  %v5088 = vunpack.c.l.b16 %v4902
  %v5089 = vunpack.c.h.b16 %v4902
  %v5090 = vunpack.c.l.b16 %v4903
  %v5091 = vunpack.c.h.b16 %v4903
  %v5092 = vunpack.c.l.b16 %v4904
  %v5093 = vunpack.c.h.b16 %v4904
  %v5094 = vunpack.c.l.b16 %v4905
  %v5095 = vunpack.c.h.b16 %v4905
  %v5096 = vunpack.c.l.b16 %v4906
  %v5097 = vunpack.c.h.b16 %v4906
  %v5098 = vunpack.c.l.b16 %v4907
  %v5099 = vunpack.c.h.b16 %v4907
  %v5100 = vunpack.c.l.b16 %v4908
  %v5101 = vunpack.c.h.b16 %v4908
  %v5102 = vunpack.c.l.b16 %v4909
  %v5103 = vunpack.c.h.b16 %v4909
  %v5104 = vunpack.c.l.b16 %v4910
  %v5105 = vunpack.c.h.b16 %v4910
  %v5106 = vunpack.c.l.b16 %v4911
  %v5107 = vunpack.c.h.b16 %v4911
  %v5108 = vunpack.c.l.b16 %v4912
  %v5109 = vunpack.c.h.b16 %v4912
  %v5110 = vunpack.c.l.b16 %v4913
  %v5111 = vunpack.c.h.b16 %v4913
  %v5112 = vunpack.c.l.b16 %v4914
  %v5113 = vunpack.c.h.b16 %v4914
  %v5114 = vunpack.c.l.b16 %v4915
  %v5115 = vunpack.c.h.b16 %v4915
  %v5116 = vunpack.c.l.b16 %v4916
  %v5117 = vunpack.c.h.b16 %v4916
  %v5118 = vunpack.c.l.b16 %v4917
  %v5119 = vunpack.c.h.b16 %v4917
  %v5120 = vunpack.c.l.b16 %v4918
  %v5121 = vunpack.c.h.b16 %v4918
  %v5122 = vunpack.c.l.b16 %v4919
  %v5123 = vunpack.c.h.b16 %v4919
  %v5124 = vpack.c.b16 %v4998, %v4996
  %v5125 = vpack.c.b16 %v4999, %v4997
  %v5126 = vpack.c.b16 %v5002, %v5000
  %v5127 = vpack.c.b16 %v5003, %v5001
  %v5128 = vpack.c.b16 %v5006, %v5004
  %v5129 = vpack.c.b16 %v5007, %v5005
  %v5130 = vpack.c.b16 %v5010, %v5008
  %v5131 = vpack.c.b16 %v5011, %v5009
  %v5132 = vpack.c.b16 %v5014, %v5012
  %v5133 = vpack.c.b16 %v5015, %v5013
  %v5134 = vpack.c.b16 %v5018, %v5016
  %v5135 = vpack.c.b16 %v5019, %v5017
  %v5136 = vpack.c.b16 %v5022, %v5020
  %v5137 = vpack.c.b16 %v5023, %v5021
  %v5138 = vpack.c.b16 %v5026, %v5024
  %v5139 = vpack.c.b16 %v5027, %v5025
  %v5140 = vpack.c.b16 %v5030, %v5028
  %v5141 = vpack.c.b16 %v5031, %v5029
  %v5142 = vpack.c.b16 %v5034, %v5032
  %v5143 = vpack.c.b16 %v5035, %v5033
  %v5144 = vpack.c.b16 %v5038, %v5036
  %v5145 = vpack.c.b16 %v5039, %v5037
  %v5146 = vpack.c.b16 %v5042, %v5040
  %v5147 = vpack.c.b16 %v5043, %v5041
  %v5148 = vpack.c.b16 %v5046, %v5044
  %v5149 = vpack.c.b16 %v5047, %v5045
  %v5150 = vpack.c.b16 %v5050, %v5048
  %v5151 = vpack.c.b16 %v5051, %v5049
  %v5152 = vpack.c.b16 %v5054, %v5052
  %v5153 = vpack.c.b16 %v5055, %v5053
  %v5154 = vpack.c.b16 %v5058, %v5056
  %v5155 = vpack.c.b16 %v5059, %v5057
  %v5156 = vpack.c.b16 %v5062, %v5060
  %v5157 = vpack.c.b16 %v5063, %v5061
  %v5158 = vpack.c.b16 %v5066, %v5064
  %v5159 = vpack.c.b16 %v5067, %v5065
  %v5160 = vpack.c.b16 %v5070, %v5068
  %v5161 = vpack.c.b16 %v5071, %v5069
  %v5162 = vpack.c.b16 %v5074, %v5072
  %v5163 = vpack.c.b16 %v5075, %v5073
  %v5164 = vpack.c.b16 %v5078, %v5076
  %v5165 = vpack.c.b16 %v5079, %v5077
  %v5166 = vpack.c.b16 %v5082, %v5080
  %v5167 = vpack.c.b16 %v5083, %v5081
  %v5168 = vpack.c.b16 %v5086, %v5084
  %v5169 = vpack.c.b16 %v5087, %v5085
  %v5170 = vpack.c.b16 %v5090, %v5088
  %v5171 = vpack.c.b16 %v5091, %v5089
  %v5172 = vpack.c.b16 %v5094, %v5092
  %v5173 = vpack.c.b16 %v5095, %v5093
  %v5174 = vpack.c.b16 %v5098, %v5096
  %v5175 = vpack.c.b16 %v5099, %v5097
  %v5176 = vpack.c.b16 %v5102, %v5100
  %v5177 = vpack.c.b16 %v5103, %v5101
  %v5178 = vpack.c.b16 %v5106, %v5104
  %v5179 = vpack.c.b16 %v5107, %v5105
  %v5180 = vpack.c.b16 %v5110, %v5108
  %v5181 = vpack.c.b16 %v5111, %v5109
  %v5182 = vpack.c.b16 %v5114, %v5112
  %v5183 = vpack.c.b16 %v5115, %v5113
  %v5184 = vpack.c.b16 %v5118, %v5116
  %v5185 = vpack.c.b16 %v5119, %v5117
  %v5186 = vpack.c.b16 %v5122, %v5120
  %v5187 = vpack.c.b16 %v5123, %v5121
  %5252 = vmatprep.subr.bf16.mxu0 %v5125
  %5253 = vmatpush1.bf16.msra.mxu0 %v5124
  %5254 = vmatprep.subr.bf16.mxu0 %v5127
  %5255 = vmatpush1.bf16.msra.mxu0 %v5126
  %5256 = vmatprep.subr.bf16.mxu0 %v5129
  %5257 = vmatpush1.bf16.msra.mxu0 %v5128
  %5258 = vmatprep.subr.bf16.mxu0 %v5131
  %5259 = vmatpush1.bf16.msra.mxu0 %v5130
  %5260 = vmatprep.subr.bf16.mxu0 %v5133
  %5261 = vmatpush1.bf16.msra.mxu0 %v5132
  %5262 = vmatprep.subr.bf16.mxu0 %v5135
  %5263 = vmatpush1.bf16.msra.mxu0 %v5134
  %5264 = vmatprep.subr.bf16.mxu0 %v5137
  %5265 = vmatpush1.bf16.msra.mxu0 %v5136
  %5266 = vmatprep.subr.bf16.mxu0 %v5139
  %5267 = vmatpush1.bf16.msra.mxu0 %v5138
  %5268 = vmatprep.subr.bf16.mxu0 %v5141
  %5269 = vmatpush1.bf16.msra.mxu0 %v5140
  %5270 = vmatprep.subr.bf16.mxu0 %v5143
  %5271 = vmatpush1.bf16.msra.mxu0 %v5142
  %5272 = vmatprep.subr.bf16.mxu0 %v5145
  %5273 = vmatpush1.bf16.msra.mxu0 %v5144
  %5274 = vmatprep.subr.bf16.mxu0 %v5147
  %5275 = vmatpush1.bf16.msra.mxu0 %v5146
  %5276 = vmatprep.subr.bf16.mxu0 %v5149
  %5277 = vmatpush1.bf16.msra.mxu0 %v5148
  %5278 = vmatprep.subr.bf16.mxu0 %v5151
  %5279 = vmatpush1.bf16.msra.mxu0 %v5150
  %5280 = vmatprep.subr.bf16.mxu0 %v5153
  %5281 = vmatpush1.bf16.msra.mxu0 %v5152
  %5282 = vmatprep.subr.bf16.mxu0 %v5155
  %5283 = vmatpush1.bf16.msra.mxu0 %v5154
  %5284 = vmatprep.mubr.bf16.mxu0 %v4853
  %5285 = vmatmul.mubr.bf16.gmra.mrb[0].mxu0 %v4852
  %v5286 = vpop.f32.mrb[0].mxu0
  %v5287 = vadd.f32 %v4925, %v5286
  %v5288 = vpop.f32.mrb[0].mxu0
  %v5289 = vadd.f32 %v4929, %v5288
  %v5290 = vpop.f32.mrb[0].mxu0
  %v5291 = vadd.f32 %v4925, %v5290
  %v5292 = vpop.f32.mrb[0].mxu0
  %v5293 = vadd.f32 %v4929, %v5292
  %5294 = vdwg.mxu0
  %5295 = vmatprep.subr.bf16.mxu0 %v5157
  %5296 = vmatpush1.bf16.msra.mxu0 %v5156
  %5297 = vmatprep.subr.bf16.mxu0 %v5159
  %5298 = vmatpush1.bf16.msra.mxu0 %v5158
  %5299 = vmatprep.subr.bf16.mxu0 %v5161
  %5300 = vmatpush1.bf16.msra.mxu0 %v5160
  %5301 = vmatprep.subr.bf16.mxu0 %v5163
  %5302 = vmatpush1.bf16.msra.mxu0 %v5162
  %5303 = vmatprep.subr.bf16.mxu0 %v5165
  %5304 = vmatpush1.bf16.msra.mxu0 %v5164
  %5305 = vmatprep.subr.bf16.mxu0 %v5167
  %5306 = vmatpush1.bf16.msra.mxu0 %v5166
  %5307 = vmatprep.subr.bf16.mxu0 %v5169
  %5308 = vmatpush1.bf16.msra.mxu0 %v5168
  %5309 = vmatprep.subr.bf16.mxu0 %v5171
  %5310 = vmatpush1.bf16.msra.mxu0 %v5170
  %5311 = vmatprep.subr.bf16.mxu0 %v5173
  %5312 = vmatpush1.bf16.msra.mxu0 %v5172
  %5313 = vmatprep.subr.bf16.mxu0 %v5175
  %5314 = vmatpush1.bf16.msra.mxu0 %v5174
  %5315 = vmatprep.subr.bf16.mxu0 %v5177
  %5316 = vmatpush1.bf16.msra.mxu0 %v5176
  %5317 = vmatprep.subr.bf16.mxu0 %v5179
  %5318 = vmatpush1.bf16.msra.mxu0 %v5178
  %5319 = vmatprep.subr.bf16.mxu0 %v5181
  %5320 = vmatpush1.bf16.msra.mxu0 %v5180
  %5321 = vmatprep.subr.bf16.mxu0 %v5183
  %5322 = vmatpush1.bf16.msra.mxu0 %v5182
  %5323 = vmatprep.subr.bf16.mxu0 %v5185
  %5324 = vmatpush1.bf16.msra.mxu0 %v5184
  %5325 = vmatprep.subr.bf16.mxu0 %v5187
  %5326 = vmatpush1.bf16.msra.mxu0 %v5186
  %5327 = vmatprep.mubr.bf16.mxu0 %v4855
  %5328 = vmatmul.mubr.bf16.gmra.mrb[0].mxu0 %v4854
  %v5329 = vpop.f32.mrb[0].mxu0
  %v5330 = vadd.f32 %v5287, %v5329
  %v5331 = vpop.f32.mrb[0].mxu0
  %v5332 = vadd.f32 %v5289, %v5331
  %v5333 = vpop.f32.mrb[0].mxu0
  %v5334 = vadd.f32 %v5291, %v5333
  %v5335 = vpop.f32.mrb[0].mxu0
  %v5336 = vadd.f32 %v5293, %v5335
  %5337 = vdwg.mxu0
  %vm5338 = vcmp.gt.f32.partialorder %v5330, 0.0
  %vm5339 = vcmp.gt.f32.partialorder %v5332, 0.0
  %vm5340 = vcmp.gt.f32.partialorder %v5334, 0.0
  %vm5341 = vcmp.gt.f32.partialorder %v5336, 0.0
  %v5342 = vmul.f32 %v5330, 0.01
  %v5343 = vmul.f32 %v5332, 0.01
  %v5344 = vmul.f32 %v5334, 0.01
  %v5345 = vmul.f32 %v5336, 0.01
  %v5346 = vsel %vm5338, %v5330, %v5342
  %v5347 = vsel %vm5339, %v5332, %v5343
  %v5348 = vsel %vm5340, %v5334, %v5344
  %v5349 = vsel %vm5341, %v5336, %v5345
  %v5350 = vpack.c.bf16 %v5348, %v5346
  %v5351 = vpack.c.bf16 %v5349, %v5347
  %v5352 = vld [vmem:[%s7] sm:$0xf]
  %v5353 = vld [vmem:[%s7 + $0x4] sm:$0xf]
  %v5354 = vld [vmem:[%s7 + $0x8] sm:$0xf]
  %v5355 = vld [vmem:[%s7 + $0xc] sm:$0xf]
  %v5356 = vld [vmem:[%s7 + $0x10] sm:$0xf]
  %v5357 = vld [vmem:[%s7 + $0x14] sm:$0xf]
  %v5358 = vld [vmem:[%s7 + $0x18] sm:$0xf]
  %v5359 = vld [vmem:[%s7 + $0x1c] sm:$0xf]
  %v5360 = vld [vmem:[%s7 + $0x20] sm:$0xf]
  %v5361 = vld [vmem:[%s7 + $0x24] sm:$0xf]
  %v5362 = vld [vmem:[%s7 + $0x28] sm:$0xf]
  %v5363 = vld [vmem:[%s7 + $0x2c] sm:$0xf]
  %v5364 = vld [vmem:[%s7 + $0x30] sm:$0xf]
  %v5365 = vld [vmem:[%s7 + $0x34] sm:$0xf]
  %v5366 = vld [vmem:[%s7 + $0x38] sm:$0xf]
  %v5367 = vld [vmem:[%s7 + $0x3c] sm:$0xf]
  %v5368 = vld [vmem:[%s7 + $0x40] sm:$0xf]
  %v5369 = vld [vmem:[%s7 + $0x44] sm:$0xf]
  %v5370 = vld [vmem:[%s7 + $0x48] sm:$0xf]
  %v5371 = vld [vmem:[%s7 + $0x4c] sm:$0xf]
  %v5372 = vld [vmem:[%s7 + $0x50] sm:$0xf]
  %v5373 = vld [vmem:[%s7 + $0x54] sm:$0xf]
  %v5374 = vld [vmem:[%s7 + $0x58] sm:$0xf]
  %v5375 = vld [vmem:[%s7 + $0x5c] sm:$0xf]
  %v5376 = vld [vmem:[%s7 + $0x60] sm:$0xf]
  %v5377 = vld [vmem:[%s7 + $0x64] sm:$0xf]
  %v5378 = vld [vmem:[%s7 + $0x68] sm:$0xf]
  %v5379 = vld [vmem:[%s7 + $0x6c] sm:$0xf]
  %v5380 = vld [vmem:[%s7 + $0x70] sm:$0xf]
  %v5381 = vld [vmem:[%s7 + $0x74] sm:$0xf]
  %v5382 = vld [vmem:[%s7 + $0x78] sm:$0xf]
  %v5383 = vld [vmem:[%s7 + $0x7c] sm:$0xf]
  %v5384 = vld [vmem:[%s8] sm:$0x1]
  %v5386 = vlaneseq
  %v5387 = vshrl.u32 %v5386, 7
  %v5388 = vsub.s32 0, %v5387
  %v5389 = vrot.slane %v5384, %v5388
  %v5423 = vunpack.c.l.b16 %v5352
  %v5424 = vunpack.c.l.b16 %v5353
  %v5425 = vunpack.c.l.b16 %v5354
  %v5426 = vunpack.c.l.b16 %v5355
  %v5427 = vunpack.c.l.b16 %v5356
  %v5428 = vunpack.c.l.b16 %v5357
  %v5429 = vunpack.c.l.b16 %v5358
  %v5430 = vunpack.c.l.b16 %v5359
  %v5431 = vunpack.c.l.b16 %v5360
  %v5432 = vunpack.c.l.b16 %v5361
  %v5433 = vunpack.c.l.b16 %v5362
  %v5434 = vunpack.c.l.b16 %v5363
  %v5435 = vunpack.c.l.b16 %v5364
  %v5436 = vunpack.c.l.b16 %v5365
  %v5437 = vunpack.c.l.b16 %v5366
  %v5438 = vunpack.c.l.b16 %v5367
  %v5439 = vunpack.c.l.b16 %v5368
  %v5440 = vunpack.c.l.b16 %v5369
  %v5441 = vunpack.c.l.b16 %v5370
  %v5442 = vunpack.c.l.b16 %v5371
  %v5443 = vunpack.c.l.b16 %v5372
  %v5444 = vunpack.c.l.b16 %v5373
  %v5445 = vunpack.c.l.b16 %v5374
  %v5446 = vunpack.c.l.b16 %v5375
  %v5447 = vunpack.c.l.b16 %v5376
  %v5448 = vunpack.c.l.b16 %v5377
  %v5449 = vunpack.c.l.b16 %v5378
  %v5450 = vunpack.c.l.b16 %v5379
  %v5451 = vunpack.c.l.b16 %v5380
  %v5452 = vunpack.c.l.b16 %v5381
  %v5453 = vunpack.c.l.b16 %v5382
  %v5454 = vunpack.c.l.b16 %v5383
  %v5455 = vpack.c.b16 %v5424, %v5423
  %v5456 = vpack.c.b16 %v5426, %v5425
  %v5457 = vpack.c.b16 %v5428, %v5427
  %v5458 = vpack.c.b16 %v5430, %v5429
  %v5459 = vpack.c.b16 %v5432, %v5431
  %v5460 = vpack.c.b16 %v5434, %v5433
  %v5461 = vpack.c.b16 %v5436, %v5435
  %v5462 = vpack.c.b16 %v5438, %v5437
  %v5463 = vpack.c.b16 %v5440, %v5439
  %v5464 = vpack.c.b16 %v5442, %v5441
  %v5465 = vpack.c.b16 %v5444, %v5443
  %v5466 = vpack.c.b16 %v5446, %v5445
  %v5467 = vpack.c.b16 %v5448, %v5447
  %v5468 = vpack.c.b16 %v5450, %v5449
  %v5469 = vpack.c.b16 %v5452, %v5451
  %v5470 = vpack.c.b16 %v5454, %v5453
  %5487 = vmatprep.subr.bf16.mxu0 0
  %5488 = vmatpush1.bf16.msra.mxu0 %v5455
  %5489 = vmatprep.subr.bf16.mxu0 0
  %5490 = vmatpush1.bf16.msra.mxu0 %v5456
  %5491 = vmatprep.subr.bf16.mxu0 0
  %5492 = vmatpush1.bf16.msra.mxu0 %v5457
  %5493 = vmatprep.subr.bf16.mxu0 0
  %5494 = vmatpush1.bf16.msra.mxu0 %v5458
  %5495 = vmatprep.subr.bf16.mxu0 0
  %5496 = vmatpush1.bf16.msra.mxu0 %v5459
  %5497 = vmatprep.subr.bf16.mxu0 0
  %5498 = vmatpush1.bf16.msra.mxu0 %v5460
  %5499 = vmatprep.subr.bf16.mxu0 0
  %5500 = vmatpush1.bf16.msra.mxu0 %v5461
  %5501 = vmatprep.subr.bf16.mxu0 0
  %5502 = vmatpush1.bf16.msra.mxu0 %v5462
  %5503 = vmatprep.subr.bf16.mxu0 0
  %5504 = vmatpush1.bf16.msra.mxu0 %v5463
  %5505 = vmatprep.subr.bf16.mxu0 0
  %5506 = vmatpush1.bf16.msra.mxu0 %v5464
  %5507 = vmatprep.subr.bf16.mxu0 0
  %5508 = vmatpush1.bf16.msra.mxu0 %v5465
  %5509 = vmatprep.subr.bf16.mxu0 0
  %5510 = vmatpush1.bf16.msra.mxu0 %v5466
  %5511 = vmatprep.subr.bf16.mxu0 0
  %5512 = vmatpush1.bf16.msra.mxu0 %v5467
  %5513 = vmatprep.subr.bf16.mxu0 0
  %5514 = vmatpush1.bf16.msra.mxu0 %v5468
  %5515 = vmatprep.subr.bf16.mxu0 0
  %5516 = vmatpush1.bf16.msra.mxu0 %v5469
  %5517 = vmatprep.subr.bf16.mxu0 0
  %5518 = vmatpush1.bf16.msra.mxu0 %v5470
  %5519 = vmatprep.mubr.bf16.mxu0 %v5351
  %5520 = vmatmul.mubr.bf16.gmra.mrb[0].mxu0 %v5350
  %v5521 = vpop.f32.mrb[0].mxu0
  %v5522 = vadd.f32 %v5389, %v5521
  %v5523 = vpop.f32.mrb[0].mxu0
  %v5524 = vpop.f32.mrb[0].mxu0
  %v5525 = vadd.f32 %v5389, %v5524
  %v5526 = vpop.f32.mrb[0].mxu0
  %5527 = vdwg.mxu0
  %5528 = vst [vmem:[%s9] sm:$0xff] %v5522
  %5529 = vst [vmem:[%s9 + $0x8] sm:$0xff] %v5525
  // Predicated region
  $region45: #{forward.5} parent=0 // pred_check
    _
  $region46: #{forward.5} parent=0 // pred_check_branch
    %5531 = sbr.rel (0) target = $region48
  $region47: #{forward.5} parent=0 // pred_region
    _
  $region48: #{forward.5} parent=0 // pred_fallthru
    _
  // Predicated region
  $region49: #{forward.5} parent=0 // pred_check
    _
  $region50: #{forward.5} parent=0 // pred_check_branch
    %5533 = sbr.rel (0) target = $region52
  $region51: #{forward.5} parent=0 // pred_region
    _
  $region52: #{forward.5} parent=0 // pred_fallthru
    _

</llo_original>
